<compile_context>
chip_gen: v6e
topology: v6e:2x2x1
jax: 0.10.0
libtpu: 0.0.40
codegen_flags: <defaults>
</compile_context>

<pallas_src>
import functools

import numpy as np
import jax
import jax.numpy as jnp
from jax.experimental import pallas as pl
from jax.experimental.pallas import tpu as pltpu

EPS = 1e-5

HIDDEN_DIM = 32
LAST_LAYER_DIM = 32
PROPAGATION_DEPTH = 2
AGGREGATORS = ("mean", "max", "min", "std")
SCALERS = ("identity", "amplification", "attenuation")
AVG_D = 1.5
RESIDUAL = True
VOCAB_SIZES = (16, 4, 12, 12, 10, 6, 6, 2, 2)       # AtomEncoder categorical features

READOUT_AGGREGATORS = ("sum", "mean", "max")
READOUT_HIDDEN_DIM = 32
TARGET_DIM = 1


def _round_up(x, m):
    return int(pl.cdiv(int(x), m) * m)


# ------------------------------ fused forward kernel ------------------------------- #
def pna_fused_kernel(idx_ref, h_ref, wl_ref, bl_ref, wr1_ref, br1_ref,
                     wr2t_ref, br2_ref, pred_ref, hout_ref,
                     *, n_real, n_layers, n_nb, n_agg, n_ro):
    n_pad = h_ref.shape[0]
    inv_k = 1.0 / n_nb

    # ---- in-kernel neighbor gather setup -------------------------------------------
    # K one-hot selection matrices (n_pad, n_pad), built once from the neighbor index
    # table and reused by BOTH propagation layers (graph structure is static).
    # sel_k @ h is an exact row gather on the MXU (exactly one 1.0 per row).
    col = jax.lax.broadcasted_iota(jnp.int32, (n_pad, n_pad), 1)
    sels = []
    for k in range(n_nb):
        idx_col = idx_ref[:, k:k + 1]                              # (n_pad, 1) int32
        sels.append(jnp.where(col == idx_col, 1.0, 0.0).astype(jnp.bfloat16))

    # ---- PNASimpleLayer x depth, h resident in VMEM ---------------------------------
    h = h_ref[...]                                                 # (n_pad, D) f32
    for li in range(n_layers):
        hb = h.astype(jnp.bfloat16)                                # bf16 only at MXU
        g = jnp.dot(sels[0], hb, preferred_element_type=jnp.float32)
        s, sq, mx, mn = g, g * g, g, g
        for k in range(1, n_nb):
            g = jnp.dot(sels[k], hb, preferred_element_type=jnp.float32)
            s = s + g
            sq = sq + g * g
            mx = jnp.maximum(mx, g)
            mn = jnp.minimum(mn, g)
        mean = s * inv_k
        var = jnp.maximum(sq * inv_k - mean * mean, 0.0)           # aggregate_var (relu)
        std = jnp.sqrt(var + EPS)                                  # aggregate_std
        aggs = (mean, mx, mn, std)                                 # == AGGREGATORS order

        # posttrans Linear with scalers pre-folded into wl (host-side); split-weight
        # accumulation (per-aggregator (D, Dout) dots) — no lane concatenation needed.
        post = bl_ref[li]                                          # (1, Dout), broadcasts
        for a in range(n_agg):
            post = post + jnp.dot(aggs[a].astype(jnp.bfloat16),
                                  wl_ref[li * n_agg + a],
                                  preferred_element_type=jnp.float32)
        h = h + jnp.maximum(post, 0.0)                             # F.relu + residual; dropout p=0
    hout_ref[...] = h

    # ---- graph readout (sum / mean / max over real nodes) + output MLP --------------
    row = jax.lax.broadcasted_iota(jnp.int32, (n_pad, 1), 0)
    valid = row < n_real                                           # mask padded rows
    ssum = jnp.sum(jnp.where(valid, h, 0.0), axis=0, keepdims=True)      # (1, D)
    smean = ssum * (1.0 / n_real)
    smax = jnp.max(jnp.where(valid, h, jnp.finfo(jnp.float32).min),
                   axis=0, keepdims=True)
    reads = (ssum, smean, smax)                                    # == READOUT_AGGREGATORS

    # output MLP: Linear(3D, RH) -> ReLU -> Linear(RH, 1); split-weight accumulation,
    # rows broadcast to 8 sublanes so every dot is a clean (8, D) @ (D, RH).
    z = br1_ref[...]                                               # (1, RH)
    for a in range(n_ro):
        ra = jnp.broadcast_to(reads[a], (8, reads[a].shape[-1]))
        z = z + jnp.dot(ra, wr1_ref[a], preferred_element_type=jnp.float32)
    z = jnp.maximum(z, 0.0)                                        # (8, RH)
    out = jnp.sum(z * wr2t_ref[...], axis=-1, keepdims=True) + br2_ref[...]   # (8, 1)
    pred_ref[...] = out[0:1, :]


# --------------------------------- module wrappers ---------------------------------- #
def atom_encoder(x_int, emb_tables):
    # AtomEncoder: sum of per-feature embedding lookups (tiny int gathers; XLA glue).
    h = jnp.zeros((x_int.shape[0], emb_tables[0].shape[1]), jnp.float32)
    for i, tbl in enumerate(emb_tables):
        h = h + tbl[x_int[:, i]]
    return h


def pna_original_simple_forward(x_atom, neighbors, params):
    h0 = atom_encoder(x_atom, params["atom_emb"])                  # embedding_h
    # in_feat_dropout p = 0.0 -> identity
    N, D = h0.shape
    K = int(neighbors.shape[1])
    L = len(params["layers"])
    A = len(AGGREGATORS)
    AD = A * D

    # Fold the (identity / amplification / attenuation) scalers into the posttrans
    # weights: with the fixed in-degree-K mailbox model every node has the same
    # log(K+1)/avg_d factor, so the fold is exact and commutes with the Linear.
    c_amp = float(np.log(K + 1) / AVG_D)
    c_att = float(AVG_D / np.log(K + 1))
    w_l, b_l = [], []
    for lp in params["layers"]:
        w = lp["w_post"]                                           # (A*S*D, Dout)
        dout = int(w.shape[1])
        assert dout == D, "fused kernel assumes residual-compatible equal layer dims"
        w_eff = w[:AD] + c_amp * w[AD:2 * AD] + c_att * w[2 * AD:3 * AD]
        w_l.append(w_eff.reshape(A, D, dout).astype(jnp.bfloat16))
        b_l.append(lp["b_post"].astype(jnp.float32))
    w_layers = jnp.concatenate(w_l, axis=0)                        # (L*A, D, D) bf16
    b_layers = jnp.stack(b_l, axis=0)                              # (L, 1, D)   f32

    rp = params["readout"]
    n_ro = len(READOUT_AGGREGATORS)
    RH = int(rp["w_ro1"].shape[1])
    T = int(rp["w_ro2"].shape[1])
    w_ro1 = rp["w_ro1"].reshape(n_ro, D, RH)                       # per-readout blocks
    w_ro2t = jnp.transpose(rp["w_ro2"])                            # (T, RH), T == 1

    # Pad the node axis ONCE (sublane multiple). Padded rows gather node 0 (harmless),
    # are masked in the readout and sliced off the node-feature output.
    n_pad = _round_up(N, 8)
    h0_p = jnp.pad(h0, ((0, n_pad - N), (0, 0)))
    idx_p = jnp.pad(neighbors.astype(jnp.int32), ((0, n_pad - N), (0, 0)))

    kernel = functools.partial(pna_fused_kernel, n_real=N, n_layers=L,
                               n_nb=K, n_agg=A, n_ro=n_ro)

    pred, h_pad = pl.pallas_call(
        kernel,
        out_shape=(jax.ShapeDtypeStruct((1, T), jnp.float32),
                   jax.ShapeDtypeStruct((n_pad, D), jnp.float32)),
        grid=(1,),
        in_specs=[
            pl.BlockSpec((n_pad, K), lambda i: (0, 0)),            # neighbor indices (int32)
            pl.BlockSpec((n_pad, D), lambda i: (0, 0)),            # h0 (f32)
            pl.BlockSpec((L * A, D, D), lambda i: (0, 0, 0)),      # folded posttrans W (bf16)
            pl.BlockSpec((L, 1, D), lambda i: (0, 0, 0)),          # posttrans biases
            pl.BlockSpec((n_ro, D, RH), lambda i: (0, 0, 0)),      # readout W1 blocks
            pl.BlockSpec((1, RH), lambda i: (0, 0)),               # readout b1
            pl.BlockSpec((1, RH), lambda i: (0, 0)),               # readout W2^T
            pl.BlockSpec((1, T), lambda i: (0, 0)),                # readout b2
        ],
        out_specs=(pl.BlockSpec((1, T), lambda i: (0, 0)),
                   pl.BlockSpec((n_pad, D), lambda i: (0, 0))),
        compiler_params=pltpu.CompilerParams(
            dimension_semantics=("arbitrary",),
            vmem_limit_bytes=32 * 1024 * 1024),
    )(idx_p, h0_p, w_layers, b_layers, w_ro1, rp["b_ro1"], w_ro2t, rp["b_ro2"])

    return pred, h_pad[:N]


# ------------------------------ deterministic params -------------------------------- #
def init_params(key):
    A, S = len(AGGREGATORS), len(SCALERS)
    D = HIDDEN_DIM
    keys = jax.random.split(key, 2 + PROPAGATION_DEPTH)

    ek = jax.random.split(keys[0], len(VOCAB_SIZES))
    atom_emb = [0.1 * jax.random.normal(ek[i], (v, D), jnp.float32)
                for i, v in enumerate(VOCAB_SIZES)]

    def glorot(k, shape):
        return jax.random.normal(k, shape, jnp.float32) / np.sqrt(shape[0])

    layers = []
    for li in range(PROPAGATION_DEPTH):
        out_dim = LAST_LAYER_DIM if li == PROPAGATION_DEPTH - 1 else HIDDEN_DIM
        lk = jax.random.split(keys[1 + li], 2)
        layers.append(dict(
            w_post=glorot(lk[0], (A * S * D, out_dim)),            # posttrans Linear
            b_post=0.01 * jax.random.normal(lk[1], (1, out_dim), jnp.float32),
        ))

    rk = jax.random.split(keys[-1], 4)
    n_ro = len(READOUT_AGGREGATORS)
    readout = dict(
        w_ro1=glorot(rk[0], (n_ro * HIDDEN_DIM, READOUT_HIDDEN_DIM)),
        b_ro1=0.01 * jax.random.normal(rk[1], (1, READOUT_HIDDEN_DIM), jnp.float32),
        w_ro2=glorot(rk[2], (READOUT_HIDDEN_DIM, TARGET_DIM)),
        b_ro2=0.01 * jax.random.normal(rk[3], (1, TARGET_DIM), jnp.float32),
    )
    return dict(atom_emb=atom_emb, layers=layers, readout=readout)


# -------------------------------- pure-JAX reference --------------------------------- #
def pna_simple_layer_ref(h, neighbors, p):
    K = neighbors.shape[1]
    m = h[neighbors]                                               # (N, K, D) mailbox
    mean = m.mean(1)
    mx = m.max(1)
    mn = m.min(1)
    var = jnp.maximum((m * m).mean(1) - mean * mean, 0.0)
    std = jnp.sqrt(var + EPS)
    agg = jnp.concatenate([mean, mx, mn, std], -1)
    c_amp = np.log(K + 1) / AVG_D
    c_att = AVG_D / np.log(K + 1)
    scaled = jnp.concatenate([agg, agg * c_amp, agg * c_att], -1)
    post = scaled @ p["w_post"] + p["b_post"]
    post = jax.nn.relu(post)
    if RESIDUAL and h.shape[1] == post.shape[1]:
        post = h + post
    return post


def readout_mlp_ref(h, rp):
    s = jnp.sum(h, axis=0, keepdims=True)
    mean = jnp.mean(h, axis=0, keepdims=True)
    mx = jnp.max(h, axis=0, keepdims=True)
    r = jnp.concatenate([s, mean, mx], -1)
    z = jax.nn.relu(r @ rp["w_ro1"] + rp["b_ro1"])
    return z @ rp["w_ro2"] + rp["b_ro2"]


if __name__ == "__main__":
    key = jax.random.PRNGKey(0)
    kp, kx, kn = jax.random.split(key, 3)
    params = init_params(kp)

    N, K = 256, 4                                                  # nodes, fixed in-degree
    xk = jax.random.split(kx, len(VOCAB_SIZES))
    x_atom = jnp.stack(
        [jax.random.randint(xk[i], (N,), 0, v) for i, v in enumerate(VOCAB_SIZES)],
        axis=1).astype(jnp.int32)                                  # (N, 9) categorical
    neighbors = jax.random.randint(kn, (N, K), 0, N).astype(jnp.int32)   # (N, K)

    fwd = jax.jit(pna_original_simple_forward)
    pred, h_nodes = jax.block_until_ready(fwd(x_atom, neighbors, params))

    # correctness check against the pure-JAX f32 reference
    h_ref = atom_encoder(x_atom, params["atom_emb"])
    for lp in params["layers"]:
        h_ref = pna_simple_layer_ref(h_ref, neighbors, lp)
    pred_ref = readout_mlp_ref(h_ref, params["readout"])

    np.testing.assert_allclose(np.asarray(h_nodes), np.asarray(h_ref),
                               rtol=3e-2, atol=3e-2)               # bf16 MXU operands
    np.testing.assert_allclose(np.asarray(pred), np.asarray(pred_ref),
                               rtol=3e-2, atol=3e-2)
    print("KERNEL_OK")
</pallas_src>

<mosaic_0001>
module attributes {stable_mosaic.version = 11 : i64} {
  func.func @pna_fused_kernel(%arg0: i32, %arg1: memref<256x4xi32, #tpu.memory_space<vmem>>, %arg2: memref<256x32xf32, #tpu.memory_space<vmem>>, %arg3: memref<8x32x32xbf16, #tpu.memory_space<vmem>>, %arg4: memref<2x1x32xf32, #tpu.memory_space<vmem>>, %arg5: memref<3x32x32xf32, #tpu.memory_space<vmem>>, %arg6: memref<1x32xf32, #tpu.memory_space<vmem>>, %arg7: memref<1x32xf32, #tpu.memory_space<vmem>>, %arg8: memref<1x1xf32, #tpu.memory_space<vmem>>, %arg9: memref<1x1xf32, #tpu.memory_space<vmem>>, %arg10: memref<256x32xf32, #tpu.memory_space<vmem>>) attributes {dimension_semantics = [#tpu.dimension_semantics<arbitrary>], iteration_bounds = array<i64: 1>, scalar_prefetch = 0 : i64, scratch_operands = 0 : i64, tpu.core_type = #tpu.core_type<tc>, window_params = [{pipeline_mode = #tpu.pipeline_mode<synchronous>, transform_indices = @transform_0, window_bounds = array<i64: 256, 4>}, {pipeline_mode = #tpu.pipeline_mode<synchronous>, transform_indices = @transform_1, window_bounds = array<i64: 256, 32>}, {pipeline_mode = #tpu.pipeline_mode<synchronous>, transform_indices = @transform_2, window_bounds = array<i64: 8, 32, 32>}, {pipeline_mode = #tpu.pipeline_mode<synchronous>, transform_indices = @transform_3, window_bounds = array<i64: 2, 1, 32>}, {pipeline_mode = #tpu.pipeline_mode<synchronous>, transform_indices = @transform_4, window_bounds = array<i64: 3, 32, 32>}, {pipeline_mode = #tpu.pipeline_mode<synchronous>, transform_indices = @transform_5, window_bounds = array<i64: 1, 32>}, {pipeline_mode = #tpu.pipeline_mode<synchronous>, transform_indices = @transform_6, window_bounds = array<i64: 1, 32>}, {pipeline_mode = #tpu.pipeline_mode<synchronous>, transform_indices = @transform_7, window_bounds = array<i64: 1, 1>}, {pipeline_mode = #tpu.pipeline_mode<synchronous>, transform_indices = @transform_8, window_bounds = array<i64: 1, 1>}, {pipeline_mode = #tpu.pipeline_mode<synchronous>, transform_indices = @transform_9, window_bounds = array<i64: 256, 32>}]} {
    %0 = tpu.iota {dimensions = array<i32: 1>} : vector<256x256xi32>
    %c0 = arith.constant 0 : index
    %c0_0 = arith.constant 0 : index
    %1 = vector.load %arg1[%c0, %c0_0] : memref<256x4xi32, #tpu.memory_space<vmem>>, vector<256x1xi32>
    %2 = vector.broadcast %1 : vector<256x1xi32> to vector<256x256xi32>
    %3 = arith.cmpi eq, %0, %2 : vector<256x256xi32>
    %cst = arith.constant 1.000000e+00 : f32
    %cst_1 = arith.constant 0.000000e+00 : f32
    %4 = vector.broadcast %cst : f32 to vector<256x256xf32>
    %5 = vector.broadcast %cst_1 : f32 to vector<256x256xf32>
    %6 = arith.select %3, %4, %5 : vector<256x256xi1>, vector<256x256xf32>
    %7 = arith.truncf %6 : vector<256x256xf32> to vector<256x256xbf16>
    %c0_2 = arith.constant 0 : index
    %c1 = arith.constant 1 : index
    %8 = vector.load %arg1[%c0_2, %c1] : memref<256x4xi32, #tpu.memory_space<vmem>>, vector<256x1xi32>
    %9 = vector.broadcast %8 : vector<256x1xi32> to vector<256x256xi32>
    %10 = arith.cmpi eq, %0, %9 : vector<256x256xi32>
    %cst_3 = arith.constant 1.000000e+00 : f32
    %cst_4 = arith.constant 0.000000e+00 : f32
    %11 = vector.broadcast %cst_3 : f32 to vector<256x256xf32>
    %12 = vector.broadcast %cst_4 : f32 to vector<256x256xf32>
    %13 = arith.select %10, %11, %12 : vector<256x256xi1>, vector<256x256xf32>
    %14 = arith.truncf %13 : vector<256x256xf32> to vector<256x256xbf16>
    %c0_5 = arith.constant 0 : index
    %c2 = arith.constant 2 : index
    %15 = vector.load %arg1[%c0_5, %c2] : memref<256x4xi32, #tpu.memory_space<vmem>>, vector<256x1xi32>
    %16 = vector.broadcast %15 : vector<256x1xi32> to vector<256x256xi32>
    %17 = arith.cmpi eq, %0, %16 : vector<256x256xi32>
    %cst_6 = arith.constant 1.000000e+00 : f32
    %cst_7 = arith.constant 0.000000e+00 : f32
    %18 = vector.broadcast %cst_6 : f32 to vector<256x256xf32>
    %19 = vector.broadcast %cst_7 : f32 to vector<256x256xf32>
    %20 = arith.select %17, %18, %19 : vector<256x256xi1>, vector<256x256xf32>
    %21 = arith.truncf %20 : vector<256x256xf32> to vector<256x256xbf16>
    %c0_8 = arith.constant 0 : index
    %c3 = arith.constant 3 : index
    %22 = vector.load %arg1[%c0_8, %c3] : memref<256x4xi32, #tpu.memory_space<vmem>>, vector<256x1xi32>
    %23 = vector.broadcast %22 : vector<256x1xi32> to vector<256x256xi32>
    %24 = arith.cmpi eq, %0, %23 : vector<256x256xi32>
    %cst_9 = arith.constant 1.000000e+00 : f32
    %cst_10 = arith.constant 0.000000e+00 : f32
    %25 = vector.broadcast %cst_9 : f32 to vector<256x256xf32>
    %26 = vector.broadcast %cst_10 : f32 to vector<256x256xf32>
    %27 = arith.select %24, %25, %26 : vector<256x256xi1>, vector<256x256xf32>
    %28 = arith.truncf %27 : vector<256x256xf32> to vector<256x256xbf16>
    %c0_11 = arith.constant 0 : index
    %c0_12 = arith.constant 0 : index
    %29 = vector.load %arg2[%c0_11, %c0_12] : memref<256x32xf32, #tpu.memory_space<vmem>>, vector<256x32xf32>
    %30 = arith.truncf %29 : vector<256x32xf32> to vector<256x32xbf16>
    %cst_13 = arith.constant dense<0.000000e+00> : vector<256x32xf32>
    %31 = tpu.matmul %7, %30, %cst_13 {dimension_numbers = #tpu.dot_dimension_numbers<[1], [0], [0], [1], [0, 0, 1, 1], [], []>} : vector<256x256xbf16>, vector<256x32xbf16>, vector<256x32xf32> -> vector<256x32xf32>
    %32 = arith.mulf %31, %31 : vector<256x32xf32>
    %cst_14 = arith.constant dense<0.000000e+00> : vector<256x32xf32>
    %33 = tpu.matmul %14, %30, %cst_14 {dimension_numbers = #tpu.dot_dimension_numbers<[1], [0], [0], [1], [0, 0, 1, 1], [], []>} : vector<256x256xbf16>, vector<256x32xbf16>, vector<256x32xf32> -> vector<256x32xf32>
    %34 = arith.addf %31, %33 : vector<256x32xf32>
    %35 = arith.mulf %33, %33 : vector<256x32xf32>
    %36 = arith.addf %32, %35 : vector<256x32xf32>
    %37 = arith.maximumf %31, %33 : vector<256x32xf32>
    %38 = arith.minimumf %31, %33 : vector<256x32xf32>
    %cst_15 = arith.constant dense<0.000000e+00> : vector<256x32xf32>
    %39 = tpu.matmul %21, %30, %cst_15 {dimension_numbers = #tpu.dot_dimension_numbers<[1], [0], [0], [1], [0, 0, 1, 1], [], []>} : vector<256x256xbf16>, vector<256x32xbf16>, vector<256x32xf32> -> vector<256x32xf32>
    %40 = arith.addf %34, %39 : vector<256x32xf32>
    %41 = arith.mulf %39, %39 : vector<256x32xf32>
    %42 = arith.addf %36, %41 : vector<256x32xf32>
    %43 = arith.maximumf %37, %39 : vector<256x32xf32>
    %44 = arith.minimumf %38, %39 : vector<256x32xf32>
    %cst_16 = arith.constant dense<0.000000e+00> : vector<256x32xf32>
    %45 = tpu.matmul %28, %30, %cst_16 {dimension_numbers = #tpu.dot_dimension_numbers<[1], [0], [0], [1], [0, 0, 1, 1], [], []>} : vector<256x256xbf16>, vector<256x32xbf16>, vector<256x32xf32> -> vector<256x32xf32>
    %46 = arith.addf %40, %45 : vector<256x32xf32>
    %47 = arith.mulf %45, %45 : vector<256x32xf32>
    %48 = arith.addf %42, %47 : vector<256x32xf32>
    %49 = arith.maximumf %43, %45 : vector<256x32xf32>
    %50 = arith.minimumf %44, %45 : vector<256x32xf32>
    %cst_17 = arith.constant 2.500000e-01 : f32
    %51 = vector.broadcast %cst_17 : f32 to vector<256x32xf32>
    %52 = arith.mulf %46, %51 : vector<256x32xf32>
    %cst_18 = arith.constant 2.500000e-01 : f32
    %53 = vector.broadcast %cst_18 : f32 to vector<256x32xf32>
    %54 = arith.mulf %48, %53 : vector<256x32xf32>
    %55 = arith.mulf %52, %52 : vector<256x32xf32>
    %56 = arith.subf %54, %55 : vector<256x32xf32>
    %cst_19 = arith.constant 0.000000e+00 : f32
    %57 = vector.broadcast %cst_19 : f32 to vector<256x32xf32>
    %58 = arith.maximumf %56, %57 : vector<256x32xf32>
    %cst_20 = arith.constant 9.99999974E-6 : f32
    %59 = vector.broadcast %cst_20 : f32 to vector<256x32xf32>
    %60 = arith.addf %58, %59 : vector<256x32xf32>
    %61 = math.sqrt %60 : vector<256x32xf32>
    %c0_21 = arith.constant 0 : index
    %c0_22 = arith.constant 0 : index
    %c0_23 = arith.constant 0 : index
    %62 = vector.load %arg4[%c0_21, %c0_22, %c0_23] : memref<2x1x32xf32, #tpu.memory_space<vmem>>, vector<1x1x32xf32>
    %63 = vector.shape_cast %62 : vector<1x1x32xf32> to vector<1x32xf32>
    %64 = arith.truncf %52 : vector<256x32xf32> to vector<256x32xbf16>
    %c0_24 = arith.constant 0 : index
    %c0_25 = arith.constant 0 : index
    %c0_26 = arith.constant 0 : index
    %65 = vector.load %arg3[%c0_24, %c0_25, %c0_26] : memref<8x32x32xbf16, #tpu.memory_space<vmem>>, vector<1x32x32xbf16>
    %66 = vector.shape_cast %65 : vector<1x32x32xbf16> to vector<32x32xbf16>
    %cst_27 = arith.constant dense<0.000000e+00> : vector<256x32xf32>
    %67 = tpu.matmul %64, %66, %cst_27 {dimension_numbers = #tpu.dot_dimension_numbers<[1], [0], [0], [1], [0, 0, 1, 1], [], []>} : vector<256x32xbf16>, vector<32x32xbf16>, vector<256x32xf32> -> vector<256x32xf32>
    %68 = vector.broadcast %63 : vector<1x32xf32> to vector<256x32xf32>
    %69 = arith.addf %68, %67 : vector<256x32xf32>
    %70 = arith.truncf %49 : vector<256x32xf32> to vector<256x32xbf16>
    %c1_28 = arith.constant 1 : index
    %c0_29 = arith.constant 0 : index
    %c0_30 = arith.constant 0 : index
    %71 = vector.load %arg3[%c1_28, %c0_29, %c0_30] : memref<8x32x32xbf16, #tpu.memory_space<vmem>>, vector<1x32x32xbf16>
    %72 = vector.shape_cast %71 : vector<1x32x32xbf16> to vector<32x32xbf16>
    %cst_31 = arith.constant dense<0.000000e+00> : vector<256x32xf32>
    %73 = tpu.matmul %70, %72, %cst_31 {dimension_numbers = #tpu.dot_dimension_numbers<[1], [0], [0], [1], [0, 0, 1, 1], [], []>} : vector<256x32xbf16>, vector<32x32xbf16>, vector<256x32xf32> -> vector<256x32xf32>
    %74 = arith.addf %69, %73 : vector<256x32xf32>
    %75 = arith.truncf %50 : vector<256x32xf32> to vector<256x32xbf16>
    %c2_32 = arith.constant 2 : index
    %c0_33 = arith.constant 0 : index
    %c0_34 = arith.constant 0 : index
    %76 = vector.load %arg3[%c2_32, %c0_33, %c0_34] : memref<8x32x32xbf16, #tpu.memory_space<vmem>>, vector<1x32x32xbf16>
    %77 = vector.shape_cast %76 : vector<1x32x32xbf16> to vector<32x32xbf16>
    %cst_35 = arith.constant dense<0.000000e+00> : vector<256x32xf32>
    %78 = tpu.matmul %75, %77, %cst_35 {dimension_numbers = #tpu.dot_dimension_numbers<[1], [0], [0], [1], [0, 0, 1, 1], [], []>} : vector<256x32xbf16>, vector<32x32xbf16>, vector<256x32xf32> -> vector<256x32xf32>
    %79 = arith.addf %74, %78 : vector<256x32xf32>
    %80 = arith.truncf %61 : vector<256x32xf32> to vector<256x32xbf16>
    %c3_36 = arith.constant 3 : index
    %c0_37 = arith.constant 0 : index
    %c0_38 = arith.constant 0 : index
    %81 = vector.load %arg3[%c3_36, %c0_37, %c0_38] : memref<8x32x32xbf16, #tpu.memory_space<vmem>>, vector<1x32x32xbf16>
    %82 = vector.shape_cast %81 : vector<1x32x32xbf16> to vector<32x32xbf16>
    %cst_39 = arith.constant dense<0.000000e+00> : vector<256x32xf32>
    %83 = tpu.matmul %80, %82, %cst_39 {dimension_numbers = #tpu.dot_dimension_numbers<[1], [0], [0], [1], [0, 0, 1, 1], [], []>} : vector<256x32xbf16>, vector<32x32xbf16>, vector<256x32xf32> -> vector<256x32xf32>
    %84 = arith.addf %79, %83 : vector<256x32xf32>
    %cst_40 = arith.constant 0.000000e+00 : f32
    %85 = vector.broadcast %cst_40 : f32 to vector<256x32xf32>
    %86 = arith.maximumf %84, %85 : vector<256x32xf32>
    %87 = arith.addf %29, %86 : vector<256x32xf32>
    %88 = arith.truncf %87 : vector<256x32xf32> to vector<256x32xbf16>
    %cst_41 = arith.constant dense<0.000000e+00> : vector<256x32xf32>
    %89 = tpu.matmul %7, %88, %cst_41 {dimension_numbers = #tpu.dot_dimension_numbers<[1], [0], [0], [1], [0, 0, 1, 1], [], []>} : vector<256x256xbf16>, vector<256x32xbf16>, vector<256x32xf32> -> vector<256x32xf32>
    %90 = arith.mulf %89, %89 : vector<256x32xf32>
    %cst_42 = arith.constant dense<0.000000e+00> : vector<256x32xf32>
    %91 = tpu.matmul %14, %88, %cst_42 {dimension_numbers = #tpu.dot_dimension_numbers<[1], [0], [0], [1], [0, 0, 1, 1], [], []>} : vector<256x256xbf16>, vector<256x32xbf16>, vector<256x32xf32> -> vector<256x32xf32>
    %92 = arith.addf %89, %91 : vector<256x32xf32>
    %93 = arith.mulf %91, %91 : vector<256x32xf32>
    %94 = arith.addf %90, %93 : vector<256x32xf32>
    %95 = arith.maximumf %89, %91 : vector<256x32xf32>
    %96 = arith.minimumf %89, %91 : vector<256x32xf32>
    %cst_43 = arith.constant dense<0.000000e+00> : vector<256x32xf32>
    %97 = tpu.matmul %21, %88, %cst_43 {dimension_numbers = #tpu.dot_dimension_numbers<[1], [0], [0], [1], [0, 0, 1, 1], [], []>} : vector<256x256xbf16>, vector<256x32xbf16>, vector<256x32xf32> -> vector<256x32xf32>
    %98 = arith.addf %92, %97 : vector<256x32xf32>
    %99 = arith.mulf %97, %97 : vector<256x32xf32>
    %100 = arith.addf %94, %99 : vector<256x32xf32>
    %101 = arith.maximumf %95, %97 : vector<256x32xf32>
    %102 = arith.minimumf %96, %97 : vector<256x32xf32>
    %cst_44 = arith.constant dense<0.000000e+00> : vector<256x32xf32>
    %103 = tpu.matmul %28, %88, %cst_44 {dimension_numbers = #tpu.dot_dimension_numbers<[1], [0], [0], [1], [0, 0, 1, 1], [], []>} : vector<256x256xbf16>, vector<256x32xbf16>, vector<256x32xf32> -> vector<256x32xf32>
    %104 = arith.addf %98, %103 : vector<256x32xf32>
    %105 = arith.mulf %103, %103 : vector<256x32xf32>
    %106 = arith.addf %100, %105 : vector<256x32xf32>
    %107 = arith.maximumf %101, %103 : vector<256x32xf32>
    %108 = arith.minimumf %102, %103 : vector<256x32xf32>
    %cst_45 = arith.constant 2.500000e-01 : f32
    %109 = vector.broadcast %cst_45 : f32 to vector<256x32xf32>
    %110 = arith.mulf %104, %109 : vector<256x32xf32>
    %cst_46 = arith.constant 2.500000e-01 : f32
    %111 = vector.broadcast %cst_46 : f32 to vector<256x32xf32>
    %112 = arith.mulf %106, %111 : vector<256x32xf32>
    %113 = arith.mulf %110, %110 : vector<256x32xf32>
    %114 = arith.subf %112, %113 : vector<256x32xf32>
    %cst_47 = arith.constant 0.000000e+00 : f32
    %115 = vector.broadcast %cst_47 : f32 to vector<256x32xf32>
    %116 = arith.maximumf %114, %115 : vector<256x32xf32>
    %cst_48 = arith.constant 9.99999974E-6 : f32
    %117 = vector.broadcast %cst_48 : f32 to vector<256x32xf32>
    %118 = arith.addf %116, %117 : vector<256x32xf32>
    %119 = math.sqrt %118 : vector<256x32xf32>
    %c1_49 = arith.constant 1 : index
    %c0_50 = arith.constant 0 : index
    %c0_51 = arith.constant 0 : index
    %120 = vector.load %arg4[%c1_49, %c0_50, %c0_51] : memref<2x1x32xf32, #tpu.memory_space<vmem>>, vector<1x1x32xf32>
    %121 = vector.shape_cast %120 : vector<1x1x32xf32> to vector<1x32xf32>
    %122 = arith.truncf %110 : vector<256x32xf32> to vector<256x32xbf16>
    %c4 = arith.constant 4 : index
    %c0_52 = arith.constant 0 : index
    %c0_53 = arith.constant 0 : index
    %123 = vector.load %arg3[%c4, %c0_52, %c0_53] : memref<8x32x32xbf16, #tpu.memory_space<vmem>>, vector<1x32x32xbf16>
    %124 = vector.shape_cast %123 : vector<1x32x32xbf16> to vector<32x32xbf16>
    %cst_54 = arith.constant dense<0.000000e+00> : vector<256x32xf32>
    %125 = tpu.matmul %122, %124, %cst_54 {dimension_numbers = #tpu.dot_dimension_numbers<[1], [0], [0], [1], [0, 0, 1, 1], [], []>} : vector<256x32xbf16>, vector<32x32xbf16>, vector<256x32xf32> -> vector<256x32xf32>
    %126 = vector.broadcast %121 : vector<1x32xf32> to vector<256x32xf32>
    %127 = arith.addf %126, %125 : vector<256x32xf32>
    %128 = arith.truncf %107 : vector<256x32xf32> to vector<256x32xbf16>
    %c5 = arith.constant 5 : index
    %c0_55 = arith.constant 0 : index
    %c0_56 = arith.constant 0 : index
    %129 = vector.load %arg3[%c5, %c0_55, %c0_56] : memref<8x32x32xbf16, #tpu.memory_space<vmem>>, vector<1x32x32xbf16>
    %130 = vector.shape_cast %129 : vector<1x32x32xbf16> to vector<32x32xbf16>
    %cst_57 = arith.constant dense<0.000000e+00> : vector<256x32xf32>
    %131 = tpu.matmul %128, %130, %cst_57 {dimension_numbers = #tpu.dot_dimension_numbers<[1], [0], [0], [1], [0, 0, 1, 1], [], []>} : vector<256x32xbf16>, vector<32x32xbf16>, vector<256x32xf32> -> vector<256x32xf32>
    %132 = arith.addf %127, %131 : vector<256x32xf32>
    %133 = arith.truncf %108 : vector<256x32xf32> to vector<256x32xbf16>
    %c6 = arith.constant 6 : index
    %c0_58 = arith.constant 0 : index
    %c0_59 = arith.constant 0 : index
    %134 = vector.load %arg3[%c6, %c0_58, %c0_59] : memref<8x32x32xbf16, #tpu.memory_space<vmem>>, vector<1x32x32xbf16>
    %135 = vector.shape_cast %134 : vector<1x32x32xbf16> to vector<32x32xbf16>
    %cst_60 = arith.constant dense<0.000000e+00> : vector<256x32xf32>
    %136 = tpu.matmul %133, %135, %cst_60 {dimension_numbers = #tpu.dot_dimension_numbers<[1], [0], [0], [1], [0, 0, 1, 1], [], []>} : vector<256x32xbf16>, vector<32x32xbf16>, vector<256x32xf32> -> vector<256x32xf32>
    %137 = arith.addf %132, %136 : vector<256x32xf32>
    %138 = arith.truncf %119 : vector<256x32xf32> to vector<256x32xbf16>
    %c7 = arith.constant 7 : index
    %c0_61 = arith.constant 0 : index
    %c0_62 = arith.constant 0 : index
    %139 = vector.load %arg3[%c7, %c0_61, %c0_62] : memref<8x32x32xbf16, #tpu.memory_space<vmem>>, vector<1x32x32xbf16>
    %140 = vector.shape_cast %139 : vector<1x32x32xbf16> to vector<32x32xbf16>
    %cst_63 = arith.constant dense<0.000000e+00> : vector<256x32xf32>
    %141 = tpu.matmul %138, %140, %cst_63 {dimension_numbers = #tpu.dot_dimension_numbers<[1], [0], [0], [1], [0, 0, 1, 1], [], []>} : vector<256x32xbf16>, vector<32x32xbf16>, vector<256x32xf32> -> vector<256x32xf32>
    %142 = arith.addf %137, %141 : vector<256x32xf32>
    %cst_64 = arith.constant 0.000000e+00 : f32
    %143 = vector.broadcast %cst_64 : f32 to vector<256x32xf32>
    %144 = arith.maximumf %142, %143 : vector<256x32xf32>
    %145 = arith.addf %87, %144 : vector<256x32xf32>
    %c0_65 = arith.constant 0 : index
    %c0_66 = arith.constant 0 : index
    %146 = vector.load %arg10[%c0_65, %c0_66] : memref<256x32xf32, #tpu.memory_space<vmem>>, vector<256x32xf32>
    tpu.vector_store %arg10[%c0_65, %c0_66], %145 {strides = array<i32>} : memref<256x32xf32, #tpu.memory_space<vmem>>, vector<256x32xf32>,
    %147 = tpu.iota {dimensions = array<i32: 0>} : vector<256x1xi32>
    %c256_i32 = arith.constant 256 : i32
    %148 = vector.broadcast %c256_i32 : i32 to vector<256x1xi32>
    %149 = arith.cmpi slt, %147, %148 : vector<256x1xi32>
    %cst_67 = arith.constant 0.000000e+00 : f32
    %150 = vector.shape_cast %149 : vector<256x1xi1> to vector<256x1xi1>
    %151 = vector.broadcast %150 : vector<256x1xi1> to vector<256x32xi1>
    %152 = vector.broadcast %cst_67 : f32 to vector<256x32xf32>
    %153 = arith.select %151, %145, %152 : vector<256x32xi1>, vector<256x32xf32>
    %cst_68 = arith.constant dense<0.000000e+00> : vector<32xf32>
    %154 = vector.multi_reduction <add>, %153, %cst_68 [0] : vector<256x32xf32> to vector<32xf32>
    %155 = vector.shape_cast %154 : vector<32xf32> to vector<1x32xf32>
    %cst_69 = arith.constant 3.906250e-03 : f32
    %156 = vector.broadcast %cst_69 : f32 to vector<1x32xf32>
    %157 = arith.mulf %155, %156 : vector<1x32xf32>
    %cst_70 = arith.constant -3.40282347E+38 : f32
    %158 = vector.shape_cast %149 : vector<256x1xi1> to vector<256x1xi1>
    %159 = vector.broadcast %158 : vector<256x1xi1> to vector<256x32xi1>
    %160 = vector.broadcast %cst_70 : f32 to vector<256x32xf32>
    %161 = arith.select %159, %145, %160 : vector<256x32xi1>, vector<256x32xf32>
    %cst_71 = arith.constant dense<0xFF800000> : vector<32xf32>
    %162 = vector.multi_reduction <maximumf>, %161, %cst_71 [0] : vector<256x32xf32> to vector<32xf32>
    %163 = vector.shape_cast %162 : vector<32xf32> to vector<1x32xf32>
    %c0_72 = arith.constant 0 : index
    %c0_73 = arith.constant 0 : index
    %164 = vector.load %arg6[%c0_72, %c0_73] : memref<1x32xf32, #tpu.memory_space<vmem>>, vector<1x32xf32>
    %165 = vector.shape_cast %155 : vector<1x32xf32> to vector<1x32xf32>
    %166 = vector.broadcast %165 : vector<1x32xf32> to vector<8x32xf32>
    %c0_74 = arith.constant 0 : index
    %c0_75 = arith.constant 0 : index
    %c0_76 = arith.constant 0 : index
    %167 = vector.load %arg5[%c0_74, %c0_75, %c0_76] : memref<3x32x32xf32, #tpu.memory_space<vmem>>, vector<1x32x32xf32>
    %168 = vector.shape_cast %167 : vector<1x32x32xf32> to vector<32x32xf32>
    %cst_77 = arith.constant dense<0.000000e+00> : vector<8x32xf32>
    %169 = tpu.matmul %166, %168, %cst_77 {dimension_numbers = #tpu.dot_dimension_numbers<[1], [0], [0], [1], [0, 0, 1, 1], [], []>} : vector<8x32xf32>, vector<32x32xf32>, vector<8x32xf32> -> vector<8x32xf32>
    %170 = vector.broadcast %164 : vector<1x32xf32> to vector<8x32xf32>
    %171 = arith.addf %170, %169 : vector<8x32xf32>
    %172 = vector.shape_cast %157 : vector<1x32xf32> to vector<1x32xf32>
    %173 = vector.broadcast %172 : vector<1x32xf32> to vector<8x32xf32>
    %c1_78 = arith.constant 1 : index
    %c0_79 = arith.constant 0 : index
    %c0_80 = arith.constant 0 : index
    %174 = vector.load %arg5[%c1_78, %c0_79, %c0_80] : memref<3x32x32xf32, #tpu.memory_space<vmem>>, vector<1x32x32xf32>
    %175 = vector.shape_cast %174 : vector<1x32x32xf32> to vector<32x32xf32>
    %cst_81 = arith.constant dense<0.000000e+00> : vector<8x32xf32>
    %176 = tpu.matmul %173, %175, %cst_81 {dimension_numbers = #tpu.dot_dimension_numbers<[1], [0], [0], [1], [0, 0, 1, 1], [], []>} : vector<8x32xf32>, vector<32x32xf32>, vector<8x32xf32> -> vector<8x32xf32>
    %177 = arith.addf %171, %176 : vector<8x32xf32>
    %178 = vector.shape_cast %163 : vector<1x32xf32> to vector<1x32xf32>
    %179 = vector.broadcast %178 : vector<1x32xf32> to vector<8x32xf32>
    %c2_82 = arith.constant 2 : index
    %c0_83 = arith.constant 0 : index
    %c0_84 = arith.constant 0 : index
    %180 = vector.load %arg5[%c2_82, %c0_83, %c0_84] : memref<3x32x32xf32, #tpu.memory_space<vmem>>, vector<1x32x32xf32>
    %181 = vector.shape_cast %180 : vector<1x32x32xf32> to vector<32x32xf32>
    %cst_85 = arith.constant dense<0.000000e+00> : vector<8x32xf32>
    %182 = tpu.matmul %179, %181, %cst_85 {dimension_numbers = #tpu.dot_dimension_numbers<[1], [0], [0], [1], [0, 0, 1, 1], [], []>} : vector<8x32xf32>, vector<32x32xf32>, vector<8x32xf32> -> vector<8x32xf32>
    %183 = arith.addf %177, %182 : vector<8x32xf32>
    %cst_86 = arith.constant 0.000000e+00 : f32
    %184 = vector.broadcast %cst_86 : f32 to vector<8x32xf32>
    %185 = arith.maximumf %183, %184 : vector<8x32xf32>
    %c0_87 = arith.constant 0 : index
    %c0_88 = arith.constant 0 : index
    %186 = vector.load %arg7[%c0_87, %c0_88] : memref<1x32xf32, #tpu.memory_space<vmem>>, vector<1x32xf32>
    %187 = vector.broadcast %186 : vector<1x32xf32> to vector<8x32xf32>
    %188 = arith.mulf %185, %187 : vector<8x32xf32>
    %cst_89 = arith.constant dense<0.000000e+00> : vector<8xf32>
    %189 = vector.multi_reduction <add>, %188, %cst_89 [1] : vector<8x32xf32> to vector<8xf32>
    %190 = vector.shape_cast %189 : vector<8xf32> to vector<8x1xf32>
    %c0_90 = arith.constant 0 : index
    %c0_91 = arith.constant 0 : index
    %191 = vector.load %arg8[%c0_90, %c0_91] : memref<1x1xf32, #tpu.memory_space<vmem>>, vector<1x1xf32>
    %192 = vector.broadcast %191 : vector<1x1xf32> to vector<8x1xf32>
    %193 = arith.addf %190, %192 : vector<8x1xf32>
    %194 = vector.extract_strided_slice %193 {offsets = [0, 0], sizes = [1, 1], strides = [1, 1]} : vector<8x1xf32> to vector<1x1xf32>
    %c0_92 = arith.constant 0 : index
    %c0_93 = arith.constant 0 : index
    %195 = vector.load %arg9[%c0_92, %c0_93] : memref<1x1xf32, #tpu.memory_space<vmem>>, vector<1x1xf32>
    tpu.vector_store %arg9[%c0_92, %c0_93], %194 {strides = array<i32>} : memref<1x1xf32, #tpu.memory_space<vmem>>, vector<1x1xf32>,
    return
  }
  func.func @transform_0(%arg0: i32) -> (i32, i32) {
    %c0_i32 = arith.constant 0 : i32
    %c0_i32_0 = arith.constant 0 : i32
    %c0_i32_1 = arith.constant 0 : i32
    return %c0_i32, %c0_i32_0 : i32, i32
  }
  func.func @transform_1(%arg0: i32) -> (i32, i32) {
    %c0_i32 = arith.constant 0 : i32
    %c0_i32_0 = arith.constant 0 : i32
    %c0_i32_1 = arith.constant 0 : i32
    return %c0_i32, %c0_i32_0 : i32, i32
  }
  func.func @transform_2(%arg0: i32) -> (i32, i32, i32) {
    %c0_i32 = arith.constant 0 : i32
    %c0_i32_0 = arith.constant 0 : i32
    %c0_i32_1 = arith.constant 0 : i32
    %c0_i32_2 = arith.constant 0 : i32
    return %c0_i32, %c0_i32_0, %c0_i32_1 : i32, i32, i32
  }
  func.func @transform_3(%arg0: i32) -> (i32, i32, i32) {
    %c0_i32 = arith.constant 0 : i32
    %c0_i32_0 = arith.constant 0 : i32
    %c0_i32_1 = arith.constant 0 : i32
    %c0_i32_2 = arith.constant 0 : i32
    return %c0_i32, %c0_i32_0, %c0_i32_1 : i32, i32, i32
  }
  func.func @transform_4(%arg0: i32) -> (i32, i32, i32) {
    %c0_i32 = arith.constant 0 : i32
    %c0_i32_0 = arith.constant 0 : i32
    %c0_i32_1 = arith.constant 0 : i32
    %c0_i32_2 = arith.constant 0 : i32
    return %c0_i32, %c0_i32_0, %c0_i32_1 : i32, i32, i32
  }
  func.func @transform_5(%arg0: i32) -> (i32, i32) {
    %c0_i32 = arith.constant 0 : i32
    %c0_i32_0 = arith.constant 0 : i32
    %c0_i32_1 = arith.constant 0 : i32
    return %c0_i32, %c0_i32_0 : i32, i32
  }
  func.func @transform_6(%arg0: i32) -> (i32, i32) {
    %c0_i32 = arith.constant 0 : i32
    %c0_i32_0 = arith.constant 0 : i32
    %c0_i32_1 = arith.constant 0 : i32
    return %c0_i32, %c0_i32_0 : i32, i32
  }
  func.func @transform_7(%arg0: i32) -> (i32, i32) {
    %c0_i32 = arith.constant 0 : i32
    %c0_i32_0 = arith.constant 0 : i32
    %c0_i32_1 = arith.constant 0 : i32
    return %c0_i32, %c0_i32_0 : i32, i32
  }
  func.func @transform_8(%arg0: i32) -> (i32, i32) {
    %c0_i32 = arith.constant 0 : i32
    %c0_i32_0 = arith.constant 0 : i32
    %c0_i32_1 = arith.constant 0 : i32
    return %c0_i32, %c0_i32_0 : i32, i32
  }
  func.func @transform_9(%arg0: i32) -> (i32, i32) {
    %c0_i32 = arith.constant 0 : i32
    %c0_i32_0 = arith.constant 0 : i32
    %c0_i32_1 = arith.constant 0 : i32
    return %c0_i32, %c0_i32_0 : i32, i32
  }
}

</mosaic_0001>

<llo_original>
// kernel: pna_original_simple_forward.1
$region0: #{pna_original_simple_forward.1}
  #allocation0 [shape = 'u32[]', space=smem, size = 0x4, offset = 0x4, fixed_abs, tag = 'smem constant byte address 0x4 - core index']
  #allocation1 [shape = 'u32[144,128]{1,0:T(1,128)}', space=vmem, size = 0x12000, scoped, tag = 'internal scratch']
  #allocation2 [shape = 'f32[1,1]{1,0:T(1,128)S(1)}', space=vmem, size = 0x200, scoped, tag = 'scoped memory for pna_original_simple_forward.1']
  %s0 = inlined_call_operand.vmem [shape: s32[256,4], index: 0, kind: input, shape index: {}]
  %s1 = inlined_call_operand.vmem [shape: f32[256,32], index: 1, kind: input, shape index: {}]
  %s2 = inlined_call_operand.vmem [shape: bf16[8,32,32], index: 2, kind: input, shape index: {}]
  %s3 = inlined_call_operand.vmem [shape: f32[2,1,32], index: 3, kind: input, shape index: {}]
  %s4 = inlined_call_operand.vmem [shape: f32[3,32,32], index: 4, kind: input, shape index: {}]
  %s5 = inlined_call_operand.vmem [shape: f32[1,32], index: 5, kind: input, shape index: {}]
  %s6 = inlined_call_operand.vmem [shape: f32[1,32], index: 6, kind: input, shape index: {}]
  %s7 = inlined_call_operand.<no memory space> [shape: f32[1,1], index: 7, kind: input, shape index: {}]
  %s8 = inlined_call_operand.hbm [shape: f32[1,1], index: 8, kind: output, shape index: {0}]
  %s9 = inlined_call_operand.vmem [shape: f32[256,32], index: 9, kind: output, shape index: {1}]
  %10 = xla_tuple %s8, %s9
  %s11 = sld [smem:[#allocation0]]
  $region50: #{pna_original_simple_forward.1} parent=0
    _
  %s13 = ssub.s32 1, %s11
  %s14 = scalar_select 0, %s13, %s11
  %v15 = vstv %s7
  %16 = vst [vmem:[#allocation2] sm:$0x1] %v15
  $region1: #{pna_original_simple_forward.1} parent=0
    #allocation3 [shape = 'u8[512]{0}', space=vmem, size = 0x400, scoped, tag = 'output window, operand 0, single buffered']
    #allocation4 [shape = 's32[1]{0}', space=sflag, size = 0x4, scoped, tag = 'scoped memory for pna_original_simple_forward.1']
    %17 = vsyncpa [#allocation4], 0
    // Predicated region
    $region2: #{pna_original_simple_forward.1} parent=1 // pred_check
      _
    $region3: #{pna_original_simple_forward.1} parent=1 // pred_check_branch
      %19 = sbr.rel (0) target = $region5
    $region4: #{pna_original_simple_forward.1} parent=1 // pred_region
      _
    $region5: #{pna_original_simple_forward.1} parent=1 // pred_fallthru
      _
    // Predicated region
    $region6: #{pna_original_simple_forward.1} parent=1 // pred_check
      _
    $region7: #{pna_original_simple_forward.1} parent=1 // pred_check_branch
      %21 = sbr.rel (0) target = $region9
    $region8: #{pna_original_simple_forward.1} parent=1 // pred_region
      _
    $region9: #{pna_original_simple_forward.1} parent=1 // pred_fallthru
      _
    // Predicated region
    $region10: #{pna_original_simple_forward.1} parent=1 // pred_check
      _
    $region11: #{pna_original_simple_forward.1} parent=1 // pred_check_branch
      %23 = sbr.rel (0) target = $region13
    $region12: #{pna_original_simple_forward.1} parent=1 // pred_region
      _
    $region13: #{pna_original_simple_forward.1} parent=1 // pred_fallthru
      _
    // Predicated region
    $region14: #{pna_original_simple_forward.1} parent=1 // pred_check
      _
    $region15: #{pna_original_simple_forward.1} parent=1 // pred_check_branch
      %25 = sbr.rel (0) target = $region17
    $region16: #{pna_original_simple_forward.1} parent=1 // pred_region
      _
    $region17: #{pna_original_simple_forward.1} parent=1 // pred_fallthru
      _
    // Predicated region
    $region18: #{pna_original_simple_forward.1} parent=1 // pred_check
      _
    $region19: #{pna_original_simple_forward.1} parent=1 // pred_check_branch
      %27 = sbr.rel (0) target = $region21
    $region20: #{pna_original_simple_forward.1} parent=1 // pred_region
      _
    $region21: #{pna_original_simple_forward.1} parent=1 // pred_fallthru
      _
    // Predicated region
    $region22: #{pna_original_simple_forward.1} parent=1 // pred_check
      _
    $region23: #{pna_original_simple_forward.1} parent=1 // pred_check_branch
      %29 = sbr.rel (0) target = $region25
    $region24: #{pna_original_simple_forward.1} parent=1 // pred_region
      _
    $region25: #{pna_original_simple_forward.1} parent=1 // pred_fallthru
      _
    // Predicated region
    $region26: #{pna_original_simple_forward.1} parent=1 // pred_check
      _
    $region27: #{pna_original_simple_forward.1} parent=1 // pred_check_branch
      %31 = sbr.rel (0) target = $region29
    $region28: #{pna_original_simple_forward.1} parent=1 // pred_region
      _
    $region29: #{pna_original_simple_forward.1} parent=1 // pred_fallthru
      _
    // Predicated region
    $region30: #{pna_original_simple_forward.1} parent=1 // pred_check
      _
    $region31: #{pna_original_simple_forward.1} parent=1 // pred_check_branch
      %33 = sbr.rel (0) target = $region33
    $region32: #{pna_original_simple_forward.1} parent=1 // pred_region
      _
    $region33: #{pna_original_simple_forward.1} parent=1 // pred_fallthru
      _
    %v35 = vlaneseq
    %v36 = vand.u32 %v35, 127
    %v37 = vadd.s32 %v36, 128
    %v38 = vld [vmem:[%s0] sm:$0xff]
    %v39 = vld [vmem:[%s0 + $0x8] sm:$0xff]
    %v40 = vld [vmem:[%s0 + $0x10] sm:$0xff]
    %v41 = vld [vmem:[%s0 + $0x18] sm:$0xff]
    %v42 = vld [vmem:[%s0 + $0x20] sm:$0xff]
    %v43 = vld [vmem:[%s0 + $0x28] sm:$0xff]
    %v44 = vld [vmem:[%s0 + $0x30] sm:$0xff]
    %v45 = vld [vmem:[%s0 + $0x38] sm:$0xff]
    %v46 = vld [vmem:[%s0 + $0x40] sm:$0xff]
    %v47 = vld [vmem:[%s0 + $0x48] sm:$0xff]
    %v48 = vld [vmem:[%s0 + $0x50] sm:$0xff]
    %v49 = vld [vmem:[%s0 + $0x58] sm:$0xff]
    %v50 = vld [vmem:[%s0 + $0x60] sm:$0xff]
    %v51 = vld [vmem:[%s0 + $0x68] sm:$0xff]
    %v52 = vld [vmem:[%s0 + $0x70] sm:$0xff]
    %v53 = vld [vmem:[%s0 + $0x78] sm:$0xff]
    %v54 = vld [vmem:[%s0 + $0x80] sm:$0xff]
    %v55 = vld [vmem:[%s0 + $0x88] sm:$0xff]
    %v56 = vld [vmem:[%s0 + $0x90] sm:$0xff]
    %v57 = vld [vmem:[%s0 + $0x98] sm:$0xff]
    %v58 = vld [vmem:[%s0 + $0xa0] sm:$0xff]
    %v59 = vld [vmem:[%s0 + $0xa8] sm:$0xff]
    %v60 = vld [vmem:[%s0 + $0xb0] sm:$0xff]
    %v61 = vld [vmem:[%s0 + $0xb8] sm:$0xff]
    %v62 = vld [vmem:[%s0 + $0xc0] sm:$0xff]
    %v63 = vld [vmem:[%s0 + $0xc8] sm:$0xff]
    %v64 = vld [vmem:[%s0 + $0xd0] sm:$0xff]
    %v65 = vld [vmem:[%s0 + $0xd8] sm:$0xff]
    %v66 = vld [vmem:[%s0 + $0xe0] sm:$0xff]
    %v67 = vld [vmem:[%s0 + $0xe8] sm:$0xff]
    %v68 = vld [vmem:[%s0 + $0xf0] sm:$0xff]
    %v69 = vld [vmem:[%s0 + $0xf8] sm:$0xff]
    %70 = vset.pattern.permute.xlu0 0
    %71 = vperm.xlu0 %70, %v38
    %v72 = vpop.permute.xlu0 %71
    %73 = vset.pattern.permute.xlu0 0
    %74 = vperm.xlu0 %73, %v39
    %v75 = vpop.permute.xlu0 %74
    %76 = vset.pattern.permute.xlu0 0
    %77 = vperm.xlu0 %76, %v40
    %v78 = vpop.permute.xlu0 %77
    %79 = vset.pattern.permute.xlu0 0
    %80 = vperm.xlu0 %79, %v41
    %v81 = vpop.permute.xlu0 %80
    %82 = vset.pattern.permute.xlu0 0
    %83 = vperm.xlu0 %82, %v42
    %v84 = vpop.permute.xlu0 %83
    %85 = vset.pattern.permute.xlu0 0
    %86 = vperm.xlu0 %85, %v43
    %v87 = vpop.permute.xlu0 %86
    %88 = vset.pattern.permute.xlu0 0
    %89 = vperm.xlu0 %88, %v44
    %v90 = vpop.permute.xlu0 %89
    %91 = vset.pattern.permute.xlu0 0
    %92 = vperm.xlu0 %91, %v45
    %v93 = vpop.permute.xlu0 %92
    %94 = vset.pattern.permute.xlu0 0
    %95 = vperm.xlu0 %94, %v46
    %v96 = vpop.permute.xlu0 %95
    %97 = vset.pattern.permute.xlu0 0
    %98 = vperm.xlu0 %97, %v47
    %v99 = vpop.permute.xlu0 %98
    %100 = vset.pattern.permute.xlu0 0
    %101 = vperm.xlu0 %100, %v48
    %v102 = vpop.permute.xlu0 %101
    %103 = vset.pattern.permute.xlu0 0
    %104 = vperm.xlu0 %103, %v49
    %v105 = vpop.permute.xlu0 %104
    %106 = vset.pattern.permute.xlu0 0
    %107 = vperm.xlu0 %106, %v50
    %v108 = vpop.permute.xlu0 %107
    %109 = vset.pattern.permute.xlu0 0
    %110 = vperm.xlu0 %109, %v51
    %v111 = vpop.permute.xlu0 %110
    %112 = vset.pattern.permute.xlu0 0
    %113 = vperm.xlu0 %112, %v52
    %v114 = vpop.permute.xlu0 %113
    %115 = vset.pattern.permute.xlu0 0
    %116 = vperm.xlu0 %115, %v53
    %v117 = vpop.permute.xlu0 %116
    %118 = vset.pattern.permute.xlu0 0
    %119 = vperm.xlu0 %118, %v54
    %v120 = vpop.permute.xlu0 %119
    %121 = vset.pattern.permute.xlu0 0
    %122 = vperm.xlu0 %121, %v55
    %v123 = vpop.permute.xlu0 %122
    %124 = vset.pattern.permute.xlu0 0
    %125 = vperm.xlu0 %124, %v56
    %v126 = vpop.permute.xlu0 %125
    %127 = vset.pattern.permute.xlu0 0
    %128 = vperm.xlu0 %127, %v57
    %v129 = vpop.permute.xlu0 %128
    %130 = vset.pattern.permute.xlu0 0
    %131 = vperm.xlu0 %130, %v58
    %v132 = vpop.permute.xlu0 %131
    %133 = vset.pattern.permute.xlu0 0
    %134 = vperm.xlu0 %133, %v59
    %v135 = vpop.permute.xlu0 %134
    %136 = vset.pattern.permute.xlu0 0
    %137 = vperm.xlu0 %136, %v60
    %v138 = vpop.permute.xlu0 %137
    %139 = vset.pattern.permute.xlu0 0
    %140 = vperm.xlu0 %139, %v61
    %v141 = vpop.permute.xlu0 %140
    %142 = vset.pattern.permute.xlu0 0
    %143 = vperm.xlu0 %142, %v62
    %v144 = vpop.permute.xlu0 %143
    %145 = vset.pattern.permute.xlu0 0
    %146 = vperm.xlu0 %145, %v63
    %v147 = vpop.permute.xlu0 %146
    %148 = vset.pattern.permute.xlu0 0
    %149 = vperm.xlu0 %148, %v64
    %v150 = vpop.permute.xlu0 %149
    %151 = vset.pattern.permute.xlu0 0
    %152 = vperm.xlu0 %151, %v65
    %v153 = vpop.permute.xlu0 %152
    %154 = vset.pattern.permute.xlu0 0
    %155 = vperm.xlu0 %154, %v66
    %v156 = vpop.permute.xlu0 %155
    %157 = vset.pattern.permute.xlu0 0
    %158 = vperm.xlu0 %157, %v67
    %v159 = vpop.permute.xlu0 %158
    %160 = vset.pattern.permute.xlu0 0
    %161 = vperm.xlu0 %160, %v68
    %v162 = vpop.permute.xlu0 %161
    %163 = vset.pattern.permute.xlu0 0
    %164 = vperm.xlu0 %163, %v69
    %v165 = vpop.permute.xlu0 %164
    %vm166 = vcmp.eq.s32.totalorder %v36, %v72
    %vm167 = vcmp.eq.s32.totalorder %v37, %v72
    %vm168 = vcmp.eq.s32.totalorder %v36, %v75
    %vm169 = vcmp.eq.s32.totalorder %v37, %v75
    %vm170 = vcmp.eq.s32.totalorder %v36, %v78
    %vm171 = vcmp.eq.s32.totalorder %v37, %v78
    %vm172 = vcmp.eq.s32.totalorder %v36, %v81
    %vm173 = vcmp.eq.s32.totalorder %v37, %v81
    %vm174 = vcmp.eq.s32.totalorder %v36, %v84
    %vm175 = vcmp.eq.s32.totalorder %v37, %v84
    %vm176 = vcmp.eq.s32.totalorder %v36, %v87
    %vm177 = vcmp.eq.s32.totalorder %v37, %v87
    %vm178 = vcmp.eq.s32.totalorder %v36, %v90
    %vm179 = vcmp.eq.s32.totalorder %v37, %v90
    %vm180 = vcmp.eq.s32.totalorder %v36, %v93
    %vm181 = vcmp.eq.s32.totalorder %v37, %v93
    %vm182 = vcmp.eq.s32.totalorder %v36, %v96
    %vm183 = vcmp.eq.s32.totalorder %v37, %v96
    %vm184 = vcmp.eq.s32.totalorder %v36, %v99
    %vm185 = vcmp.eq.s32.totalorder %v37, %v99
    %vm186 = vcmp.eq.s32.totalorder %v36, %v102
    %vm187 = vcmp.eq.s32.totalorder %v37, %v102
    %vm188 = vcmp.eq.s32.totalorder %v36, %v105
    %vm189 = vcmp.eq.s32.totalorder %v37, %v105
    %vm190 = vcmp.eq.s32.totalorder %v36, %v108
    %vm191 = vcmp.eq.s32.totalorder %v37, %v108
    %vm192 = vcmp.eq.s32.totalorder %v36, %v111
    %vm193 = vcmp.eq.s32.totalorder %v37, %v111
    %vm194 = vcmp.eq.s32.totalorder %v36, %v114
    %vm195 = vcmp.eq.s32.totalorder %v37, %v114
    %vm196 = vcmp.eq.s32.totalorder %v36, %v117
    %vm197 = vcmp.eq.s32.totalorder %v37, %v117
    %vm198 = vcmp.eq.s32.totalorder %v36, %v120
    %vm199 = vcmp.eq.s32.totalorder %v37, %v120
    %vm200 = vcmp.eq.s32.totalorder %v36, %v123
    %vm201 = vcmp.eq.s32.totalorder %v37, %v123
    %vm202 = vcmp.eq.s32.totalorder %v36, %v126
    %vm203 = vcmp.eq.s32.totalorder %v37, %v126
    %vm204 = vcmp.eq.s32.totalorder %v36, %v129
    %vm205 = vcmp.eq.s32.totalorder %v37, %v129
    %vm206 = vcmp.eq.s32.totalorder %v36, %v132
    %vm207 = vcmp.eq.s32.totalorder %v37, %v132
    %vm208 = vcmp.eq.s32.totalorder %v36, %v135
    %vm209 = vcmp.eq.s32.totalorder %v37, %v135
    %vm210 = vcmp.eq.s32.totalorder %v36, %v138
    %vm211 = vcmp.eq.s32.totalorder %v37, %v138
    %vm212 = vcmp.eq.s32.totalorder %v36, %v141
    %vm213 = vcmp.eq.s32.totalorder %v37, %v141
    %vm214 = vcmp.eq.s32.totalorder %v36, %v144
    %vm215 = vcmp.eq.s32.totalorder %v37, %v144
    %vm216 = vcmp.eq.s32.totalorder %v36, %v147
    %vm217 = vcmp.eq.s32.totalorder %v37, %v147
    %vm218 = vcmp.eq.s32.totalorder %v36, %v150
    %vm219 = vcmp.eq.s32.totalorder %v37, %v150
    %vm220 = vcmp.eq.s32.totalorder %v36, %v153
    %vm221 = vcmp.eq.s32.totalorder %v37, %v153
    %vm222 = vcmp.eq.s32.totalorder %v36, %v156
    %vm223 = vcmp.eq.s32.totalorder %v37, %v156
    %vm224 = vcmp.eq.s32.totalorder %v36, %v159
    %vm225 = vcmp.eq.s32.totalorder %v37, %v159
    %vm226 = vcmp.eq.s32.totalorder %v36, %v162
    %vm227 = vcmp.eq.s32.totalorder %v37, %v162
    %vm228 = vcmp.eq.s32.totalorder %v36, %v165
    %vm229 = vcmp.eq.s32.totalorder %v37, %v165
    %v230 = vsel %vm166, 1.0, 0.0
    %v231 = vsel %vm167, 1.0, 0.0
    %v232 = vsel %vm168, 1.0, 0.0
    %v233 = vsel %vm169, 1.0, 0.0
    %v234 = vsel %vm170, 1.0, 0.0
    %v235 = vsel %vm171, 1.0, 0.0
    %v236 = vsel %vm172, 1.0, 0.0
    %v237 = vsel %vm173, 1.0, 0.0
    %v238 = vsel %vm174, 1.0, 0.0
    %v239 = vsel %vm175, 1.0, 0.0
    %v240 = vsel %vm176, 1.0, 0.0
    %v241 = vsel %vm177, 1.0, 0.0
    %v242 = vsel %vm178, 1.0, 0.0
    %v243 = vsel %vm179, 1.0, 0.0
    %v244 = vsel %vm180, 1.0, 0.0
    %v245 = vsel %vm181, 1.0, 0.0
    %v246 = vsel %vm182, 1.0, 0.0
    %v247 = vsel %vm183, 1.0, 0.0
    %v248 = vsel %vm184, 1.0, 0.0
    %v249 = vsel %vm185, 1.0, 0.0
    %v250 = vsel %vm186, 1.0, 0.0
    %v251 = vsel %vm187, 1.0, 0.0
    %v252 = vsel %vm188, 1.0, 0.0
    %v253 = vsel %vm189, 1.0, 0.0
    %v254 = vsel %vm190, 1.0, 0.0
    %v255 = vsel %vm191, 1.0, 0.0
    %v256 = vsel %vm192, 1.0, 0.0
    %v257 = vsel %vm193, 1.0, 0.0
    %v258 = vsel %vm194, 1.0, 0.0
    %v259 = vsel %vm195, 1.0, 0.0
    %v260 = vsel %vm196, 1.0, 0.0
    %v261 = vsel %vm197, 1.0, 0.0
    %v262 = vsel %vm198, 1.0, 0.0
    %v263 = vsel %vm199, 1.0, 0.0
    %v264 = vsel %vm200, 1.0, 0.0
    %v265 = vsel %vm201, 1.0, 0.0
    %v266 = vsel %vm202, 1.0, 0.0
    %v267 = vsel %vm203, 1.0, 0.0
    %v268 = vsel %vm204, 1.0, 0.0
    %v269 = vsel %vm205, 1.0, 0.0
    %v270 = vsel %vm206, 1.0, 0.0
    %v271 = vsel %vm207, 1.0, 0.0
    %v272 = vsel %vm208, 1.0, 0.0
    %v273 = vsel %vm209, 1.0, 0.0
    %v274 = vsel %vm210, 1.0, 0.0
    %v275 = vsel %vm211, 1.0, 0.0
    %v276 = vsel %vm212, 1.0, 0.0
    %v277 = vsel %vm213, 1.0, 0.0
    %v278 = vsel %vm214, 1.0, 0.0
    %v279 = vsel %vm215, 1.0, 0.0
    %v280 = vsel %vm216, 1.0, 0.0
    %v281 = vsel %vm217, 1.0, 0.0
    %v282 = vsel %vm218, 1.0, 0.0
    %v283 = vsel %vm219, 1.0, 0.0
    %v284 = vsel %vm220, 1.0, 0.0
    %v285 = vsel %vm221, 1.0, 0.0
    %v286 = vsel %vm222, 1.0, 0.0
    %v287 = vsel %vm223, 1.0, 0.0
    %v288 = vsel %vm224, 1.0, 0.0
    %v289 = vsel %vm225, 1.0, 0.0
    %v290 = vsel %vm226, 1.0, 0.0
    %v291 = vsel %vm227, 1.0, 0.0
    %v292 = vsel %vm228, 1.0, 0.0
    %v293 = vsel %vm229, 1.0, 0.0
    %v294 = vpack.c.bf16 %v232, %v230
    %v295 = vpack.c.bf16 %v233, %v231
    %v296 = vpack.c.bf16 %v236, %v234
    %v297 = vpack.c.bf16 %v237, %v235
    %v298 = vpack.c.bf16 %v240, %v238
    %v299 = vpack.c.bf16 %v241, %v239
    %v300 = vpack.c.bf16 %v244, %v242
    %v301 = vpack.c.bf16 %v245, %v243
    %v302 = vpack.c.bf16 %v248, %v246
    %v303 = vpack.c.bf16 %v249, %v247
    %v304 = vpack.c.bf16 %v252, %v250
    %v305 = vpack.c.bf16 %v253, %v251
    %v306 = vpack.c.bf16 %v256, %v254
    %v307 = vpack.c.bf16 %v257, %v255
    %v308 = vpack.c.bf16 %v260, %v258
    %v309 = vpack.c.bf16 %v261, %v259
    %v310 = vpack.c.bf16 %v264, %v262
    %v311 = vpack.c.bf16 %v265, %v263
    %v312 = vpack.c.bf16 %v268, %v266
    %v313 = vpack.c.bf16 %v269, %v267
    %v314 = vpack.c.bf16 %v272, %v270
    %v315 = vpack.c.bf16 %v273, %v271
    %v316 = vpack.c.bf16 %v276, %v274
    %v317 = vpack.c.bf16 %v277, %v275
    %v318 = vpack.c.bf16 %v280, %v278
    %v319 = vpack.c.bf16 %v281, %v279
    %v320 = vpack.c.bf16 %v284, %v282
    %v321 = vpack.c.bf16 %v285, %v283
    %v322 = vpack.c.bf16 %v288, %v286
    %v323 = vpack.c.bf16 %v289, %v287
    %v324 = vpack.c.bf16 %v292, %v290
    %v325 = vpack.c.bf16 %v293, %v291
    %326 = vset.pattern.permute.xlu0 1
    %327 = vperm.xlu0 %326, %v38
    %v328 = vpop.permute.xlu0 %327
    %329 = vset.pattern.permute.xlu0 1
    %330 = vperm.xlu0 %329, %v39
    %v331 = vpop.permute.xlu0 %330
    %332 = vset.pattern.permute.xlu0 1
    %333 = vperm.xlu0 %332, %v40
    %v334 = vpop.permute.xlu0 %333
    %335 = vset.pattern.permute.xlu0 1
    %336 = vperm.xlu0 %335, %v41
    %v337 = vpop.permute.xlu0 %336
    %338 = vset.pattern.permute.xlu0 1
    %339 = vperm.xlu0 %338, %v42
    %v340 = vpop.permute.xlu0 %339
    %341 = vset.pattern.permute.xlu0 1
    %342 = vperm.xlu0 %341, %v43
    %v343 = vpop.permute.xlu0 %342
    %344 = vset.pattern.permute.xlu0 1
    %345 = vperm.xlu0 %344, %v44
    %v346 = vpop.permute.xlu0 %345
    %347 = vset.pattern.permute.xlu0 1
    %348 = vperm.xlu0 %347, %v45
    %v349 = vpop.permute.xlu0 %348
    %350 = vset.pattern.permute.xlu0 1
    %351 = vperm.xlu0 %350, %v46
    %v352 = vpop.permute.xlu0 %351
    %353 = vset.pattern.permute.xlu0 1
    %354 = vperm.xlu0 %353, %v47
    %v355 = vpop.permute.xlu0 %354
    %356 = vset.pattern.permute.xlu0 1
    %357 = vperm.xlu0 %356, %v48
    %v358 = vpop.permute.xlu0 %357
    %359 = vset.pattern.permute.xlu0 1
    %360 = vperm.xlu0 %359, %v49
    %v361 = vpop.permute.xlu0 %360
    %362 = vset.pattern.permute.xlu0 1
    %363 = vperm.xlu0 %362, %v50
    %v364 = vpop.permute.xlu0 %363
    %365 = vset.pattern.permute.xlu0 1
    %366 = vperm.xlu0 %365, %v51
    %v367 = vpop.permute.xlu0 %366
    %368 = vset.pattern.permute.xlu0 1
    %369 = vperm.xlu0 %368, %v52
    %v370 = vpop.permute.xlu0 %369
    %371 = vset.pattern.permute.xlu0 1
    %372 = vperm.xlu0 %371, %v53
    %v373 = vpop.permute.xlu0 %372
    %374 = vset.pattern.permute.xlu0 1
    %375 = vperm.xlu0 %374, %v54
    %v376 = vpop.permute.xlu0 %375
    %377 = vset.pattern.permute.xlu0 1
    %378 = vperm.xlu0 %377, %v55
    %v379 = vpop.permute.xlu0 %378
    %380 = vset.pattern.permute.xlu0 1
    %381 = vperm.xlu0 %380, %v56
    %v382 = vpop.permute.xlu0 %381
    %383 = vset.pattern.permute.xlu0 1
    %384 = vperm.xlu0 %383, %v57
    %v385 = vpop.permute.xlu0 %384
    %386 = vset.pattern.permute.xlu0 1
    %387 = vperm.xlu0 %386, %v58
    %v388 = vpop.permute.xlu0 %387
    %389 = vset.pattern.permute.xlu0 1
    %390 = vperm.xlu0 %389, %v59
    %v391 = vpop.permute.xlu0 %390
    %392 = vset.pattern.permute.xlu0 1
    %393 = vperm.xlu0 %392, %v60
    %v394 = vpop.permute.xlu0 %393
    %395 = vset.pattern.permute.xlu0 1
    %396 = vperm.xlu0 %395, %v61
    %v397 = vpop.permute.xlu0 %396
    %398 = vset.pattern.permute.xlu0 1
    %399 = vperm.xlu0 %398, %v62
    %v400 = vpop.permute.xlu0 %399
    %401 = vset.pattern.permute.xlu0 1
    %402 = vperm.xlu0 %401, %v63
    %v403 = vpop.permute.xlu0 %402
    %404 = vset.pattern.permute.xlu0 1
    %405 = vperm.xlu0 %404, %v64
    %v406 = vpop.permute.xlu0 %405
    %407 = vset.pattern.permute.xlu0 1
    %408 = vperm.xlu0 %407, %v65
    %v409 = vpop.permute.xlu0 %408
    %410 = vset.pattern.permute.xlu0 1
    %411 = vperm.xlu0 %410, %v66
    %v412 = vpop.permute.xlu0 %411
    %413 = vset.pattern.permute.xlu0 1
    %414 = vperm.xlu0 %413, %v67
    %v415 = vpop.permute.xlu0 %414
    %416 = vset.pattern.permute.xlu0 1
    %417 = vperm.xlu0 %416, %v68
    %v418 = vpop.permute.xlu0 %417
    %419 = vset.pattern.permute.xlu0 1
    %420 = vperm.xlu0 %419, %v69
    %v421 = vpop.permute.xlu0 %420
    %vm422 = vcmp.eq.s32.totalorder %v36, %v328
    %vm423 = vcmp.eq.s32.totalorder %v37, %v328
    %vm424 = vcmp.eq.s32.totalorder %v36, %v331
    %vm425 = vcmp.eq.s32.totalorder %v37, %v331
    %vm426 = vcmp.eq.s32.totalorder %v36, %v334
    %vm427 = vcmp.eq.s32.totalorder %v37, %v334
    %vm428 = vcmp.eq.s32.totalorder %v36, %v337
    %vm429 = vcmp.eq.s32.totalorder %v37, %v337
    %vm430 = vcmp.eq.s32.totalorder %v36, %v340
    %vm431 = vcmp.eq.s32.totalorder %v37, %v340
    %vm432 = vcmp.eq.s32.totalorder %v36, %v343
    %vm433 = vcmp.eq.s32.totalorder %v37, %v343
    %vm434 = vcmp.eq.s32.totalorder %v36, %v346
    %vm435 = vcmp.eq.s32.totalorder %v37, %v346
    %vm436 = vcmp.eq.s32.totalorder %v36, %v349
    %vm437 = vcmp.eq.s32.totalorder %v37, %v349
    %vm438 = vcmp.eq.s32.totalorder %v36, %v352
    %vm439 = vcmp.eq.s32.totalorder %v37, %v352
    %vm440 = vcmp.eq.s32.totalorder %v36, %v355
    %vm441 = vcmp.eq.s32.totalorder %v37, %v355
    %vm442 = vcmp.eq.s32.totalorder %v36, %v358
    %vm443 = vcmp.eq.s32.totalorder %v37, %v358
    %vm444 = vcmp.eq.s32.totalorder %v36, %v361
    %vm445 = vcmp.eq.s32.totalorder %v37, %v361
    %vm446 = vcmp.eq.s32.totalorder %v36, %v364
    %vm447 = vcmp.eq.s32.totalorder %v37, %v364
    %vm448 = vcmp.eq.s32.totalorder %v36, %v367
    %vm449 = vcmp.eq.s32.totalorder %v37, %v367
    %vm450 = vcmp.eq.s32.totalorder %v36, %v370
    %vm451 = vcmp.eq.s32.totalorder %v37, %v370
    %vm452 = vcmp.eq.s32.totalorder %v36, %v373
    %vm453 = vcmp.eq.s32.totalorder %v37, %v373
    %vm454 = vcmp.eq.s32.totalorder %v36, %v376
    %vm455 = vcmp.eq.s32.totalorder %v37, %v376
    %vm456 = vcmp.eq.s32.totalorder %v36, %v379
    %vm457 = vcmp.eq.s32.totalorder %v37, %v379
    %vm458 = vcmp.eq.s32.totalorder %v36, %v382
    %vm459 = vcmp.eq.s32.totalorder %v37, %v382
    %vm460 = vcmp.eq.s32.totalorder %v36, %v385
    %vm461 = vcmp.eq.s32.totalorder %v37, %v385
    %vm462 = vcmp.eq.s32.totalorder %v36, %v388
    %vm463 = vcmp.eq.s32.totalorder %v37, %v388
    %vm464 = vcmp.eq.s32.totalorder %v36, %v391
    %vm465 = vcmp.eq.s32.totalorder %v37, %v391
    %vm466 = vcmp.eq.s32.totalorder %v36, %v394
    %vm467 = vcmp.eq.s32.totalorder %v37, %v394
    %vm468 = vcmp.eq.s32.totalorder %v36, %v397
    %vm469 = vcmp.eq.s32.totalorder %v37, %v397
    %vm470 = vcmp.eq.s32.totalorder %v36, %v400
    %vm471 = vcmp.eq.s32.totalorder %v37, %v400
    %vm472 = vcmp.eq.s32.totalorder %v36, %v403
    %vm473 = vcmp.eq.s32.totalorder %v37, %v403
    %vm474 = vcmp.eq.s32.totalorder %v36, %v406
    %vm475 = vcmp.eq.s32.totalorder %v37, %v406
    %vm476 = vcmp.eq.s32.totalorder %v36, %v409
    %vm477 = vcmp.eq.s32.totalorder %v37, %v409
    %vm478 = vcmp.eq.s32.totalorder %v36, %v412
    %vm479 = vcmp.eq.s32.totalorder %v37, %v412
    %vm480 = vcmp.eq.s32.totalorder %v36, %v415
    %vm481 = vcmp.eq.s32.totalorder %v37, %v415
    %vm482 = vcmp.eq.s32.totalorder %v36, %v418
    %vm483 = vcmp.eq.s32.totalorder %v37, %v418
    %vm484 = vcmp.eq.s32.totalorder %v36, %v421
    %vm485 = vcmp.eq.s32.totalorder %v37, %v421
    %v486 = vsel %vm422, 1.0, 0.0
    %v487 = vsel %vm423, 1.0, 0.0
    %v488 = vsel %vm424, 1.0, 0.0
    %v489 = vsel %vm425, 1.0, 0.0
    %v490 = vsel %vm426, 1.0, 0.0
    %v491 = vsel %vm427, 1.0, 0.0
    %v492 = vsel %vm428, 1.0, 0.0
    %v493 = vsel %vm429, 1.0, 0.0
    %v494 = vsel %vm430, 1.0, 0.0
    %v495 = vsel %vm431, 1.0, 0.0
    %v496 = vsel %vm432, 1.0, 0.0
    %v497 = vsel %vm433, 1.0, 0.0
    %v498 = vsel %vm434, 1.0, 0.0
    %v499 = vsel %vm435, 1.0, 0.0
    %v500 = vsel %vm436, 1.0, 0.0
    %v501 = vsel %vm437, 1.0, 0.0
    %v502 = vsel %vm438, 1.0, 0.0
    %v503 = vsel %vm439, 1.0, 0.0
    %v504 = vsel %vm440, 1.0, 0.0
    %v505 = vsel %vm441, 1.0, 0.0
    %v506 = vsel %vm442, 1.0, 0.0
    %v507 = vsel %vm443, 1.0, 0.0
    %v508 = vsel %vm444, 1.0, 0.0
    %v509 = vsel %vm445, 1.0, 0.0
    %v510 = vsel %vm446, 1.0, 0.0
    %v511 = vsel %vm447, 1.0, 0.0
    %v512 = vsel %vm448, 1.0, 0.0
    %v513 = vsel %vm449, 1.0, 0.0
    %v514 = vsel %vm450, 1.0, 0.0
    %v515 = vsel %vm451, 1.0, 0.0
    %v516 = vsel %vm452, 1.0, 0.0
    %v517 = vsel %vm453, 1.0, 0.0
    %v518 = vsel %vm454, 1.0, 0.0
    %v519 = vsel %vm455, 1.0, 0.0
    %v520 = vsel %vm456, 1.0, 0.0
    %v521 = vsel %vm457, 1.0, 0.0
    %v522 = vsel %vm458, 1.0, 0.0
    %v523 = vsel %vm459, 1.0, 0.0
    %v524 = vsel %vm460, 1.0, 0.0
    %v525 = vsel %vm461, 1.0, 0.0
    %v526 = vsel %vm462, 1.0, 0.0
    %v527 = vsel %vm463, 1.0, 0.0
    %v528 = vsel %vm464, 1.0, 0.0
    %v529 = vsel %vm465, 1.0, 0.0
    %v530 = vsel %vm466, 1.0, 0.0
    %v531 = vsel %vm467, 1.0, 0.0
    %v532 = vsel %vm468, 1.0, 0.0
    %v533 = vsel %vm469, 1.0, 0.0
    %v534 = vsel %vm470, 1.0, 0.0
    %v535 = vsel %vm471, 1.0, 0.0
    %v536 = vsel %vm472, 1.0, 0.0
    %v537 = vsel %vm473, 1.0, 0.0
    %v538 = vsel %vm474, 1.0, 0.0
    %v539 = vsel %vm475, 1.0, 0.0
    %v540 = vsel %vm476, 1.0, 0.0
    %v541 = vsel %vm477, 1.0, 0.0
    %v542 = vsel %vm478, 1.0, 0.0
    %v543 = vsel %vm479, 1.0, 0.0
    %v544 = vsel %vm480, 1.0, 0.0
    %v545 = vsel %vm481, 1.0, 0.0
    %v546 = vsel %vm482, 1.0, 0.0
    %v547 = vsel %vm483, 1.0, 0.0
    %v548 = vsel %vm484, 1.0, 0.0
    %v549 = vsel %vm485, 1.0, 0.0
    %v550 = vpack.c.bf16 %v488, %v486
    %v551 = vpack.c.bf16 %v489, %v487
    %v552 = vpack.c.bf16 %v492, %v490
    %v553 = vpack.c.bf16 %v493, %v491
    %v554 = vpack.c.bf16 %v496, %v494
    %v555 = vpack.c.bf16 %v497, %v495
    %v556 = vpack.c.bf16 %v500, %v498
    %v557 = vpack.c.bf16 %v501, %v499
    %v558 = vpack.c.bf16 %v504, %v502
    %v559 = vpack.c.bf16 %v505, %v503
    %v560 = vpack.c.bf16 %v508, %v506
    %v561 = vpack.c.bf16 %v509, %v507
    %v562 = vpack.c.bf16 %v512, %v510
    %v563 = vpack.c.bf16 %v513, %v511
    %v564 = vpack.c.bf16 %v516, %v514
    %v565 = vpack.c.bf16 %v517, %v515
    %v566 = vpack.c.bf16 %v520, %v518
    %v567 = vpack.c.bf16 %v521, %v519
    %v568 = vpack.c.bf16 %v524, %v522
    %v569 = vpack.c.bf16 %v525, %v523
    %v570 = vpack.c.bf16 %v528, %v526
    %v571 = vpack.c.bf16 %v529, %v527
    %v572 = vpack.c.bf16 %v532, %v530
    %v573 = vpack.c.bf16 %v533, %v531
    %v574 = vpack.c.bf16 %v536, %v534
    %v575 = vpack.c.bf16 %v537, %v535
    %v576 = vpack.c.bf16 %v540, %v538
    %v577 = vpack.c.bf16 %v541, %v539
    %v578 = vpack.c.bf16 %v544, %v542
    %v579 = vpack.c.bf16 %v545, %v543
    %v580 = vpack.c.bf16 %v548, %v546
    %v581 = vpack.c.bf16 %v549, %v547
    %582 = vset.pattern.permute.xlu0 2
    %583 = vperm.xlu0 %582, %v38
    %v584 = vpop.permute.xlu0 %583
    %585 = vset.pattern.permute.xlu0 2
    %586 = vperm.xlu0 %585, %v39
    %v587 = vpop.permute.xlu0 %586
    %588 = vset.pattern.permute.xlu0 2
    %589 = vperm.xlu0 %588, %v40
    %v590 = vpop.permute.xlu0 %589
    %591 = vset.pattern.permute.xlu0 2
    %592 = vperm.xlu0 %591, %v41
    %v593 = vpop.permute.xlu0 %592
    %594 = vset.pattern.permute.xlu0 2
    %595 = vperm.xlu0 %594, %v42
    %v596 = vpop.permute.xlu0 %595
    %597 = vset.pattern.permute.xlu0 2
    %598 = vperm.xlu0 %597, %v43
    %v599 = vpop.permute.xlu0 %598
    %600 = vset.pattern.permute.xlu0 2
    %601 = vperm.xlu0 %600, %v44
    %v602 = vpop.permute.xlu0 %601
    %603 = vset.pattern.permute.xlu0 2
    %604 = vperm.xlu0 %603, %v45
    %v605 = vpop.permute.xlu0 %604
    %606 = vset.pattern.permute.xlu0 2
    %607 = vperm.xlu0 %606, %v46
    %v608 = vpop.permute.xlu0 %607
    %609 = vset.pattern.permute.xlu0 2
    %610 = vperm.xlu0 %609, %v47
    %v611 = vpop.permute.xlu0 %610
    %612 = vset.pattern.permute.xlu0 2
    %613 = vperm.xlu0 %612, %v48
    %v614 = vpop.permute.xlu0 %613
    %615 = vset.pattern.permute.xlu0 2
    %616 = vperm.xlu0 %615, %v49
    %v617 = vpop.permute.xlu0 %616
    %618 = vset.pattern.permute.xlu0 2
    %619 = vperm.xlu0 %618, %v50
    %v620 = vpop.permute.xlu0 %619
    %621 = vset.pattern.permute.xlu0 2
    %622 = vperm.xlu0 %621, %v51
    %v623 = vpop.permute.xlu0 %622
    %624 = vset.pattern.permute.xlu0 2
    %625 = vperm.xlu0 %624, %v52
    %v626 = vpop.permute.xlu0 %625
    %627 = vset.pattern.permute.xlu0 2
    %628 = vperm.xlu0 %627, %v53
    %v629 = vpop.permute.xlu0 %628
    %630 = vset.pattern.permute.xlu0 2
    %631 = vperm.xlu0 %630, %v54
    %v632 = vpop.permute.xlu0 %631
    %633 = vset.pattern.permute.xlu0 2
    %634 = vperm.xlu0 %633, %v55
    %v635 = vpop.permute.xlu0 %634
    %636 = vset.pattern.permute.xlu0 2
    %637 = vperm.xlu0 %636, %v56
    %v638 = vpop.permute.xlu0 %637
    %639 = vset.pattern.permute.xlu0 2
    %640 = vperm.xlu0 %639, %v57
    %v641 = vpop.permute.xlu0 %640
    %642 = vset.pattern.permute.xlu0 2
    %643 = vperm.xlu0 %642, %v58
    %v644 = vpop.permute.xlu0 %643
    %645 = vset.pattern.permute.xlu0 2
    %646 = vperm.xlu0 %645, %v59
    %v647 = vpop.permute.xlu0 %646
    %648 = vset.pattern.permute.xlu0 2
    %649 = vperm.xlu0 %648, %v60
    %v650 = vpop.permute.xlu0 %649
    %651 = vset.pattern.permute.xlu0 2
    %652 = vperm.xlu0 %651, %v61
    %v653 = vpop.permute.xlu0 %652
    %654 = vset.pattern.permute.xlu0 2
    %655 = vperm.xlu0 %654, %v62
    %v656 = vpop.permute.xlu0 %655
    %657 = vset.pattern.permute.xlu0 2
    %658 = vperm.xlu0 %657, %v63
    %v659 = vpop.permute.xlu0 %658
    %660 = vset.pattern.permute.xlu0 2
    %661 = vperm.xlu0 %660, %v64
    %v662 = vpop.permute.xlu0 %661
    %663 = vset.pattern.permute.xlu0 2
    %664 = vperm.xlu0 %663, %v65
    %v665 = vpop.permute.xlu0 %664
    %666 = vset.pattern.permute.xlu0 2
    %667 = vperm.xlu0 %666, %v66
    %v668 = vpop.permute.xlu0 %667
    %669 = vset.pattern.permute.xlu0 2
    %670 = vperm.xlu0 %669, %v67
    %v671 = vpop.permute.xlu0 %670
    %672 = vset.pattern.permute.xlu0 2
    %673 = vperm.xlu0 %672, %v68
    %v674 = vpop.permute.xlu0 %673
    %675 = vset.pattern.permute.xlu0 2
    %676 = vperm.xlu0 %675, %v69
    %v677 = vpop.permute.xlu0 %676
    %vm678 = vcmp.eq.s32.totalorder %v36, %v584
    %vm679 = vcmp.eq.s32.totalorder %v37, %v584
    %vm680 = vcmp.eq.s32.totalorder %v36, %v587
    %vm681 = vcmp.eq.s32.totalorder %v37, %v587
    %vm682 = vcmp.eq.s32.totalorder %v36, %v590
    %vm683 = vcmp.eq.s32.totalorder %v37, %v590
    %vm684 = vcmp.eq.s32.totalorder %v36, %v593
    %vm685 = vcmp.eq.s32.totalorder %v37, %v593
    %vm686 = vcmp.eq.s32.totalorder %v36, %v596
    %vm687 = vcmp.eq.s32.totalorder %v37, %v596
    %vm688 = vcmp.eq.s32.totalorder %v36, %v599
    %vm689 = vcmp.eq.s32.totalorder %v37, %v599
    %vm690 = vcmp.eq.s32.totalorder %v36, %v602
    %vm691 = vcmp.eq.s32.totalorder %v37, %v602
    %vm692 = vcmp.eq.s32.totalorder %v36, %v605
    %vm693 = vcmp.eq.s32.totalorder %v37, %v605
    %vm694 = vcmp.eq.s32.totalorder %v36, %v608
    %vm695 = vcmp.eq.s32.totalorder %v37, %v608
    %vm696 = vcmp.eq.s32.totalorder %v36, %v611
    %vm697 = vcmp.eq.s32.totalorder %v37, %v611
    %vm698 = vcmp.eq.s32.totalorder %v36, %v614
    %vm699 = vcmp.eq.s32.totalorder %v37, %v614
    %vm700 = vcmp.eq.s32.totalorder %v36, %v617
    %vm701 = vcmp.eq.s32.totalorder %v37, %v617
    %vm702 = vcmp.eq.s32.totalorder %v36, %v620
    %vm703 = vcmp.eq.s32.totalorder %v37, %v620
    %vm704 = vcmp.eq.s32.totalorder %v36, %v623
    %vm705 = vcmp.eq.s32.totalorder %v37, %v623
    %vm706 = vcmp.eq.s32.totalorder %v36, %v626
    %vm707 = vcmp.eq.s32.totalorder %v37, %v626
    %vm708 = vcmp.eq.s32.totalorder %v36, %v629
    %vm709 = vcmp.eq.s32.totalorder %v37, %v629
    %vm710 = vcmp.eq.s32.totalorder %v36, %v632
    %vm711 = vcmp.eq.s32.totalorder %v37, %v632
    %vm712 = vcmp.eq.s32.totalorder %v36, %v635
    %vm713 = vcmp.eq.s32.totalorder %v37, %v635
    %vm714 = vcmp.eq.s32.totalorder %v36, %v638
    %vm715 = vcmp.eq.s32.totalorder %v37, %v638
    %vm716 = vcmp.eq.s32.totalorder %v36, %v641
    %vm717 = vcmp.eq.s32.totalorder %v37, %v641
    %vm718 = vcmp.eq.s32.totalorder %v36, %v644
    %vm719 = vcmp.eq.s32.totalorder %v37, %v644
    %vm720 = vcmp.eq.s32.totalorder %v36, %v647
    %vm721 = vcmp.eq.s32.totalorder %v37, %v647
    %vm722 = vcmp.eq.s32.totalorder %v36, %v650
    %vm723 = vcmp.eq.s32.totalorder %v37, %v650
    %vm724 = vcmp.eq.s32.totalorder %v36, %v653
    %vm725 = vcmp.eq.s32.totalorder %v37, %v653
    %vm726 = vcmp.eq.s32.totalorder %v36, %v656
    %vm727 = vcmp.eq.s32.totalorder %v37, %v656
    %vm728 = vcmp.eq.s32.totalorder %v36, %v659
    %vm729 = vcmp.eq.s32.totalorder %v37, %v659
    %vm730 = vcmp.eq.s32.totalorder %v36, %v662
    %vm731 = vcmp.eq.s32.totalorder %v37, %v662
    %vm732 = vcmp.eq.s32.totalorder %v36, %v665
    %vm733 = vcmp.eq.s32.totalorder %v37, %v665
    %vm734 = vcmp.eq.s32.totalorder %v36, %v668
    %vm735 = vcmp.eq.s32.totalorder %v37, %v668
    %vm736 = vcmp.eq.s32.totalorder %v36, %v671
    %vm737 = vcmp.eq.s32.totalorder %v37, %v671
    %vm738 = vcmp.eq.s32.totalorder %v36, %v674
    %vm739 = vcmp.eq.s32.totalorder %v37, %v674
    %vm740 = vcmp.eq.s32.totalorder %v36, %v677
    %vm741 = vcmp.eq.s32.totalorder %v37, %v677
    %v742 = vsel %vm678, 1.0, 0.0
    %v743 = vsel %vm679, 1.0, 0.0
    %v744 = vsel %vm680, 1.0, 0.0
    %v745 = vsel %vm681, 1.0, 0.0
    %v746 = vsel %vm682, 1.0, 0.0
    %v747 = vsel %vm683, 1.0, 0.0
    %v748 = vsel %vm684, 1.0, 0.0
    %v749 = vsel %vm685, 1.0, 0.0
    %v750 = vsel %vm686, 1.0, 0.0
    %v751 = vsel %vm687, 1.0, 0.0
    %v752 = vsel %vm688, 1.0, 0.0
    %v753 = vsel %vm689, 1.0, 0.0
    %v754 = vsel %vm690, 1.0, 0.0
    %v755 = vsel %vm691, 1.0, 0.0
    %v756 = vsel %vm692, 1.0, 0.0
    %v757 = vsel %vm693, 1.0, 0.0
    %v758 = vsel %vm694, 1.0, 0.0
    %v759 = vsel %vm695, 1.0, 0.0
    %v760 = vsel %vm696, 1.0, 0.0
    %v761 = vsel %vm697, 1.0, 0.0
    %v762 = vsel %vm698, 1.0, 0.0
    %v763 = vsel %vm699, 1.0, 0.0
    %v764 = vsel %vm700, 1.0, 0.0
    %v765 = vsel %vm701, 1.0, 0.0
    %v766 = vsel %vm702, 1.0, 0.0
    %v767 = vsel %vm703, 1.0, 0.0
    %v768 = vsel %vm704, 1.0, 0.0
    %v769 = vsel %vm705, 1.0, 0.0
    %v770 = vsel %vm706, 1.0, 0.0
    %v771 = vsel %vm707, 1.0, 0.0
    %v772 = vsel %vm708, 1.0, 0.0
    %v773 = vsel %vm709, 1.0, 0.0
    %v774 = vsel %vm710, 1.0, 0.0
    %v775 = vsel %vm711, 1.0, 0.0
    %v776 = vsel %vm712, 1.0, 0.0
    %v777 = vsel %vm713, 1.0, 0.0
    %v778 = vsel %vm714, 1.0, 0.0
    %v779 = vsel %vm715, 1.0, 0.0
    %v780 = vsel %vm716, 1.0, 0.0
    %v781 = vsel %vm717, 1.0, 0.0
    %v782 = vsel %vm718, 1.0, 0.0
    %v783 = vsel %vm719, 1.0, 0.0
    %v784 = vsel %vm720, 1.0, 0.0
    %v785 = vsel %vm721, 1.0, 0.0
    %v786 = vsel %vm722, 1.0, 0.0
    %v787 = vsel %vm723, 1.0, 0.0
    %v788 = vsel %vm724, 1.0, 0.0
    %v789 = vsel %vm725, 1.0, 0.0
    %v790 = vsel %vm726, 1.0, 0.0
    %v791 = vsel %vm727, 1.0, 0.0
    %v792 = vsel %vm728, 1.0, 0.0
    %v793 = vsel %vm729, 1.0, 0.0
    %v794 = vsel %vm730, 1.0, 0.0
    %v795 = vsel %vm731, 1.0, 0.0
    %v796 = vsel %vm732, 1.0, 0.0
    %v797 = vsel %vm733, 1.0, 0.0
    %v798 = vsel %vm734, 1.0, 0.0
    %v799 = vsel %vm735, 1.0, 0.0
    %v800 = vsel %vm736, 1.0, 0.0
    %v801 = vsel %vm737, 1.0, 0.0
    %v802 = vsel %vm738, 1.0, 0.0
    %v803 = vsel %vm739, 1.0, 0.0
    %v804 = vsel %vm740, 1.0, 0.0
    %v805 = vsel %vm741, 1.0, 0.0
    %v806 = vpack.c.bf16 %v744, %v742
    %v807 = vpack.c.bf16 %v745, %v743
    %v808 = vpack.c.bf16 %v748, %v746
    %v809 = vpack.c.bf16 %v749, %v747
    %v810 = vpack.c.bf16 %v752, %v750
    %v811 = vpack.c.bf16 %v753, %v751
    %v812 = vpack.c.bf16 %v756, %v754
    %v813 = vpack.c.bf16 %v757, %v755
    %v814 = vpack.c.bf16 %v760, %v758
    %v815 = vpack.c.bf16 %v761, %v759
    %v816 = vpack.c.bf16 %v764, %v762
    %v817 = vpack.c.bf16 %v765, %v763
    %v818 = vpack.c.bf16 %v768, %v766
    %v819 = vpack.c.bf16 %v769, %v767
    %v820 = vpack.c.bf16 %v772, %v770
    %v821 = vpack.c.bf16 %v773, %v771
    %v822 = vpack.c.bf16 %v776, %v774
    %v823 = vpack.c.bf16 %v777, %v775
    %v824 = vpack.c.bf16 %v780, %v778
    %v825 = vpack.c.bf16 %v781, %v779
    %v826 = vpack.c.bf16 %v784, %v782
    %v827 = vpack.c.bf16 %v785, %v783
    %v828 = vpack.c.bf16 %v788, %v786
    %v829 = vpack.c.bf16 %v789, %v787
    %v830 = vpack.c.bf16 %v792, %v790
    %v831 = vpack.c.bf16 %v793, %v791
    %v832 = vpack.c.bf16 %v796, %v794
    %v833 = vpack.c.bf16 %v797, %v795
    %v834 = vpack.c.bf16 %v800, %v798
    %v835 = vpack.c.bf16 %v801, %v799
    %v836 = vpack.c.bf16 %v804, %v802
    %v837 = vpack.c.bf16 %v805, %v803
    %838 = vset.pattern.permute.xlu0 3
    %839 = vperm.xlu0 %838, %v38
    %v840 = vpop.permute.xlu0 %839
    %841 = vset.pattern.permute.xlu0 3
    %842 = vperm.xlu0 %841, %v39
    %v843 = vpop.permute.xlu0 %842
    %844 = vset.pattern.permute.xlu0 3
    %845 = vperm.xlu0 %844, %v40
    %v846 = vpop.permute.xlu0 %845
    %847 = vset.pattern.permute.xlu0 3
    %848 = vperm.xlu0 %847, %v41
    %v849 = vpop.permute.xlu0 %848
    %850 = vset.pattern.permute.xlu0 3
    %851 = vperm.xlu0 %850, %v42
    %v852 = vpop.permute.xlu0 %851
    %853 = vset.pattern.permute.xlu0 3
    %854 = vperm.xlu0 %853, %v43
    %v855 = vpop.permute.xlu0 %854
    %856 = vset.pattern.permute.xlu0 3
    %857 = vperm.xlu0 %856, %v44
    %v858 = vpop.permute.xlu0 %857
    %859 = vset.pattern.permute.xlu0 3
    %860 = vperm.xlu0 %859, %v45
    %v861 = vpop.permute.xlu0 %860
    %862 = vset.pattern.permute.xlu0 3
    %863 = vperm.xlu0 %862, %v46
    %v864 = vpop.permute.xlu0 %863
    %865 = vset.pattern.permute.xlu0 3
    %866 = vperm.xlu0 %865, %v47
    %v867 = vpop.permute.xlu0 %866
    %868 = vset.pattern.permute.xlu0 3
    %869 = vperm.xlu0 %868, %v48
    %v870 = vpop.permute.xlu0 %869
    %871 = vset.pattern.permute.xlu0 3
    %872 = vperm.xlu0 %871, %v49
    %v873 = vpop.permute.xlu0 %872
    %874 = vset.pattern.permute.xlu0 3
    %875 = vperm.xlu0 %874, %v50
    %v876 = vpop.permute.xlu0 %875
    %877 = vset.pattern.permute.xlu0 3
    %878 = vperm.xlu0 %877, %v51
    %v879 = vpop.permute.xlu0 %878
    %880 = vset.pattern.permute.xlu0 3
    %881 = vperm.xlu0 %880, %v52
    %v882 = vpop.permute.xlu0 %881
    %883 = vset.pattern.permute.xlu0 3
    %884 = vperm.xlu0 %883, %v53
    %v885 = vpop.permute.xlu0 %884
    %886 = vset.pattern.permute.xlu0 3
    %887 = vperm.xlu0 %886, %v54
    %v888 = vpop.permute.xlu0 %887
    %889 = vset.pattern.permute.xlu0 3
    %890 = vperm.xlu0 %889, %v55
    %v891 = vpop.permute.xlu0 %890
    %892 = vset.pattern.permute.xlu0 3
    %893 = vperm.xlu0 %892, %v56
    %v894 = vpop.permute.xlu0 %893
    %895 = vset.pattern.permute.xlu0 3
    %896 = vperm.xlu0 %895, %v57
    %v897 = vpop.permute.xlu0 %896
    %898 = vset.pattern.permute.xlu0 3
    %899 = vperm.xlu0 %898, %v58
    %v900 = vpop.permute.xlu0 %899
    %901 = vset.pattern.permute.xlu0 3
    %902 = vperm.xlu0 %901, %v59
    %v903 = vpop.permute.xlu0 %902
    %904 = vset.pattern.permute.xlu0 3
    %905 = vperm.xlu0 %904, %v60
    %v906 = vpop.permute.xlu0 %905
    %907 = vset.pattern.permute.xlu0 3
    %908 = vperm.xlu0 %907, %v61
    %v909 = vpop.permute.xlu0 %908
    %910 = vset.pattern.permute.xlu0 3
    %911 = vperm.xlu0 %910, %v62
    %v912 = vpop.permute.xlu0 %911
    %913 = vset.pattern.permute.xlu0 3
    %914 = vperm.xlu0 %913, %v63
    %v915 = vpop.permute.xlu0 %914
    %916 = vset.pattern.permute.xlu0 3
    %917 = vperm.xlu0 %916, %v64
    %v918 = vpop.permute.xlu0 %917
    %919 = vset.pattern.permute.xlu0 3
    %920 = vperm.xlu0 %919, %v65
    %v921 = vpop.permute.xlu0 %920
    %922 = vset.pattern.permute.xlu0 3
    %923 = vperm.xlu0 %922, %v66
    %v924 = vpop.permute.xlu0 %923
    %925 = vset.pattern.permute.xlu0 3
    %926 = vperm.xlu0 %925, %v67
    %v927 = vpop.permute.xlu0 %926
    %928 = vset.pattern.permute.xlu0 3
    %929 = vperm.xlu0 %928, %v68
    %v930 = vpop.permute.xlu0 %929
    %931 = vset.pattern.permute.xlu0 3
    %932 = vperm.xlu0 %931, %v69
    %v933 = vpop.permute.xlu0 %932
    %vm934 = vcmp.eq.s32.totalorder %v36, %v840
    %vm935 = vcmp.eq.s32.totalorder %v37, %v840
    %vm936 = vcmp.eq.s32.totalorder %v36, %v843
    %vm937 = vcmp.eq.s32.totalorder %v37, %v843
    %vm938 = vcmp.eq.s32.totalorder %v36, %v846
    %vm939 = vcmp.eq.s32.totalorder %v37, %v846
    %vm940 = vcmp.eq.s32.totalorder %v36, %v849
    %vm941 = vcmp.eq.s32.totalorder %v37, %v849
    %vm942 = vcmp.eq.s32.totalorder %v36, %v852
    %vm943 = vcmp.eq.s32.totalorder %v37, %v852
    %vm944 = vcmp.eq.s32.totalorder %v36, %v855
    %vm945 = vcmp.eq.s32.totalorder %v37, %v855
    %vm946 = vcmp.eq.s32.totalorder %v36, %v858
    %vm947 = vcmp.eq.s32.totalorder %v37, %v858
    %vm948 = vcmp.eq.s32.totalorder %v36, %v861
    %vm949 = vcmp.eq.s32.totalorder %v37, %v861
    %vm950 = vcmp.eq.s32.totalorder %v36, %v864
    %vm951 = vcmp.eq.s32.totalorder %v37, %v864
    %vm952 = vcmp.eq.s32.totalorder %v36, %v867
    %vm953 = vcmp.eq.s32.totalorder %v37, %v867
    %vm954 = vcmp.eq.s32.totalorder %v36, %v870
    %vm955 = vcmp.eq.s32.totalorder %v37, %v870
    %vm956 = vcmp.eq.s32.totalorder %v36, %v873
    %vm957 = vcmp.eq.s32.totalorder %v37, %v873
    %vm958 = vcmp.eq.s32.totalorder %v36, %v876
    %vm959 = vcmp.eq.s32.totalorder %v37, %v876
    %vm960 = vcmp.eq.s32.totalorder %v36, %v879
    %vm961 = vcmp.eq.s32.totalorder %v37, %v879
    %vm962 = vcmp.eq.s32.totalorder %v36, %v882
    %vm963 = vcmp.eq.s32.totalorder %v37, %v882
    %vm964 = vcmp.eq.s32.totalorder %v36, %v885
    %vm965 = vcmp.eq.s32.totalorder %v37, %v885
    %vm966 = vcmp.eq.s32.totalorder %v36, %v888
    %vm967 = vcmp.eq.s32.totalorder %v37, %v888
    %vm968 = vcmp.eq.s32.totalorder %v36, %v891
    %vm969 = vcmp.eq.s32.totalorder %v37, %v891
    %vm970 = vcmp.eq.s32.totalorder %v36, %v894
    %vm971 = vcmp.eq.s32.totalorder %v37, %v894
    %vm972 = vcmp.eq.s32.totalorder %v36, %v897
    %vm973 = vcmp.eq.s32.totalorder %v37, %v897
    %vm974 = vcmp.eq.s32.totalorder %v36, %v900
    %vm975 = vcmp.eq.s32.totalorder %v37, %v900
    %vm976 = vcmp.eq.s32.totalorder %v36, %v903
    %vm977 = vcmp.eq.s32.totalorder %v37, %v903
    %vm978 = vcmp.eq.s32.totalorder %v36, %v906
    %vm979 = vcmp.eq.s32.totalorder %v37, %v906
    %vm980 = vcmp.eq.s32.totalorder %v36, %v909
    %vm981 = vcmp.eq.s32.totalorder %v37, %v909
    %vm982 = vcmp.eq.s32.totalorder %v36, %v912
    %vm983 = vcmp.eq.s32.totalorder %v37, %v912
    %vm984 = vcmp.eq.s32.totalorder %v36, %v915
    %vm985 = vcmp.eq.s32.totalorder %v37, %v915
    %vm986 = vcmp.eq.s32.totalorder %v36, %v918
    %vm987 = vcmp.eq.s32.totalorder %v37, %v918
    %vm988 = vcmp.eq.s32.totalorder %v36, %v921
    %vm989 = vcmp.eq.s32.totalorder %v37, %v921
    %vm990 = vcmp.eq.s32.totalorder %v36, %v924
    %vm991 = vcmp.eq.s32.totalorder %v37, %v924
    %vm992 = vcmp.eq.s32.totalorder %v36, %v927
    %vm993 = vcmp.eq.s32.totalorder %v37, %v927
    %vm994 = vcmp.eq.s32.totalorder %v36, %v930
    %vm995 = vcmp.eq.s32.totalorder %v37, %v930
    %vm996 = vcmp.eq.s32.totalorder %v36, %v933
    %vm997 = vcmp.eq.s32.totalorder %v37, %v933
    %v998 = vsel %vm934, 1.0, 0.0
    %v999 = vsel %vm935, 1.0, 0.0
    %v1000 = vsel %vm936, 1.0, 0.0
    %v1001 = vsel %vm937, 1.0, 0.0
    %v1002 = vsel %vm938, 1.0, 0.0
    %v1003 = vsel %vm939, 1.0, 0.0
    %v1004 = vsel %vm940, 1.0, 0.0
    %v1005 = vsel %vm941, 1.0, 0.0
    %v1006 = vsel %vm942, 1.0, 0.0
    %v1007 = vsel %vm943, 1.0, 0.0
    %v1008 = vsel %vm944, 1.0, 0.0
    %v1009 = vsel %vm945, 1.0, 0.0
    %v1010 = vsel %vm946, 1.0, 0.0
    %v1011 = vsel %vm947, 1.0, 0.0
    %v1012 = vsel %vm948, 1.0, 0.0
    %v1013 = vsel %vm949, 1.0, 0.0
    %v1014 = vsel %vm950, 1.0, 0.0
    %v1015 = vsel %vm951, 1.0, 0.0
    %v1016 = vsel %vm952, 1.0, 0.0
    %v1017 = vsel %vm953, 1.0, 0.0
    %v1018 = vsel %vm954, 1.0, 0.0
    %v1019 = vsel %vm955, 1.0, 0.0
    %v1020 = vsel %vm956, 1.0, 0.0
    %v1021 = vsel %vm957, 1.0, 0.0
    %v1022 = vsel %vm958, 1.0, 0.0
    %v1023 = vsel %vm959, 1.0, 0.0
    %v1024 = vsel %vm960, 1.0, 0.0
    %v1025 = vsel %vm961, 1.0, 0.0
    %v1026 = vsel %vm962, 1.0, 0.0
    %v1027 = vsel %vm963, 1.0, 0.0
    %v1028 = vsel %vm964, 1.0, 0.0
    %v1029 = vsel %vm965, 1.0, 0.0
    %v1030 = vsel %vm966, 1.0, 0.0
    %v1031 = vsel %vm967, 1.0, 0.0
    %v1032 = vsel %vm968, 1.0, 0.0
    %v1033 = vsel %vm969, 1.0, 0.0
    %v1034 = vsel %vm970, 1.0, 0.0
    %v1035 = vsel %vm971, 1.0, 0.0
    %v1036 = vsel %vm972, 1.0, 0.0
    %v1037 = vsel %vm973, 1.0, 0.0
    %v1038 = vsel %vm974, 1.0, 0.0
    %v1039 = vsel %vm975, 1.0, 0.0
    %v1040 = vsel %vm976, 1.0, 0.0
    %v1041 = vsel %vm977, 1.0, 0.0
    %v1042 = vsel %vm978, 1.0, 0.0
    %v1043 = vsel %vm979, 1.0, 0.0
    %v1044 = vsel %vm980, 1.0, 0.0
    %v1045 = vsel %vm981, 1.0, 0.0
    %v1046 = vsel %vm982, 1.0, 0.0
    %v1047 = vsel %vm983, 1.0, 0.0
    %v1048 = vsel %vm984, 1.0, 0.0
    %v1049 = vsel %vm985, 1.0, 0.0
    %v1050 = vsel %vm986, 1.0, 0.0
    %v1051 = vsel %vm987, 1.0, 0.0
    %v1052 = vsel %vm988, 1.0, 0.0
    %v1053 = vsel %vm989, 1.0, 0.0
    %v1054 = vsel %vm990, 1.0, 0.0
    %v1055 = vsel %vm991, 1.0, 0.0
    %v1056 = vsel %vm992, 1.0, 0.0
    %v1057 = vsel %vm993, 1.0, 0.0
    %v1058 = vsel %vm994, 1.0, 0.0
    %v1059 = vsel %vm995, 1.0, 0.0
    %v1060 = vsel %vm996, 1.0, 0.0
    %v1061 = vsel %vm997, 1.0, 0.0
    %v1062 = vpack.c.bf16 %v1000, %v998
    %v1063 = vpack.c.bf16 %v1001, %v999
    %v1064 = vpack.c.bf16 %v1004, %v1002
    %v1065 = vpack.c.bf16 %v1005, %v1003
    %v1066 = vpack.c.bf16 %v1008, %v1006
    %v1067 = vpack.c.bf16 %v1009, %v1007
    %v1068 = vpack.c.bf16 %v1012, %v1010
    %v1069 = vpack.c.bf16 %v1013, %v1011
    %v1070 = vpack.c.bf16 %v1016, %v1014
    %v1071 = vpack.c.bf16 %v1017, %v1015
    %v1072 = vpack.c.bf16 %v1020, %v1018
    %v1073 = vpack.c.bf16 %v1021, %v1019
    %v1074 = vpack.c.bf16 %v1024, %v1022
    %v1075 = vpack.c.bf16 %v1025, %v1023
    %v1076 = vpack.c.bf16 %v1028, %v1026
    %v1077 = vpack.c.bf16 %v1029, %v1027
    %v1078 = vpack.c.bf16 %v1032, %v1030
    %v1079 = vpack.c.bf16 %v1033, %v1031
    %v1080 = vpack.c.bf16 %v1036, %v1034
    %v1081 = vpack.c.bf16 %v1037, %v1035
    %v1082 = vpack.c.bf16 %v1040, %v1038
    %v1083 = vpack.c.bf16 %v1041, %v1039
    %v1084 = vpack.c.bf16 %v1044, %v1042
    %v1085 = vpack.c.bf16 %v1045, %v1043
    %v1086 = vpack.c.bf16 %v1048, %v1046
    %v1087 = vpack.c.bf16 %v1049, %v1047
    %v1088 = vpack.c.bf16 %v1052, %v1050
    %v1089 = vpack.c.bf16 %v1053, %v1051
    %v1090 = vpack.c.bf16 %v1056, %v1054
    %v1091 = vpack.c.bf16 %v1057, %v1055
    %v1092 = vpack.c.bf16 %v1060, %v1058
    %v1093 = vpack.c.bf16 %v1061, %v1059
    %v1094 = vld [vmem:[%s1] sm:$0xff]
    %v1095 = vld [vmem:[%s1 + $0x8] sm:$0xff]
    %v1096 = vld [vmem:[%s1 + $0x10] sm:$0xff]
    %v1097 = vld [vmem:[%s1 + $0x18] sm:$0xff]
    %v1098 = vld [vmem:[%s1 + $0x20] sm:$0xff]
    %v1099 = vld [vmem:[%s1 + $0x28] sm:$0xff]
    %v1100 = vld [vmem:[%s1 + $0x30] sm:$0xff]
    %v1101 = vld [vmem:[%s1 + $0x38] sm:$0xff]
    %v1102 = vld [vmem:[%s1 + $0x40] sm:$0xff]
    %v1103 = vld [vmem:[%s1 + $0x48] sm:$0xff]
    %v1104 = vld [vmem:[%s1 + $0x50] sm:$0xff]
    %v1105 = vld [vmem:[%s1 + $0x58] sm:$0xff]
    %v1106 = vld [vmem:[%s1 + $0x60] sm:$0xff]
    %v1107 = vld [vmem:[%s1 + $0x68] sm:$0xff]
    %v1108 = vld [vmem:[%s1 + $0x70] sm:$0xff]
    %v1109 = vld [vmem:[%s1 + $0x78] sm:$0xff]
    %v1110 = vld [vmem:[%s1 + $0x80] sm:$0xff]
    %v1111 = vld [vmem:[%s1 + $0x88] sm:$0xff]
    %v1112 = vld [vmem:[%s1 + $0x90] sm:$0xff]
    %v1113 = vld [vmem:[%s1 + $0x98] sm:$0xff]
    %v1114 = vld [vmem:[%s1 + $0xa0] sm:$0xff]
    %v1115 = vld [vmem:[%s1 + $0xa8] sm:$0xff]
    %v1116 = vld [vmem:[%s1 + $0xb0] sm:$0xff]
    %v1117 = vld [vmem:[%s1 + $0xb8] sm:$0xff]
    %v1118 = vld [vmem:[%s1 + $0xc0] sm:$0xff]
    %v1119 = vld [vmem:[%s1 + $0xc8] sm:$0xff]
    %v1120 = vld [vmem:[%s1 + $0xd0] sm:$0xff]
    %v1121 = vld [vmem:[%s1 + $0xd8] sm:$0xff]
    %v1122 = vld [vmem:[%s1 + $0xe0] sm:$0xff]
    %v1123 = vld [vmem:[%s1 + $0xe8] sm:$0xff]
    %v1124 = vld [vmem:[%s1 + $0xf0] sm:$0xff]
    %v1125 = vld [vmem:[%s1 + $0xf8] sm:$0xff]
    %v1126 = vpack.c.bf16 %v1095, %v1094
    %v1127 = vpack.c.bf16 %v1097, %v1096
    %v1128 = vpack.c.bf16 %v1099, %v1098
    %v1129 = vpack.c.bf16 %v1101, %v1100
    %v1130 = vpack.c.bf16 %v1103, %v1102
    %v1131 = vpack.c.bf16 %v1105, %v1104
    %v1132 = vpack.c.bf16 %v1107, %v1106
    %v1133 = vpack.c.bf16 %v1109, %v1108
    %v1134 = vpack.c.bf16 %v1111, %v1110
    %v1135 = vpack.c.bf16 %v1113, %v1112
    %v1136 = vpack.c.bf16 %v1115, %v1114
    %v1137 = vpack.c.bf16 %v1117, %v1116
    %v1138 = vpack.c.bf16 %v1119, %v1118
    %v1139 = vpack.c.bf16 %v1121, %v1120
    %v1140 = vpack.c.bf16 %v1123, %v1122
    %v1141 = vpack.c.bf16 %v1125, %v1124
    %1142 = vmatprep.subr.bf16.mxu0 0
    %1143 = vmatpush1.bf16.msra.mxu0 %v1133
    %1144 = vmatprep.subr.bf16.mxu0 0
    %1145 = vmatpush1.bf16.msra.mxu0 %v1132
    %1146 = vmatprep.subr.bf16.mxu0 0
    %1147 = vmatpush1.bf16.msra.mxu0 %v1131
    %1148 = vmatprep.subr.bf16.mxu0 0
    %1149 = vmatpush1.bf16.msra.mxu0 %v1130
    %1150 = vmatprep.subr.bf16.mxu0 0
    %1151 = vmatpush1.bf16.msra.mxu0 %v1129
    %1152 = vmatprep.subr.bf16.mxu0 0
    %1153 = vmatpush1.bf16.msra.mxu0 %v1128
    %1154 = vmatprep.subr.bf16.mxu0 0
    %1155 = vmatpush1.bf16.msra.mxu0 %v1127
    %1156 = vmatprep.subr.bf16.mxu0 0
    %1157 = vmatpush1.bf16.msra.mxu0 %v1126
    %1158 = vmatprep.subr.bf16.mxu0 0
    %1159 = vmatpush2.bf16.msra.mxu0 %v1141
    %1160 = vmatprep.subr.bf16.mxu0 0
    %1161 = vmatpush2.bf16.msra.mxu0 %v1140
    %1162 = vmatprep.subr.bf16.mxu0 0
    %1163 = vmatpush2.bf16.msra.mxu0 %v1139
    %1164 = vmatprep.subr.bf16.mxu0 0
    %1165 = vmatpush2.bf16.msra.mxu0 %v1138
    %1166 = vmatprep.subr.bf16.mxu0 0
    %1167 = vmatpush2.bf16.msra.mxu0 %v1137
    %1168 = vmatprep.subr.bf16.mxu0 0
    %1169 = vmatpush2.bf16.msra.mxu0 %v1136
    %1170 = vmatprep.subr.bf16.mxu0 0
    %1171 = vmatpush2.bf16.msra.mxu0 %v1135
    %1172 = vmatprep.subr.bf16.mxu0 0
    %1173 = vmatpush2.bf16.msra.mxu0 %v1134
    %1174 = vmatprep.mubr.bf16.mxu0 %v295
    %1175 = vmatmul.mubr.bf16.gmra.mxu0 %v294
    %v1176 = vpop.f32.mrf.mxu0
    %v1177 = vadd.f32 0.0, %v1176
    %v1178 = vpop.f32.mrf.mxu0
    %v1179 = vpop.f32.mrf.mxu0
    %v1180 = vadd.f32 0.0, %v1179
    %v1181 = vpop.f32.mrf.mxu0
    %1182 = vmatprep.mubr.bf16.mxu0 %v297
    %1183 = vmatmul.mubr.bf16.gmra.mxu0 %v296
    %v1184 = vpop.f32.mrf.mxu0
    %v1185 = vadd.f32 0.0, %v1184
    %v1186 = vpop.f32.mrf.mxu0
    %v1187 = vpop.f32.mrf.mxu0
    %v1188 = vadd.f32 0.0, %v1187
    %v1189 = vpop.f32.mrf.mxu0
    %1190 = vmatprep.mubr.bf16.mxu0 %v299
    %1191 = vmatmul.mubr.bf16.gmra.mxu0 %v298
    %v1192 = vpop.f32.mrf.mxu0
    %v1193 = vadd.f32 0.0, %v1192
    %v1194 = vpop.f32.mrf.mxu0
    %v1195 = vpop.f32.mrf.mxu0
    %v1196 = vadd.f32 0.0, %v1195
    %v1197 = vpop.f32.mrf.mxu0
    %1198 = vmatprep.mubr.bf16.mxu0 %v301
    %1199 = vmatmul.mubr.bf16.gmra.mxu0 %v300
    %v1200 = vpop.f32.mrf.mxu0
    %v1201 = vadd.f32 0.0, %v1200
    %v1202 = vpop.f32.mrf.mxu0
    %v1203 = vpop.f32.mrf.mxu0
    %v1204 = vadd.f32 0.0, %v1203
    %v1205 = vpop.f32.mrf.mxu0
    %1206 = vmatprep.mubr.bf16.mxu0 %v303
    %1207 = vmatmul.mubr.bf16.gmra.mxu0 %v302
    %v1208 = vpop.f32.mrf.mxu0
    %v1209 = vadd.f32 0.0, %v1208
    %v1210 = vpop.f32.mrf.mxu0
    %v1211 = vpop.f32.mrf.mxu0
    %v1212 = vadd.f32 0.0, %v1211
    %v1213 = vpop.f32.mrf.mxu0
    %1214 = vmatprep.mubr.bf16.mxu0 %v305
    %1215 = vmatmul.mubr.bf16.gmra.mxu0 %v304
    %v1216 = vpop.f32.mrf.mxu0
    %v1217 = vadd.f32 0.0, %v1216
    %v1218 = vpop.f32.mrf.mxu0
    %v1219 = vpop.f32.mrf.mxu0
    %v1220 = vadd.f32 0.0, %v1219
    %v1221 = vpop.f32.mrf.mxu0
    %1222 = vmatprep.mubr.bf16.mxu0 %v307
    %1223 = vmatmul.mubr.bf16.gmra.mxu0 %v306
    %v1224 = vpop.f32.mrf.mxu0
    %v1225 = vadd.f32 0.0, %v1224
    %v1226 = vpop.f32.mrf.mxu0
    %v1227 = vpop.f32.mrf.mxu0
    %v1228 = vadd.f32 0.0, %v1227
    %v1229 = vpop.f32.mrf.mxu0
    %1230 = vmatprep.mubr.bf16.mxu0 %v309
    %1231 = vmatmul.mubr.bf16.gmra.mxu0 %v308
    %v1232 = vpop.f32.mrf.mxu0
    %v1233 = vadd.f32 0.0, %v1232
    %v1234 = vpop.f32.mrf.mxu0
    %v1235 = vpop.f32.mrf.mxu0
    %v1236 = vadd.f32 0.0, %v1235
    %v1237 = vpop.f32.mrf.mxu0
    %1238 = vmatprep.mubr.bf16.mxu0 %v311
    %1239 = vmatmul.mubr.bf16.gmra.mxu0 %v310
    %v1240 = vpop.f32.mrf.mxu0
    %v1241 = vadd.f32 0.0, %v1240
    %v1242 = vpop.f32.mrf.mxu0
    %v1243 = vpop.f32.mrf.mxu0
    %v1244 = vadd.f32 0.0, %v1243
    %v1245 = vpop.f32.mrf.mxu0
    %1246 = vmatprep.mubr.bf16.mxu0 %v313
    %1247 = vmatmul.mubr.bf16.gmra.mxu0 %v312
    %v1248 = vpop.f32.mrf.mxu0
    %v1249 = vadd.f32 0.0, %v1248
    %v1250 = vpop.f32.mrf.mxu0
    %v1251 = vpop.f32.mrf.mxu0
    %v1252 = vadd.f32 0.0, %v1251
    %v1253 = vpop.f32.mrf.mxu0
    %1254 = vmatprep.mubr.bf16.mxu0 %v315
    %1255 = vmatmul.mubr.bf16.gmra.mxu0 %v314
    %v1256 = vpop.f32.mrf.mxu0
    %v1257 = vadd.f32 0.0, %v1256
    %v1258 = vpop.f32.mrf.mxu0
    %v1259 = vpop.f32.mrf.mxu0
    %v1260 = vadd.f32 0.0, %v1259
    %v1261 = vpop.f32.mrf.mxu0
    %1262 = vmatprep.mubr.bf16.mxu0 %v317
    %1263 = vmatmul.mubr.bf16.gmra.mxu0 %v316
    %v1264 = vpop.f32.mrf.mxu0
    %v1265 = vadd.f32 0.0, %v1264
    %v1266 = vpop.f32.mrf.mxu0
    %v1267 = vpop.f32.mrf.mxu0
    %v1268 = vadd.f32 0.0, %v1267
    %v1269 = vpop.f32.mrf.mxu0
    %1270 = vmatprep.mubr.bf16.mxu0 %v319
    %1271 = vmatmul.mubr.bf16.gmra.mxu0 %v318
    %v1272 = vpop.f32.mrf.mxu0
    %v1273 = vadd.f32 0.0, %v1272
    %v1274 = vpop.f32.mrf.mxu0
    %v1275 = vpop.f32.mrf.mxu0
    %v1276 = vadd.f32 0.0, %v1275
    %v1277 = vpop.f32.mrf.mxu0
    %1278 = vmatprep.mubr.bf16.mxu0 %v321
    %1279 = vmatmul.mubr.bf16.gmra.mxu0 %v320
    %v1280 = vpop.f32.mrf.mxu0
    %v1281 = vadd.f32 0.0, %v1280
    %v1282 = vpop.f32.mrf.mxu0
    %v1283 = vpop.f32.mrf.mxu0
    %v1284 = vadd.f32 0.0, %v1283
    %v1285 = vpop.f32.mrf.mxu0
    %1286 = vmatprep.mubr.bf16.mxu0 %v323
    %1287 = vmatmul.mubr.bf16.gmra.mxu0 %v322
    %v1288 = vpop.f32.mrf.mxu0
    %v1289 = vadd.f32 0.0, %v1288
    %v1290 = vpop.f32.mrf.mxu0
    %v1291 = vpop.f32.mrf.mxu0
    %v1292 = vadd.f32 0.0, %v1291
    %v1293 = vpop.f32.mrf.mxu0
    %1294 = vmatprep.mubr.bf16.mxu0 %v325
    %1295 = vmatmul.mubr.bf16.gmra.mxu0 %v324
    %v1296 = vpop.f32.mrf.mxu0
    %v1297 = vadd.f32 0.0, %v1296
    %v1298 = vpop.f32.mrf.mxu0
    %v1299 = vpop.f32.mrf.mxu0
    %v1300 = vadd.f32 0.0, %v1299
    %v1301 = vpop.f32.mrf.mxu0
    %1302 = vdwg.mxu0
    %v1303 = vmul.f32 %v1177, %v1177
    %v1304 = vmul.f32 %v1180, %v1180
    %v1305 = vmul.f32 %v1185, %v1185
    %v1306 = vmul.f32 %v1188, %v1188
    %v1307 = vmul.f32 %v1193, %v1193
    %v1308 = vmul.f32 %v1196, %v1196
    %v1309 = vmul.f32 %v1201, %v1201
    %v1310 = vmul.f32 %v1204, %v1204
    %v1311 = vmul.f32 %v1209, %v1209
    %v1312 = vmul.f32 %v1212, %v1212
    %v1313 = vmul.f32 %v1217, %v1217
    %v1314 = vmul.f32 %v1220, %v1220
    %v1315 = vmul.f32 %v1225, %v1225
    %v1316 = vmul.f32 %v1228, %v1228
    %v1317 = vmul.f32 %v1233, %v1233
    %v1318 = vmul.f32 %v1236, %v1236
    %v1319 = vmul.f32 %v1241, %v1241
    %v1320 = vmul.f32 %v1244, %v1244
    %v1321 = vmul.f32 %v1249, %v1249
    %v1322 = vmul.f32 %v1252, %v1252
    %v1323 = vmul.f32 %v1257, %v1257
    %v1324 = vmul.f32 %v1260, %v1260
    %v1325 = vmul.f32 %v1265, %v1265
    %v1326 = vmul.f32 %v1268, %v1268
    %v1327 = vmul.f32 %v1273, %v1273
    %v1328 = vmul.f32 %v1276, %v1276
    %v1329 = vmul.f32 %v1281, %v1281
    %v1330 = vmul.f32 %v1284, %v1284
    %v1331 = vmul.f32 %v1289, %v1289
    %v1332 = vmul.f32 %v1292, %v1292
    %v1333 = vmul.f32 %v1297, %v1297
    %v1334 = vmul.f32 %v1300, %v1300
    %1335 = vmatprep.subr.bf16.mxu0 0
    %1336 = vmatpush1.bf16.msra.mxu0 %v1133
    %1337 = vmatprep.subr.bf16.mxu0 0
    %1338 = vmatpush1.bf16.msra.mxu0 %v1132
    %1339 = vmatprep.subr.bf16.mxu0 0
    %1340 = vmatpush1.bf16.msra.mxu0 %v1131
    %1341 = vmatprep.subr.bf16.mxu0 0
    %1342 = vmatpush1.bf16.msra.mxu0 %v1130
    %1343 = vmatprep.subr.bf16.mxu0 0
    %1344 = vmatpush1.bf16.msra.mxu0 %v1129
    %1345 = vmatprep.subr.bf16.mxu0 0
    %1346 = vmatpush1.bf16.msra.mxu0 %v1128
    %1347 = vmatprep.subr.bf16.mxu0 0
    %1348 = vmatpush1.bf16.msra.mxu0 %v1127
    %1349 = vmatprep.subr.bf16.mxu0 0
    %1350 = vmatpush1.bf16.msra.mxu0 %v1126
    %1351 = vmatprep.subr.bf16.mxu0 0
    %1352 = vmatpush2.bf16.msra.mxu0 %v1141
    %1353 = vmatprep.subr.bf16.mxu0 0
    %1354 = vmatpush2.bf16.msra.mxu0 %v1140
    %1355 = vmatprep.subr.bf16.mxu0 0
    %1356 = vmatpush2.bf16.msra.mxu0 %v1139
    %1357 = vmatprep.subr.bf16.mxu0 0
    %1358 = vmatpush2.bf16.msra.mxu0 %v1138
    %1359 = vmatprep.subr.bf16.mxu0 0
    %1360 = vmatpush2.bf16.msra.mxu0 %v1137
    %1361 = vmatprep.subr.bf16.mxu0 0
    %1362 = vmatpush2.bf16.msra.mxu0 %v1136
    %1363 = vmatprep.subr.bf16.mxu0 0
    %1364 = vmatpush2.bf16.msra.mxu0 %v1135
    %1365 = vmatprep.subr.bf16.mxu0 0
    %1366 = vmatpush2.bf16.msra.mxu0 %v1134
    %1367 = vmatprep.mubr.bf16.mxu0 %v551
    %1368 = vmatmul.mubr.bf16.gmra.mxu0 %v550
    %v1369 = vpop.f32.mrf.mxu0
    %v1370 = vadd.f32 0.0, %v1369
    %v1371 = vpop.f32.mrf.mxu0
    %v1372 = vpop.f32.mrf.mxu0
    %v1373 = vadd.f32 0.0, %v1372
    %v1374 = vpop.f32.mrf.mxu0
    %1375 = vmatprep.mubr.bf16.mxu0 %v553
    %1376 = vmatmul.mubr.bf16.gmra.mxu0 %v552
    %v1377 = vpop.f32.mrf.mxu0
    %v1378 = vadd.f32 0.0, %v1377
    %v1379 = vpop.f32.mrf.mxu0
    %v1380 = vpop.f32.mrf.mxu0
    %v1381 = vadd.f32 0.0, %v1380
    %v1382 = vpop.f32.mrf.mxu0
    %1383 = vmatprep.mubr.bf16.mxu0 %v555
    %1384 = vmatmul.mubr.bf16.gmra.mxu0 %v554
    %v1385 = vpop.f32.mrf.mxu0
    %v1386 = vadd.f32 0.0, %v1385
    %v1387 = vpop.f32.mrf.mxu0
    %v1388 = vpop.f32.mrf.mxu0
    %v1389 = vadd.f32 0.0, %v1388
    %v1390 = vpop.f32.mrf.mxu0
    %1391 = vmatprep.mubr.bf16.mxu0 %v557
    %1392 = vmatmul.mubr.bf16.gmra.mxu0 %v556
    %v1393 = vpop.f32.mrf.mxu0
    %v1394 = vadd.f32 0.0, %v1393
    %v1395 = vpop.f32.mrf.mxu0
    %v1396 = vpop.f32.mrf.mxu0
    %v1397 = vadd.f32 0.0, %v1396
    %v1398 = vpop.f32.mrf.mxu0
    %1399 = vmatprep.mubr.bf16.mxu0 %v559
    %1400 = vmatmul.mubr.bf16.gmra.mxu0 %v558
    %v1401 = vpop.f32.mrf.mxu0
    %v1402 = vadd.f32 0.0, %v1401
    %v1403 = vpop.f32.mrf.mxu0
    %v1404 = vpop.f32.mrf.mxu0
    %v1405 = vadd.f32 0.0, %v1404
    %v1406 = vpop.f32.mrf.mxu0
    %1407 = vmatprep.mubr.bf16.mxu0 %v561
    %1408 = vmatmul.mubr.bf16.gmra.mxu0 %v560
    %v1409 = vpop.f32.mrf.mxu0
    %v1410 = vadd.f32 0.0, %v1409
    %v1411 = vpop.f32.mrf.mxu0
    %v1412 = vpop.f32.mrf.mxu0
    %v1413 = vadd.f32 0.0, %v1412
    %v1414 = vpop.f32.mrf.mxu0
    %1415 = vmatprep.mubr.bf16.mxu0 %v563
    %1416 = vmatmul.mubr.bf16.gmra.mxu0 %v562
    %v1417 = vpop.f32.mrf.mxu0
    %v1418 = vadd.f32 0.0, %v1417
    %v1419 = vpop.f32.mrf.mxu0
    %v1420 = vpop.f32.mrf.mxu0
    %v1421 = vadd.f32 0.0, %v1420
    %v1422 = vpop.f32.mrf.mxu0
    %1423 = vmatprep.mubr.bf16.mxu0 %v565
    %1424 = vmatmul.mubr.bf16.gmra.mxu0 %v564
    %v1425 = vpop.f32.mrf.mxu0
    %v1426 = vadd.f32 0.0, %v1425
    %v1427 = vpop.f32.mrf.mxu0
    %v1428 = vpop.f32.mrf.mxu0
    %v1429 = vadd.f32 0.0, %v1428
    %v1430 = vpop.f32.mrf.mxu0
    %1431 = vmatprep.mubr.bf16.mxu0 %v567
    %1432 = vmatmul.mubr.bf16.gmra.mxu0 %v566
    %v1433 = vpop.f32.mrf.mxu0
    %v1434 = vadd.f32 0.0, %v1433
    %v1435 = vpop.f32.mrf.mxu0
    %v1436 = vpop.f32.mrf.mxu0
    %v1437 = vadd.f32 0.0, %v1436
    %v1438 = vpop.f32.mrf.mxu0
    %1439 = vmatprep.mubr.bf16.mxu0 %v569
    %1440 = vmatmul.mubr.bf16.gmra.mxu0 %v568
    %v1441 = vpop.f32.mrf.mxu0
    %v1442 = vadd.f32 0.0, %v1441
    %v1443 = vpop.f32.mrf.mxu0
    %v1444 = vpop.f32.mrf.mxu0
    %v1445 = vadd.f32 0.0, %v1444
    %v1446 = vpop.f32.mrf.mxu0
    %1447 = vmatprep.mubr.bf16.mxu0 %v571
    %1448 = vmatmul.mubr.bf16.gmra.mxu0 %v570
    %v1449 = vpop.f32.mrf.mxu0
    %v1450 = vadd.f32 0.0, %v1449
    %v1451 = vpop.f32.mrf.mxu0
    %v1452 = vpop.f32.mrf.mxu0
    %v1453 = vadd.f32 0.0, %v1452
    %v1454 = vpop.f32.mrf.mxu0
    %1455 = vmatprep.mubr.bf16.mxu0 %v573
    %1456 = vmatmul.mubr.bf16.gmra.mxu0 %v572
    %v1457 = vpop.f32.mrf.mxu0
    %v1458 = vadd.f32 0.0, %v1457
    %v1459 = vpop.f32.mrf.mxu0
    %v1460 = vpop.f32.mrf.mxu0
    %v1461 = vadd.f32 0.0, %v1460
    %v1462 = vpop.f32.mrf.mxu0
    %1463 = vmatprep.mubr.bf16.mxu0 %v575
    %1464 = vmatmul.mubr.bf16.gmra.mxu0 %v574
    %v1465 = vpop.f32.mrf.mxu0
    %v1466 = vadd.f32 0.0, %v1465
    %v1467 = vpop.f32.mrf.mxu0
    %v1468 = vpop.f32.mrf.mxu0
    %v1469 = vadd.f32 0.0, %v1468
    %v1470 = vpop.f32.mrf.mxu0
    %1471 = vmatprep.mubr.bf16.mxu0 %v577
    %1472 = vmatmul.mubr.bf16.gmra.mxu0 %v576
    %v1473 = vpop.f32.mrf.mxu0
    %v1474 = vadd.f32 0.0, %v1473
    %v1475 = vpop.f32.mrf.mxu0
    %v1476 = vpop.f32.mrf.mxu0
    %v1477 = vadd.f32 0.0, %v1476
    %v1478 = vpop.f32.mrf.mxu0
    %1479 = vmatprep.mubr.bf16.mxu0 %v579
    %1480 = vmatmul.mubr.bf16.gmra.mxu0 %v578
    %v1481 = vpop.f32.mrf.mxu0
    %v1482 = vadd.f32 0.0, %v1481
    %v1483 = vpop.f32.mrf.mxu0
    %v1484 = vpop.f32.mrf.mxu0
    %v1485 = vadd.f32 0.0, %v1484
    %v1486 = vpop.f32.mrf.mxu0
    %1487 = vmatprep.mubr.bf16.mxu0 %v581
    %1488 = vmatmul.mubr.bf16.gmra.mxu0 %v580
    %v1489 = vpop.f32.mrf.mxu0
    %v1490 = vadd.f32 0.0, %v1489
    %v1491 = vpop.f32.mrf.mxu0
    %v1492 = vpop.f32.mrf.mxu0
    %v1493 = vadd.f32 0.0, %v1492
    %v1494 = vpop.f32.mrf.mxu0
    %1495 = vdwg.mxu0
    %v1496 = vadd.f32 %v1177, %v1370
    %v1497 = vadd.f32 %v1180, %v1373
    %v1498 = vadd.f32 %v1185, %v1378
    %v1499 = vadd.f32 %v1188, %v1381
    %v1500 = vadd.f32 %v1193, %v1386
    %v1501 = vadd.f32 %v1196, %v1389
    %v1502 = vadd.f32 %v1201, %v1394
    %v1503 = vadd.f32 %v1204, %v1397
    %v1504 = vadd.f32 %v1209, %v1402
    %v1505 = vadd.f32 %v1212, %v1405
    %v1506 = vadd.f32 %v1217, %v1410
    %v1507 = vadd.f32 %v1220, %v1413
    %v1508 = vadd.f32 %v1225, %v1418
    %v1509 = vadd.f32 %v1228, %v1421
    %v1510 = vadd.f32 %v1233, %v1426
    %v1511 = vadd.f32 %v1236, %v1429
    %v1512 = vadd.f32 %v1241, %v1434
    %v1513 = vadd.f32 %v1244, %v1437
    %v1514 = vadd.f32 %v1249, %v1442
    %v1515 = vadd.f32 %v1252, %v1445
    %v1516 = vadd.f32 %v1257, %v1450
    %v1517 = vadd.f32 %v1260, %v1453
    %v1518 = vadd.f32 %v1265, %v1458
    %v1519 = vadd.f32 %v1268, %v1461
    %v1520 = vadd.f32 %v1273, %v1466
    %v1521 = vadd.f32 %v1276, %v1469
    %v1522 = vadd.f32 %v1281, %v1474
    %v1523 = vadd.f32 %v1284, %v1477
    %v1524 = vadd.f32 %v1289, %v1482
    %v1525 = vadd.f32 %v1292, %v1485
    %v1526 = vadd.f32 %v1297, %v1490
    %v1527 = vadd.f32 %v1300, %v1493
    %v1528 = vmul.f32 %v1370, %v1370
    %v1529 = vmul.f32 %v1373, %v1373
    %v1530 = vmul.f32 %v1378, %v1378
    %v1531 = vmul.f32 %v1381, %v1381
    %v1532 = vmul.f32 %v1386, %v1386
    %v1533 = vmul.f32 %v1389, %v1389
    %v1534 = vmul.f32 %v1394, %v1394
    %v1535 = vmul.f32 %v1397, %v1397
    %v1536 = vmul.f32 %v1402, %v1402
    %v1537 = vmul.f32 %v1405, %v1405
    %v1538 = vmul.f32 %v1410, %v1410
    %v1539 = vmul.f32 %v1413, %v1413
    %v1540 = vmul.f32 %v1418, %v1418
    %v1541 = vmul.f32 %v1421, %v1421
    %v1542 = vmul.f32 %v1426, %v1426
    %v1543 = vmul.f32 %v1429, %v1429
    %v1544 = vmul.f32 %v1434, %v1434
    %v1545 = vmul.f32 %v1437, %v1437
    %v1546 = vmul.f32 %v1442, %v1442
    %v1547 = vmul.f32 %v1445, %v1445
    %v1548 = vmul.f32 %v1450, %v1450
    %v1549 = vmul.f32 %v1453, %v1453
    %v1550 = vmul.f32 %v1458, %v1458
    %v1551 = vmul.f32 %v1461, %v1461
    %v1552 = vmul.f32 %v1466, %v1466
    %v1553 = vmul.f32 %v1469, %v1469
    %v1554 = vmul.f32 %v1474, %v1474
    %v1555 = vmul.f32 %v1477, %v1477
    %v1556 = vmul.f32 %v1482, %v1482
    %v1557 = vmul.f32 %v1485, %v1485
    %v1558 = vmul.f32 %v1490, %v1490
    %v1559 = vmul.f32 %v1493, %v1493
    %v1560 = vadd.f32 %v1303, %v1528
    %v1561 = vadd.f32 %v1304, %v1529
    %v1562 = vadd.f32 %v1305, %v1530
    %v1563 = vadd.f32 %v1306, %v1531
    %v1564 = vadd.f32 %v1307, %v1532
    %v1565 = vadd.f32 %v1308, %v1533
    %v1566 = vadd.f32 %v1309, %v1534
    %v1567 = vadd.f32 %v1310, %v1535
    %v1568 = vadd.f32 %v1311, %v1536
    %v1569 = vadd.f32 %v1312, %v1537
    %v1570 = vadd.f32 %v1313, %v1538
    %v1571 = vadd.f32 %v1314, %v1539
    %v1572 = vadd.f32 %v1315, %v1540
    %v1573 = vadd.f32 %v1316, %v1541
    %v1574 = vadd.f32 %v1317, %v1542
    %v1575 = vadd.f32 %v1318, %v1543
    %v1576 = vadd.f32 %v1319, %v1544
    %v1577 = vadd.f32 %v1320, %v1545
    %v1578 = vadd.f32 %v1321, %v1546
    %v1579 = vadd.f32 %v1322, %v1547
    %v1580 = vadd.f32 %v1323, %v1548
    %v1581 = vadd.f32 %v1324, %v1549
    %v1582 = vadd.f32 %v1325, %v1550
    %v1583 = vadd.f32 %v1326, %v1551
    %v1584 = vadd.f32 %v1327, %v1552
    %v1585 = vadd.f32 %v1328, %v1553
    %v1586 = vadd.f32 %v1329, %v1554
    %v1587 = vadd.f32 %v1330, %v1555
    %v1588 = vadd.f32 %v1331, %v1556
    %v1589 = vadd.f32 %v1332, %v1557
    %v1590 = vadd.f32 %v1333, %v1558
    %v1591 = vadd.f32 %v1334, %v1559
    %v1592 = vmax.f32 %v1177, %v1370
    %v1593 = vmax.f32 %v1180, %v1373
    %v1594 = vmax.f32 %v1185, %v1378
    %v1595 = vmax.f32 %v1188, %v1381
    %v1596 = vmax.f32 %v1193, %v1386
    %v1597 = vmax.f32 %v1196, %v1389
    %v1598 = vmax.f32 %v1201, %v1394
    %v1599 = vmax.f32 %v1204, %v1397
    %v1600 = vmax.f32 %v1209, %v1402
    %v1601 = vmax.f32 %v1212, %v1405
    %v1602 = vmax.f32 %v1217, %v1410
    %v1603 = vmax.f32 %v1220, %v1413
    %v1604 = vmax.f32 %v1225, %v1418
    %v1605 = vmax.f32 %v1228, %v1421
    %v1606 = vmax.f32 %v1233, %v1426
    %v1607 = vmax.f32 %v1236, %v1429
    %v1608 = vmax.f32 %v1241, %v1434
    %v1609 = vmax.f32 %v1244, %v1437
    %v1610 = vmax.f32 %v1249, %v1442
    %v1611 = vmax.f32 %v1252, %v1445
    %v1612 = vmax.f32 %v1257, %v1450
    %v1613 = vmax.f32 %v1260, %v1453
    %v1614 = vmax.f32 %v1265, %v1458
    %v1615 = vmax.f32 %v1268, %v1461
    %v1616 = vmax.f32 %v1273, %v1466
    %v1617 = vmax.f32 %v1276, %v1469
    %v1618 = vmax.f32 %v1281, %v1474
    %v1619 = vmax.f32 %v1284, %v1477
    %v1620 = vmax.f32 %v1289, %v1482
    %v1621 = vmax.f32 %v1292, %v1485
    %v1622 = vmax.f32 %v1297, %v1490
    %v1623 = vmax.f32 %v1300, %v1493
    %v1624 = vmin.f32 %v1177, %v1370
    %v1625 = vmin.f32 %v1180, %v1373
    %v1626 = vmin.f32 %v1185, %v1378
    %v1627 = vmin.f32 %v1188, %v1381
    %v1628 = vmin.f32 %v1193, %v1386
    %v1629 = vmin.f32 %v1196, %v1389
    %v1630 = vmin.f32 %v1201, %v1394
    %v1631 = vmin.f32 %v1204, %v1397
    %v1632 = vmin.f32 %v1209, %v1402
    %v1633 = vmin.f32 %v1212, %v1405
    %v1634 = vmin.f32 %v1217, %v1410
    %v1635 = vmin.f32 %v1220, %v1413
    %v1636 = vmin.f32 %v1225, %v1418
    %v1637 = vmin.f32 %v1228, %v1421
    %v1638 = vmin.f32 %v1233, %v1426
    %v1639 = vmin.f32 %v1236, %v1429
    %v1640 = vmin.f32 %v1241, %v1434
    %v1641 = vmin.f32 %v1244, %v1437
    %v1642 = vmin.f32 %v1249, %v1442
    %v1643 = vmin.f32 %v1252, %v1445
    %v1644 = vmin.f32 %v1257, %v1450
    %v1645 = vmin.f32 %v1260, %v1453
    %v1646 = vmin.f32 %v1265, %v1458
    %v1647 = vmin.f32 %v1268, %v1461
    %v1648 = vmin.f32 %v1273, %v1466
    %v1649 = vmin.f32 %v1276, %v1469
    %v1650 = vmin.f32 %v1281, %v1474
    %v1651 = vmin.f32 %v1284, %v1477
    %v1652 = vmin.f32 %v1289, %v1482
    %v1653 = vmin.f32 %v1292, %v1485
    %v1654 = vmin.f32 %v1297, %v1490
    %v1655 = vmin.f32 %v1300, %v1493
    %1656 = vmatprep.subr.bf16.mxu0 0
    %1657 = vmatpush1.bf16.msra.mxu0 %v1133
    %1658 = vmatprep.subr.bf16.mxu0 0
    %1659 = vmatpush1.bf16.msra.mxu0 %v1132
    %1660 = vmatprep.subr.bf16.mxu0 0
    %1661 = vmatpush1.bf16.msra.mxu0 %v1131
    %1662 = vmatprep.subr.bf16.mxu0 0
    %1663 = vmatpush1.bf16.msra.mxu0 %v1130
    %1664 = vmatprep.subr.bf16.mxu0 0
    %1665 = vmatpush1.bf16.msra.mxu0 %v1129
    %1666 = vmatprep.subr.bf16.mxu0 0
    %1667 = vmatpush1.bf16.msra.mxu0 %v1128
    %1668 = vmatprep.subr.bf16.mxu0 0
    %1669 = vmatpush1.bf16.msra.mxu0 %v1127
    %1670 = vmatprep.subr.bf16.mxu0 0
    %1671 = vmatpush1.bf16.msra.mxu0 %v1126
    %1672 = vmatprep.subr.bf16.mxu0 0
    %1673 = vmatpush2.bf16.msra.mxu0 %v1141
    %1674 = vmatprep.subr.bf16.mxu0 0
    %1675 = vmatpush2.bf16.msra.mxu0 %v1140
    %1676 = vmatprep.subr.bf16.mxu0 0
    %1677 = vmatpush2.bf16.msra.mxu0 %v1139
    %1678 = vmatprep.subr.bf16.mxu0 0
    %1679 = vmatpush2.bf16.msra.mxu0 %v1138
    %1680 = vmatprep.subr.bf16.mxu0 0
    %1681 = vmatpush2.bf16.msra.mxu0 %v1137
    %1682 = vmatprep.subr.bf16.mxu0 0
    %1683 = vmatpush2.bf16.msra.mxu0 %v1136
    %1684 = vmatprep.subr.bf16.mxu0 0
    %1685 = vmatpush2.bf16.msra.mxu0 %v1135
    %1686 = vmatprep.subr.bf16.mxu0 0
    %1687 = vmatpush2.bf16.msra.mxu0 %v1134
    %1688 = vmatprep.mubr.bf16.mxu0 %v807
    %1689 = vmatmul.mubr.bf16.gmra.mxu0 %v806
    %v1690 = vpop.f32.mrf.mxu0
    %v1691 = vadd.f32 0.0, %v1690
    %v1692 = vpop.f32.mrf.mxu0
    %v1693 = vpop.f32.mrf.mxu0
    %v1694 = vadd.f32 0.0, %v1693
    %v1695 = vpop.f32.mrf.mxu0
    %1696 = vmatprep.mubr.bf16.mxu0 %v809
    %1697 = vmatmul.mubr.bf16.gmra.mxu0 %v808
    %v1698 = vpop.f32.mrf.mxu0
    %v1699 = vadd.f32 0.0, %v1698
    %v1700 = vpop.f32.mrf.mxu0
    %v1701 = vpop.f32.mrf.mxu0
    %v1702 = vadd.f32 0.0, %v1701
    %v1703 = vpop.f32.mrf.mxu0
    %1704 = vmatprep.mubr.bf16.mxu0 %v811
    %1705 = vmatmul.mubr.bf16.gmra.mxu0 %v810
    %v1706 = vpop.f32.mrf.mxu0
    %v1707 = vadd.f32 0.0, %v1706
    %v1708 = vpop.f32.mrf.mxu0
    %v1709 = vpop.f32.mrf.mxu0
    %v1710 = vadd.f32 0.0, %v1709
    %v1711 = vpop.f32.mrf.mxu0
    %1712 = vmatprep.mubr.bf16.mxu0 %v813
    %1713 = vmatmul.mubr.bf16.gmra.mxu0 %v812
    %v1714 = vpop.f32.mrf.mxu0
    %v1715 = vadd.f32 0.0, %v1714
    %v1716 = vpop.f32.mrf.mxu0
    %v1717 = vpop.f32.mrf.mxu0
    %v1718 = vadd.f32 0.0, %v1717
    %v1719 = vpop.f32.mrf.mxu0
    %1720 = vmatprep.mubr.bf16.mxu0 %v815
    %1721 = vmatmul.mubr.bf16.gmra.mxu0 %v814
    %v1722 = vpop.f32.mrf.mxu0
    %v1723 = vadd.f32 0.0, %v1722
    %v1724 = vpop.f32.mrf.mxu0
    %v1725 = vpop.f32.mrf.mxu0
    %v1726 = vadd.f32 0.0, %v1725
    %v1727 = vpop.f32.mrf.mxu0
    %1728 = vmatprep.mubr.bf16.mxu0 %v817
    %1729 = vmatmul.mubr.bf16.gmra.mxu0 %v816
    %v1730 = vpop.f32.mrf.mxu0
    %v1731 = vadd.f32 0.0, %v1730
    %v1732 = vpop.f32.mrf.mxu0
    %v1733 = vpop.f32.mrf.mxu0
    %v1734 = vadd.f32 0.0, %v1733
    %v1735 = vpop.f32.mrf.mxu0
    %1736 = vmatprep.mubr.bf16.mxu0 %v819
    %1737 = vmatmul.mubr.bf16.gmra.mxu0 %v818
    %v1738 = vpop.f32.mrf.mxu0
    %v1739 = vadd.f32 0.0, %v1738
    %v1740 = vpop.f32.mrf.mxu0
    %v1741 = vpop.f32.mrf.mxu0
    %v1742 = vadd.f32 0.0, %v1741
    %v1743 = vpop.f32.mrf.mxu0
    %1744 = vmatprep.mubr.bf16.mxu0 %v821
    %1745 = vmatmul.mubr.bf16.gmra.mxu0 %v820
    %v1746 = vpop.f32.mrf.mxu0
    %v1747 = vadd.f32 0.0, %v1746
    %v1748 = vpop.f32.mrf.mxu0
    %v1749 = vpop.f32.mrf.mxu0
    %v1750 = vadd.f32 0.0, %v1749
    %v1751 = vpop.f32.mrf.mxu0
    %1752 = vmatprep.mubr.bf16.mxu0 %v823
    %1753 = vmatmul.mubr.bf16.gmra.mxu0 %v822
    %v1754 = vpop.f32.mrf.mxu0
    %v1755 = vadd.f32 0.0, %v1754
    %v1756 = vpop.f32.mrf.mxu0
    %v1757 = vpop.f32.mrf.mxu0
    %v1758 = vadd.f32 0.0, %v1757
    %v1759 = vpop.f32.mrf.mxu0
    %1760 = vmatprep.mubr.bf16.mxu0 %v825
    %1761 = vmatmul.mubr.bf16.gmra.mxu0 %v824
    %v1762 = vpop.f32.mrf.mxu0
    %v1763 = vadd.f32 0.0, %v1762
    %v1764 = vpop.f32.mrf.mxu0
    %v1765 = vpop.f32.mrf.mxu0
    %v1766 = vadd.f32 0.0, %v1765
    %v1767 = vpop.f32.mrf.mxu0
    %1768 = vmatprep.mubr.bf16.mxu0 %v827
    %1769 = vmatmul.mubr.bf16.gmra.mxu0 %v826
    %v1770 = vpop.f32.mrf.mxu0
    %v1771 = vadd.f32 0.0, %v1770
    %v1772 = vpop.f32.mrf.mxu0
    %v1773 = vpop.f32.mrf.mxu0
    %v1774 = vadd.f32 0.0, %v1773
    %v1775 = vpop.f32.mrf.mxu0
    %1776 = vmatprep.mubr.bf16.mxu0 %v829
    %1777 = vmatmul.mubr.bf16.gmra.mxu0 %v828
    %v1778 = vpop.f32.mrf.mxu0
    %v1779 = vadd.f32 0.0, %v1778
    %v1780 = vpop.f32.mrf.mxu0
    %v1781 = vpop.f32.mrf.mxu0
    %v1782 = vadd.f32 0.0, %v1781
    %v1783 = vpop.f32.mrf.mxu0
    %1784 = vmatprep.mubr.bf16.mxu0 %v831
    %1785 = vmatmul.mubr.bf16.gmra.mxu0 %v830
    %v1786 = vpop.f32.mrf.mxu0
    %v1787 = vadd.f32 0.0, %v1786
    %v1788 = vpop.f32.mrf.mxu0
    %v1789 = vpop.f32.mrf.mxu0
    %v1790 = vadd.f32 0.0, %v1789
    %v1791 = vpop.f32.mrf.mxu0
    %1792 = vmatprep.mubr.bf16.mxu0 %v833
    %1793 = vmatmul.mubr.bf16.gmra.mxu0 %v832
    %v1794 = vpop.f32.mrf.mxu0
    %v1795 = vadd.f32 0.0, %v1794
    %v1796 = vpop.f32.mrf.mxu0
    %v1797 = vpop.f32.mrf.mxu0
    %v1798 = vadd.f32 0.0, %v1797
    %v1799 = vpop.f32.mrf.mxu0
    %1800 = vmatprep.mubr.bf16.mxu0 %v835
    %1801 = vmatmul.mubr.bf16.gmra.mxu0 %v834
    %v1802 = vpop.f32.mrf.mxu0
    %v1803 = vadd.f32 0.0, %v1802
    %v1804 = vpop.f32.mrf.mxu0
    %v1805 = vpop.f32.mrf.mxu0
    %v1806 = vadd.f32 0.0, %v1805
    %v1807 = vpop.f32.mrf.mxu0
    %1808 = vmatprep.mubr.bf16.mxu0 %v837
    %1809 = vmatmul.mubr.bf16.gmra.mxu0 %v836
    %v1810 = vpop.f32.mrf.mxu0
    %v1811 = vadd.f32 0.0, %v1810
    %v1812 = vpop.f32.mrf.mxu0
    %v1813 = vpop.f32.mrf.mxu0
    %v1814 = vadd.f32 0.0, %v1813
    %v1815 = vpop.f32.mrf.mxu0
    %1816 = vdwg.mxu0
    %v1817 = vadd.f32 %v1496, %v1691
    %v1818 = vadd.f32 %v1497, %v1694
    %v1819 = vadd.f32 %v1498, %v1699
    %v1820 = vadd.f32 %v1499, %v1702
    %v1821 = vadd.f32 %v1500, %v1707
    %v1822 = vadd.f32 %v1501, %v1710
    %v1823 = vadd.f32 %v1502, %v1715
    %v1824 = vadd.f32 %v1503, %v1718
    %v1825 = vadd.f32 %v1504, %v1723
    %v1826 = vadd.f32 %v1505, %v1726
    %v1827 = vadd.f32 %v1506, %v1731
    %v1828 = vadd.f32 %v1507, %v1734
    %v1829 = vadd.f32 %v1508, %v1739
    %v1830 = vadd.f32 %v1509, %v1742
    %v1831 = vadd.f32 %v1510, %v1747
    %v1832 = vadd.f32 %v1511, %v1750
    %v1833 = vadd.f32 %v1512, %v1755
    %v1834 = vadd.f32 %v1513, %v1758
    %v1835 = vadd.f32 %v1514, %v1763
    %v1836 = vadd.f32 %v1515, %v1766
    %v1837 = vadd.f32 %v1516, %v1771
    %v1838 = vadd.f32 %v1517, %v1774
    %v1839 = vadd.f32 %v1518, %v1779
    %v1840 = vadd.f32 %v1519, %v1782
    %v1841 = vadd.f32 %v1520, %v1787
    %v1842 = vadd.f32 %v1521, %v1790
    %v1843 = vadd.f32 %v1522, %v1795
    %v1844 = vadd.f32 %v1523, %v1798
    %v1845 = vadd.f32 %v1524, %v1803
    %v1846 = vadd.f32 %v1525, %v1806
    %v1847 = vadd.f32 %v1526, %v1811
    %v1848 = vadd.f32 %v1527, %v1814
    %v1849 = vmul.f32 %v1691, %v1691
    %v1850 = vmul.f32 %v1694, %v1694
    %v1851 = vmul.f32 %v1699, %v1699
    %v1852 = vmul.f32 %v1702, %v1702
    %v1853 = vmul.f32 %v1707, %v1707
    %v1854 = vmul.f32 %v1710, %v1710
    %v1855 = vmul.f32 %v1715, %v1715
    %v1856 = vmul.f32 %v1718, %v1718
    %v1857 = vmul.f32 %v1723, %v1723
    %v1858 = vmul.f32 %v1726, %v1726
    %v1859 = vmul.f32 %v1731, %v1731
    %v1860 = vmul.f32 %v1734, %v1734
    %v1861 = vmul.f32 %v1739, %v1739
    %v1862 = vmul.f32 %v1742, %v1742
    %v1863 = vmul.f32 %v1747, %v1747
    %v1864 = vmul.f32 %v1750, %v1750
    %v1865 = vmul.f32 %v1755, %v1755
    %v1866 = vmul.f32 %v1758, %v1758
    %v1867 = vmul.f32 %v1763, %v1763
    %v1868 = vmul.f32 %v1766, %v1766
    %v1869 = vmul.f32 %v1771, %v1771
    %v1870 = vmul.f32 %v1774, %v1774
    %v1871 = vmul.f32 %v1779, %v1779
    %v1872 = vmul.f32 %v1782, %v1782
    %v1873 = vmul.f32 %v1787, %v1787
    %v1874 = vmul.f32 %v1790, %v1790
    %v1875 = vmul.f32 %v1795, %v1795
    %v1876 = vmul.f32 %v1798, %v1798
    %v1877 = vmul.f32 %v1803, %v1803
    %v1878 = vmul.f32 %v1806, %v1806
    %v1879 = vmul.f32 %v1811, %v1811
    %v1880 = vmul.f32 %v1814, %v1814
    %v1881 = vadd.f32 %v1560, %v1849
    %v1882 = vadd.f32 %v1561, %v1850
    %v1883 = vadd.f32 %v1562, %v1851
    %v1884 = vadd.f32 %v1563, %v1852
    %v1885 = vadd.f32 %v1564, %v1853
    %v1886 = vadd.f32 %v1565, %v1854
    %v1887 = vadd.f32 %v1566, %v1855
    %v1888 = vadd.f32 %v1567, %v1856
    %v1889 = vadd.f32 %v1568, %v1857
    %v1890 = vadd.f32 %v1569, %v1858
    %v1891 = vadd.f32 %v1570, %v1859
    %v1892 = vadd.f32 %v1571, %v1860
    %v1893 = vadd.f32 %v1572, %v1861
    %v1894 = vadd.f32 %v1573, %v1862
    %v1895 = vadd.f32 %v1574, %v1863
    %v1896 = vadd.f32 %v1575, %v1864
    %v1897 = vadd.f32 %v1576, %v1865
    %v1898 = vadd.f32 %v1577, %v1866
    %v1899 = vadd.f32 %v1578, %v1867
    %v1900 = vadd.f32 %v1579, %v1868
    %v1901 = vadd.f32 %v1580, %v1869
    %v1902 = vadd.f32 %v1581, %v1870
    %v1903 = vadd.f32 %v1582, %v1871
    %v1904 = vadd.f32 %v1583, %v1872
    %v1905 = vadd.f32 %v1584, %v1873
    %v1906 = vadd.f32 %v1585, %v1874
    %v1907 = vadd.f32 %v1586, %v1875
    %v1908 = vadd.f32 %v1587, %v1876
    %v1909 = vadd.f32 %v1588, %v1877
    %v1910 = vadd.f32 %v1589, %v1878
    %v1911 = vadd.f32 %v1590, %v1879
    %v1912 = vadd.f32 %v1591, %v1880
    %v1913 = vmax.f32 %v1592, %v1691
    %v1914 = vmax.f32 %v1593, %v1694
    %v1915 = vmax.f32 %v1594, %v1699
    %v1916 = vmax.f32 %v1595, %v1702
    %v1917 = vmax.f32 %v1596, %v1707
    %v1918 = vmax.f32 %v1597, %v1710
    %v1919 = vmax.f32 %v1598, %v1715
    %v1920 = vmax.f32 %v1599, %v1718
    %v1921 = vmax.f32 %v1600, %v1723
    %v1922 = vmax.f32 %v1601, %v1726
    %v1923 = vmax.f32 %v1602, %v1731
    %v1924 = vmax.f32 %v1603, %v1734
    %v1925 = vmax.f32 %v1604, %v1739
    %v1926 = vmax.f32 %v1605, %v1742
    %v1927 = vmax.f32 %v1606, %v1747
    %v1928 = vmax.f32 %v1607, %v1750
    %v1929 = vmax.f32 %v1608, %v1755
    %v1930 = vmax.f32 %v1609, %v1758
    %v1931 = vmax.f32 %v1610, %v1763
    %v1932 = vmax.f32 %v1611, %v1766
    %v1933 = vmax.f32 %v1612, %v1771
    %v1934 = vmax.f32 %v1613, %v1774
    %v1935 = vmax.f32 %v1614, %v1779
    %v1936 = vmax.f32 %v1615, %v1782
    %v1937 = vmax.f32 %v1616, %v1787
    %v1938 = vmax.f32 %v1617, %v1790
    %v1939 = vmax.f32 %v1618, %v1795
    %v1940 = vmax.f32 %v1619, %v1798
    %v1941 = vmax.f32 %v1620, %v1803
    %v1942 = vmax.f32 %v1621, %v1806
    %v1943 = vmax.f32 %v1622, %v1811
    %v1944 = vmax.f32 %v1623, %v1814
    %v1945 = vmin.f32 %v1624, %v1691
    %v1946 = vmin.f32 %v1625, %v1694
    %v1947 = vmin.f32 %v1626, %v1699
    %v1948 = vmin.f32 %v1627, %v1702
    %v1949 = vmin.f32 %v1628, %v1707
    %v1950 = vmin.f32 %v1629, %v1710
    %v1951 = vmin.f32 %v1630, %v1715
    %v1952 = vmin.f32 %v1631, %v1718
    %v1953 = vmin.f32 %v1632, %v1723
    %v1954 = vmin.f32 %v1633, %v1726
    %v1955 = vmin.f32 %v1634, %v1731
    %v1956 = vmin.f32 %v1635, %v1734
    %v1957 = vmin.f32 %v1636, %v1739
    %v1958 = vmin.f32 %v1637, %v1742
    %v1959 = vmin.f32 %v1638, %v1747
    %v1960 = vmin.f32 %v1639, %v1750
    %v1961 = vmin.f32 %v1640, %v1755
    %v1962 = vmin.f32 %v1641, %v1758
    %v1963 = vmin.f32 %v1642, %v1763
    %v1964 = vmin.f32 %v1643, %v1766
    %v1965 = vmin.f32 %v1644, %v1771
    %v1966 = vmin.f32 %v1645, %v1774
    %v1967 = vmin.f32 %v1646, %v1779
    %v1968 = vmin.f32 %v1647, %v1782
    %v1969 = vmin.f32 %v1648, %v1787
    %v1970 = vmin.f32 %v1649, %v1790
    %v1971 = vmin.f32 %v1650, %v1795
    %v1972 = vmin.f32 %v1651, %v1798
    %v1973 = vmin.f32 %v1652, %v1803
    %v1974 = vmin.f32 %v1653, %v1806
    %v1975 = vmin.f32 %v1654, %v1811
    %v1976 = vmin.f32 %v1655, %v1814
    %1977 = vmatprep.subr.bf16.mxu0 0
    %1978 = vmatpush1.bf16.msra.mxu0 %v1133
    %1979 = vmatprep.subr.bf16.mxu0 0
    %1980 = vmatpush1.bf16.msra.mxu0 %v1132
    %1981 = vmatprep.subr.bf16.mxu0 0
    %1982 = vmatpush1.bf16.msra.mxu0 %v1131
    %1983 = vmatprep.subr.bf16.mxu0 0
    %1984 = vmatpush1.bf16.msra.mxu0 %v1130
    %1985 = vmatprep.subr.bf16.mxu0 0
    %1986 = vmatpush1.bf16.msra.mxu0 %v1129
    %1987 = vmatprep.subr.bf16.mxu0 0
    %1988 = vmatpush1.bf16.msra.mxu0 %v1128
    %1989 = vmatprep.subr.bf16.mxu0 0
    %1990 = vmatpush1.bf16.msra.mxu0 %v1127
    %1991 = vmatprep.subr.bf16.mxu0 0
    %1992 = vmatpush1.bf16.msra.mxu0 %v1126
    %1993 = vmatprep.subr.bf16.mxu0 0
    %1994 = vmatpush2.bf16.msra.mxu0 %v1141
    %1995 = vmatprep.subr.bf16.mxu0 0
    %1996 = vmatpush2.bf16.msra.mxu0 %v1140
    %1997 = vmatprep.subr.bf16.mxu0 0
    %1998 = vmatpush2.bf16.msra.mxu0 %v1139
    %1999 = vmatprep.subr.bf16.mxu0 0
    %2000 = vmatpush2.bf16.msra.mxu0 %v1138
    %2001 = vmatprep.subr.bf16.mxu0 0
    %2002 = vmatpush2.bf16.msra.mxu0 %v1137
    %2003 = vmatprep.subr.bf16.mxu0 0
    %2004 = vmatpush2.bf16.msra.mxu0 %v1136
    %2005 = vmatprep.subr.bf16.mxu0 0
    %2006 = vmatpush2.bf16.msra.mxu0 %v1135
    %2007 = vmatprep.subr.bf16.mxu0 0
    %2008 = vmatpush2.bf16.msra.mxu0 %v1134
    %2009 = vmatprep.mubr.bf16.mxu0 %v1063
    %2010 = vmatmul.mubr.bf16.gmra.mxu0 %v1062
    %v2011 = vpop.f32.mrf.mxu0
    %v2012 = vadd.f32 0.0, %v2011
    %v2013 = vpop.f32.mrf.mxu0
    %v2014 = vpop.f32.mrf.mxu0
    %v2015 = vadd.f32 0.0, %v2014
    %v2016 = vpop.f32.mrf.mxu0
    %2017 = vmatprep.mubr.bf16.mxu0 %v1065
    %2018 = vmatmul.mubr.bf16.gmra.mxu0 %v1064
    %v2019 = vpop.f32.mrf.mxu0
    %v2020 = vadd.f32 0.0, %v2019
    %v2021 = vpop.f32.mrf.mxu0
    %v2022 = vpop.f32.mrf.mxu0
    %v2023 = vadd.f32 0.0, %v2022
    %v2024 = vpop.f32.mrf.mxu0
    %2025 = vmatprep.mubr.bf16.mxu0 %v1067
    %2026 = vmatmul.mubr.bf16.gmra.mxu0 %v1066
    %v2027 = vpop.f32.mrf.mxu0
    %v2028 = vadd.f32 0.0, %v2027
    %v2029 = vpop.f32.mrf.mxu0
    %v2030 = vpop.f32.mrf.mxu0
    %v2031 = vadd.f32 0.0, %v2030
    %v2032 = vpop.f32.mrf.mxu0
    %2033 = vmatprep.mubr.bf16.mxu0 %v1069
    %2034 = vmatmul.mubr.bf16.gmra.mxu0 %v1068
    %v2035 = vpop.f32.mrf.mxu0
    %v2036 = vadd.f32 0.0, %v2035
    %v2037 = vpop.f32.mrf.mxu0
    %v2038 = vpop.f32.mrf.mxu0
    %v2039 = vadd.f32 0.0, %v2038
    %v2040 = vpop.f32.mrf.mxu0
    %2041 = vmatprep.mubr.bf16.mxu0 %v1071
    %2042 = vmatmul.mubr.bf16.gmra.mxu0 %v1070
    %v2043 = vpop.f32.mrf.mxu0
    %v2044 = vadd.f32 0.0, %v2043
    %v2045 = vpop.f32.mrf.mxu0
    %v2046 = vpop.f32.mrf.mxu0
    %v2047 = vadd.f32 0.0, %v2046
    %v2048 = vpop.f32.mrf.mxu0
    %2049 = vmatprep.mubr.bf16.mxu0 %v1073
    %2050 = vmatmul.mubr.bf16.gmra.mxu0 %v1072
    %v2051 = vpop.f32.mrf.mxu0
    %v2052 = vadd.f32 0.0, %v2051
    %v2053 = vpop.f32.mrf.mxu0
    %v2054 = vpop.f32.mrf.mxu0
    %v2055 = vadd.f32 0.0, %v2054
    %v2056 = vpop.f32.mrf.mxu0
    %2057 = vmatprep.mubr.bf16.mxu0 %v1075
    %2058 = vmatmul.mubr.bf16.gmra.mxu0 %v1074
    %v2059 = vpop.f32.mrf.mxu0
    %v2060 = vadd.f32 0.0, %v2059
    %v2061 = vpop.f32.mrf.mxu0
    %v2062 = vpop.f32.mrf.mxu0
    %v2063 = vadd.f32 0.0, %v2062
    %v2064 = vpop.f32.mrf.mxu0
    %2065 = vmatprep.mubr.bf16.mxu0 %v1077
    %2066 = vmatmul.mubr.bf16.gmra.mxu0 %v1076
    %v2067 = vpop.f32.mrf.mxu0
    %v2068 = vadd.f32 0.0, %v2067
    %v2069 = vpop.f32.mrf.mxu0
    %v2070 = vpop.f32.mrf.mxu0
    %v2071 = vadd.f32 0.0, %v2070
    %v2072 = vpop.f32.mrf.mxu0
    %2073 = vmatprep.mubr.bf16.mxu0 %v1079
    %2074 = vmatmul.mubr.bf16.gmra.mxu0 %v1078
    %v2075 = vpop.f32.mrf.mxu0
    %v2076 = vadd.f32 0.0, %v2075
    %v2077 = vpop.f32.mrf.mxu0
    %v2078 = vpop.f32.mrf.mxu0
    %v2079 = vadd.f32 0.0, %v2078
    %v2080 = vpop.f32.mrf.mxu0
    %2081 = vmatprep.mubr.bf16.mxu0 %v1081
    %2082 = vmatmul.mubr.bf16.gmra.mxu0 %v1080
    %v2083 = vpop.f32.mrf.mxu0
    %v2084 = vadd.f32 0.0, %v2083
    %v2085 = vpop.f32.mrf.mxu0
    %v2086 = vpop.f32.mrf.mxu0
    %v2087 = vadd.f32 0.0, %v2086
    %v2088 = vpop.f32.mrf.mxu0
    %2089 = vmatprep.mubr.bf16.mxu0 %v1083
    %2090 = vmatmul.mubr.bf16.gmra.mxu0 %v1082
    %v2091 = vpop.f32.mrf.mxu0
    %v2092 = vadd.f32 0.0, %v2091
    %v2093 = vpop.f32.mrf.mxu0
    %v2094 = vpop.f32.mrf.mxu0
    %v2095 = vadd.f32 0.0, %v2094
    %v2096 = vpop.f32.mrf.mxu0
    %2097 = vmatprep.mubr.bf16.mxu0 %v1085
    %2098 = vmatmul.mubr.bf16.gmra.mxu0 %v1084
    %v2099 = vpop.f32.mrf.mxu0
    %v2100 = vadd.f32 0.0, %v2099
    %v2101 = vpop.f32.mrf.mxu0
    %v2102 = vpop.f32.mrf.mxu0
    %v2103 = vadd.f32 0.0, %v2102
    %v2104 = vpop.f32.mrf.mxu0
    %2105 = vmatprep.mubr.bf16.mxu0 %v1087
    %2106 = vmatmul.mubr.bf16.gmra.mxu0 %v1086
    %v2107 = vpop.f32.mrf.mxu0
    %v2108 = vadd.f32 0.0, %v2107
    %v2109 = vpop.f32.mrf.mxu0
    %v2110 = vpop.f32.mrf.mxu0
    %v2111 = vadd.f32 0.0, %v2110
    %v2112 = vpop.f32.mrf.mxu0
    %2113 = vmatprep.mubr.bf16.mxu0 %v1089
    %2114 = vmatmul.mubr.bf16.gmra.mxu0 %v1088
    %v2115 = vpop.f32.mrf.mxu0
    %v2116 = vadd.f32 0.0, %v2115
    %v2117 = vpop.f32.mrf.mxu0
    %v2118 = vpop.f32.mrf.mxu0
    %v2119 = vadd.f32 0.0, %v2118
    %v2120 = vpop.f32.mrf.mxu0
    %2121 = vmatprep.mubr.bf16.mxu0 %v1091
    %2122 = vmatmul.mubr.bf16.gmra.mxu0 %v1090
    %v2123 = vpop.f32.mrf.mxu0
    %v2124 = vadd.f32 0.0, %v2123
    %v2125 = vpop.f32.mrf.mxu0
    %v2126 = vpop.f32.mrf.mxu0
    %v2127 = vadd.f32 0.0, %v2126
    %v2128 = vpop.f32.mrf.mxu0
    %2129 = vmatprep.mubr.bf16.mxu0 %v1093
    %2130 = vmatmul.mubr.bf16.gmra.mxu0 %v1092
    %v2131 = vpop.f32.mrf.mxu0
    %v2132 = vadd.f32 0.0, %v2131
    %v2133 = vpop.f32.mrf.mxu0
    %v2134 = vpop.f32.mrf.mxu0
    %v2135 = vadd.f32 0.0, %v2134
    %v2136 = vpop.f32.mrf.mxu0
    %2137 = vdwg.mxu0
    %v2138 = vadd.f32 %v1817, %v2012
    %v2139 = vadd.f32 %v1818, %v2015
    %v2140 = vadd.f32 %v1819, %v2020
    %v2141 = vadd.f32 %v1820, %v2023
    %v2142 = vadd.f32 %v1821, %v2028
    %v2143 = vadd.f32 %v1822, %v2031
    %v2144 = vadd.f32 %v1823, %v2036
    %v2145 = vadd.f32 %v1824, %v2039
    %v2146 = vadd.f32 %v1825, %v2044
    %v2147 = vadd.f32 %v1826, %v2047
    %v2148 = vadd.f32 %v1827, %v2052
    %v2149 = vadd.f32 %v1828, %v2055
    %v2150 = vadd.f32 %v1829, %v2060
    %v2151 = vadd.f32 %v1830, %v2063
    %v2152 = vadd.f32 %v1831, %v2068
    %v2153 = vadd.f32 %v1832, %v2071
    %v2154 = vadd.f32 %v1833, %v2076
    %v2155 = vadd.f32 %v1834, %v2079
    %v2156 = vadd.f32 %v1835, %v2084
    %v2157 = vadd.f32 %v1836, %v2087
    %v2158 = vadd.f32 %v1837, %v2092
    %v2159 = vadd.f32 %v1838, %v2095
    %v2160 = vadd.f32 %v1839, %v2100
    %v2161 = vadd.f32 %v1840, %v2103
    %v2162 = vadd.f32 %v1841, %v2108
    %v2163 = vadd.f32 %v1842, %v2111
    %v2164 = vadd.f32 %v1843, %v2116
    %v2165 = vadd.f32 %v1844, %v2119
    %v2166 = vadd.f32 %v1845, %v2124
    %v2167 = vadd.f32 %v1846, %v2127
    %v2168 = vadd.f32 %v1847, %v2132
    %v2169 = vadd.f32 %v1848, %v2135
    %v2170 = vmul.f32 %v2012, %v2012
    %v2171 = vmul.f32 %v2015, %v2015
    %v2172 = vmul.f32 %v2020, %v2020
    %v2173 = vmul.f32 %v2023, %v2023
    %v2174 = vmul.f32 %v2028, %v2028
    %v2175 = vmul.f32 %v2031, %v2031
    %v2176 = vmul.f32 %v2036, %v2036
    %v2177 = vmul.f32 %v2039, %v2039
    %v2178 = vmul.f32 %v2044, %v2044
    %v2179 = vmul.f32 %v2047, %v2047
    %v2180 = vmul.f32 %v2052, %v2052
    %v2181 = vmul.f32 %v2055, %v2055
    %v2182 = vmul.f32 %v2060, %v2060
    %v2183 = vmul.f32 %v2063, %v2063
    %v2184 = vmul.f32 %v2068, %v2068
    %v2185 = vmul.f32 %v2071, %v2071
    %v2186 = vmul.f32 %v2076, %v2076
    %v2187 = vmul.f32 %v2079, %v2079
    %v2188 = vmul.f32 %v2084, %v2084
    %v2189 = vmul.f32 %v2087, %v2087
    %v2190 = vmul.f32 %v2092, %v2092
    %v2191 = vmul.f32 %v2095, %v2095
    %v2192 = vmul.f32 %v2100, %v2100
    %v2193 = vmul.f32 %v2103, %v2103
    %v2194 = vmul.f32 %v2108, %v2108
    %v2195 = vmul.f32 %v2111, %v2111
    %v2196 = vmul.f32 %v2116, %v2116
    %v2197 = vmul.f32 %v2119, %v2119
    %v2198 = vmul.f32 %v2124, %v2124
    %v2199 = vmul.f32 %v2127, %v2127
    %v2200 = vmul.f32 %v2132, %v2132
    %v2201 = vmul.f32 %v2135, %v2135
    %v2202 = vadd.f32 %v1881, %v2170
    %v2203 = vadd.f32 %v1882, %v2171
    %v2204 = vadd.f32 %v1883, %v2172
    %v2205 = vadd.f32 %v1884, %v2173
    %v2206 = vadd.f32 %v1885, %v2174
    %v2207 = vadd.f32 %v1886, %v2175
    %v2208 = vadd.f32 %v1887, %v2176
    %v2209 = vadd.f32 %v1888, %v2177
    %v2210 = vadd.f32 %v1889, %v2178
    %v2211 = vadd.f32 %v1890, %v2179
    %v2212 = vadd.f32 %v1891, %v2180
    %v2213 = vadd.f32 %v1892, %v2181
    %v2214 = vadd.f32 %v1893, %v2182
    %v2215 = vadd.f32 %v1894, %v2183
    %v2216 = vadd.f32 %v1895, %v2184
    %v2217 = vadd.f32 %v1896, %v2185
    %v2218 = vadd.f32 %v1897, %v2186
    %v2219 = vadd.f32 %v1898, %v2187
    %v2220 = vadd.f32 %v1899, %v2188
    %v2221 = vadd.f32 %v1900, %v2189
    %v2222 = vadd.f32 %v1901, %v2190
    %v2223 = vadd.f32 %v1902, %v2191
    %v2224 = vadd.f32 %v1903, %v2192
    %v2225 = vadd.f32 %v1904, %v2193
    %v2226 = vadd.f32 %v1905, %v2194
    %v2227 = vadd.f32 %v1906, %v2195
    %v2228 = vadd.f32 %v1907, %v2196
    %v2229 = vadd.f32 %v1908, %v2197
    %v2230 = vadd.f32 %v1909, %v2198
    %v2231 = vadd.f32 %v1910, %v2199
    %v2232 = vadd.f32 %v1911, %v2200
    %v2233 = vadd.f32 %v1912, %v2201
    %v2234 = vmax.f32 %v1913, %v2012
    %v2235 = vmax.f32 %v1914, %v2015
    %v2236 = vmax.f32 %v1915, %v2020
    %v2237 = vmax.f32 %v1916, %v2023
    %v2238 = vmax.f32 %v1917, %v2028
    %v2239 = vmax.f32 %v1918, %v2031
    %v2240 = vmax.f32 %v1919, %v2036
    %v2241 = vmax.f32 %v1920, %v2039
    %v2242 = vmax.f32 %v1921, %v2044
    %v2243 = vmax.f32 %v1922, %v2047
    %v2244 = vmax.f32 %v1923, %v2052
    %v2245 = vmax.f32 %v1924, %v2055
    %v2246 = vmax.f32 %v1925, %v2060
    %v2247 = vmax.f32 %v1926, %v2063
    %v2248 = vmax.f32 %v1927, %v2068
    %v2249 = vmax.f32 %v1928, %v2071
    %v2250 = vmax.f32 %v1929, %v2076
    %v2251 = vmax.f32 %v1930, %v2079
    %v2252 = vmax.f32 %v1931, %v2084
    %v2253 = vmax.f32 %v1932, %v2087
    %v2254 = vmax.f32 %v1933, %v2092
    %v2255 = vmax.f32 %v1934, %v2095
    %v2256 = vmax.f32 %v1935, %v2100
    %v2257 = vmax.f32 %v1936, %v2103
    %v2258 = vmax.f32 %v1937, %v2108
    %v2259 = vmax.f32 %v1938, %v2111
    %v2260 = vmax.f32 %v1939, %v2116
    %v2261 = vmax.f32 %v1940, %v2119
    %v2262 = vmax.f32 %v1941, %v2124
    %v2263 = vmax.f32 %v1942, %v2127
    %v2264 = vmax.f32 %v1943, %v2132
    %v2265 = vmax.f32 %v1944, %v2135
    %v2266 = vmin.f32 %v1945, %v2012
    %v2267 = vmin.f32 %v1946, %v2015
    %v2268 = vmin.f32 %v1947, %v2020
    %v2269 = vmin.f32 %v1948, %v2023
    %v2270 = vmin.f32 %v1949, %v2028
    %v2271 = vmin.f32 %v1950, %v2031
    %v2272 = vmin.f32 %v1951, %v2036
    %v2273 = vmin.f32 %v1952, %v2039
    %v2274 = vmin.f32 %v1953, %v2044
    %v2275 = vmin.f32 %v1954, %v2047
    %v2276 = vmin.f32 %v1955, %v2052
    %v2277 = vmin.f32 %v1956, %v2055
    %v2278 = vmin.f32 %v1957, %v2060
    %v2279 = vmin.f32 %v1958, %v2063
    %v2280 = vmin.f32 %v1959, %v2068
    %v2281 = vmin.f32 %v1960, %v2071
    %v2282 = vmin.f32 %v1961, %v2076
    %v2283 = vmin.f32 %v1962, %v2079
    %v2284 = vmin.f32 %v1963, %v2084
    %v2285 = vmin.f32 %v1964, %v2087
    %v2286 = vmin.f32 %v1965, %v2092
    %v2287 = vmin.f32 %v1966, %v2095
    %v2288 = vmin.f32 %v1967, %v2100
    %v2289 = vmin.f32 %v1968, %v2103
    %v2290 = vmin.f32 %v1969, %v2108
    %v2291 = vmin.f32 %v1970, %v2111
    %v2292 = vmin.f32 %v1971, %v2116
    %v2293 = vmin.f32 %v1972, %v2119
    %v2294 = vmin.f32 %v1973, %v2124
    %v2295 = vmin.f32 %v1974, %v2127
    %v2296 = vmin.f32 %v1975, %v2132
    %v2297 = vmin.f32 %v1976, %v2135
    %v2298 = vmul.f32 %v2138, 0.25
    %v2299 = vmul.f32 %v2139, 0.25
    %v2300 = vmul.f32 %v2140, 0.25
    %v2301 = vmul.f32 %v2141, 0.25
    %v2302 = vmul.f32 %v2142, 0.25
    %v2303 = vmul.f32 %v2143, 0.25
    %v2304 = vmul.f32 %v2144, 0.25
    %v2305 = vmul.f32 %v2145, 0.25
    %v2306 = vmul.f32 %v2146, 0.25
    %v2307 = vmul.f32 %v2147, 0.25
    %v2308 = vmul.f32 %v2148, 0.25
    %v2309 = vmul.f32 %v2149, 0.25
    %v2310 = vmul.f32 %v2150, 0.25
    %v2311 = vmul.f32 %v2151, 0.25
    %v2312 = vmul.f32 %v2152, 0.25
    %v2313 = vmul.f32 %v2153, 0.25
    %v2314 = vmul.f32 %v2154, 0.25
    %v2315 = vmul.f32 %v2155, 0.25
    %v2316 = vmul.f32 %v2156, 0.25
    %v2317 = vmul.f32 %v2157, 0.25
    %v2318 = vmul.f32 %v2158, 0.25
    %v2319 = vmul.f32 %v2159, 0.25
    %v2320 = vmul.f32 %v2160, 0.25
    %v2321 = vmul.f32 %v2161, 0.25
    %v2322 = vmul.f32 %v2162, 0.25
    %v2323 = vmul.f32 %v2163, 0.25
    %v2324 = vmul.f32 %v2164, 0.25
    %v2325 = vmul.f32 %v2165, 0.25
    %v2326 = vmul.f32 %v2166, 0.25
    %v2327 = vmul.f32 %v2167, 0.25
    %v2328 = vmul.f32 %v2168, 0.25
    %v2329 = vmul.f32 %v2169, 0.25
    %v2330 = vmul.f32 %v2202, 0.25
    %v2331 = vmul.f32 %v2203, 0.25
    %v2332 = vmul.f32 %v2204, 0.25
    %v2333 = vmul.f32 %v2205, 0.25
    %v2334 = vmul.f32 %v2206, 0.25
    %v2335 = vmul.f32 %v2207, 0.25
    %v2336 = vmul.f32 %v2208, 0.25
    %v2337 = vmul.f32 %v2209, 0.25
    %v2338 = vmul.f32 %v2210, 0.25
    %v2339 = vmul.f32 %v2211, 0.25
    %v2340 = vmul.f32 %v2212, 0.25
    %v2341 = vmul.f32 %v2213, 0.25
    %v2342 = vmul.f32 %v2214, 0.25
    %v2343 = vmul.f32 %v2215, 0.25
    %v2344 = vmul.f32 %v2216, 0.25
    %v2345 = vmul.f32 %v2217, 0.25
    %v2346 = vmul.f32 %v2218, 0.25
    %v2347 = vmul.f32 %v2219, 0.25
    %v2348 = vmul.f32 %v2220, 0.25
    %v2349 = vmul.f32 %v2221, 0.25
    %v2350 = vmul.f32 %v2222, 0.25
    %v2351 = vmul.f32 %v2223, 0.25
    %v2352 = vmul.f32 %v2224, 0.25
    %v2353 = vmul.f32 %v2225, 0.25
    %v2354 = vmul.f32 %v2226, 0.25
    %v2355 = vmul.f32 %v2227, 0.25
    %v2356 = vmul.f32 %v2228, 0.25
    %v2357 = vmul.f32 %v2229, 0.25
    %v2358 = vmul.f32 %v2230, 0.25
    %v2359 = vmul.f32 %v2231, 0.25
    %v2360 = vmul.f32 %v2232, 0.25
    %v2361 = vmul.f32 %v2233, 0.25
    %v2362 = vmul.f32 %v2298, %v2298
    %v2363 = vmul.f32 %v2299, %v2299
    %v2364 = vmul.f32 %v2300, %v2300
    %v2365 = vmul.f32 %v2301, %v2301
    %v2366 = vmul.f32 %v2302, %v2302
    %v2367 = vmul.f32 %v2303, %v2303
    %v2368 = vmul.f32 %v2304, %v2304
    %v2369 = vmul.f32 %v2305, %v2305
    %v2370 = vmul.f32 %v2306, %v2306
    %v2371 = vmul.f32 %v2307, %v2307
    %v2372 = vmul.f32 %v2308, %v2308
    %v2373 = vmul.f32 %v2309, %v2309
    %v2374 = vmul.f32 %v2310, %v2310
    %v2375 = vmul.f32 %v2311, %v2311
    %v2376 = vmul.f32 %v2312, %v2312
    %v2377 = vmul.f32 %v2313, %v2313
    %v2378 = vmul.f32 %v2314, %v2314
    %v2379 = vmul.f32 %v2315, %v2315
    %v2380 = vmul.f32 %v2316, %v2316
    %v2381 = vmul.f32 %v2317, %v2317
    %v2382 = vmul.f32 %v2318, %v2318
    %v2383 = vmul.f32 %v2319, %v2319
    %v2384 = vmul.f32 %v2320, %v2320
    %v2385 = vmul.f32 %v2321, %v2321
    %v2386 = vmul.f32 %v2322, %v2322
    %v2387 = vmul.f32 %v2323, %v2323
    %v2388 = vmul.f32 %v2324, %v2324
    %v2389 = vmul.f32 %v2325, %v2325
    %v2390 = vmul.f32 %v2326, %v2326
    %v2391 = vmul.f32 %v2327, %v2327
    %v2392 = vmul.f32 %v2328, %v2328
    %v2393 = vmul.f32 %v2329, %v2329
    %v2394 = vsub.f32 %v2330, %v2362
    %v2395 = vsub.f32 %v2331, %v2363
    %v2396 = vsub.f32 %v2332, %v2364
    %v2397 = vsub.f32 %v2333, %v2365
    %v2398 = vsub.f32 %v2334, %v2366
    %v2399 = vsub.f32 %v2335, %v2367
    %v2400 = vsub.f32 %v2336, %v2368
    %v2401 = vsub.f32 %v2337, %v2369
    %v2402 = vsub.f32 %v2338, %v2370
    %v2403 = vsub.f32 %v2339, %v2371
    %v2404 = vsub.f32 %v2340, %v2372
    %v2405 = vsub.f32 %v2341, %v2373
    %v2406 = vsub.f32 %v2342, %v2374
    %v2407 = vsub.f32 %v2343, %v2375
    %v2408 = vsub.f32 %v2344, %v2376
    %v2409 = vsub.f32 %v2345, %v2377
    %v2410 = vsub.f32 %v2346, %v2378
    %v2411 = vsub.f32 %v2347, %v2379
    %v2412 = vsub.f32 %v2348, %v2380
    %v2413 = vsub.f32 %v2349, %v2381
    %v2414 = vsub.f32 %v2350, %v2382
    %v2415 = vsub.f32 %v2351, %v2383
    %v2416 = vsub.f32 %v2352, %v2384
    %v2417 = vsub.f32 %v2353, %v2385
    %v2418 = vsub.f32 %v2354, %v2386
    %v2419 = vsub.f32 %v2355, %v2387
    %v2420 = vsub.f32 %v2356, %v2388
    %v2421 = vsub.f32 %v2357, %v2389
    %v2422 = vsub.f32 %v2358, %v2390
    %v2423 = vsub.f32 %v2359, %v2391
    %v2424 = vsub.f32 %v2360, %v2392
    %v2425 = vsub.f32 %v2361, %v2393
    %v2426 = vmax.f32 %v2394, 0.0
    %v2427 = vmax.f32 %v2395, 0.0
    %v2428 = vmax.f32 %v2396, 0.0
    %v2429 = vmax.f32 %v2397, 0.0
    %v2430 = vmax.f32 %v2398, 0.0
    %v2431 = vmax.f32 %v2399, 0.0
    %v2432 = vmax.f32 %v2400, 0.0
    %v2433 = vmax.f32 %v2401, 0.0
    %v2434 = vmax.f32 %v2402, 0.0
    %v2435 = vmax.f32 %v2403, 0.0
    %v2436 = vmax.f32 %v2404, 0.0
    %v2437 = vmax.f32 %v2405, 0.0
    %v2438 = vmax.f32 %v2406, 0.0
    %v2439 = vmax.f32 %v2407, 0.0
    %v2440 = vmax.f32 %v2408, 0.0
    %v2441 = vmax.f32 %v2409, 0.0
    %v2442 = vmax.f32 %v2410, 0.0
    %v2443 = vmax.f32 %v2411, 0.0
    %v2444 = vmax.f32 %v2412, 0.0
    %v2445 = vmax.f32 %v2413, 0.0
    %v2446 = vmax.f32 %v2414, 0.0
    %v2447 = vmax.f32 %v2415, 0.0
    %v2448 = vmax.f32 %v2416, 0.0
    %v2449 = vmax.f32 %v2417, 0.0
    %v2450 = vmax.f32 %v2418, 0.0
    %v2451 = vmax.f32 %v2419, 0.0
    %v2452 = vmax.f32 %v2420, 0.0
    %v2453 = vmax.f32 %v2421, 0.0
    %v2454 = vmax.f32 %v2422, 0.0
    %v2455 = vmax.f32 %v2423, 0.0
    %v2456 = vmax.f32 %v2424, 0.0
    %v2457 = vmax.f32 %v2425, 0.0
    %v2458 = vadd.f32 %v2426, 1e-05
    %v2459 = vadd.f32 %v2427, 1e-05
    %v2460 = vadd.f32 %v2428, 1e-05
    %v2461 = vadd.f32 %v2429, 1e-05
    %v2462 = vadd.f32 %v2430, 1e-05
    %v2463 = vadd.f32 %v2431, 1e-05
    %v2464 = vadd.f32 %v2432, 1e-05
    %v2465 = vadd.f32 %v2433, 1e-05
    %v2466 = vadd.f32 %v2434, 1e-05
    %v2467 = vadd.f32 %v2435, 1e-05
    %v2468 = vadd.f32 %v2436, 1e-05
    %v2469 = vadd.f32 %v2437, 1e-05
    %v2470 = vadd.f32 %v2438, 1e-05
    %v2471 = vadd.f32 %v2439, 1e-05
    %v2472 = vadd.f32 %v2440, 1e-05
    %v2473 = vadd.f32 %v2441, 1e-05
    %v2474 = vadd.f32 %v2442, 1e-05
    %v2475 = vadd.f32 %v2443, 1e-05
    %v2476 = vadd.f32 %v2444, 1e-05
    %v2477 = vadd.f32 %v2445, 1e-05
    %v2478 = vadd.f32 %v2446, 1e-05
    %v2479 = vadd.f32 %v2447, 1e-05
    %v2480 = vadd.f32 %v2448, 1e-05
    %v2481 = vadd.f32 %v2449, 1e-05
    %v2482 = vadd.f32 %v2450, 1e-05
    %v2483 = vadd.f32 %v2451, 1e-05
    %v2484 = vadd.f32 %v2452, 1e-05
    %v2485 = vadd.f32 %v2453, 1e-05
    %v2486 = vadd.f32 %v2454, 1e-05
    %v2487 = vadd.f32 %v2455, 1e-05
    %v2488 = vadd.f32 %v2456, 1e-05
    %v2489 = vadd.f32 %v2457, 1e-05
    %v2490 = vrsqrt.pop %v2458
    %v2491 = vmul.f32 %v2458, %v2490
    %vm2492 = vcmp.eq.f32.partialorder %v2458, inf
    %v2493 = vsel %vm2492, %v2458, %v2491
    %vm2494 = vcmp.eq.f32.partialorder %v2458, 0.0
    %v2495 = vand.u32 %v2458, 2147483648
    %v2496 = vsel %vm2494, %v2495, %v2493
    %v2497 = vrsqrt.pop %v2459
    %v2498 = vmul.f32 %v2459, %v2497
    %vm2499 = vcmp.eq.f32.partialorder %v2459, inf
    %v2500 = vsel %vm2499, %v2459, %v2498
    %vm2501 = vcmp.eq.f32.partialorder %v2459, 0.0
    %v2502 = vand.u32 %v2459, 2147483648
    %v2503 = vsel %vm2501, %v2502, %v2500
    %v2504 = vrsqrt.pop %v2460
    %v2505 = vmul.f32 %v2460, %v2504
    %vm2506 = vcmp.eq.f32.partialorder %v2460, inf
    %v2507 = vsel %vm2506, %v2460, %v2505
    %vm2508 = vcmp.eq.f32.partialorder %v2460, 0.0
    %v2509 = vand.u32 %v2460, 2147483648
    %v2510 = vsel %vm2508, %v2509, %v2507
    %v2511 = vrsqrt.pop %v2461
    %v2512 = vmul.f32 %v2461, %v2511
    %vm2513 = vcmp.eq.f32.partialorder %v2461, inf
    %v2514 = vsel %vm2513, %v2461, %v2512
    %vm2515 = vcmp.eq.f32.partialorder %v2461, 0.0
    %v2516 = vand.u32 %v2461, 2147483648
    %v2517 = vsel %vm2515, %v2516, %v2514
    %v2518 = vrsqrt.pop %v2462
    %v2519 = vmul.f32 %v2462, %v2518
    %vm2520 = vcmp.eq.f32.partialorder %v2462, inf
    %v2521 = vsel %vm2520, %v2462, %v2519
    %vm2522 = vcmp.eq.f32.partialorder %v2462, 0.0
    %v2523 = vand.u32 %v2462, 2147483648
    %v2524 = vsel %vm2522, %v2523, %v2521
    %v2525 = vrsqrt.pop %v2463
    %v2526 = vmul.f32 %v2463, %v2525
    %vm2527 = vcmp.eq.f32.partialorder %v2463, inf
    %v2528 = vsel %vm2527, %v2463, %v2526
    %vm2529 = vcmp.eq.f32.partialorder %v2463, 0.0
    %v2530 = vand.u32 %v2463, 2147483648
    %v2531 = vsel %vm2529, %v2530, %v2528
    %v2532 = vrsqrt.pop %v2464
    %v2533 = vmul.f32 %v2464, %v2532
    %vm2534 = vcmp.eq.f32.partialorder %v2464, inf
    %v2535 = vsel %vm2534, %v2464, %v2533
    %vm2536 = vcmp.eq.f32.partialorder %v2464, 0.0
    %v2537 = vand.u32 %v2464, 2147483648
    %v2538 = vsel %vm2536, %v2537, %v2535
    %v2539 = vrsqrt.pop %v2465
    %v2540 = vmul.f32 %v2465, %v2539
    %vm2541 = vcmp.eq.f32.partialorder %v2465, inf
    %v2542 = vsel %vm2541, %v2465, %v2540
    %vm2543 = vcmp.eq.f32.partialorder %v2465, 0.0
    %v2544 = vand.u32 %v2465, 2147483648
    %v2545 = vsel %vm2543, %v2544, %v2542
    %v2546 = vrsqrt.pop %v2466
    %v2547 = vmul.f32 %v2466, %v2546
    %vm2548 = vcmp.eq.f32.partialorder %v2466, inf
    %v2549 = vsel %vm2548, %v2466, %v2547
    %vm2550 = vcmp.eq.f32.partialorder %v2466, 0.0
    %v2551 = vand.u32 %v2466, 2147483648
    %v2552 = vsel %vm2550, %v2551, %v2549
    %v2553 = vrsqrt.pop %v2467
    %v2554 = vmul.f32 %v2467, %v2553
    %vm2555 = vcmp.eq.f32.partialorder %v2467, inf
    %v2556 = vsel %vm2555, %v2467, %v2554
    %vm2557 = vcmp.eq.f32.partialorder %v2467, 0.0
    %v2558 = vand.u32 %v2467, 2147483648
    %v2559 = vsel %vm2557, %v2558, %v2556
    %v2560 = vrsqrt.pop %v2468
    %v2561 = vmul.f32 %v2468, %v2560
    %vm2562 = vcmp.eq.f32.partialorder %v2468, inf
    %v2563 = vsel %vm2562, %v2468, %v2561
    %vm2564 = vcmp.eq.f32.partialorder %v2468, 0.0
    %v2565 = vand.u32 %v2468, 2147483648
    %v2566 = vsel %vm2564, %v2565, %v2563
    %v2567 = vrsqrt.pop %v2469
    %v2568 = vmul.f32 %v2469, %v2567
    %vm2569 = vcmp.eq.f32.partialorder %v2469, inf
    %v2570 = vsel %vm2569, %v2469, %v2568
    %vm2571 = vcmp.eq.f32.partialorder %v2469, 0.0
    %v2572 = vand.u32 %v2469, 2147483648
    %v2573 = vsel %vm2571, %v2572, %v2570
    %v2574 = vrsqrt.pop %v2470
    %v2575 = vmul.f32 %v2470, %v2574
    %vm2576 = vcmp.eq.f32.partialorder %v2470, inf
    %v2577 = vsel %vm2576, %v2470, %v2575
    %vm2578 = vcmp.eq.f32.partialorder %v2470, 0.0
    %v2579 = vand.u32 %v2470, 2147483648
    %v2580 = vsel %vm2578, %v2579, %v2577
    %v2581 = vrsqrt.pop %v2471
    %v2582 = vmul.f32 %v2471, %v2581
    %vm2583 = vcmp.eq.f32.partialorder %v2471, inf
    %v2584 = vsel %vm2583, %v2471, %v2582
    %vm2585 = vcmp.eq.f32.partialorder %v2471, 0.0
    %v2586 = vand.u32 %v2471, 2147483648
    %v2587 = vsel %vm2585, %v2586, %v2584
    %v2588 = vrsqrt.pop %v2472
    %v2589 = vmul.f32 %v2472, %v2588
    %vm2590 = vcmp.eq.f32.partialorder %v2472, inf
    %v2591 = vsel %vm2590, %v2472, %v2589
    %vm2592 = vcmp.eq.f32.partialorder %v2472, 0.0
    %v2593 = vand.u32 %v2472, 2147483648
    %v2594 = vsel %vm2592, %v2593, %v2591
    %v2595 = vrsqrt.pop %v2473
    %v2596 = vmul.f32 %v2473, %v2595
    %vm2597 = vcmp.eq.f32.partialorder %v2473, inf
    %v2598 = vsel %vm2597, %v2473, %v2596
    %vm2599 = vcmp.eq.f32.partialorder %v2473, 0.0
    %v2600 = vand.u32 %v2473, 2147483648
    %v2601 = vsel %vm2599, %v2600, %v2598
    %v2602 = vrsqrt.pop %v2474
    %v2603 = vmul.f32 %v2474, %v2602
    %vm2604 = vcmp.eq.f32.partialorder %v2474, inf
    %v2605 = vsel %vm2604, %v2474, %v2603
    %vm2606 = vcmp.eq.f32.partialorder %v2474, 0.0
    %v2607 = vand.u32 %v2474, 2147483648
    %v2608 = vsel %vm2606, %v2607, %v2605
    %v2609 = vrsqrt.pop %v2475
    %v2610 = vmul.f32 %v2475, %v2609
    %vm2611 = vcmp.eq.f32.partialorder %v2475, inf
    %v2612 = vsel %vm2611, %v2475, %v2610
    %vm2613 = vcmp.eq.f32.partialorder %v2475, 0.0
    %v2614 = vand.u32 %v2475, 2147483648
    %v2615 = vsel %vm2613, %v2614, %v2612
    %v2616 = vrsqrt.pop %v2476
    %v2617 = vmul.f32 %v2476, %v2616
    %vm2618 = vcmp.eq.f32.partialorder %v2476, inf
    %v2619 = vsel %vm2618, %v2476, %v2617
    %vm2620 = vcmp.eq.f32.partialorder %v2476, 0.0
    %v2621 = vand.u32 %v2476, 2147483648
    %v2622 = vsel %vm2620, %v2621, %v2619
    %v2623 = vrsqrt.pop %v2477
    %v2624 = vmul.f32 %v2477, %v2623
    %vm2625 = vcmp.eq.f32.partialorder %v2477, inf
    %v2626 = vsel %vm2625, %v2477, %v2624
    %vm2627 = vcmp.eq.f32.partialorder %v2477, 0.0
    %v2628 = vand.u32 %v2477, 2147483648
    %v2629 = vsel %vm2627, %v2628, %v2626
    %v2630 = vrsqrt.pop %v2478
    %v2631 = vmul.f32 %v2478, %v2630
    %vm2632 = vcmp.eq.f32.partialorder %v2478, inf
    %v2633 = vsel %vm2632, %v2478, %v2631
    %vm2634 = vcmp.eq.f32.partialorder %v2478, 0.0
    %v2635 = vand.u32 %v2478, 2147483648
    %v2636 = vsel %vm2634, %v2635, %v2633
    %v2637 = vrsqrt.pop %v2479
    %v2638 = vmul.f32 %v2479, %v2637
    %vm2639 = vcmp.eq.f32.partialorder %v2479, inf
    %v2640 = vsel %vm2639, %v2479, %v2638
    %vm2641 = vcmp.eq.f32.partialorder %v2479, 0.0
    %v2642 = vand.u32 %v2479, 2147483648
    %v2643 = vsel %vm2641, %v2642, %v2640
    %v2644 = vrsqrt.pop %v2480
    %v2645 = vmul.f32 %v2480, %v2644
    %vm2646 = vcmp.eq.f32.partialorder %v2480, inf
    %v2647 = vsel %vm2646, %v2480, %v2645
    %vm2648 = vcmp.eq.f32.partialorder %v2480, 0.0
    %v2649 = vand.u32 %v2480, 2147483648
    %v2650 = vsel %vm2648, %v2649, %v2647
    %v2651 = vrsqrt.pop %v2481
    %v2652 = vmul.f32 %v2481, %v2651
    %vm2653 = vcmp.eq.f32.partialorder %v2481, inf
    %v2654 = vsel %vm2653, %v2481, %v2652
    %vm2655 = vcmp.eq.f32.partialorder %v2481, 0.0
    %v2656 = vand.u32 %v2481, 2147483648
    %v2657 = vsel %vm2655, %v2656, %v2654
    %v2658 = vrsqrt.pop %v2482
    %v2659 = vmul.f32 %v2482, %v2658
    %vm2660 = vcmp.eq.f32.partialorder %v2482, inf
    %v2661 = vsel %vm2660, %v2482, %v2659
    %vm2662 = vcmp.eq.f32.partialorder %v2482, 0.0
    %v2663 = vand.u32 %v2482, 2147483648
    %v2664 = vsel %vm2662, %v2663, %v2661
    %v2665 = vrsqrt.pop %v2483
    %v2666 = vmul.f32 %v2483, %v2665
    %vm2667 = vcmp.eq.f32.partialorder %v2483, inf
    %v2668 = vsel %vm2667, %v2483, %v2666
    %vm2669 = vcmp.eq.f32.partialorder %v2483, 0.0
    %v2670 = vand.u32 %v2483, 2147483648
    %v2671 = vsel %vm2669, %v2670, %v2668
    %v2672 = vrsqrt.pop %v2484
    %v2673 = vmul.f32 %v2484, %v2672
    %vm2674 = vcmp.eq.f32.partialorder %v2484, inf
    %v2675 = vsel %vm2674, %v2484, %v2673
    %vm2676 = vcmp.eq.f32.partialorder %v2484, 0.0
    %v2677 = vand.u32 %v2484, 2147483648
    %v2678 = vsel %vm2676, %v2677, %v2675
    %v2679 = vrsqrt.pop %v2485
    %v2680 = vmul.f32 %v2485, %v2679
    %vm2681 = vcmp.eq.f32.partialorder %v2485, inf
    %v2682 = vsel %vm2681, %v2485, %v2680
    %vm2683 = vcmp.eq.f32.partialorder %v2485, 0.0
    %v2684 = vand.u32 %v2485, 2147483648
    %v2685 = vsel %vm2683, %v2684, %v2682
    %v2686 = vrsqrt.pop %v2486
    %v2687 = vmul.f32 %v2486, %v2686
    %vm2688 = vcmp.eq.f32.partialorder %v2486, inf
    %v2689 = vsel %vm2688, %v2486, %v2687
    %vm2690 = vcmp.eq.f32.partialorder %v2486, 0.0
    %v2691 = vand.u32 %v2486, 2147483648
    %v2692 = vsel %vm2690, %v2691, %v2689
    %v2693 = vrsqrt.pop %v2487
    %v2694 = vmul.f32 %v2487, %v2693
    %vm2695 = vcmp.eq.f32.partialorder %v2487, inf
    %v2696 = vsel %vm2695, %v2487, %v2694
    %vm2697 = vcmp.eq.f32.partialorder %v2487, 0.0
    %v2698 = vand.u32 %v2487, 2147483648
    %v2699 = vsel %vm2697, %v2698, %v2696
    %v2700 = vrsqrt.pop %v2488
    %v2701 = vmul.f32 %v2488, %v2700
    %vm2702 = vcmp.eq.f32.partialorder %v2488, inf
    %v2703 = vsel %vm2702, %v2488, %v2701
    %vm2704 = vcmp.eq.f32.partialorder %v2488, 0.0
    %v2705 = vand.u32 %v2488, 2147483648
    %v2706 = vsel %vm2704, %v2705, %v2703
    %v2707 = vrsqrt.pop %v2489
    %v2708 = vmul.f32 %v2489, %v2707
    %vm2709 = vcmp.eq.f32.partialorder %v2489, inf
    %v2710 = vsel %vm2709, %v2489, %v2708
    %vm2711 = vcmp.eq.f32.partialorder %v2489, 0.0
    %v2712 = vand.u32 %v2489, 2147483648
    %v2713 = vsel %vm2711, %v2712, %v2710
    %v2714 = vld [vmem:[%s3] sm:$0x1]
    %v2715 = vpack.c.bf16 %v2299, %v2298
    %v2716 = vpack.c.bf16 %v2301, %v2300
    %v2717 = vpack.c.bf16 %v2303, %v2302
    %v2718 = vpack.c.bf16 %v2305, %v2304
    %v2719 = vpack.c.bf16 %v2307, %v2306
    %v2720 = vpack.c.bf16 %v2309, %v2308
    %v2721 = vpack.c.bf16 %v2311, %v2310
    %v2722 = vpack.c.bf16 %v2313, %v2312
    %v2723 = vpack.c.bf16 %v2315, %v2314
    %v2724 = vpack.c.bf16 %v2317, %v2316
    %v2725 = vpack.c.bf16 %v2319, %v2318
    %v2726 = vpack.c.bf16 %v2321, %v2320
    %v2727 = vpack.c.bf16 %v2323, %v2322
    %v2728 = vpack.c.bf16 %v2325, %v2324
    %v2729 = vpack.c.bf16 %v2327, %v2326
    %v2730 = vpack.c.bf16 %v2329, %v2328
    %v2731 = vld [vmem:[%s2] sm:$0xf]
    %v2732 = vld [vmem:[%s2 + $0x4] sm:$0xf]
    %v2733 = vld [vmem:[%s2 + $0x8] sm:$0xf]
    %v2734 = vld [vmem:[%s2 + $0xc] sm:$0xf]
    %v2739 = vunpack.c.l.b16 %v2731
    %v2740 = vunpack.c.l.b16 %v2732
    %v2741 = vunpack.c.l.b16 %v2733
    %v2742 = vunpack.c.l.b16 %v2734
    %v2743 = vpack.c.b16 %v2740, %v2739
    %v2744 = vpack.c.b16 %v2742, %v2741
    %vm2747 = vcmask 261120
    %v2749 = vsel %vm2747, %v2715, 0
    %v2752 = vsel %vm2747, %v2716, 0
    %v2755 = vsel %vm2747, %v2717, 0
    %v2758 = vsel %vm2747, %v2718, 0
    %v2761 = vsel %vm2747, %v2719, 0
    %v2764 = vsel %vm2747, %v2720, 0
    %v2767 = vsel %vm2747, %v2721, 0
    %v2770 = vsel %vm2747, %v2722, 0
    %v2773 = vsel %vm2747, %v2723, 0
    %v2776 = vsel %vm2747, %v2724, 0
    %v2779 = vsel %vm2747, %v2725, 0
    %v2782 = vsel %vm2747, %v2726, 0
    %v2785 = vsel %vm2747, %v2727, 0
    %v2788 = vsel %vm2747, %v2728, 0
    %v2791 = vsel %vm2747, %v2729, 0
    %v2794 = vsel %vm2747, %v2730, 0
    %2796 = vmatprep.subr.bf16.mxu0 0
    %2797 = vmatpush1.bf16.msra.mxu0 0
    %2798 = vmatprep.subr.bf16.mxu0 0
    %2799 = vmatpush1.bf16.msra.mxu0 0
    %2800 = vmatprep.subr.bf16.mxu0 0
    %2801 = vmatpush1.bf16.msra.mxu0 0
    %2802 = vmatprep.subr.bf16.mxu0 0
    %2803 = vmatpush1.bf16.msra.mxu0 0
    %2804 = vmatprep.subr.bf16.mxu0 0
    %2805 = vmatpush1.bf16.msra.mxu0 0
    %2806 = vmatprep.subr.bf16.mxu0 0
    %2807 = vmatpush1.bf16.msra.mxu0 0
    %2808 = vmatprep.subr.bf16.mxu0 0
    %2809 = vmatpush1.bf16.msra.mxu0 %v2744
    %2810 = vmatprep.subr.bf16.mxu0 0
    %2811 = vmatpush1.bf16.msra.mxu0 %v2743
    %2812 = vmatprep.subr.bf16.mxu0 0
    %2813 = vmatpush2.bf16.msra.mxu0 0
    %2814 = vmatprep.subr.bf16.mxu0 0
    %2815 = vmatpush2.bf16.msra.mxu0 0
    %2816 = vmatprep.subr.bf16.mxu0 0
    %2817 = vmatpush2.bf16.msra.mxu0 0
    %2818 = vmatprep.subr.bf16.mxu0 0
    %2819 = vmatpush2.bf16.msra.mxu0 0
    %2820 = vmatprep.subr.bf16.mxu0 0
    %2821 = vmatpush2.bf16.msra.mxu0 0
    %2822 = vmatprep.subr.bf16.mxu0 0
    %2823 = vmatpush2.bf16.msra.mxu0 0
    %2824 = vmatprep.subr.bf16.mxu0 0
    %2825 = vmatpush2.bf16.msra.mxu0 0
    %2826 = vmatprep.subr.bf16.mxu0 0
    %2827 = vmatpush2.bf16.msra.mxu0 0
    %2828 = vmatprep.mubr.bf16.mxu0 0
    %2829 = vmatmul.mubr.bf16.gmra.mxu0 %v2749
    %v2830 = vpop.f32.mrf.mxu0
    %v2831 = vadd.f32 0.0, %v2830
    %v2832 = vpop.f32.mrf.mxu0
    %v2833 = vpop.f32.mrf.mxu0
    %v2834 = vadd.f32 0.0, %v2833
    %v2835 = vpop.f32.mrf.mxu0
    %2836 = vmatprep.mubr.bf16.mxu0 0
    %2837 = vmatmul.mubr.bf16.gmra.mxu0 %v2752
    %v2838 = vpop.f32.mrf.mxu0
    %v2839 = vadd.f32 0.0, %v2838
    %v2840 = vpop.f32.mrf.mxu0
    %v2841 = vpop.f32.mrf.mxu0
    %v2842 = vadd.f32 0.0, %v2841
    %v2843 = vpop.f32.mrf.mxu0
    %2844 = vmatprep.mubr.bf16.mxu0 0
    %2845 = vmatmul.mubr.bf16.gmra.mxu0 %v2755
    %v2846 = vpop.f32.mrf.mxu0
    %v2847 = vadd.f32 0.0, %v2846
    %v2848 = vpop.f32.mrf.mxu0
    %v2849 = vpop.f32.mrf.mxu0
    %v2850 = vadd.f32 0.0, %v2849
    %v2851 = vpop.f32.mrf.mxu0
    %2852 = vmatprep.mubr.bf16.mxu0 0
    %2853 = vmatmul.mubr.bf16.gmra.mxu0 %v2758
    %v2854 = vpop.f32.mrf.mxu0
    %v2855 = vadd.f32 0.0, %v2854
    %v2856 = vpop.f32.mrf.mxu0
    %v2857 = vpop.f32.mrf.mxu0
    %v2858 = vadd.f32 0.0, %v2857
    %v2859 = vpop.f32.mrf.mxu0
    %2860 = vmatprep.mubr.bf16.mxu0 0
    %2861 = vmatmul.mubr.bf16.gmra.mxu0 %v2761
    %v2862 = vpop.f32.mrf.mxu0
    %v2863 = vadd.f32 0.0, %v2862
    %v2864 = vpop.f32.mrf.mxu0
    %v2865 = vpop.f32.mrf.mxu0
    %v2866 = vadd.f32 0.0, %v2865
    %v2867 = vpop.f32.mrf.mxu0
    %2868 = vmatprep.mubr.bf16.mxu0 0
    %2869 = vmatmul.mubr.bf16.gmra.mxu0 %v2764
    %v2870 = vpop.f32.mrf.mxu0
    %v2871 = vadd.f32 0.0, %v2870
    %v2872 = vpop.f32.mrf.mxu0
    %v2873 = vpop.f32.mrf.mxu0
    %v2874 = vadd.f32 0.0, %v2873
    %v2875 = vpop.f32.mrf.mxu0
    %2876 = vmatprep.mubr.bf16.mxu0 0
    %2877 = vmatmul.mubr.bf16.gmra.mxu0 %v2767
    %v2878 = vpop.f32.mrf.mxu0
    %v2879 = vadd.f32 0.0, %v2878
    %v2880 = vpop.f32.mrf.mxu0
    %v2881 = vpop.f32.mrf.mxu0
    %v2882 = vadd.f32 0.0, %v2881
    %v2883 = vpop.f32.mrf.mxu0
    %2884 = vmatprep.mubr.bf16.mxu0 0
    %2885 = vmatmul.mubr.bf16.gmra.mxu0 %v2770
    %v2886 = vpop.f32.mrf.mxu0
    %v2887 = vadd.f32 0.0, %v2886
    %v2888 = vpop.f32.mrf.mxu0
    %v2889 = vpop.f32.mrf.mxu0
    %v2890 = vadd.f32 0.0, %v2889
    %v2891 = vpop.f32.mrf.mxu0
    %2892 = vmatprep.mubr.bf16.mxu0 0
    %2893 = vmatmul.mubr.bf16.gmra.mxu0 %v2773
    %v2894 = vpop.f32.mrf.mxu0
    %v2895 = vadd.f32 0.0, %v2894
    %v2896 = vpop.f32.mrf.mxu0
    %v2897 = vpop.f32.mrf.mxu0
    %v2898 = vadd.f32 0.0, %v2897
    %v2899 = vpop.f32.mrf.mxu0
    %2900 = vmatprep.mubr.bf16.mxu0 0
    %2901 = vmatmul.mubr.bf16.gmra.mxu0 %v2776
    %v2902 = vpop.f32.mrf.mxu0
    %v2903 = vadd.f32 0.0, %v2902
    %v2904 = vpop.f32.mrf.mxu0
    %v2905 = vpop.f32.mrf.mxu0
    %v2906 = vadd.f32 0.0, %v2905
    %v2907 = vpop.f32.mrf.mxu0
    %2908 = vmatprep.mubr.bf16.mxu0 0
    %2909 = vmatmul.mubr.bf16.gmra.mxu0 %v2779
    %v2910 = vpop.f32.mrf.mxu0
    %v2911 = vadd.f32 0.0, %v2910
    %v2912 = vpop.f32.mrf.mxu0
    %v2913 = vpop.f32.mrf.mxu0
    %v2914 = vadd.f32 0.0, %v2913
    %v2915 = vpop.f32.mrf.mxu0
    %2916 = vmatprep.mubr.bf16.mxu0 0
    %2917 = vmatmul.mubr.bf16.gmra.mxu0 %v2782
    %v2918 = vpop.f32.mrf.mxu0
    %v2919 = vadd.f32 0.0, %v2918
    %v2920 = vpop.f32.mrf.mxu0
    %v2921 = vpop.f32.mrf.mxu0
    %v2922 = vadd.f32 0.0, %v2921
    %v2923 = vpop.f32.mrf.mxu0
    %2924 = vmatprep.mubr.bf16.mxu0 0
    %2925 = vmatmul.mubr.bf16.gmra.mxu0 %v2785
    %v2926 = vpop.f32.mrf.mxu0
    %v2927 = vadd.f32 0.0, %v2926
    %v2928 = vpop.f32.mrf.mxu0
    %v2929 = vpop.f32.mrf.mxu0
    %v2930 = vadd.f32 0.0, %v2929
    %v2931 = vpop.f32.mrf.mxu0
    %2932 = vmatprep.mubr.bf16.mxu0 0
    %2933 = vmatmul.mubr.bf16.gmra.mxu0 %v2788
    %v2934 = vpop.f32.mrf.mxu0
    %v2935 = vadd.f32 0.0, %v2934
    %v2936 = vpop.f32.mrf.mxu0
    %v2937 = vpop.f32.mrf.mxu0
    %v2938 = vadd.f32 0.0, %v2937
    %v2939 = vpop.f32.mrf.mxu0
    %2940 = vmatprep.mubr.bf16.mxu0 0
    %2941 = vmatmul.mubr.bf16.gmra.mxu0 %v2791
    %v2942 = vpop.f32.mrf.mxu0
    %v2943 = vadd.f32 0.0, %v2942
    %v2944 = vpop.f32.mrf.mxu0
    %v2945 = vpop.f32.mrf.mxu0
    %v2946 = vadd.f32 0.0, %v2945
    %v2947 = vpop.f32.mrf.mxu0
    %2948 = vmatprep.mubr.bf16.mxu0 0
    %2949 = vmatmul.mubr.bf16.gmra.mxu0 %v2794
    %v2950 = vpop.f32.mrf.mxu0
    %v2951 = vadd.f32 0.0, %v2950
    %v2952 = vpop.f32.mrf.mxu0
    %v2953 = vpop.f32.mrf.mxu0
    %v2954 = vadd.f32 0.0, %v2953
    %v2955 = vpop.f32.mrf.mxu0
    %2956 = vdwg.mxu0
    %v2958 = vlaneseq
    %v2959 = vshrl.u32 %v2958, 7
    %v2960 = vsub.s32 0, %v2959
    %v2961 = vrot.slane %v2714, %v2960
    %v2963 = vadd.f32 %v2961, %v2831
    %v2964 = vadd.f32 %v2961, %v2834
    %v2965 = vadd.f32 %v2961, %v2839
    %v2966 = vadd.f32 %v2961, %v2842
    %v2967 = vadd.f32 %v2961, %v2847
    %v2968 = vadd.f32 %v2961, %v2850
    %v2969 = vadd.f32 %v2961, %v2855
    %v2970 = vadd.f32 %v2961, %v2858
    %v2971 = vadd.f32 %v2961, %v2863
    %v2972 = vadd.f32 %v2961, %v2866
    %v2973 = vadd.f32 %v2961, %v2871
    %v2974 = vadd.f32 %v2961, %v2874
    %v2975 = vadd.f32 %v2961, %v2879
    %v2976 = vadd.f32 %v2961, %v2882
    %v2977 = vadd.f32 %v2961, %v2887
    %v2978 = vadd.f32 %v2961, %v2890
    %v2979 = vadd.f32 %v2961, %v2895
    %v2980 = vadd.f32 %v2961, %v2898
    %v2981 = vadd.f32 %v2961, %v2903
    %v2982 = vadd.f32 %v2961, %v2906
    %v2983 = vadd.f32 %v2961, %v2911
    %v2984 = vadd.f32 %v2961, %v2914
    %v2985 = vadd.f32 %v2961, %v2919
    %v2986 = vadd.f32 %v2961, %v2922
    %v2987 = vadd.f32 %v2961, %v2927
    %v2988 = vadd.f32 %v2961, %v2930
    %v2989 = vadd.f32 %v2961, %v2935
    %v2990 = vadd.f32 %v2961, %v2938
    %v2991 = vadd.f32 %v2961, %v2943
    %v2992 = vadd.f32 %v2961, %v2946
    %v2993 = vadd.f32 %v2961, %v2951
    %v2994 = vadd.f32 %v2961, %v2954
    %v2995 = vpack.c.bf16 %v2235, %v2234
    %v2996 = vpack.c.bf16 %v2237, %v2236
    %v2997 = vpack.c.bf16 %v2239, %v2238
    %v2998 = vpack.c.bf16 %v2241, %v2240
    %v2999 = vpack.c.bf16 %v2243, %v2242
    %v3000 = vpack.c.bf16 %v2245, %v2244
    %v3001 = vpack.c.bf16 %v2247, %v2246
    %v3002 = vpack.c.bf16 %v2249, %v2248
    %v3003 = vpack.c.bf16 %v2251, %v2250
    %v3004 = vpack.c.bf16 %v2253, %v2252
    %v3005 = vpack.c.bf16 %v2255, %v2254
    %v3006 = vpack.c.bf16 %v2257, %v2256
    %v3007 = vpack.c.bf16 %v2259, %v2258
    %v3008 = vpack.c.bf16 %v2261, %v2260
    %v3009 = vpack.c.bf16 %v2263, %v2262
    %v3010 = vpack.c.bf16 %v2265, %v2264
    %s3011 = scalar_lea.vmem %s2, 16
    %v3012 = vld [vmem:[%s3011] sm:$0xf]
    %v3013 = vld [vmem:[%s3011 + $0x4] sm:$0xf]
    %v3014 = vld [vmem:[%s3011 + $0x8] sm:$0xf]
    %v3015 = vld [vmem:[%s3011 + $0xc] sm:$0xf]
    %v3020 = vunpack.c.l.b16 %v3012
    %v3021 = vunpack.c.l.b16 %v3013
    %v3022 = vunpack.c.l.b16 %v3014
    %v3023 = vunpack.c.l.b16 %v3015
    %v3024 = vpack.c.b16 %v3021, %v3020
    %v3025 = vpack.c.b16 %v3023, %v3022
    %v3029 = vsel %vm2747, %v2995, 0
    %v3032 = vsel %vm2747, %v2996, 0
    %v3035 = vsel %vm2747, %v2997, 0
    %v3038 = vsel %vm2747, %v2998, 0
    %v3041 = vsel %vm2747, %v2999, 0
    %v3044 = vsel %vm2747, %v3000, 0
    %v3047 = vsel %vm2747, %v3001, 0
    %v3050 = vsel %vm2747, %v3002, 0
    %v3053 = vsel %vm2747, %v3003, 0
    %v3056 = vsel %vm2747, %v3004, 0
    %v3059 = vsel %vm2747, %v3005, 0
    %v3062 = vsel %vm2747, %v3006, 0
    %v3065 = vsel %vm2747, %v3007, 0
    %v3068 = vsel %vm2747, %v3008, 0
    %v3071 = vsel %vm2747, %v3009, 0
    %v3074 = vsel %vm2747, %v3010, 0
    %3076 = vmatprep.subr.bf16.mxu0 0
    %3077 = vmatpush1.bf16.msra.mxu0 0
    %3078 = vmatprep.subr.bf16.mxu0 0
    %3079 = vmatpush1.bf16.msra.mxu0 0
    %3080 = vmatprep.subr.bf16.mxu0 0
    %3081 = vmatpush1.bf16.msra.mxu0 0
    %3082 = vmatprep.subr.bf16.mxu0 0
    %3083 = vmatpush1.bf16.msra.mxu0 0
    %3084 = vmatprep.subr.bf16.mxu0 0
    %3085 = vmatpush1.bf16.msra.mxu0 0
    %3086 = vmatprep.subr.bf16.mxu0 0
    %3087 = vmatpush1.bf16.msra.mxu0 0
    %3088 = vmatprep.subr.bf16.mxu0 0
    %3089 = vmatpush1.bf16.msra.mxu0 %v3025
    %3090 = vmatprep.subr.bf16.mxu0 0
    %3091 = vmatpush1.bf16.msra.mxu0 %v3024
    %3092 = vmatprep.subr.bf16.mxu0 0
    %3093 = vmatpush2.bf16.msra.mxu0 0
    %3094 = vmatprep.subr.bf16.mxu0 0
    %3095 = vmatpush2.bf16.msra.mxu0 0
    %3096 = vmatprep.subr.bf16.mxu0 0
    %3097 = vmatpush2.bf16.msra.mxu0 0
    %3098 = vmatprep.subr.bf16.mxu0 0
    %3099 = vmatpush2.bf16.msra.mxu0 0
    %3100 = vmatprep.subr.bf16.mxu0 0
    %3101 = vmatpush2.bf16.msra.mxu0 0
    %3102 = vmatprep.subr.bf16.mxu0 0
    %3103 = vmatpush2.bf16.msra.mxu0 0
    %3104 = vmatprep.subr.bf16.mxu0 0
    %3105 = vmatpush2.bf16.msra.mxu0 0
    %3106 = vmatprep.subr.bf16.mxu0 0
    %3107 = vmatpush2.bf16.msra.mxu0 0
    %3108 = vmatprep.mubr.bf16.mxu0 0
    %3109 = vmatmul.mubr.bf16.gmra.mxu0 %v3029
    %v3110 = vpop.f32.mrf.mxu0
    %v3111 = vadd.f32 0.0, %v3110
    %v3112 = vpop.f32.mrf.mxu0
    %v3113 = vpop.f32.mrf.mxu0
    %v3114 = vadd.f32 0.0, %v3113
    %v3115 = vpop.f32.mrf.mxu0
    %3116 = vmatprep.mubr.bf16.mxu0 0
    %3117 = vmatmul.mubr.bf16.gmra.mxu0 %v3032
    %v3118 = vpop.f32.mrf.mxu0
    %v3119 = vadd.f32 0.0, %v3118
    %v3120 = vpop.f32.mrf.mxu0
    %v3121 = vpop.f32.mrf.mxu0
    %v3122 = vadd.f32 0.0, %v3121
    %v3123 = vpop.f32.mrf.mxu0
    %3124 = vmatprep.mubr.bf16.mxu0 0
    %3125 = vmatmul.mubr.bf16.gmra.mxu0 %v3035
    %v3126 = vpop.f32.mrf.mxu0
    %v3127 = vadd.f32 0.0, %v3126
    %v3128 = vpop.f32.mrf.mxu0
    %v3129 = vpop.f32.mrf.mxu0
    %v3130 = vadd.f32 0.0, %v3129
    %v3131 = vpop.f32.mrf.mxu0
    %3132 = vmatprep.mubr.bf16.mxu0 0
    %3133 = vmatmul.mubr.bf16.gmra.mxu0 %v3038
    %v3134 = vpop.f32.mrf.mxu0
    %v3135 = vadd.f32 0.0, %v3134
    %v3136 = vpop.f32.mrf.mxu0
    %v3137 = vpop.f32.mrf.mxu0
    %v3138 = vadd.f32 0.0, %v3137
    %v3139 = vpop.f32.mrf.mxu0
    %3140 = vmatprep.mubr.bf16.mxu0 0
    %3141 = vmatmul.mubr.bf16.gmra.mxu0 %v3041
    %v3142 = vpop.f32.mrf.mxu0
    %v3143 = vadd.f32 0.0, %v3142
    %v3144 = vpop.f32.mrf.mxu0
    %v3145 = vpop.f32.mrf.mxu0
    %v3146 = vadd.f32 0.0, %v3145
    %v3147 = vpop.f32.mrf.mxu0
    %3148 = vmatprep.mubr.bf16.mxu0 0
    %3149 = vmatmul.mubr.bf16.gmra.mxu0 %v3044
    %v3150 = vpop.f32.mrf.mxu0
    %v3151 = vadd.f32 0.0, %v3150
    %v3152 = vpop.f32.mrf.mxu0
    %v3153 = vpop.f32.mrf.mxu0
    %v3154 = vadd.f32 0.0, %v3153
    %v3155 = vpop.f32.mrf.mxu0
    %3156 = vmatprep.mubr.bf16.mxu0 0
    %3157 = vmatmul.mubr.bf16.gmra.mxu0 %v3047
    %v3158 = vpop.f32.mrf.mxu0
    %v3159 = vadd.f32 0.0, %v3158
    %v3160 = vpop.f32.mrf.mxu0
    %v3161 = vpop.f32.mrf.mxu0
    %v3162 = vadd.f32 0.0, %v3161
    %v3163 = vpop.f32.mrf.mxu0
    %3164 = vmatprep.mubr.bf16.mxu0 0
    %3165 = vmatmul.mubr.bf16.gmra.mxu0 %v3050
    %v3166 = vpop.f32.mrf.mxu0
    %v3167 = vadd.f32 0.0, %v3166
    %v3168 = vpop.f32.mrf.mxu0
    %v3169 = vpop.f32.mrf.mxu0
    %v3170 = vadd.f32 0.0, %v3169
    %v3171 = vpop.f32.mrf.mxu0
    %3172 = vmatprep.mubr.bf16.mxu0 0
    %3173 = vmatmul.mubr.bf16.gmra.mxu0 %v3053
    %v3174 = vpop.f32.mrf.mxu0
    %v3175 = vadd.f32 0.0, %v3174
    %v3176 = vpop.f32.mrf.mxu0
    %v3177 = vpop.f32.mrf.mxu0
    %v3178 = vadd.f32 0.0, %v3177
    %v3179 = vpop.f32.mrf.mxu0
    %3180 = vmatprep.mubr.bf16.mxu0 0
    %3181 = vmatmul.mubr.bf16.gmra.mxu0 %v3056
    %v3182 = vpop.f32.mrf.mxu0
    %v3183 = vadd.f32 0.0, %v3182
    %v3184 = vpop.f32.mrf.mxu0
    %v3185 = vpop.f32.mrf.mxu0
    %v3186 = vadd.f32 0.0, %v3185
    %v3187 = vpop.f32.mrf.mxu0
    %3188 = vmatprep.mubr.bf16.mxu0 0
    %3189 = vmatmul.mubr.bf16.gmra.mxu0 %v3059
    %v3190 = vpop.f32.mrf.mxu0
    %v3191 = vadd.f32 0.0, %v3190
    %v3192 = vpop.f32.mrf.mxu0
    %v3193 = vpop.f32.mrf.mxu0
    %v3194 = vadd.f32 0.0, %v3193
    %v3195 = vpop.f32.mrf.mxu0
    %3196 = vmatprep.mubr.bf16.mxu0 0
    %3197 = vmatmul.mubr.bf16.gmra.mxu0 %v3062
    %v3198 = vpop.f32.mrf.mxu0
    %v3199 = vadd.f32 0.0, %v3198
    %v3200 = vpop.f32.mrf.mxu0
    %v3201 = vpop.f32.mrf.mxu0
    %v3202 = vadd.f32 0.0, %v3201
    %v3203 = vpop.f32.mrf.mxu0
    %3204 = vmatprep.mubr.bf16.mxu0 0
    %3205 = vmatmul.mubr.bf16.gmra.mxu0 %v3065
    %v3206 = vpop.f32.mrf.mxu0
    %v3207 = vadd.f32 0.0, %v3206
    %v3208 = vpop.f32.mrf.mxu0
    %v3209 = vpop.f32.mrf.mxu0
    %v3210 = vadd.f32 0.0, %v3209
    %v3211 = vpop.f32.mrf.mxu0
    %3212 = vmatprep.mubr.bf16.mxu0 0
    %3213 = vmatmul.mubr.bf16.gmra.mxu0 %v3068
    %v3214 = vpop.f32.mrf.mxu0
    %v3215 = vadd.f32 0.0, %v3214
    %v3216 = vpop.f32.mrf.mxu0
    %v3217 = vpop.f32.mrf.mxu0
    %v3218 = vadd.f32 0.0, %v3217
    %v3219 = vpop.f32.mrf.mxu0
    %3220 = vmatprep.mubr.bf16.mxu0 0
    %3221 = vmatmul.mubr.bf16.gmra.mxu0 %v3071
    %v3222 = vpop.f32.mrf.mxu0
    %v3223 = vadd.f32 0.0, %v3222
    %v3224 = vpop.f32.mrf.mxu0
    %v3225 = vpop.f32.mrf.mxu0
    %v3226 = vadd.f32 0.0, %v3225
    %v3227 = vpop.f32.mrf.mxu0
    %3228 = vmatprep.mubr.bf16.mxu0 0
    %3229 = vmatmul.mubr.bf16.gmra.mxu0 %v3074
    %v3230 = vpop.f32.mrf.mxu0
    %v3231 = vadd.f32 0.0, %v3230
    %v3232 = vpop.f32.mrf.mxu0
    %v3233 = vpop.f32.mrf.mxu0
    %v3234 = vadd.f32 0.0, %v3233
    %v3235 = vpop.f32.mrf.mxu0
    %3236 = vdwg.mxu0
    %v3237 = vadd.f32 %v2963, %v3111
    %v3238 = vadd.f32 %v2964, %v3114
    %v3239 = vadd.f32 %v2965, %v3119
    %v3240 = vadd.f32 %v2966, %v3122
    %v3241 = vadd.f32 %v2967, %v3127
    %v3242 = vadd.f32 %v2968, %v3130
    %v3243 = vadd.f32 %v2969, %v3135
    %v3244 = vadd.f32 %v2970, %v3138
    %v3245 = vadd.f32 %v2971, %v3143
    %v3246 = vadd.f32 %v2972, %v3146
    %v3247 = vadd.f32 %v2973, %v3151
    %v3248 = vadd.f32 %v2974, %v3154
    %v3249 = vadd.f32 %v2975, %v3159
    %v3250 = vadd.f32 %v2976, %v3162
    %v3251 = vadd.f32 %v2977, %v3167
    %v3252 = vadd.f32 %v2978, %v3170
    %v3253 = vadd.f32 %v2979, %v3175
    %v3254 = vadd.f32 %v2980, %v3178
    %v3255 = vadd.f32 %v2981, %v3183
    %v3256 = vadd.f32 %v2982, %v3186
    %v3257 = vadd.f32 %v2983, %v3191
    %v3258 = vadd.f32 %v2984, %v3194
    %v3259 = vadd.f32 %v2985, %v3199
    %v3260 = vadd.f32 %v2986, %v3202
    %v3261 = vadd.f32 %v2987, %v3207
    %v3262 = vadd.f32 %v2988, %v3210
    %v3263 = vadd.f32 %v2989, %v3215
    %v3264 = vadd.f32 %v2990, %v3218
    %v3265 = vadd.f32 %v2991, %v3223
    %v3266 = vadd.f32 %v2992, %v3226
    %v3267 = vadd.f32 %v2993, %v3231
    %v3268 = vadd.f32 %v2994, %v3234
    %v3269 = vpack.c.bf16 %v2267, %v2266
    %v3270 = vpack.c.bf16 %v2269, %v2268
    %v3271 = vpack.c.bf16 %v2271, %v2270
    %v3272 = vpack.c.bf16 %v2273, %v2272
    %v3273 = vpack.c.bf16 %v2275, %v2274
    %v3274 = vpack.c.bf16 %v2277, %v2276
    %v3275 = vpack.c.bf16 %v2279, %v2278
    %v3276 = vpack.c.bf16 %v2281, %v2280
    %v3277 = vpack.c.bf16 %v2283, %v2282
    %v3278 = vpack.c.bf16 %v2285, %v2284
    %v3279 = vpack.c.bf16 %v2287, %v2286
    %v3280 = vpack.c.bf16 %v2289, %v2288
    %v3281 = vpack.c.bf16 %v2291, %v2290
    %v3282 = vpack.c.bf16 %v2293, %v2292
    %v3283 = vpack.c.bf16 %v2295, %v2294
    %v3284 = vpack.c.bf16 %v2297, %v2296
    %s3285 = scalar_lea.vmem %s2, 32
    %v3286 = vld [vmem:[%s3285] sm:$0xf]
    %v3287 = vld [vmem:[%s3285 + $0x4] sm:$0xf]
    %v3288 = vld [vmem:[%s3285 + $0x8] sm:$0xf]
    %v3289 = vld [vmem:[%s3285 + $0xc] sm:$0xf]
    %v3294 = vunpack.c.l.b16 %v3286
    %v3295 = vunpack.c.l.b16 %v3287
    %v3296 = vunpack.c.l.b16 %v3288
    %v3297 = vunpack.c.l.b16 %v3289
    %v3298 = vpack.c.b16 %v3295, %v3294
    %v3299 = vpack.c.b16 %v3297, %v3296
    %v3303 = vsel %vm2747, %v3269, 0
    %v3306 = vsel %vm2747, %v3270, 0
    %v3309 = vsel %vm2747, %v3271, 0
    %v3312 = vsel %vm2747, %v3272, 0
    %v3315 = vsel %vm2747, %v3273, 0
    %v3318 = vsel %vm2747, %v3274, 0
    %v3321 = vsel %vm2747, %v3275, 0
    %v3324 = vsel %vm2747, %v3276, 0
    %v3327 = vsel %vm2747, %v3277, 0
    %v3330 = vsel %vm2747, %v3278, 0
    %v3333 = vsel %vm2747, %v3279, 0
    %v3336 = vsel %vm2747, %v3280, 0
    %v3339 = vsel %vm2747, %v3281, 0
    %v3342 = vsel %vm2747, %v3282, 0
    %v3345 = vsel %vm2747, %v3283, 0
    %v3348 = vsel %vm2747, %v3284, 0
    %3350 = vmatprep.subr.bf16.mxu0 0
    %3351 = vmatpush1.bf16.msra.mxu0 0
    %3352 = vmatprep.subr.bf16.mxu0 0
    %3353 = vmatpush1.bf16.msra.mxu0 0
    %3354 = vmatprep.subr.bf16.mxu0 0
    %3355 = vmatpush1.bf16.msra.mxu0 0
    %3356 = vmatprep.subr.bf16.mxu0 0
    %3357 = vmatpush1.bf16.msra.mxu0 0
    %3358 = vmatprep.subr.bf16.mxu0 0
    %3359 = vmatpush1.bf16.msra.mxu0 0
    %3360 = vmatprep.subr.bf16.mxu0 0
    %3361 = vmatpush1.bf16.msra.mxu0 0
    %3362 = vmatprep.subr.bf16.mxu0 0
    %3363 = vmatpush1.bf16.msra.mxu0 %v3299
    %3364 = vmatprep.subr.bf16.mxu0 0
    %3365 = vmatpush1.bf16.msra.mxu0 %v3298
    %3366 = vmatprep.subr.bf16.mxu0 0
    %3367 = vmatpush2.bf16.msra.mxu0 0
    %3368 = vmatprep.subr.bf16.mxu0 0
    %3369 = vmatpush2.bf16.msra.mxu0 0
    %3370 = vmatprep.subr.bf16.mxu0 0
    %3371 = vmatpush2.bf16.msra.mxu0 0
    %3372 = vmatprep.subr.bf16.mxu0 0
    %3373 = vmatpush2.bf16.msra.mxu0 0
    %3374 = vmatprep.subr.bf16.mxu0 0
    %3375 = vmatpush2.bf16.msra.mxu0 0
    %3376 = vmatprep.subr.bf16.mxu0 0
    %3377 = vmatpush2.bf16.msra.mxu0 0
    %3378 = vmatprep.subr.bf16.mxu0 0
    %3379 = vmatpush2.bf16.msra.mxu0 0
    %3380 = vmatprep.subr.bf16.mxu0 0
    %3381 = vmatpush2.bf16.msra.mxu0 0
    %3382 = vmatprep.mubr.bf16.mxu0 0
    %3383 = vmatmul.mubr.bf16.gmra.mxu0 %v3303
    %v3384 = vpop.f32.mrf.mxu0
    %v3385 = vadd.f32 0.0, %v3384
    %v3386 = vpop.f32.mrf.mxu0
    %v3387 = vpop.f32.mrf.mxu0
    %v3388 = vadd.f32 0.0, %v3387
    %v3389 = vpop.f32.mrf.mxu0
    %3390 = vmatprep.mubr.bf16.mxu0 0
    %3391 = vmatmul.mubr.bf16.gmra.mxu0 %v3306
    %v3392 = vpop.f32.mrf.mxu0
    %v3393 = vadd.f32 0.0, %v3392
    %v3394 = vpop.f32.mrf.mxu0
    %v3395 = vpop.f32.mrf.mxu0
    %v3396 = vadd.f32 0.0, %v3395
    %v3397 = vpop.f32.mrf.mxu0
    %3398 = vmatprep.mubr.bf16.mxu0 0
    %3399 = vmatmul.mubr.bf16.gmra.mxu0 %v3309
    %v3400 = vpop.f32.mrf.mxu0
    %v3401 = vadd.f32 0.0, %v3400
    %v3402 = vpop.f32.mrf.mxu0
    %v3403 = vpop.f32.mrf.mxu0
    %v3404 = vadd.f32 0.0, %v3403
    %v3405 = vpop.f32.mrf.mxu0
    %3406 = vmatprep.mubr.bf16.mxu0 0
    %3407 = vmatmul.mubr.bf16.gmra.mxu0 %v3312
    %v3408 = vpop.f32.mrf.mxu0
    %v3409 = vadd.f32 0.0, %v3408
    %v3410 = vpop.f32.mrf.mxu0
    %v3411 = vpop.f32.mrf.mxu0
    %v3412 = vadd.f32 0.0, %v3411
    %v3413 = vpop.f32.mrf.mxu0
    %3414 = vmatprep.mubr.bf16.mxu0 0
    %3415 = vmatmul.mubr.bf16.gmra.mxu0 %v3315
    %v3416 = vpop.f32.mrf.mxu0
    %v3417 = vadd.f32 0.0, %v3416
    %v3418 = vpop.f32.mrf.mxu0
    %v3419 = vpop.f32.mrf.mxu0
    %v3420 = vadd.f32 0.0, %v3419
    %v3421 = vpop.f32.mrf.mxu0
    %3422 = vmatprep.mubr.bf16.mxu0 0
    %3423 = vmatmul.mubr.bf16.gmra.mxu0 %v3318
    %v3424 = vpop.f32.mrf.mxu0
    %v3425 = vadd.f32 0.0, %v3424
    %v3426 = vpop.f32.mrf.mxu0
    %v3427 = vpop.f32.mrf.mxu0
    %v3428 = vadd.f32 0.0, %v3427
    %v3429 = vpop.f32.mrf.mxu0
    %3430 = vmatprep.mubr.bf16.mxu0 0
    %3431 = vmatmul.mubr.bf16.gmra.mxu0 %v3321
    %v3432 = vpop.f32.mrf.mxu0
    %v3433 = vadd.f32 0.0, %v3432
    %v3434 = vpop.f32.mrf.mxu0
    %v3435 = vpop.f32.mrf.mxu0
    %v3436 = vadd.f32 0.0, %v3435
    %v3437 = vpop.f32.mrf.mxu0
    %3438 = vmatprep.mubr.bf16.mxu0 0
    %3439 = vmatmul.mubr.bf16.gmra.mxu0 %v3324
    %v3440 = vpop.f32.mrf.mxu0
    %v3441 = vadd.f32 0.0, %v3440
    %v3442 = vpop.f32.mrf.mxu0
    %v3443 = vpop.f32.mrf.mxu0
    %v3444 = vadd.f32 0.0, %v3443
    %v3445 = vpop.f32.mrf.mxu0
    %3446 = vmatprep.mubr.bf16.mxu0 0
    %3447 = vmatmul.mubr.bf16.gmra.mxu0 %v3327
    %v3448 = vpop.f32.mrf.mxu0
    %v3449 = vadd.f32 0.0, %v3448
    %v3450 = vpop.f32.mrf.mxu0
    %v3451 = vpop.f32.mrf.mxu0
    %v3452 = vadd.f32 0.0, %v3451
    %v3453 = vpop.f32.mrf.mxu0
    %3454 = vmatprep.mubr.bf16.mxu0 0
    %3455 = vmatmul.mubr.bf16.gmra.mxu0 %v3330
    %v3456 = vpop.f32.mrf.mxu0
    %v3457 = vadd.f32 0.0, %v3456
    %v3458 = vpop.f32.mrf.mxu0
    %v3459 = vpop.f32.mrf.mxu0
    %v3460 = vadd.f32 0.0, %v3459
    %v3461 = vpop.f32.mrf.mxu0
    %3462 = vmatprep.mubr.bf16.mxu0 0
    %3463 = vmatmul.mubr.bf16.gmra.mxu0 %v3333
    %v3464 = vpop.f32.mrf.mxu0
    %v3465 = vadd.f32 0.0, %v3464
    %v3466 = vpop.f32.mrf.mxu0
    %v3467 = vpop.f32.mrf.mxu0
    %v3468 = vadd.f32 0.0, %v3467
    %v3469 = vpop.f32.mrf.mxu0
    %3470 = vmatprep.mubr.bf16.mxu0 0
    %3471 = vmatmul.mubr.bf16.gmra.mxu0 %v3336
    %v3472 = vpop.f32.mrf.mxu0
    %v3473 = vadd.f32 0.0, %v3472
    %v3474 = vpop.f32.mrf.mxu0
    %v3475 = vpop.f32.mrf.mxu0
    %v3476 = vadd.f32 0.0, %v3475
    %v3477 = vpop.f32.mrf.mxu0
    %3478 = vmatprep.mubr.bf16.mxu0 0
    %3479 = vmatmul.mubr.bf16.gmra.mxu0 %v3339
    %v3480 = vpop.f32.mrf.mxu0
    %v3481 = vadd.f32 0.0, %v3480
    %v3482 = vpop.f32.mrf.mxu0
    %v3483 = vpop.f32.mrf.mxu0
    %v3484 = vadd.f32 0.0, %v3483
    %v3485 = vpop.f32.mrf.mxu0
    %3486 = vmatprep.mubr.bf16.mxu0 0
    %3487 = vmatmul.mubr.bf16.gmra.mxu0 %v3342
    %v3488 = vpop.f32.mrf.mxu0
    %v3489 = vadd.f32 0.0, %v3488
    %v3490 = vpop.f32.mrf.mxu0
    %v3491 = vpop.f32.mrf.mxu0
    %v3492 = vadd.f32 0.0, %v3491
    %v3493 = vpop.f32.mrf.mxu0
    %3494 = vmatprep.mubr.bf16.mxu0 0
    %3495 = vmatmul.mubr.bf16.gmra.mxu0 %v3345
    %v3496 = vpop.f32.mrf.mxu0
    %v3497 = vadd.f32 0.0, %v3496
    %v3498 = vpop.f32.mrf.mxu0
    %v3499 = vpop.f32.mrf.mxu0
    %v3500 = vadd.f32 0.0, %v3499
    %v3501 = vpop.f32.mrf.mxu0
    %3502 = vmatprep.mubr.bf16.mxu0 0
    %3503 = vmatmul.mubr.bf16.gmra.mxu0 %v3348
    %v3504 = vpop.f32.mrf.mxu0
    %v3505 = vadd.f32 0.0, %v3504
    %v3506 = vpop.f32.mrf.mxu0
    %v3507 = vpop.f32.mrf.mxu0
    %v3508 = vadd.f32 0.0, %v3507
    %v3509 = vpop.f32.mrf.mxu0
    %3510 = vdwg.mxu0
    %v3511 = vadd.f32 %v3237, %v3385
    %v3512 = vadd.f32 %v3238, %v3388
    %v3513 = vadd.f32 %v3239, %v3393
    %v3514 = vadd.f32 %v3240, %v3396
    %v3515 = vadd.f32 %v3241, %v3401
    %v3516 = vadd.f32 %v3242, %v3404
    %v3517 = vadd.f32 %v3243, %v3409
    %v3518 = vadd.f32 %v3244, %v3412
    %v3519 = vadd.f32 %v3245, %v3417
    %v3520 = vadd.f32 %v3246, %v3420
    %v3521 = vadd.f32 %v3247, %v3425
    %v3522 = vadd.f32 %v3248, %v3428
    %v3523 = vadd.f32 %v3249, %v3433
    %v3524 = vadd.f32 %v3250, %v3436
    %v3525 = vadd.f32 %v3251, %v3441
    %v3526 = vadd.f32 %v3252, %v3444
    %v3527 = vadd.f32 %v3253, %v3449
    %v3528 = vadd.f32 %v3254, %v3452
    %v3529 = vadd.f32 %v3255, %v3457
    %v3530 = vadd.f32 %v3256, %v3460
    %v3531 = vadd.f32 %v3257, %v3465
    %v3532 = vadd.f32 %v3258, %v3468
    %v3533 = vadd.f32 %v3259, %v3473
    %v3534 = vadd.f32 %v3260, %v3476
    %v3535 = vadd.f32 %v3261, %v3481
    %v3536 = vadd.f32 %v3262, %v3484
    %v3537 = vadd.f32 %v3263, %v3489
    %v3538 = vadd.f32 %v3264, %v3492
    %v3539 = vadd.f32 %v3265, %v3497
    %v3540 = vadd.f32 %v3266, %v3500
    %v3541 = vadd.f32 %v3267, %v3505
    %v3542 = vadd.f32 %v3268, %v3508
    %v3543 = vpack.c.bf16 %v2503, %v2496
    %v3544 = vpack.c.bf16 %v2517, %v2510
    %v3545 = vpack.c.bf16 %v2531, %v2524
    %v3546 = vpack.c.bf16 %v2545, %v2538
    %v3547 = vpack.c.bf16 %v2559, %v2552
    %v3548 = vpack.c.bf16 %v2573, %v2566
    %v3549 = vpack.c.bf16 %v2587, %v2580
    %v3550 = vpack.c.bf16 %v2601, %v2594
    %v3551 = vpack.c.bf16 %v2615, %v2608
    %v3552 = vpack.c.bf16 %v2629, %v2622
    %v3553 = vpack.c.bf16 %v2643, %v2636
    %v3554 = vpack.c.bf16 %v2657, %v2650
    %v3555 = vpack.c.bf16 %v2671, %v2664
    %v3556 = vpack.c.bf16 %v2685, %v2678
    %v3557 = vpack.c.bf16 %v2699, %v2692
    %v3558 = vpack.c.bf16 %v2713, %v2706
    %s3559 = scalar_lea.vmem %s2, 48
    %v3560 = vld [vmem:[%s3559] sm:$0xf]
    %v3561 = vld [vmem:[%s3559 + $0x4] sm:$0xf]
    %v3562 = vld [vmem:[%s3559 + $0x8] sm:$0xf]
    %v3563 = vld [vmem:[%s3559 + $0xc] sm:$0xf]
    %v3568 = vunpack.c.l.b16 %v3560
    %v3569 = vunpack.c.l.b16 %v3561
    %v3570 = vunpack.c.l.b16 %v3562
    %v3571 = vunpack.c.l.b16 %v3563
    %v3572 = vpack.c.b16 %v3569, %v3568
    %v3573 = vpack.c.b16 %v3571, %v3570
    %v3577 = vsel %vm2747, %v3543, 0
    %v3580 = vsel %vm2747, %v3544, 0
    %v3583 = vsel %vm2747, %v3545, 0
    %v3586 = vsel %vm2747, %v3546, 0
    %v3589 = vsel %vm2747, %v3547, 0
    %v3592 = vsel %vm2747, %v3548, 0
    %v3595 = vsel %vm2747, %v3549, 0
    %v3598 = vsel %vm2747, %v3550, 0
    %v3601 = vsel %vm2747, %v3551, 0
    %v3604 = vsel %vm2747, %v3552, 0
    %v3607 = vsel %vm2747, %v3553, 0
    %v3610 = vsel %vm2747, %v3554, 0
    %v3613 = vsel %vm2747, %v3555, 0
    %v3616 = vsel %vm2747, %v3556, 0
    %v3619 = vsel %vm2747, %v3557, 0
    %v3622 = vsel %vm2747, %v3558, 0
    %3624 = vmatprep.subr.bf16.mxu0 0
    %3625 = vmatpush1.bf16.msra.mxu0 0
    %3626 = vmatprep.subr.bf16.mxu0 0
    %3627 = vmatpush1.bf16.msra.mxu0 0
    %3628 = vmatprep.subr.bf16.mxu0 0
    %3629 = vmatpush1.bf16.msra.mxu0 0
    %3630 = vmatprep.subr.bf16.mxu0 0
    %3631 = vmatpush1.bf16.msra.mxu0 0
    %3632 = vmatprep.subr.bf16.mxu0 0
    %3633 = vmatpush1.bf16.msra.mxu0 0
    %3634 = vmatprep.subr.bf16.mxu0 0
    %3635 = vmatpush1.bf16.msra.mxu0 0
    %3636 = vmatprep.subr.bf16.mxu0 0
    %3637 = vmatpush1.bf16.msra.mxu0 %v3573
    %3638 = vmatprep.subr.bf16.mxu0 0
    %3639 = vmatpush1.bf16.msra.mxu0 %v3572
    %3640 = vmatprep.subr.bf16.mxu0 0
    %3641 = vmatpush2.bf16.msra.mxu0 0
    %3642 = vmatprep.subr.bf16.mxu0 0
    %3643 = vmatpush2.bf16.msra.mxu0 0
    %3644 = vmatprep.subr.bf16.mxu0 0
    %3645 = vmatpush2.bf16.msra.mxu0 0
    %3646 = vmatprep.subr.bf16.mxu0 0
    %3647 = vmatpush2.bf16.msra.mxu0 0
    %3648 = vmatprep.subr.bf16.mxu0 0
    %3649 = vmatpush2.bf16.msra.mxu0 0
    %3650 = vmatprep.subr.bf16.mxu0 0
    %3651 = vmatpush2.bf16.msra.mxu0 0
    %3652 = vmatprep.subr.bf16.mxu0 0
    %3653 = vmatpush2.bf16.msra.mxu0 0
    %3654 = vmatprep.subr.bf16.mxu0 0
    %3655 = vmatpush2.bf16.msra.mxu0 0
    %3656 = vmatprep.mubr.bf16.mxu0 0
    %3657 = vmatmul.mubr.bf16.gmra.mxu0 %v3577
    %v3658 = vpop.f32.mrf.mxu0
    %v3659 = vadd.f32 0.0, %v3658
    %v3660 = vpop.f32.mrf.mxu0
    %v3661 = vpop.f32.mrf.mxu0
    %v3662 = vadd.f32 0.0, %v3661
    %v3663 = vpop.f32.mrf.mxu0
    %3664 = vmatprep.mubr.bf16.mxu0 0
    %3665 = vmatmul.mubr.bf16.gmra.mxu0 %v3580
    %v3666 = vpop.f32.mrf.mxu0
    %v3667 = vadd.f32 0.0, %v3666
    %v3668 = vpop.f32.mrf.mxu0
    %v3669 = vpop.f32.mrf.mxu0
    %v3670 = vadd.f32 0.0, %v3669
    %v3671 = vpop.f32.mrf.mxu0
    %3672 = vmatprep.mubr.bf16.mxu0 0
    %3673 = vmatmul.mubr.bf16.gmra.mxu0 %v3583
    %v3674 = vpop.f32.mrf.mxu0
    %v3675 = vadd.f32 0.0, %v3674
    %v3676 = vpop.f32.mrf.mxu0
    %v3677 = vpop.f32.mrf.mxu0
    %v3678 = vadd.f32 0.0, %v3677
    %v3679 = vpop.f32.mrf.mxu0
    %3680 = vmatprep.mubr.bf16.mxu0 0
    %3681 = vmatmul.mubr.bf16.gmra.mxu0 %v3586
    %v3682 = vpop.f32.mrf.mxu0
    %v3683 = vadd.f32 0.0, %v3682
    %v3684 = vpop.f32.mrf.mxu0
    %v3685 = vpop.f32.mrf.mxu0
    %v3686 = vadd.f32 0.0, %v3685
    %v3687 = vpop.f32.mrf.mxu0
    %3688 = vmatprep.mubr.bf16.mxu0 0
    %3689 = vmatmul.mubr.bf16.gmra.mxu0 %v3589
    %v3690 = vpop.f32.mrf.mxu0
    %v3691 = vadd.f32 0.0, %v3690
    %v3692 = vpop.f32.mrf.mxu0
    %v3693 = vpop.f32.mrf.mxu0
    %v3694 = vadd.f32 0.0, %v3693
    %v3695 = vpop.f32.mrf.mxu0
    %3696 = vmatprep.mubr.bf16.mxu0 0
    %3697 = vmatmul.mubr.bf16.gmra.mxu0 %v3592
    %v3698 = vpop.f32.mrf.mxu0
    %v3699 = vadd.f32 0.0, %v3698
    %v3700 = vpop.f32.mrf.mxu0
    %v3701 = vpop.f32.mrf.mxu0
    %v3702 = vadd.f32 0.0, %v3701
    %v3703 = vpop.f32.mrf.mxu0
    %3704 = vmatprep.mubr.bf16.mxu0 0
    %3705 = vmatmul.mubr.bf16.gmra.mxu0 %v3595
    %v3706 = vpop.f32.mrf.mxu0
    %v3707 = vadd.f32 0.0, %v3706
    %v3708 = vpop.f32.mrf.mxu0
    %v3709 = vpop.f32.mrf.mxu0
    %v3710 = vadd.f32 0.0, %v3709
    %v3711 = vpop.f32.mrf.mxu0
    %3712 = vmatprep.mubr.bf16.mxu0 0
    %3713 = vmatmul.mubr.bf16.gmra.mxu0 %v3598
    %v3714 = vpop.f32.mrf.mxu0
    %v3715 = vadd.f32 0.0, %v3714
    %v3716 = vpop.f32.mrf.mxu0
    %v3717 = vpop.f32.mrf.mxu0
    %v3718 = vadd.f32 0.0, %v3717
    %v3719 = vpop.f32.mrf.mxu0
    %3720 = vmatprep.mubr.bf16.mxu0 0
    %3721 = vmatmul.mubr.bf16.gmra.mxu0 %v3601
    %v3722 = vpop.f32.mrf.mxu0
    %v3723 = vadd.f32 0.0, %v3722
    %v3724 = vpop.f32.mrf.mxu0
    %v3725 = vpop.f32.mrf.mxu0
    %v3726 = vadd.f32 0.0, %v3725
    %v3727 = vpop.f32.mrf.mxu0
    %3728 = vmatprep.mubr.bf16.mxu0 0
    %3729 = vmatmul.mubr.bf16.gmra.mxu0 %v3604
    %v3730 = vpop.f32.mrf.mxu0
    %v3731 = vadd.f32 0.0, %v3730
    %v3732 = vpop.f32.mrf.mxu0
    %v3733 = vpop.f32.mrf.mxu0
    %v3734 = vadd.f32 0.0, %v3733
    %v3735 = vpop.f32.mrf.mxu0
    %3736 = vmatprep.mubr.bf16.mxu0 0
    %3737 = vmatmul.mubr.bf16.gmra.mxu0 %v3607
    %v3738 = vpop.f32.mrf.mxu0
    %v3739 = vadd.f32 0.0, %v3738
    %v3740 = vpop.f32.mrf.mxu0
    %v3741 = vpop.f32.mrf.mxu0
    %v3742 = vadd.f32 0.0, %v3741
    %v3743 = vpop.f32.mrf.mxu0
    %3744 = vmatprep.mubr.bf16.mxu0 0
    %3745 = vmatmul.mubr.bf16.gmra.mxu0 %v3610
    %v3746 = vpop.f32.mrf.mxu0
    %v3747 = vadd.f32 0.0, %v3746
    %v3748 = vpop.f32.mrf.mxu0
    %v3749 = vpop.f32.mrf.mxu0
    %v3750 = vadd.f32 0.0, %v3749
    %v3751 = vpop.f32.mrf.mxu0
    %3752 = vmatprep.mubr.bf16.mxu0 0
    %3753 = vmatmul.mubr.bf16.gmra.mxu0 %v3613
    %v3754 = vpop.f32.mrf.mxu0
    %v3755 = vadd.f32 0.0, %v3754
    %v3756 = vpop.f32.mrf.mxu0
    %v3757 = vpop.f32.mrf.mxu0
    %v3758 = vadd.f32 0.0, %v3757
    %v3759 = vpop.f32.mrf.mxu0
    %3760 = vmatprep.mubr.bf16.mxu0 0
    %3761 = vmatmul.mubr.bf16.gmra.mxu0 %v3616
    %v3762 = vpop.f32.mrf.mxu0
    %v3763 = vadd.f32 0.0, %v3762
    %v3764 = vpop.f32.mrf.mxu0
    %v3765 = vpop.f32.mrf.mxu0
    %v3766 = vadd.f32 0.0, %v3765
    %v3767 = vpop.f32.mrf.mxu0
    %3768 = vmatprep.mubr.bf16.mxu0 0
    %3769 = vmatmul.mubr.bf16.gmra.mxu0 %v3619
    %v3770 = vpop.f32.mrf.mxu0
    %v3771 = vadd.f32 0.0, %v3770
    %v3772 = vpop.f32.mrf.mxu0
    %v3773 = vpop.f32.mrf.mxu0
    %v3774 = vadd.f32 0.0, %v3773
    %v3775 = vpop.f32.mrf.mxu0
    %3776 = vmatprep.mubr.bf16.mxu0 0
    %3777 = vmatmul.mubr.bf16.gmra.mxu0 %v3622
    %v3778 = vpop.f32.mrf.mxu0
    %v3779 = vadd.f32 0.0, %v3778
    %v3780 = vpop.f32.mrf.mxu0
    %v3781 = vpop.f32.mrf.mxu0
    %v3782 = vadd.f32 0.0, %v3781
    %v3783 = vpop.f32.mrf.mxu0
    %3784 = vdwg.mxu0
    %v3785 = vadd.f32 %v3511, %v3659
    %v3786 = vadd.f32 %v3512, %v3662
    %v3787 = vadd.f32 %v3513, %v3667
    %v3788 = vadd.f32 %v3514, %v3670
    %v3789 = vadd.f32 %v3515, %v3675
    %v3790 = vadd.f32 %v3516, %v3678
    %v3791 = vadd.f32 %v3517, %v3683
    %v3792 = vadd.f32 %v3518, %v3686
    %v3793 = vadd.f32 %v3519, %v3691
    %v3794 = vadd.f32 %v3520, %v3694
    %v3795 = vadd.f32 %v3521, %v3699
    %v3796 = vadd.f32 %v3522, %v3702
    %v3797 = vadd.f32 %v3523, %v3707
    %v3798 = vadd.f32 %v3524, %v3710
    %v3799 = vadd.f32 %v3525, %v3715
    %v3800 = vadd.f32 %v3526, %v3718
    %v3801 = vadd.f32 %v3527, %v3723
    %v3802 = vadd.f32 %v3528, %v3726
    %v3803 = vadd.f32 %v3529, %v3731
    %v3804 = vadd.f32 %v3530, %v3734
    %v3805 = vadd.f32 %v3531, %v3739
    %v3806 = vadd.f32 %v3532, %v3742
    %v3807 = vadd.f32 %v3533, %v3747
    %v3808 = vadd.f32 %v3534, %v3750
    %v3809 = vadd.f32 %v3535, %v3755
    %v3810 = vadd.f32 %v3536, %v3758
    %v3811 = vadd.f32 %v3537, %v3763
    %v3812 = vadd.f32 %v3538, %v3766
    %v3813 = vadd.f32 %v3539, %v3771
    %v3814 = vadd.f32 %v3540, %v3774
    %v3815 = vadd.f32 %v3541, %v3779
    %v3816 = vadd.f32 %v3542, %v3782
    %v3817 = vmax.f32 %v3785, 0.0
    %v3818 = vmax.f32 %v3786, 0.0
    %v3819 = vmax.f32 %v3787, 0.0
    %v3820 = vmax.f32 %v3788, 0.0
    %v3821 = vmax.f32 %v3789, 0.0
    %v3822 = vmax.f32 %v3790, 0.0
    %v3823 = vmax.f32 %v3791, 0.0
    %v3824 = vmax.f32 %v3792, 0.0
    %v3825 = vmax.f32 %v3793, 0.0
    %v3826 = vmax.f32 %v3794, 0.0
    %v3827 = vmax.f32 %v3795, 0.0
    %v3828 = vmax.f32 %v3796, 0.0
    %v3829 = vmax.f32 %v3797, 0.0
    %v3830 = vmax.f32 %v3798, 0.0
    %v3831 = vmax.f32 %v3799, 0.0
    %v3832 = vmax.f32 %v3800, 0.0
    %v3833 = vmax.f32 %v3801, 0.0
    %v3834 = vmax.f32 %v3802, 0.0
    %v3835 = vmax.f32 %v3803, 0.0
    %v3836 = vmax.f32 %v3804, 0.0
    %v3837 = vmax.f32 %v3805, 0.0
    %v3838 = vmax.f32 %v3806, 0.0
    %v3839 = vmax.f32 %v3807, 0.0
    %v3840 = vmax.f32 %v3808, 0.0
    %v3841 = vmax.f32 %v3809, 0.0
    %v3842 = vmax.f32 %v3810, 0.0
    %v3843 = vmax.f32 %v3811, 0.0
    %v3844 = vmax.f32 %v3812, 0.0
    %v3845 = vmax.f32 %v3813, 0.0
    %v3846 = vmax.f32 %v3814, 0.0
    %v3847 = vmax.f32 %v3815, 0.0
    %v3848 = vmax.f32 %v3816, 0.0
    %v3849 = vadd.f32 %v1094, %v3817
    %v3850 = vadd.f32 %v1095, %v3818
    %v3851 = vadd.f32 %v1096, %v3819
    %v3852 = vadd.f32 %v1097, %v3820
    %v3853 = vadd.f32 %v1098, %v3821
    %v3854 = vadd.f32 %v1099, %v3822
    %v3855 = vadd.f32 %v1100, %v3823
    %v3856 = vadd.f32 %v1101, %v3824
    %v3857 = vadd.f32 %v1102, %v3825
    %v3858 = vadd.f32 %v1103, %v3826
    %v3859 = vadd.f32 %v1104, %v3827
    %v3860 = vadd.f32 %v1105, %v3828
    %v3861 = vadd.f32 %v1106, %v3829
    %v3862 = vadd.f32 %v1107, %v3830
    %v3863 = vadd.f32 %v1108, %v3831
    %v3864 = vadd.f32 %v1109, %v3832
    %v3865 = vadd.f32 %v1110, %v3833
    %v3866 = vadd.f32 %v1111, %v3834
    %v3867 = vadd.f32 %v1112, %v3835
    %v3868 = vadd.f32 %v1113, %v3836
    %v3869 = vadd.f32 %v1114, %v3837
    %v3870 = vadd.f32 %v1115, %v3838
    %v3871 = vadd.f32 %v1116, %v3839
    %v3872 = vadd.f32 %v1117, %v3840
    %v3873 = vadd.f32 %v1118, %v3841
    %v3874 = vadd.f32 %v1119, %v3842
    %v3875 = vadd.f32 %v1120, %v3843
    %v3876 = vadd.f32 %v1121, %v3844
    %v3877 = vadd.f32 %v1122, %v3845
    %v3878 = vadd.f32 %v1123, %v3846
    %v3879 = vadd.f32 %v1124, %v3847
    %v3880 = vadd.f32 %v1125, %v3848
    %v3881 = vpack.c.bf16 %v3850, %v3849
    %v3882 = vpack.c.bf16 %v3852, %v3851
    %v3883 = vpack.c.bf16 %v3854, %v3853
    %v3884 = vpack.c.bf16 %v3856, %v3855
    %v3885 = vpack.c.bf16 %v3858, %v3857
    %v3886 = vpack.c.bf16 %v3860, %v3859
    %v3887 = vpack.c.bf16 %v3862, %v3861
    %v3888 = vpack.c.bf16 %v3864, %v3863
    %v3889 = vpack.c.bf16 %v3866, %v3865
    %v3890 = vpack.c.bf16 %v3868, %v3867
    %v3891 = vpack.c.bf16 %v3870, %v3869
    %v3892 = vpack.c.bf16 %v3872, %v3871
    %v3893 = vpack.c.bf16 %v3874, %v3873
    %v3894 = vpack.c.bf16 %v3876, %v3875
    %v3895 = vpack.c.bf16 %v3878, %v3877
    %v3896 = vpack.c.bf16 %v3880, %v3879
    %3897 = vmatprep.subr.bf16.mxu0 0
    %3898 = vmatpush1.bf16.msra.mxu0 %v3888
    %3899 = vmatprep.subr.bf16.mxu0 0
    %3900 = vmatpush1.bf16.msra.mxu0 %v3887
    %3901 = vmatprep.subr.bf16.mxu0 0
    %3902 = vmatpush1.bf16.msra.mxu0 %v3886
    %3903 = vmatprep.subr.bf16.mxu0 0
    %3904 = vmatpush1.bf16.msra.mxu0 %v3885
    %3905 = vmatprep.subr.bf16.mxu0 0
    %3906 = vmatpush1.bf16.msra.mxu0 %v3884
    %3907 = vmatprep.subr.bf16.mxu0 0
    %3908 = vmatpush1.bf16.msra.mxu0 %v3883
    %3909 = vmatprep.subr.bf16.mxu0 0
    %3910 = vmatpush1.bf16.msra.mxu0 %v3882
    %3911 = vmatprep.subr.bf16.mxu0 0
    %3912 = vmatpush1.bf16.msra.mxu0 %v3881
    %3913 = vmatprep.subr.bf16.mxu0 0
    %3914 = vmatpush2.bf16.msra.mxu0 %v3896
    %3915 = vmatprep.subr.bf16.mxu0 0
    %3916 = vmatpush2.bf16.msra.mxu0 %v3895
    %3917 = vmatprep.subr.bf16.mxu0 0
    %3918 = vmatpush2.bf16.msra.mxu0 %v3894
    %3919 = vmatprep.subr.bf16.mxu0 0
    %3920 = vmatpush2.bf16.msra.mxu0 %v3893
    %3921 = vmatprep.subr.bf16.mxu0 0
    %3922 = vmatpush2.bf16.msra.mxu0 %v3892
    %3923 = vmatprep.subr.bf16.mxu0 0
    %3924 = vmatpush2.bf16.msra.mxu0 %v3891
    %3925 = vmatprep.subr.bf16.mxu0 0
    %3926 = vmatpush2.bf16.msra.mxu0 %v3890
    %3927 = vmatprep.subr.bf16.mxu0 0
    %3928 = vmatpush2.bf16.msra.mxu0 %v3889
    %3929 = vmatprep.mubr.bf16.mxu0 %v295
    %3930 = vmatmul.mubr.bf16.gmra.mxu0 %v294
    %v3931 = vpop.f32.mrf.mxu0
    %v3932 = vadd.f32 0.0, %v3931
    %v3933 = vpop.f32.mrf.mxu0
    %v3934 = vpop.f32.mrf.mxu0
    %v3935 = vadd.f32 0.0, %v3934
    %v3936 = vpop.f32.mrf.mxu0
    %3937 = vmatprep.mubr.bf16.mxu0 %v297
    %3938 = vmatmul.mubr.bf16.gmra.mxu0 %v296
    %v3939 = vpop.f32.mrf.mxu0
    %v3940 = vadd.f32 0.0, %v3939
    %v3941 = vpop.f32.mrf.mxu0
    %v3942 = vpop.f32.mrf.mxu0
    %v3943 = vadd.f32 0.0, %v3942
    %v3944 = vpop.f32.mrf.mxu0
    %3945 = vmatprep.mubr.bf16.mxu0 %v299
    %3946 = vmatmul.mubr.bf16.gmra.mxu0 %v298
    %v3947 = vpop.f32.mrf.mxu0
    %v3948 = vadd.f32 0.0, %v3947
    %v3949 = vpop.f32.mrf.mxu0
    %v3950 = vpop.f32.mrf.mxu0
    %v3951 = vadd.f32 0.0, %v3950
    %v3952 = vpop.f32.mrf.mxu0
    %3953 = vmatprep.mubr.bf16.mxu0 %v301
    %3954 = vmatmul.mubr.bf16.gmra.mxu0 %v300
    %v3955 = vpop.f32.mrf.mxu0
    %v3956 = vadd.f32 0.0, %v3955
    %v3957 = vpop.f32.mrf.mxu0
    %v3958 = vpop.f32.mrf.mxu0
    %v3959 = vadd.f32 0.0, %v3958
    %v3960 = vpop.f32.mrf.mxu0
    %3961 = vmatprep.mubr.bf16.mxu0 %v303
    %3962 = vmatmul.mubr.bf16.gmra.mxu0 %v302
    %v3963 = vpop.f32.mrf.mxu0
    %v3964 = vadd.f32 0.0, %v3963
    %v3965 = vpop.f32.mrf.mxu0
    %v3966 = vpop.f32.mrf.mxu0
    %v3967 = vadd.f32 0.0, %v3966
    %v3968 = vpop.f32.mrf.mxu0
    %3969 = vmatprep.mubr.bf16.mxu0 %v305
    %3970 = vmatmul.mubr.bf16.gmra.mxu0 %v304
    %v3971 = vpop.f32.mrf.mxu0
    %v3972 = vadd.f32 0.0, %v3971
    %v3973 = vpop.f32.mrf.mxu0
    %v3974 = vpop.f32.mrf.mxu0
    %v3975 = vadd.f32 0.0, %v3974
    %v3976 = vpop.f32.mrf.mxu0
    %3977 = vmatprep.mubr.bf16.mxu0 %v307
    %3978 = vmatmul.mubr.bf16.gmra.mxu0 %v306
    %v3979 = vpop.f32.mrf.mxu0
    %v3980 = vadd.f32 0.0, %v3979
    %v3981 = vpop.f32.mrf.mxu0
    %v3982 = vpop.f32.mrf.mxu0
    %v3983 = vadd.f32 0.0, %v3982
    %v3984 = vpop.f32.mrf.mxu0
    %3985 = vmatprep.mubr.bf16.mxu0 %v309
    %3986 = vmatmul.mubr.bf16.gmra.mxu0 %v308
    %v3987 = vpop.f32.mrf.mxu0
    %v3988 = vadd.f32 0.0, %v3987
    %v3989 = vpop.f32.mrf.mxu0
    %v3990 = vpop.f32.mrf.mxu0
    %v3991 = vadd.f32 0.0, %v3990
    %v3992 = vpop.f32.mrf.mxu0
    %3993 = vmatprep.mubr.bf16.mxu0 %v311
    %3994 = vmatmul.mubr.bf16.gmra.mxu0 %v310
    %v3995 = vpop.f32.mrf.mxu0
    %v3996 = vadd.f32 0.0, %v3995
    %v3997 = vpop.f32.mrf.mxu0
    %v3998 = vpop.f32.mrf.mxu0
    %v3999 = vadd.f32 0.0, %v3998
    %v4000 = vpop.f32.mrf.mxu0
    %4001 = vmatprep.mubr.bf16.mxu0 %v313
    %4002 = vmatmul.mubr.bf16.gmra.mxu0 %v312
    %v4003 = vpop.f32.mrf.mxu0
    %v4004 = vadd.f32 0.0, %v4003
    %v4005 = vpop.f32.mrf.mxu0
    %v4006 = vpop.f32.mrf.mxu0
    %v4007 = vadd.f32 0.0, %v4006
    %v4008 = vpop.f32.mrf.mxu0
    %4009 = vmatprep.mubr.bf16.mxu0 %v315
    %4010 = vmatmul.mubr.bf16.gmra.mxu0 %v314
    %v4011 = vpop.f32.mrf.mxu0
    %v4012 = vadd.f32 0.0, %v4011
    %v4013 = vpop.f32.mrf.mxu0
    %v4014 = vpop.f32.mrf.mxu0
    %v4015 = vadd.f32 0.0, %v4014
    %v4016 = vpop.f32.mrf.mxu0
    %4017 = vmatprep.mubr.bf16.mxu0 %v317
    %4018 = vmatmul.mubr.bf16.gmra.mxu0 %v316
    %v4019 = vpop.f32.mrf.mxu0
    %v4020 = vadd.f32 0.0, %v4019
    %v4021 = vpop.f32.mrf.mxu0
    %v4022 = vpop.f32.mrf.mxu0
    %v4023 = vadd.f32 0.0, %v4022
    %v4024 = vpop.f32.mrf.mxu0
    %4025 = vmatprep.mubr.bf16.mxu0 %v319
    %4026 = vmatmul.mubr.bf16.gmra.mxu0 %v318
    %v4027 = vpop.f32.mrf.mxu0
    %v4028 = vadd.f32 0.0, %v4027
    %v4029 = vpop.f32.mrf.mxu0
    %v4030 = vpop.f32.mrf.mxu0
    %v4031 = vadd.f32 0.0, %v4030
    %v4032 = vpop.f32.mrf.mxu0
    %4033 = vmatprep.mubr.bf16.mxu0 %v321
    %4034 = vmatmul.mubr.bf16.gmra.mxu0 %v320
    %v4035 = vpop.f32.mrf.mxu0
    %v4036 = vadd.f32 0.0, %v4035
    %v4037 = vpop.f32.mrf.mxu0
    %v4038 = vpop.f32.mrf.mxu0
    %v4039 = vadd.f32 0.0, %v4038
    %v4040 = vpop.f32.mrf.mxu0
    %4041 = vmatprep.mubr.bf16.mxu0 %v323
    %4042 = vmatmul.mubr.bf16.gmra.mxu0 %v322
    %v4043 = vpop.f32.mrf.mxu0
    %v4044 = vadd.f32 0.0, %v4043
    %v4045 = vpop.f32.mrf.mxu0
    %v4046 = vpop.f32.mrf.mxu0
    %v4047 = vadd.f32 0.0, %v4046
    %v4048 = vpop.f32.mrf.mxu0
    %4049 = vmatprep.mubr.bf16.mxu0 %v325
    %4050 = vmatmul.mubr.bf16.gmra.mxu0 %v324
    %v4051 = vpop.f32.mrf.mxu0
    %v4052 = vadd.f32 0.0, %v4051
    %v4053 = vpop.f32.mrf.mxu0
    %v4054 = vpop.f32.mrf.mxu0
    %v4055 = vadd.f32 0.0, %v4054
    %v4056 = vpop.f32.mrf.mxu0
    %4057 = vdwg.mxu0
    %v4058 = vmul.f32 %v3932, %v3932
    %v4059 = vmul.f32 %v3935, %v3935
    %v4060 = vmul.f32 %v3940, %v3940
    %v4061 = vmul.f32 %v3943, %v3943
    %v4062 = vmul.f32 %v3948, %v3948
    %v4063 = vmul.f32 %v3951, %v3951
    %v4064 = vmul.f32 %v3956, %v3956
    %v4065 = vmul.f32 %v3959, %v3959
    %v4066 = vmul.f32 %v3964, %v3964
    %v4067 = vmul.f32 %v3967, %v3967
    %v4068 = vmul.f32 %v3972, %v3972
    %v4069 = vmul.f32 %v3975, %v3975
    %v4070 = vmul.f32 %v3980, %v3980
    %v4071 = vmul.f32 %v3983, %v3983
    %v4072 = vmul.f32 %v3988, %v3988
    %v4073 = vmul.f32 %v3991, %v3991
    %v4074 = vmul.f32 %v3996, %v3996
    %v4075 = vmul.f32 %v3999, %v3999
    %v4076 = vmul.f32 %v4004, %v4004
    %v4077 = vmul.f32 %v4007, %v4007
    %v4078 = vmul.f32 %v4012, %v4012
    %v4079 = vmul.f32 %v4015, %v4015
    %v4080 = vmul.f32 %v4020, %v4020
    %v4081 = vmul.f32 %v4023, %v4023
    %v4082 = vmul.f32 %v4028, %v4028
    %v4083 = vmul.f32 %v4031, %v4031
    %v4084 = vmul.f32 %v4036, %v4036
    %v4085 = vmul.f32 %v4039, %v4039
    %v4086 = vmul.f32 %v4044, %v4044
    %v4087 = vmul.f32 %v4047, %v4047
    %v4088 = vmul.f32 %v4052, %v4052
    %v4089 = vmul.f32 %v4055, %v4055
    %4090 = vmatprep.subr.bf16.mxu0 0
    %4091 = vmatpush1.bf16.msra.mxu0 %v3888
    %4092 = vmatprep.subr.bf16.mxu0 0
    %4093 = vmatpush1.bf16.msra.mxu0 %v3887
    %4094 = vmatprep.subr.bf16.mxu0 0
    %4095 = vmatpush1.bf16.msra.mxu0 %v3886
    %4096 = vmatprep.subr.bf16.mxu0 0
    %4097 = vmatpush1.bf16.msra.mxu0 %v3885
    %4098 = vmatprep.subr.bf16.mxu0 0
    %4099 = vmatpush1.bf16.msra.mxu0 %v3884
    %4100 = vmatprep.subr.bf16.mxu0 0
    %4101 = vmatpush1.bf16.msra.mxu0 %v3883
    %4102 = vmatprep.subr.bf16.mxu0 0
    %4103 = vmatpush1.bf16.msra.mxu0 %v3882
    %4104 = vmatprep.subr.bf16.mxu0 0
    %4105 = vmatpush1.bf16.msra.mxu0 %v3881
    %4106 = vmatprep.subr.bf16.mxu0 0
    %4107 = vmatpush2.bf16.msra.mxu0 %v3896
    %4108 = vmatprep.subr.bf16.mxu0 0
    %4109 = vmatpush2.bf16.msra.mxu0 %v3895
    %4110 = vmatprep.subr.bf16.mxu0 0
    %4111 = vmatpush2.bf16.msra.mxu0 %v3894
    %4112 = vmatprep.subr.bf16.mxu0 0
    %4113 = vmatpush2.bf16.msra.mxu0 %v3893
    %4114 = vmatprep.subr.bf16.mxu0 0
    %4115 = vmatpush2.bf16.msra.mxu0 %v3892
    %4116 = vmatprep.subr.bf16.mxu0 0
    %4117 = vmatpush2.bf16.msra.mxu0 %v3891
    %4118 = vmatprep.subr.bf16.mxu0 0
    %4119 = vmatpush2.bf16.msra.mxu0 %v3890
    %4120 = vmatprep.subr.bf16.mxu0 0
    %4121 = vmatpush2.bf16.msra.mxu0 %v3889
    %4122 = vmatprep.mubr.bf16.mxu0 %v551
    %4123 = vmatmul.mubr.bf16.gmra.mxu0 %v550
    %v4124 = vpop.f32.mrf.mxu0
    %v4125 = vadd.f32 0.0, %v4124
    %v4126 = vpop.f32.mrf.mxu0
    %v4127 = vpop.f32.mrf.mxu0
    %v4128 = vadd.f32 0.0, %v4127
    %v4129 = vpop.f32.mrf.mxu0
    %4130 = vmatprep.mubr.bf16.mxu0 %v553
    %4131 = vmatmul.mubr.bf16.gmra.mxu0 %v552
    %v4132 = vpop.f32.mrf.mxu0
    %v4133 = vadd.f32 0.0, %v4132
    %v4134 = vpop.f32.mrf.mxu0
    %v4135 = vpop.f32.mrf.mxu0
    %v4136 = vadd.f32 0.0, %v4135
    %v4137 = vpop.f32.mrf.mxu0
    %4138 = vmatprep.mubr.bf16.mxu0 %v555
    %4139 = vmatmul.mubr.bf16.gmra.mxu0 %v554
    %v4140 = vpop.f32.mrf.mxu0
    %v4141 = vadd.f32 0.0, %v4140
    %v4142 = vpop.f32.mrf.mxu0
    %v4143 = vpop.f32.mrf.mxu0
    %v4144 = vadd.f32 0.0, %v4143
    %v4145 = vpop.f32.mrf.mxu0
    %4146 = vmatprep.mubr.bf16.mxu0 %v557
    %4147 = vmatmul.mubr.bf16.gmra.mxu0 %v556
    %v4148 = vpop.f32.mrf.mxu0
    %v4149 = vadd.f32 0.0, %v4148
    %v4150 = vpop.f32.mrf.mxu0
    %v4151 = vpop.f32.mrf.mxu0
    %v4152 = vadd.f32 0.0, %v4151
    %v4153 = vpop.f32.mrf.mxu0
    %4154 = vmatprep.mubr.bf16.mxu0 %v559
    %4155 = vmatmul.mubr.bf16.gmra.mxu0 %v558
    %v4156 = vpop.f32.mrf.mxu0
    %v4157 = vadd.f32 0.0, %v4156
    %v4158 = vpop.f32.mrf.mxu0
    %v4159 = vpop.f32.mrf.mxu0
    %v4160 = vadd.f32 0.0, %v4159
    %v4161 = vpop.f32.mrf.mxu0
    %4162 = vmatprep.mubr.bf16.mxu0 %v561
    %4163 = vmatmul.mubr.bf16.gmra.mxu0 %v560
    %v4164 = vpop.f32.mrf.mxu0
    %v4165 = vadd.f32 0.0, %v4164
    %v4166 = vpop.f32.mrf.mxu0
    %v4167 = vpop.f32.mrf.mxu0
    %v4168 = vadd.f32 0.0, %v4167
    %v4169 = vpop.f32.mrf.mxu0
    %4170 = vmatprep.mubr.bf16.mxu0 %v563
    %4171 = vmatmul.mubr.bf16.gmra.mxu0 %v562
    %v4172 = vpop.f32.mrf.mxu0
    %v4173 = vadd.f32 0.0, %v4172
    %v4174 = vpop.f32.mrf.mxu0
    %v4175 = vpop.f32.mrf.mxu0
    %v4176 = vadd.f32 0.0, %v4175
    %v4177 = vpop.f32.mrf.mxu0
    %4178 = vmatprep.mubr.bf16.mxu0 %v565
    %4179 = vmatmul.mubr.bf16.gmra.mxu0 %v564
    %v4180 = vpop.f32.mrf.mxu0
    %v4181 = vadd.f32 0.0, %v4180
    %v4182 = vpop.f32.mrf.mxu0
    %v4183 = vpop.f32.mrf.mxu0
    %v4184 = vadd.f32 0.0, %v4183
    %v4185 = vpop.f32.mrf.mxu0
    %4186 = vmatprep.mubr.bf16.mxu0 %v567
    %4187 = vmatmul.mubr.bf16.gmra.mxu0 %v566
    %v4188 = vpop.f32.mrf.mxu0
    %v4189 = vadd.f32 0.0, %v4188
    %v4190 = vpop.f32.mrf.mxu0
    %v4191 = vpop.f32.mrf.mxu0
    %v4192 = vadd.f32 0.0, %v4191
    %v4193 = vpop.f32.mrf.mxu0
    %4194 = vmatprep.mubr.bf16.mxu0 %v569
    %4195 = vmatmul.mubr.bf16.gmra.mxu0 %v568
    %v4196 = vpop.f32.mrf.mxu0
    %v4197 = vadd.f32 0.0, %v4196
    %v4198 = vpop.f32.mrf.mxu0
    %v4199 = vpop.f32.mrf.mxu0
    %v4200 = vadd.f32 0.0, %v4199
    %v4201 = vpop.f32.mrf.mxu0
    %4202 = vmatprep.mubr.bf16.mxu0 %v571
    %4203 = vmatmul.mubr.bf16.gmra.mxu0 %v570
    %v4204 = vpop.f32.mrf.mxu0
    %v4205 = vadd.f32 0.0, %v4204
    %v4206 = vpop.f32.mrf.mxu0
    %v4207 = vpop.f32.mrf.mxu0
    %v4208 = vadd.f32 0.0, %v4207
    %v4209 = vpop.f32.mrf.mxu0
    %4210 = vmatprep.mubr.bf16.mxu0 %v573
    %4211 = vmatmul.mubr.bf16.gmra.mxu0 %v572
    %v4212 = vpop.f32.mrf.mxu0
    %v4213 = vadd.f32 0.0, %v4212
    %v4214 = vpop.f32.mrf.mxu0
    %v4215 = vpop.f32.mrf.mxu0
    %v4216 = vadd.f32 0.0, %v4215
    %v4217 = vpop.f32.mrf.mxu0
    %4218 = vmatprep.mubr.bf16.mxu0 %v575
    %4219 = vmatmul.mubr.bf16.gmra.mxu0 %v574
    %v4220 = vpop.f32.mrf.mxu0
    %v4221 = vadd.f32 0.0, %v4220
    %v4222 = vpop.f32.mrf.mxu0
    %v4223 = vpop.f32.mrf.mxu0
    %v4224 = vadd.f32 0.0, %v4223
    %v4225 = vpop.f32.mrf.mxu0
    %4226 = vmatprep.mubr.bf16.mxu0 %v577
    %4227 = vmatmul.mubr.bf16.gmra.mxu0 %v576
    %v4228 = vpop.f32.mrf.mxu0
    %v4229 = vadd.f32 0.0, %v4228
    %v4230 = vpop.f32.mrf.mxu0
    %v4231 = vpop.f32.mrf.mxu0
    %v4232 = vadd.f32 0.0, %v4231
    %v4233 = vpop.f32.mrf.mxu0
    %4234 = vmatprep.mubr.bf16.mxu0 %v579
    %4235 = vmatmul.mubr.bf16.gmra.mxu0 %v578
    %v4236 = vpop.f32.mrf.mxu0
    %v4237 = vadd.f32 0.0, %v4236
    %v4238 = vpop.f32.mrf.mxu0
    %v4239 = vpop.f32.mrf.mxu0
    %v4240 = vadd.f32 0.0, %v4239
    %v4241 = vpop.f32.mrf.mxu0
    %4242 = vmatprep.mubr.bf16.mxu0 %v581
    %4243 = vmatmul.mubr.bf16.gmra.mxu0 %v580
    %v4244 = vpop.f32.mrf.mxu0
    %v4245 = vadd.f32 0.0, %v4244
    %v4246 = vpop.f32.mrf.mxu0
    %v4247 = vpop.f32.mrf.mxu0
    %v4248 = vadd.f32 0.0, %v4247
    %v4249 = vpop.f32.mrf.mxu0
    %4250 = vdwg.mxu0
    %v4251 = vadd.f32 %v3932, %v4125
    %v4252 = vadd.f32 %v3935, %v4128
    %v4253 = vadd.f32 %v3940, %v4133
    %v4254 = vadd.f32 %v3943, %v4136
    %v4255 = vadd.f32 %v3948, %v4141
    %v4256 = vadd.f32 %v3951, %v4144
    %v4257 = vadd.f32 %v3956, %v4149
    %v4258 = vadd.f32 %v3959, %v4152
    %v4259 = vadd.f32 %v3964, %v4157
    %v4260 = vadd.f32 %v3967, %v4160
    %v4261 = vadd.f32 %v3972, %v4165
    %v4262 = vadd.f32 %v3975, %v4168
    %v4263 = vadd.f32 %v3980, %v4173
    %v4264 = vadd.f32 %v3983, %v4176
    %v4265 = vadd.f32 %v3988, %v4181
    %v4266 = vadd.f32 %v3991, %v4184
    %v4267 = vadd.f32 %v3996, %v4189
    %v4268 = vadd.f32 %v3999, %v4192
    %v4269 = vadd.f32 %v4004, %v4197
    %v4270 = vadd.f32 %v4007, %v4200
    %v4271 = vadd.f32 %v4012, %v4205
    %v4272 = vadd.f32 %v4015, %v4208
    %v4273 = vadd.f32 %v4020, %v4213
    %v4274 = vadd.f32 %v4023, %v4216
    %v4275 = vadd.f32 %v4028, %v4221
    %v4276 = vadd.f32 %v4031, %v4224
    %v4277 = vadd.f32 %v4036, %v4229
    %v4278 = vadd.f32 %v4039, %v4232
    %v4279 = vadd.f32 %v4044, %v4237
    %v4280 = vadd.f32 %v4047, %v4240
    %v4281 = vadd.f32 %v4052, %v4245
    %v4282 = vadd.f32 %v4055, %v4248
    %v4283 = vmul.f32 %v4125, %v4125
    %v4284 = vmul.f32 %v4128, %v4128
    %v4285 = vmul.f32 %v4133, %v4133
    %v4286 = vmul.f32 %v4136, %v4136
    %v4287 = vmul.f32 %v4141, %v4141
    %v4288 = vmul.f32 %v4144, %v4144
    %v4289 = vmul.f32 %v4149, %v4149
    %v4290 = vmul.f32 %v4152, %v4152
    %v4291 = vmul.f32 %v4157, %v4157
    %v4292 = vmul.f32 %v4160, %v4160
    %v4293 = vmul.f32 %v4165, %v4165
    %v4294 = vmul.f32 %v4168, %v4168
    %v4295 = vmul.f32 %v4173, %v4173
    %v4296 = vmul.f32 %v4176, %v4176
    %v4297 = vmul.f32 %v4181, %v4181
    %v4298 = vmul.f32 %v4184, %v4184
    %v4299 = vmul.f32 %v4189, %v4189
    %v4300 = vmul.f32 %v4192, %v4192
    %v4301 = vmul.f32 %v4197, %v4197
    %v4302 = vmul.f32 %v4200, %v4200
    %v4303 = vmul.f32 %v4205, %v4205
    %v4304 = vmul.f32 %v4208, %v4208
    %v4305 = vmul.f32 %v4213, %v4213
    %v4306 = vmul.f32 %v4216, %v4216
    %v4307 = vmul.f32 %v4221, %v4221
    %v4308 = vmul.f32 %v4224, %v4224
    %v4309 = vmul.f32 %v4229, %v4229
    %v4310 = vmul.f32 %v4232, %v4232
    %v4311 = vmul.f32 %v4237, %v4237
    %v4312 = vmul.f32 %v4240, %v4240
    %v4313 = vmul.f32 %v4245, %v4245
    %v4314 = vmul.f32 %v4248, %v4248
    %v4315 = vadd.f32 %v4058, %v4283
    %v4316 = vadd.f32 %v4059, %v4284
    %v4317 = vadd.f32 %v4060, %v4285
    %v4318 = vadd.f32 %v4061, %v4286
    %v4319 = vadd.f32 %v4062, %v4287
    %v4320 = vadd.f32 %v4063, %v4288
    %v4321 = vadd.f32 %v4064, %v4289
    %v4322 = vadd.f32 %v4065, %v4290
    %v4323 = vadd.f32 %v4066, %v4291
    %v4324 = vadd.f32 %v4067, %v4292
    %v4325 = vadd.f32 %v4068, %v4293
    %v4326 = vadd.f32 %v4069, %v4294
    %v4327 = vadd.f32 %v4070, %v4295
    %v4328 = vadd.f32 %v4071, %v4296
    %v4329 = vadd.f32 %v4072, %v4297
    %v4330 = vadd.f32 %v4073, %v4298
    %v4331 = vadd.f32 %v4074, %v4299
    %v4332 = vadd.f32 %v4075, %v4300
    %v4333 = vadd.f32 %v4076, %v4301
    %v4334 = vadd.f32 %v4077, %v4302
    %v4335 = vadd.f32 %v4078, %v4303
    %v4336 = vadd.f32 %v4079, %v4304
    %v4337 = vadd.f32 %v4080, %v4305
    %v4338 = vadd.f32 %v4081, %v4306
    %v4339 = vadd.f32 %v4082, %v4307
    %v4340 = vadd.f32 %v4083, %v4308
    %v4341 = vadd.f32 %v4084, %v4309
    %v4342 = vadd.f32 %v4085, %v4310
    %v4343 = vadd.f32 %v4086, %v4311
    %v4344 = vadd.f32 %v4087, %v4312
    %v4345 = vadd.f32 %v4088, %v4313
    %v4346 = vadd.f32 %v4089, %v4314
    %v4347 = vmax.f32 %v3932, %v4125
    %v4348 = vmax.f32 %v3935, %v4128
    %v4349 = vmax.f32 %v3940, %v4133
    %v4350 = vmax.f32 %v3943, %v4136
    %v4351 = vmax.f32 %v3948, %v4141
    %v4352 = vmax.f32 %v3951, %v4144
    %v4353 = vmax.f32 %v3956, %v4149
    %v4354 = vmax.f32 %v3959, %v4152
    %v4355 = vmax.f32 %v3964, %v4157
    %v4356 = vmax.f32 %v3967, %v4160
    %v4357 = vmax.f32 %v3972, %v4165
    %v4358 = vmax.f32 %v3975, %v4168
    %v4359 = vmax.f32 %v3980, %v4173
    %v4360 = vmax.f32 %v3983, %v4176
    %v4361 = vmax.f32 %v3988, %v4181
    %v4362 = vmax.f32 %v3991, %v4184
    %v4363 = vmax.f32 %v3996, %v4189
    %v4364 = vmax.f32 %v3999, %v4192
    %v4365 = vmax.f32 %v4004, %v4197
    %v4366 = vmax.f32 %v4007, %v4200
    %v4367 = vmax.f32 %v4012, %v4205
    %v4368 = vmax.f32 %v4015, %v4208
    %v4369 = vmax.f32 %v4020, %v4213
    %v4370 = vmax.f32 %v4023, %v4216
    %v4371 = vmax.f32 %v4028, %v4221
    %v4372 = vmax.f32 %v4031, %v4224
    %v4373 = vmax.f32 %v4036, %v4229
    %v4374 = vmax.f32 %v4039, %v4232
    %v4375 = vmax.f32 %v4044, %v4237
    %v4376 = vmax.f32 %v4047, %v4240
    %v4377 = vmax.f32 %v4052, %v4245
    %v4378 = vmax.f32 %v4055, %v4248
    %v4379 = vmin.f32 %v3932, %v4125
    %v4380 = vmin.f32 %v3935, %v4128
    %v4381 = vmin.f32 %v3940, %v4133
    %v4382 = vmin.f32 %v3943, %v4136
    %v4383 = vmin.f32 %v3948, %v4141
    %v4384 = vmin.f32 %v3951, %v4144
    %v4385 = vmin.f32 %v3956, %v4149
    %v4386 = vmin.f32 %v3959, %v4152
    %v4387 = vmin.f32 %v3964, %v4157
    %v4388 = vmin.f32 %v3967, %v4160
    %v4389 = vmin.f32 %v3972, %v4165
    %v4390 = vmin.f32 %v3975, %v4168
    %v4391 = vmin.f32 %v3980, %v4173
    %v4392 = vmin.f32 %v3983, %v4176
    %v4393 = vmin.f32 %v3988, %v4181
    %v4394 = vmin.f32 %v3991, %v4184
    %v4395 = vmin.f32 %v3996, %v4189
    %v4396 = vmin.f32 %v3999, %v4192
    %v4397 = vmin.f32 %v4004, %v4197
    %v4398 = vmin.f32 %v4007, %v4200
    %v4399 = vmin.f32 %v4012, %v4205
    %v4400 = vmin.f32 %v4015, %v4208
    %v4401 = vmin.f32 %v4020, %v4213
    %v4402 = vmin.f32 %v4023, %v4216
    %v4403 = vmin.f32 %v4028, %v4221
    %v4404 = vmin.f32 %v4031, %v4224
    %v4405 = vmin.f32 %v4036, %v4229
    %v4406 = vmin.f32 %v4039, %v4232
    %v4407 = vmin.f32 %v4044, %v4237
    %v4408 = vmin.f32 %v4047, %v4240
    %v4409 = vmin.f32 %v4052, %v4245
    %v4410 = vmin.f32 %v4055, %v4248
    %4411 = vmatprep.subr.bf16.mxu0 0
    %4412 = vmatpush1.bf16.msra.mxu0 %v3888
    %4413 = vmatprep.subr.bf16.mxu0 0
    %4414 = vmatpush1.bf16.msra.mxu0 %v3887
    %4415 = vmatprep.subr.bf16.mxu0 0
    %4416 = vmatpush1.bf16.msra.mxu0 %v3886
    %4417 = vmatprep.subr.bf16.mxu0 0
    %4418 = vmatpush1.bf16.msra.mxu0 %v3885
    %4419 = vmatprep.subr.bf16.mxu0 0
    %4420 = vmatpush1.bf16.msra.mxu0 %v3884
    %4421 = vmatprep.subr.bf16.mxu0 0
    %4422 = vmatpush1.bf16.msra.mxu0 %v3883
    %4423 = vmatprep.subr.bf16.mxu0 0
    %4424 = vmatpush1.bf16.msra.mxu0 %v3882
    %4425 = vmatprep.subr.bf16.mxu0 0
    %4426 = vmatpush1.bf16.msra.mxu0 %v3881
    %4427 = vmatprep.subr.bf16.mxu0 0
    %4428 = vmatpush2.bf16.msra.mxu0 %v3896
    %4429 = vmatprep.subr.bf16.mxu0 0
    %4430 = vmatpush2.bf16.msra.mxu0 %v3895
    %4431 = vmatprep.subr.bf16.mxu0 0
    %4432 = vmatpush2.bf16.msra.mxu0 %v3894
    %4433 = vmatprep.subr.bf16.mxu0 0
    %4434 = vmatpush2.bf16.msra.mxu0 %v3893
    %4435 = vmatprep.subr.bf16.mxu0 0
    %4436 = vmatpush2.bf16.msra.mxu0 %v3892
    %4437 = vmatprep.subr.bf16.mxu0 0
    %4438 = vmatpush2.bf16.msra.mxu0 %v3891
    %4439 = vmatprep.subr.bf16.mxu0 0
    %4440 = vmatpush2.bf16.msra.mxu0 %v3890
    %4441 = vmatprep.subr.bf16.mxu0 0
    %4442 = vmatpush2.bf16.msra.mxu0 %v3889
    %4443 = vmatprep.mubr.bf16.mxu0 %v807
    %4444 = vmatmul.mubr.bf16.gmra.mxu0 %v806
    %v4445 = vpop.f32.mrf.mxu0
    %v4446 = vadd.f32 0.0, %v4445
    %v4447 = vpop.f32.mrf.mxu0
    %v4448 = vpop.f32.mrf.mxu0
    %v4449 = vadd.f32 0.0, %v4448
    %v4450 = vpop.f32.mrf.mxu0
    %4451 = vmatprep.mubr.bf16.mxu0 %v809
    %4452 = vmatmul.mubr.bf16.gmra.mxu0 %v808
    %v4453 = vpop.f32.mrf.mxu0
    %v4454 = vadd.f32 0.0, %v4453
    %v4455 = vpop.f32.mrf.mxu0
    %v4456 = vpop.f32.mrf.mxu0
    %v4457 = vadd.f32 0.0, %v4456
    %v4458 = vpop.f32.mrf.mxu0
    %4459 = vmatprep.mubr.bf16.mxu0 %v811
    %4460 = vmatmul.mubr.bf16.gmra.mxu0 %v810
    %v4461 = vpop.f32.mrf.mxu0
    %v4462 = vadd.f32 0.0, %v4461
    %v4463 = vpop.f32.mrf.mxu0
    %v4464 = vpop.f32.mrf.mxu0
    %v4465 = vadd.f32 0.0, %v4464
    %v4466 = vpop.f32.mrf.mxu0
    %4467 = vmatprep.mubr.bf16.mxu0 %v813
    %4468 = vmatmul.mubr.bf16.gmra.mxu0 %v812
    %v4469 = vpop.f32.mrf.mxu0
    %v4470 = vadd.f32 0.0, %v4469
    %v4471 = vpop.f32.mrf.mxu0
    %v4472 = vpop.f32.mrf.mxu0
    %v4473 = vadd.f32 0.0, %v4472
    %v4474 = vpop.f32.mrf.mxu0
    %4475 = vmatprep.mubr.bf16.mxu0 %v815
    %4476 = vmatmul.mubr.bf16.gmra.mxu0 %v814
    %v4477 = vpop.f32.mrf.mxu0
    %v4478 = vadd.f32 0.0, %v4477
    %v4479 = vpop.f32.mrf.mxu0
    %v4480 = vpop.f32.mrf.mxu0
    %v4481 = vadd.f32 0.0, %v4480
    %v4482 = vpop.f32.mrf.mxu0
    %4483 = vmatprep.mubr.bf16.mxu0 %v817
    %4484 = vmatmul.mubr.bf16.gmra.mxu0 %v816
    %v4485 = vpop.f32.mrf.mxu0
    %v4486 = vadd.f32 0.0, %v4485
    %v4487 = vpop.f32.mrf.mxu0
    %v4488 = vpop.f32.mrf.mxu0
    %v4489 = vadd.f32 0.0, %v4488
    %v4490 = vpop.f32.mrf.mxu0
    %4491 = vmatprep.mubr.bf16.mxu0 %v819
    %4492 = vmatmul.mubr.bf16.gmra.mxu0 %v818
    %v4493 = vpop.f32.mrf.mxu0
    %v4494 = vadd.f32 0.0, %v4493
    %v4495 = vpop.f32.mrf.mxu0
    %v4496 = vpop.f32.mrf.mxu0
    %v4497 = vadd.f32 0.0, %v4496
    %v4498 = vpop.f32.mrf.mxu0
    %4499 = vmatprep.mubr.bf16.mxu0 %v821
    %4500 = vmatmul.mubr.bf16.gmra.mxu0 %v820
    %v4501 = vpop.f32.mrf.mxu0
    %v4502 = vadd.f32 0.0, %v4501
    %v4503 = vpop.f32.mrf.mxu0
    %v4504 = vpop.f32.mrf.mxu0
    %v4505 = vadd.f32 0.0, %v4504
    %v4506 = vpop.f32.mrf.mxu0
    %4507 = vmatprep.mubr.bf16.mxu0 %v823
    %4508 = vmatmul.mubr.bf16.gmra.mxu0 %v822
    %v4509 = vpop.f32.mrf.mxu0
    %v4510 = vadd.f32 0.0, %v4509
    %v4511 = vpop.f32.mrf.mxu0
    %v4512 = vpop.f32.mrf.mxu0
    %v4513 = vadd.f32 0.0, %v4512
    %v4514 = vpop.f32.mrf.mxu0
    %4515 = vmatprep.mubr.bf16.mxu0 %v825
    %4516 = vmatmul.mubr.bf16.gmra.mxu0 %v824
    %v4517 = vpop.f32.mrf.mxu0
    %v4518 = vadd.f32 0.0, %v4517
    %v4519 = vpop.f32.mrf.mxu0
    %v4520 = vpop.f32.mrf.mxu0
    %v4521 = vadd.f32 0.0, %v4520
    %v4522 = vpop.f32.mrf.mxu0
    %4523 = vmatprep.mubr.bf16.mxu0 %v827
    %4524 = vmatmul.mubr.bf16.gmra.mxu0 %v826
    %v4525 = vpop.f32.mrf.mxu0
    %v4526 = vadd.f32 0.0, %v4525
    %v4527 = vpop.f32.mrf.mxu0
    %v4528 = vpop.f32.mrf.mxu0
    %v4529 = vadd.f32 0.0, %v4528
    %v4530 = vpop.f32.mrf.mxu0
    %4531 = vmatprep.mubr.bf16.mxu0 %v829
    %4532 = vmatmul.mubr.bf16.gmra.mxu0 %v828
    %v4533 = vpop.f32.mrf.mxu0
    %v4534 = vadd.f32 0.0, %v4533
    %v4535 = vpop.f32.mrf.mxu0
    %v4536 = vpop.f32.mrf.mxu0
    %v4537 = vadd.f32 0.0, %v4536
    %v4538 = vpop.f32.mrf.mxu0
    %4539 = vmatprep.mubr.bf16.mxu0 %v831
    %4540 = vmatmul.mubr.bf16.gmra.mxu0 %v830
    %v4541 = vpop.f32.mrf.mxu0
    %v4542 = vadd.f32 0.0, %v4541
    %v4543 = vpop.f32.mrf.mxu0
    %v4544 = vpop.f32.mrf.mxu0
    %v4545 = vadd.f32 0.0, %v4544
    %v4546 = vpop.f32.mrf.mxu0
    %4547 = vmatprep.mubr.bf16.mxu0 %v833
    %4548 = vmatmul.mubr.bf16.gmra.mxu0 %v832
    %v4549 = vpop.f32.mrf.mxu0
    %v4550 = vadd.f32 0.0, %v4549
    %v4551 = vpop.f32.mrf.mxu0
    %v4552 = vpop.f32.mrf.mxu0
    %v4553 = vadd.f32 0.0, %v4552
    %v4554 = vpop.f32.mrf.mxu0
    %4555 = vmatprep.mubr.bf16.mxu0 %v835
    %4556 = vmatmul.mubr.bf16.gmra.mxu0 %v834
    %v4557 = vpop.f32.mrf.mxu0
    %v4558 = vadd.f32 0.0, %v4557
    %v4559 = vpop.f32.mrf.mxu0
    %v4560 = vpop.f32.mrf.mxu0
    %v4561 = vadd.f32 0.0, %v4560
    %v4562 = vpop.f32.mrf.mxu0
    %4563 = vmatprep.mubr.bf16.mxu0 %v837
    %4564 = vmatmul.mubr.bf16.gmra.mxu0 %v836
    %v4565 = vpop.f32.mrf.mxu0
    %v4566 = vadd.f32 0.0, %v4565
    %v4567 = vpop.f32.mrf.mxu0
    %v4568 = vpop.f32.mrf.mxu0
    %v4569 = vadd.f32 0.0, %v4568
    %v4570 = vpop.f32.mrf.mxu0
    %4571 = vdwg.mxu0
    %v4572 = vadd.f32 %v4251, %v4446
    %v4573 = vadd.f32 %v4252, %v4449
    %v4574 = vadd.f32 %v4253, %v4454
    %v4575 = vadd.f32 %v4254, %v4457
    %v4576 = vadd.f32 %v4255, %v4462
    %v4577 = vadd.f32 %v4256, %v4465
    %v4578 = vadd.f32 %v4257, %v4470
    %v4579 = vadd.f32 %v4258, %v4473
    %v4580 = vadd.f32 %v4259, %v4478
    %v4581 = vadd.f32 %v4260, %v4481
    %v4582 = vadd.f32 %v4261, %v4486
    %v4583 = vadd.f32 %v4262, %v4489
    %v4584 = vadd.f32 %v4263, %v4494
    %v4585 = vadd.f32 %v4264, %v4497
    %v4586 = vadd.f32 %v4265, %v4502
    %v4587 = vadd.f32 %v4266, %v4505
    %v4588 = vadd.f32 %v4267, %v4510
    %v4589 = vadd.f32 %v4268, %v4513
    %v4590 = vadd.f32 %v4269, %v4518
    %v4591 = vadd.f32 %v4270, %v4521
    %v4592 = vadd.f32 %v4271, %v4526
    %v4593 = vadd.f32 %v4272, %v4529
    %v4594 = vadd.f32 %v4273, %v4534
    %v4595 = vadd.f32 %v4274, %v4537
    %v4596 = vadd.f32 %v4275, %v4542
    %v4597 = vadd.f32 %v4276, %v4545
    %v4598 = vadd.f32 %v4277, %v4550
    %v4599 = vadd.f32 %v4278, %v4553
    %v4600 = vadd.f32 %v4279, %v4558
    %v4601 = vadd.f32 %v4280, %v4561
    %v4602 = vadd.f32 %v4281, %v4566
    %v4603 = vadd.f32 %v4282, %v4569
    %v4604 = vmul.f32 %v4446, %v4446
    %v4605 = vmul.f32 %v4449, %v4449
    %v4606 = vmul.f32 %v4454, %v4454
    %v4607 = vmul.f32 %v4457, %v4457
    %v4608 = vmul.f32 %v4462, %v4462
    %v4609 = vmul.f32 %v4465, %v4465
    %v4610 = vmul.f32 %v4470, %v4470
    %v4611 = vmul.f32 %v4473, %v4473
    %v4612 = vmul.f32 %v4478, %v4478
    %v4613 = vmul.f32 %v4481, %v4481
    %v4614 = vmul.f32 %v4486, %v4486
    %v4615 = vmul.f32 %v4489, %v4489
    %v4616 = vmul.f32 %v4494, %v4494
    %v4617 = vmul.f32 %v4497, %v4497
    %v4618 = vmul.f32 %v4502, %v4502
    %v4619 = vmul.f32 %v4505, %v4505
    %v4620 = vmul.f32 %v4510, %v4510
    %v4621 = vmul.f32 %v4513, %v4513
    %v4622 = vmul.f32 %v4518, %v4518
    %v4623 = vmul.f32 %v4521, %v4521
    %v4624 = vmul.f32 %v4526, %v4526
    %v4625 = vmul.f32 %v4529, %v4529
    %v4626 = vmul.f32 %v4534, %v4534
    %v4627 = vmul.f32 %v4537, %v4537
    %v4628 = vmul.f32 %v4542, %v4542
    %v4629 = vmul.f32 %v4545, %v4545
    %v4630 = vmul.f32 %v4550, %v4550
    %v4631 = vmul.f32 %v4553, %v4553
    %v4632 = vmul.f32 %v4558, %v4558
    %v4633 = vmul.f32 %v4561, %v4561
    %v4634 = vmul.f32 %v4566, %v4566
    %v4635 = vmul.f32 %v4569, %v4569
    %v4636 = vadd.f32 %v4315, %v4604
    %v4637 = vadd.f32 %v4316, %v4605
    %v4638 = vadd.f32 %v4317, %v4606
    %v4639 = vadd.f32 %v4318, %v4607
    %v4640 = vadd.f32 %v4319, %v4608
    %v4641 = vadd.f32 %v4320, %v4609
    %v4642 = vadd.f32 %v4321, %v4610
    %v4643 = vadd.f32 %v4322, %v4611
    %v4644 = vadd.f32 %v4323, %v4612
    %v4645 = vadd.f32 %v4324, %v4613
    %v4646 = vadd.f32 %v4325, %v4614
    %v4647 = vadd.f32 %v4326, %v4615
    %v4648 = vadd.f32 %v4327, %v4616
    %v4649 = vadd.f32 %v4328, %v4617
    %v4650 = vadd.f32 %v4329, %v4618
    %v4651 = vadd.f32 %v4330, %v4619
    %v4652 = vadd.f32 %v4331, %v4620
    %v4653 = vadd.f32 %v4332, %v4621
    %v4654 = vadd.f32 %v4333, %v4622
    %v4655 = vadd.f32 %v4334, %v4623
    %v4656 = vadd.f32 %v4335, %v4624
    %v4657 = vadd.f32 %v4336, %v4625
    %v4658 = vadd.f32 %v4337, %v4626
    %v4659 = vadd.f32 %v4338, %v4627
    %v4660 = vadd.f32 %v4339, %v4628
    %v4661 = vadd.f32 %v4340, %v4629
    %v4662 = vadd.f32 %v4341, %v4630
    %v4663 = vadd.f32 %v4342, %v4631
    %v4664 = vadd.f32 %v4343, %v4632
    %v4665 = vadd.f32 %v4344, %v4633
    %v4666 = vadd.f32 %v4345, %v4634
    %v4667 = vadd.f32 %v4346, %v4635
    %v4668 = vmax.f32 %v4347, %v4446
    %v4669 = vmax.f32 %v4348, %v4449
    %v4670 = vmax.f32 %v4349, %v4454
    %v4671 = vmax.f32 %v4350, %v4457
    %v4672 = vmax.f32 %v4351, %v4462
    %v4673 = vmax.f32 %v4352, %v4465
    %v4674 = vmax.f32 %v4353, %v4470
    %v4675 = vmax.f32 %v4354, %v4473
    %v4676 = vmax.f32 %v4355, %v4478
    %v4677 = vmax.f32 %v4356, %v4481
    %v4678 = vmax.f32 %v4357, %v4486
    %v4679 = vmax.f32 %v4358, %v4489
    %v4680 = vmax.f32 %v4359, %v4494
    %v4681 = vmax.f32 %v4360, %v4497
    %v4682 = vmax.f32 %v4361, %v4502
    %v4683 = vmax.f32 %v4362, %v4505
    %v4684 = vmax.f32 %v4363, %v4510
    %v4685 = vmax.f32 %v4364, %v4513
    %v4686 = vmax.f32 %v4365, %v4518
    %v4687 = vmax.f32 %v4366, %v4521
    %v4688 = vmax.f32 %v4367, %v4526
    %v4689 = vmax.f32 %v4368, %v4529
    %v4690 = vmax.f32 %v4369, %v4534
    %v4691 = vmax.f32 %v4370, %v4537
    %v4692 = vmax.f32 %v4371, %v4542
    %v4693 = vmax.f32 %v4372, %v4545
    %v4694 = vmax.f32 %v4373, %v4550
    %v4695 = vmax.f32 %v4374, %v4553
    %v4696 = vmax.f32 %v4375, %v4558
    %v4697 = vmax.f32 %v4376, %v4561
    %v4698 = vmax.f32 %v4377, %v4566
    %v4699 = vmax.f32 %v4378, %v4569
    %v4700 = vmin.f32 %v4379, %v4446
    %v4701 = vmin.f32 %v4380, %v4449
    %v4702 = vmin.f32 %v4381, %v4454
    %v4703 = vmin.f32 %v4382, %v4457
    %v4704 = vmin.f32 %v4383, %v4462
    %v4705 = vmin.f32 %v4384, %v4465
    %v4706 = vmin.f32 %v4385, %v4470
    %v4707 = vmin.f32 %v4386, %v4473
    %v4708 = vmin.f32 %v4387, %v4478
    %v4709 = vmin.f32 %v4388, %v4481
    %v4710 = vmin.f32 %v4389, %v4486
    %v4711 = vmin.f32 %v4390, %v4489
    %v4712 = vmin.f32 %v4391, %v4494
    %v4713 = vmin.f32 %v4392, %v4497
    %v4714 = vmin.f32 %v4393, %v4502
    %v4715 = vmin.f32 %v4394, %v4505
    %v4716 = vmin.f32 %v4395, %v4510
    %v4717 = vmin.f32 %v4396, %v4513
    %v4718 = vmin.f32 %v4397, %v4518
    %v4719 = vmin.f32 %v4398, %v4521
    %v4720 = vmin.f32 %v4399, %v4526
    %v4721 = vmin.f32 %v4400, %v4529
    %v4722 = vmin.f32 %v4401, %v4534
    %v4723 = vmin.f32 %v4402, %v4537
    %v4724 = vmin.f32 %v4403, %v4542
    %v4725 = vmin.f32 %v4404, %v4545
    %v4726 = vmin.f32 %v4405, %v4550
    %v4727 = vmin.f32 %v4406, %v4553
    %v4728 = vmin.f32 %v4407, %v4558
    %v4729 = vmin.f32 %v4408, %v4561
    %v4730 = vmin.f32 %v4409, %v4566
    %v4731 = vmin.f32 %v4410, %v4569
    %4732 = vmatprep.subr.bf16.mxu0 0
    %4733 = vmatpush1.bf16.msra.mxu0 %v3888
    %4734 = vmatprep.subr.bf16.mxu0 0
    %4735 = vmatpush1.bf16.msra.mxu0 %v3887
    %4736 = vmatprep.subr.bf16.mxu0 0
    %4737 = vmatpush1.bf16.msra.mxu0 %v3886
    %4738 = vmatprep.subr.bf16.mxu0 0
    %4739 = vmatpush1.bf16.msra.mxu0 %v3885
    %4740 = vmatprep.subr.bf16.mxu0 0
    %4741 = vmatpush1.bf16.msra.mxu0 %v3884
    %4742 = vmatprep.subr.bf16.mxu0 0
    %4743 = vmatpush1.bf16.msra.mxu0 %v3883
    %4744 = vmatprep.subr.bf16.mxu0 0
    %4745 = vmatpush1.bf16.msra.mxu0 %v3882
    %4746 = vmatprep.subr.bf16.mxu0 0
    %4747 = vmatpush1.bf16.msra.mxu0 %v3881
    %4748 = vmatprep.subr.bf16.mxu0 0
    %4749 = vmatpush2.bf16.msra.mxu0 %v3896
    %4750 = vmatprep.subr.bf16.mxu0 0
    %4751 = vmatpush2.bf16.msra.mxu0 %v3895
    %4752 = vmatprep.subr.bf16.mxu0 0
    %4753 = vmatpush2.bf16.msra.mxu0 %v3894
    %4754 = vmatprep.subr.bf16.mxu0 0
    %4755 = vmatpush2.bf16.msra.mxu0 %v3893
    %4756 = vmatprep.subr.bf16.mxu0 0
    %4757 = vmatpush2.bf16.msra.mxu0 %v3892
    %4758 = vmatprep.subr.bf16.mxu0 0
    %4759 = vmatpush2.bf16.msra.mxu0 %v3891
    %4760 = vmatprep.subr.bf16.mxu0 0
    %4761 = vmatpush2.bf16.msra.mxu0 %v3890
    %4762 = vmatprep.subr.bf16.mxu0 0
    %4763 = vmatpush2.bf16.msra.mxu0 %v3889
    %4764 = vmatprep.mubr.bf16.mxu0 %v1063
    %4765 = vmatmul.mubr.bf16.gmra.mxu0 %v1062
    %v4766 = vpop.f32.mrf.mxu0
    %v4767 = vadd.f32 0.0, %v4766
    %v4768 = vpop.f32.mrf.mxu0
    %v4769 = vpop.f32.mrf.mxu0
    %v4770 = vadd.f32 0.0, %v4769
    %v4771 = vpop.f32.mrf.mxu0
    %4772 = vmatprep.mubr.bf16.mxu0 %v1065
    %4773 = vmatmul.mubr.bf16.gmra.mxu0 %v1064
    %v4774 = vpop.f32.mrf.mxu0
    %v4775 = vadd.f32 0.0, %v4774
    %v4776 = vpop.f32.mrf.mxu0
    %v4777 = vpop.f32.mrf.mxu0
    %v4778 = vadd.f32 0.0, %v4777
    %v4779 = vpop.f32.mrf.mxu0
    %4780 = vmatprep.mubr.bf16.mxu0 %v1067
    %4781 = vmatmul.mubr.bf16.gmra.mxu0 %v1066
    %v4782 = vpop.f32.mrf.mxu0
    %v4783 = vadd.f32 0.0, %v4782
    %v4784 = vpop.f32.mrf.mxu0
    %v4785 = vpop.f32.mrf.mxu0
    %v4786 = vadd.f32 0.0, %v4785
    %v4787 = vpop.f32.mrf.mxu0
    %4788 = vmatprep.mubr.bf16.mxu0 %v1069
    %4789 = vmatmul.mubr.bf16.gmra.mxu0 %v1068
    %v4790 = vpop.f32.mrf.mxu0
    %v4791 = vadd.f32 0.0, %v4790
    %v4792 = vpop.f32.mrf.mxu0
    %v4793 = vpop.f32.mrf.mxu0
    %v4794 = vadd.f32 0.0, %v4793
    %v4795 = vpop.f32.mrf.mxu0
    %4796 = vmatprep.mubr.bf16.mxu0 %v1071
    %4797 = vmatmul.mubr.bf16.gmra.mxu0 %v1070
    %v4798 = vpop.f32.mrf.mxu0
    %v4799 = vadd.f32 0.0, %v4798
    %v4800 = vpop.f32.mrf.mxu0
    %v4801 = vpop.f32.mrf.mxu0
    %v4802 = vadd.f32 0.0, %v4801
    %v4803 = vpop.f32.mrf.mxu0
    %4804 = vmatprep.mubr.bf16.mxu0 %v1073
    %4805 = vmatmul.mubr.bf16.gmra.mxu0 %v1072
    %v4806 = vpop.f32.mrf.mxu0
    %v4807 = vadd.f32 0.0, %v4806
    %v4808 = vpop.f32.mrf.mxu0
    %v4809 = vpop.f32.mrf.mxu0
    %v4810 = vadd.f32 0.0, %v4809
    %v4811 = vpop.f32.mrf.mxu0
    %4812 = vmatprep.mubr.bf16.mxu0 %v1075
    %4813 = vmatmul.mubr.bf16.gmra.mxu0 %v1074
    %v4814 = vpop.f32.mrf.mxu0
    %v4815 = vadd.f32 0.0, %v4814
    %v4816 = vpop.f32.mrf.mxu0
    %v4817 = vpop.f32.mrf.mxu0
    %v4818 = vadd.f32 0.0, %v4817
    %v4819 = vpop.f32.mrf.mxu0
    %4820 = vmatprep.mubr.bf16.mxu0 %v1077
    %4821 = vmatmul.mubr.bf16.gmra.mxu0 %v1076
    %v4822 = vpop.f32.mrf.mxu0
    %v4823 = vadd.f32 0.0, %v4822
    %v4824 = vpop.f32.mrf.mxu0
    %v4825 = vpop.f32.mrf.mxu0
    %v4826 = vadd.f32 0.0, %v4825
    %v4827 = vpop.f32.mrf.mxu0
    %4828 = vmatprep.mubr.bf16.mxu0 %v1079
    %4829 = vmatmul.mubr.bf16.gmra.mxu0 %v1078
    %v4830 = vpop.f32.mrf.mxu0
    %v4831 = vadd.f32 0.0, %v4830
    %v4832 = vpop.f32.mrf.mxu0
    %v4833 = vpop.f32.mrf.mxu0
    %v4834 = vadd.f32 0.0, %v4833
    %v4835 = vpop.f32.mrf.mxu0
    %4836 = vmatprep.mubr.bf16.mxu0 %v1081
    %4837 = vmatmul.mubr.bf16.gmra.mxu0 %v1080
    %v4838 = vpop.f32.mrf.mxu0
    %v4839 = vadd.f32 0.0, %v4838
    %v4840 = vpop.f32.mrf.mxu0
    %v4841 = vpop.f32.mrf.mxu0
    %v4842 = vadd.f32 0.0, %v4841
    %v4843 = vpop.f32.mrf.mxu0
    %4844 = vmatprep.mubr.bf16.mxu0 %v1083
    %4845 = vmatmul.mubr.bf16.gmra.mxu0 %v1082
    %v4846 = vpop.f32.mrf.mxu0
    %v4847 = vadd.f32 0.0, %v4846
    %v4848 = vpop.f32.mrf.mxu0
    %v4849 = vpop.f32.mrf.mxu0
    %v4850 = vadd.f32 0.0, %v4849
    %v4851 = vpop.f32.mrf.mxu0
    %4852 = vmatprep.mubr.bf16.mxu0 %v1085
    %4853 = vmatmul.mubr.bf16.gmra.mxu0 %v1084
    %v4854 = vpop.f32.mrf.mxu0
    %v4855 = vadd.f32 0.0, %v4854
    %v4856 = vpop.f32.mrf.mxu0
    %v4857 = vpop.f32.mrf.mxu0
    %v4858 = vadd.f32 0.0, %v4857
    %v4859 = vpop.f32.mrf.mxu0
    %4860 = vmatprep.mubr.bf16.mxu0 %v1087
    %4861 = vmatmul.mubr.bf16.gmra.mxu0 %v1086
    %v4862 = vpop.f32.mrf.mxu0
    %v4863 = vadd.f32 0.0, %v4862
    %v4864 = vpop.f32.mrf.mxu0
    %v4865 = vpop.f32.mrf.mxu0
    %v4866 = vadd.f32 0.0, %v4865
    %v4867 = vpop.f32.mrf.mxu0
    %4868 = vmatprep.mubr.bf16.mxu0 %v1089
    %4869 = vmatmul.mubr.bf16.gmra.mxu0 %v1088
    %v4870 = vpop.f32.mrf.mxu0
    %v4871 = vadd.f32 0.0, %v4870
    %v4872 = vpop.f32.mrf.mxu0
    %v4873 = vpop.f32.mrf.mxu0
    %v4874 = vadd.f32 0.0, %v4873
    %v4875 = vpop.f32.mrf.mxu0
    %4876 = vmatprep.mubr.bf16.mxu0 %v1091
    %4877 = vmatmul.mubr.bf16.gmra.mxu0 %v1090
    %v4878 = vpop.f32.mrf.mxu0
    %v4879 = vadd.f32 0.0, %v4878
    %v4880 = vpop.f32.mrf.mxu0
    %v4881 = vpop.f32.mrf.mxu0
    %v4882 = vadd.f32 0.0, %v4881
    %v4883 = vpop.f32.mrf.mxu0
    %4884 = vmatprep.mubr.bf16.mxu0 %v1093
    %4885 = vmatmul.mubr.bf16.gmra.mxu0 %v1092
    %v4886 = vpop.f32.mrf.mxu0
    %v4887 = vadd.f32 0.0, %v4886
    %v4888 = vpop.f32.mrf.mxu0
    %v4889 = vpop.f32.mrf.mxu0
    %v4890 = vadd.f32 0.0, %v4889
    %v4891 = vpop.f32.mrf.mxu0
    %4892 = vdwg.mxu0
    %v4893 = vadd.f32 %v4572, %v4767
    %v4894 = vadd.f32 %v4573, %v4770
    %v4895 = vadd.f32 %v4574, %v4775
    %v4896 = vadd.f32 %v4575, %v4778
    %v4897 = vadd.f32 %v4576, %v4783
    %v4898 = vadd.f32 %v4577, %v4786
    %v4899 = vadd.f32 %v4578, %v4791
    %v4900 = vadd.f32 %v4579, %v4794
    %v4901 = vadd.f32 %v4580, %v4799
    %v4902 = vadd.f32 %v4581, %v4802
    %v4903 = vadd.f32 %v4582, %v4807
    %v4904 = vadd.f32 %v4583, %v4810
    %v4905 = vadd.f32 %v4584, %v4815
    %v4906 = vadd.f32 %v4585, %v4818
    %v4907 = vadd.f32 %v4586, %v4823
    %v4908 = vadd.f32 %v4587, %v4826
    %v4909 = vadd.f32 %v4588, %v4831
    %v4910 = vadd.f32 %v4589, %v4834
    %v4911 = vadd.f32 %v4590, %v4839
    %v4912 = vadd.f32 %v4591, %v4842
    %v4913 = vadd.f32 %v4592, %v4847
    %v4914 = vadd.f32 %v4593, %v4850
    %v4915 = vadd.f32 %v4594, %v4855
    %v4916 = vadd.f32 %v4595, %v4858
    %v4917 = vadd.f32 %v4596, %v4863
    %v4918 = vadd.f32 %v4597, %v4866
    %v4919 = vadd.f32 %v4598, %v4871
    %v4920 = vadd.f32 %v4599, %v4874
    %v4921 = vadd.f32 %v4600, %v4879
    %v4922 = vadd.f32 %v4601, %v4882
    %v4923 = vadd.f32 %v4602, %v4887
    %v4924 = vadd.f32 %v4603, %v4890
    %v4925 = vmul.f32 %v4767, %v4767
    %v4926 = vmul.f32 %v4770, %v4770
    %v4927 = vmul.f32 %v4775, %v4775
    %v4928 = vmul.f32 %v4778, %v4778
    %v4929 = vmul.f32 %v4783, %v4783
    %v4930 = vmul.f32 %v4786, %v4786
    %v4931 = vmul.f32 %v4791, %v4791
    %v4932 = vmul.f32 %v4794, %v4794
    %v4933 = vmul.f32 %v4799, %v4799
    %v4934 = vmul.f32 %v4802, %v4802
    %v4935 = vmul.f32 %v4807, %v4807
    %v4936 = vmul.f32 %v4810, %v4810
    %v4937 = vmul.f32 %v4815, %v4815
    %v4938 = vmul.f32 %v4818, %v4818
    %v4939 = vmul.f32 %v4823, %v4823
    %v4940 = vmul.f32 %v4826, %v4826
    %v4941 = vmul.f32 %v4831, %v4831
    %v4942 = vmul.f32 %v4834, %v4834
    %v4943 = vmul.f32 %v4839, %v4839
    %v4944 = vmul.f32 %v4842, %v4842
    %v4945 = vmul.f32 %v4847, %v4847
    %v4946 = vmul.f32 %v4850, %v4850
    %v4947 = vmul.f32 %v4855, %v4855
    %v4948 = vmul.f32 %v4858, %v4858
    %v4949 = vmul.f32 %v4863, %v4863
    %v4950 = vmul.f32 %v4866, %v4866
    %v4951 = vmul.f32 %v4871, %v4871
    %v4952 = vmul.f32 %v4874, %v4874
    %v4953 = vmul.f32 %v4879, %v4879
    %v4954 = vmul.f32 %v4882, %v4882
    %v4955 = vmul.f32 %v4887, %v4887
    %v4956 = vmul.f32 %v4890, %v4890
    %v4957 = vadd.f32 %v4636, %v4925
    %v4958 = vadd.f32 %v4637, %v4926
    %v4959 = vadd.f32 %v4638, %v4927
    %v4960 = vadd.f32 %v4639, %v4928
    %v4961 = vadd.f32 %v4640, %v4929
    %v4962 = vadd.f32 %v4641, %v4930
    %v4963 = vadd.f32 %v4642, %v4931
    %v4964 = vadd.f32 %v4643, %v4932
    %v4965 = vadd.f32 %v4644, %v4933
    %v4966 = vadd.f32 %v4645, %v4934
    %v4967 = vadd.f32 %v4646, %v4935
    %v4968 = vadd.f32 %v4647, %v4936
    %v4969 = vadd.f32 %v4648, %v4937
    %v4970 = vadd.f32 %v4649, %v4938
    %v4971 = vadd.f32 %v4650, %v4939
    %v4972 = vadd.f32 %v4651, %v4940
    %v4973 = vadd.f32 %v4652, %v4941
    %v4974 = vadd.f32 %v4653, %v4942
    %v4975 = vadd.f32 %v4654, %v4943
    %v4976 = vadd.f32 %v4655, %v4944
    %v4977 = vadd.f32 %v4656, %v4945
    %v4978 = vadd.f32 %v4657, %v4946
    %v4979 = vadd.f32 %v4658, %v4947
    %v4980 = vadd.f32 %v4659, %v4948
    %v4981 = vadd.f32 %v4660, %v4949
    %v4982 = vadd.f32 %v4661, %v4950
    %v4983 = vadd.f32 %v4662, %v4951
    %v4984 = vadd.f32 %v4663, %v4952
    %v4985 = vadd.f32 %v4664, %v4953
    %v4986 = vadd.f32 %v4665, %v4954
    %v4987 = vadd.f32 %v4666, %v4955
    %v4988 = vadd.f32 %v4667, %v4956
    %v4989 = vmax.f32 %v4668, %v4767
    %v4990 = vmax.f32 %v4669, %v4770
    %v4991 = vmax.f32 %v4670, %v4775
    %v4992 = vmax.f32 %v4671, %v4778
    %v4993 = vmax.f32 %v4672, %v4783
    %v4994 = vmax.f32 %v4673, %v4786
    %v4995 = vmax.f32 %v4674, %v4791
    %v4996 = vmax.f32 %v4675, %v4794
    %v4997 = vmax.f32 %v4676, %v4799
    %v4998 = vmax.f32 %v4677, %v4802
    %v4999 = vmax.f32 %v4678, %v4807
    %v5000 = vmax.f32 %v4679, %v4810
    %v5001 = vmax.f32 %v4680, %v4815
    %v5002 = vmax.f32 %v4681, %v4818
    %v5003 = vmax.f32 %v4682, %v4823
    %v5004 = vmax.f32 %v4683, %v4826
    %v5005 = vmax.f32 %v4684, %v4831
    %v5006 = vmax.f32 %v4685, %v4834
    %v5007 = vmax.f32 %v4686, %v4839
    %v5008 = vmax.f32 %v4687, %v4842
    %v5009 = vmax.f32 %v4688, %v4847
    %v5010 = vmax.f32 %v4689, %v4850
    %v5011 = vmax.f32 %v4690, %v4855
    %v5012 = vmax.f32 %v4691, %v4858
    %v5013 = vmax.f32 %v4692, %v4863
    %v5014 = vmax.f32 %v4693, %v4866
    %v5015 = vmax.f32 %v4694, %v4871
    %v5016 = vmax.f32 %v4695, %v4874
    %v5017 = vmax.f32 %v4696, %v4879
    %v5018 = vmax.f32 %v4697, %v4882
    %v5019 = vmax.f32 %v4698, %v4887
    %v5020 = vmax.f32 %v4699, %v4890
    %v5021 = vmin.f32 %v4700, %v4767
    %v5022 = vmin.f32 %v4701, %v4770
    %v5023 = vmin.f32 %v4702, %v4775
    %v5024 = vmin.f32 %v4703, %v4778
    %v5025 = vmin.f32 %v4704, %v4783
    %v5026 = vmin.f32 %v4705, %v4786
    %v5027 = vmin.f32 %v4706, %v4791
    %v5028 = vmin.f32 %v4707, %v4794
    %v5029 = vmin.f32 %v4708, %v4799
    %v5030 = vmin.f32 %v4709, %v4802
    %v5031 = vmin.f32 %v4710, %v4807
    %v5032 = vmin.f32 %v4711, %v4810
    %v5033 = vmin.f32 %v4712, %v4815
    %v5034 = vmin.f32 %v4713, %v4818
    %v5035 = vmin.f32 %v4714, %v4823
    %v5036 = vmin.f32 %v4715, %v4826
    %v5037 = vmin.f32 %v4716, %v4831
    %v5038 = vmin.f32 %v4717, %v4834
    %v5039 = vmin.f32 %v4718, %v4839
    %v5040 = vmin.f32 %v4719, %v4842
    %v5041 = vmin.f32 %v4720, %v4847
    %v5042 = vmin.f32 %v4721, %v4850
    %v5043 = vmin.f32 %v4722, %v4855
    %v5044 = vmin.f32 %v4723, %v4858
    %v5045 = vmin.f32 %v4724, %v4863
    %v5046 = vmin.f32 %v4725, %v4866
    %v5047 = vmin.f32 %v4726, %v4871
    %v5048 = vmin.f32 %v4727, %v4874
    %v5049 = vmin.f32 %v4728, %v4879
    %v5050 = vmin.f32 %v4729, %v4882
    %v5051 = vmin.f32 %v4730, %v4887
    %v5052 = vmin.f32 %v4731, %v4890
    %v5053 = vmul.f32 %v4893, 0.25
    %v5054 = vmul.f32 %v4894, 0.25
    %v5055 = vmul.f32 %v4895, 0.25
    %v5056 = vmul.f32 %v4896, 0.25
    %v5057 = vmul.f32 %v4897, 0.25
    %v5058 = vmul.f32 %v4898, 0.25
    %v5059 = vmul.f32 %v4899, 0.25
    %v5060 = vmul.f32 %v4900, 0.25
    %v5061 = vmul.f32 %v4901, 0.25
    %v5062 = vmul.f32 %v4902, 0.25
    %v5063 = vmul.f32 %v4903, 0.25
    %v5064 = vmul.f32 %v4904, 0.25
    %v5065 = vmul.f32 %v4905, 0.25
    %v5066 = vmul.f32 %v4906, 0.25
    %v5067 = vmul.f32 %v4907, 0.25
    %v5068 = vmul.f32 %v4908, 0.25
    %v5069 = vmul.f32 %v4909, 0.25
    %v5070 = vmul.f32 %v4910, 0.25
    %v5071 = vmul.f32 %v4911, 0.25
    %v5072 = vmul.f32 %v4912, 0.25
    %v5073 = vmul.f32 %v4913, 0.25
    %v5074 = vmul.f32 %v4914, 0.25
    %v5075 = vmul.f32 %v4915, 0.25
    %v5076 = vmul.f32 %v4916, 0.25
    %v5077 = vmul.f32 %v4917, 0.25
    %v5078 = vmul.f32 %v4918, 0.25
    %v5079 = vmul.f32 %v4919, 0.25
    %v5080 = vmul.f32 %v4920, 0.25
    %v5081 = vmul.f32 %v4921, 0.25
    %v5082 = vmul.f32 %v4922, 0.25
    %v5083 = vmul.f32 %v4923, 0.25
    %v5084 = vmul.f32 %v4924, 0.25
    %v5085 = vmul.f32 %v4957, 0.25
    %v5086 = vmul.f32 %v4958, 0.25
    %v5087 = vmul.f32 %v4959, 0.25
    %v5088 = vmul.f32 %v4960, 0.25
    %v5089 = vmul.f32 %v4961, 0.25
    %v5090 = vmul.f32 %v4962, 0.25
    %v5091 = vmul.f32 %v4963, 0.25
    %v5092 = vmul.f32 %v4964, 0.25
    %v5093 = vmul.f32 %v4965, 0.25
    %v5094 = vmul.f32 %v4966, 0.25
    %v5095 = vmul.f32 %v4967, 0.25
    %v5096 = vmul.f32 %v4968, 0.25
    %v5097 = vmul.f32 %v4969, 0.25
    %v5098 = vmul.f32 %v4970, 0.25
    %v5099 = vmul.f32 %v4971, 0.25
    %v5100 = vmul.f32 %v4972, 0.25
    %v5101 = vmul.f32 %v4973, 0.25
    %v5102 = vmul.f32 %v4974, 0.25
    %v5103 = vmul.f32 %v4975, 0.25
    %v5104 = vmul.f32 %v4976, 0.25
    %v5105 = vmul.f32 %v4977, 0.25
    %v5106 = vmul.f32 %v4978, 0.25
    %v5107 = vmul.f32 %v4979, 0.25
    %v5108 = vmul.f32 %v4980, 0.25
    %v5109 = vmul.f32 %v4981, 0.25
    %v5110 = vmul.f32 %v4982, 0.25
    %v5111 = vmul.f32 %v4983, 0.25
    %v5112 = vmul.f32 %v4984, 0.25
    %v5113 = vmul.f32 %v4985, 0.25
    %v5114 = vmul.f32 %v4986, 0.25
    %v5115 = vmul.f32 %v4987, 0.25
    %v5116 = vmul.f32 %v4988, 0.25
    %v5117 = vmul.f32 %v5053, %v5053
    %v5118 = vmul.f32 %v5054, %v5054
    %v5119 = vmul.f32 %v5055, %v5055
    %v5120 = vmul.f32 %v5056, %v5056
    %v5121 = vmul.f32 %v5057, %v5057
    %v5122 = vmul.f32 %v5058, %v5058
    %v5123 = vmul.f32 %v5059, %v5059
    %v5124 = vmul.f32 %v5060, %v5060
    %v5125 = vmul.f32 %v5061, %v5061
    %v5126 = vmul.f32 %v5062, %v5062
    %v5127 = vmul.f32 %v5063, %v5063
    %v5128 = vmul.f32 %v5064, %v5064
    %v5129 = vmul.f32 %v5065, %v5065
    %v5130 = vmul.f32 %v5066, %v5066
    %v5131 = vmul.f32 %v5067, %v5067
    %v5132 = vmul.f32 %v5068, %v5068
    %v5133 = vmul.f32 %v5069, %v5069
    %v5134 = vmul.f32 %v5070, %v5070
    %v5135 = vmul.f32 %v5071, %v5071
    %v5136 = vmul.f32 %v5072, %v5072
    %v5137 = vmul.f32 %v5073, %v5073
    %v5138 = vmul.f32 %v5074, %v5074
    %v5139 = vmul.f32 %v5075, %v5075
    %v5140 = vmul.f32 %v5076, %v5076
    %v5141 = vmul.f32 %v5077, %v5077
    %v5142 = vmul.f32 %v5078, %v5078
    %v5143 = vmul.f32 %v5079, %v5079
    %v5144 = vmul.f32 %v5080, %v5080
    %v5145 = vmul.f32 %v5081, %v5081
    %v5146 = vmul.f32 %v5082, %v5082
    %v5147 = vmul.f32 %v5083, %v5083
    %v5148 = vmul.f32 %v5084, %v5084
    %v5149 = vsub.f32 %v5085, %v5117
    %v5150 = vsub.f32 %v5086, %v5118
    %v5151 = vsub.f32 %v5087, %v5119
    %v5152 = vsub.f32 %v5088, %v5120
    %v5153 = vsub.f32 %v5089, %v5121
    %v5154 = vsub.f32 %v5090, %v5122
    %v5155 = vsub.f32 %v5091, %v5123
    %v5156 = vsub.f32 %v5092, %v5124
    %v5157 = vsub.f32 %v5093, %v5125
    %v5158 = vsub.f32 %v5094, %v5126
    %v5159 = vsub.f32 %v5095, %v5127
    %v5160 = vsub.f32 %v5096, %v5128
    %v5161 = vsub.f32 %v5097, %v5129
    %v5162 = vsub.f32 %v5098, %v5130
    %v5163 = vsub.f32 %v5099, %v5131
    %v5164 = vsub.f32 %v5100, %v5132
    %v5165 = vsub.f32 %v5101, %v5133
    %v5166 = vsub.f32 %v5102, %v5134
    %v5167 = vsub.f32 %v5103, %v5135
    %v5168 = vsub.f32 %v5104, %v5136
    %v5169 = vsub.f32 %v5105, %v5137
    %v5170 = vsub.f32 %v5106, %v5138
    %v5171 = vsub.f32 %v5107, %v5139
    %v5172 = vsub.f32 %v5108, %v5140
    %v5173 = vsub.f32 %v5109, %v5141
    %v5174 = vsub.f32 %v5110, %v5142
    %v5175 = vsub.f32 %v5111, %v5143
    %v5176 = vsub.f32 %v5112, %v5144
    %v5177 = vsub.f32 %v5113, %v5145
    %v5178 = vsub.f32 %v5114, %v5146
    %v5179 = vsub.f32 %v5115, %v5147
    %v5180 = vsub.f32 %v5116, %v5148
    %v5181 = vmax.f32 %v5149, 0.0
    %v5182 = vmax.f32 %v5150, 0.0
    %v5183 = vmax.f32 %v5151, 0.0
    %v5184 = vmax.f32 %v5152, 0.0
    %v5185 = vmax.f32 %v5153, 0.0
    %v5186 = vmax.f32 %v5154, 0.0
    %v5187 = vmax.f32 %v5155, 0.0
    %v5188 = vmax.f32 %v5156, 0.0
    %v5189 = vmax.f32 %v5157, 0.0
    %v5190 = vmax.f32 %v5158, 0.0
    %v5191 = vmax.f32 %v5159, 0.0
    %v5192 = vmax.f32 %v5160, 0.0
    %v5193 = vmax.f32 %v5161, 0.0
    %v5194 = vmax.f32 %v5162, 0.0
    %v5195 = vmax.f32 %v5163, 0.0
    %v5196 = vmax.f32 %v5164, 0.0
    %v5197 = vmax.f32 %v5165, 0.0
    %v5198 = vmax.f32 %v5166, 0.0
    %v5199 = vmax.f32 %v5167, 0.0
    %v5200 = vmax.f32 %v5168, 0.0
    %v5201 = vmax.f32 %v5169, 0.0
    %v5202 = vmax.f32 %v5170, 0.0
    %v5203 = vmax.f32 %v5171, 0.0
    %v5204 = vmax.f32 %v5172, 0.0
    %v5205 = vmax.f32 %v5173, 0.0
    %v5206 = vmax.f32 %v5174, 0.0
    %v5207 = vmax.f32 %v5175, 0.0
    %v5208 = vmax.f32 %v5176, 0.0
    %v5209 = vmax.f32 %v5177, 0.0
    %v5210 = vmax.f32 %v5178, 0.0
    %v5211 = vmax.f32 %v5179, 0.0
    %v5212 = vmax.f32 %v5180, 0.0
    %v5213 = vadd.f32 %v5181, 1e-05
    %v5214 = vadd.f32 %v5182, 1e-05
    %v5215 = vadd.f32 %v5183, 1e-05
    %v5216 = vadd.f32 %v5184, 1e-05
    %v5217 = vadd.f32 %v5185, 1e-05
    %v5218 = vadd.f32 %v5186, 1e-05
    %v5219 = vadd.f32 %v5187, 1e-05
    %v5220 = vadd.f32 %v5188, 1e-05
    %v5221 = vadd.f32 %v5189, 1e-05
    %v5222 = vadd.f32 %v5190, 1e-05
    %v5223 = vadd.f32 %v5191, 1e-05
    %v5224 = vadd.f32 %v5192, 1e-05
    %v5225 = vadd.f32 %v5193, 1e-05
    %v5226 = vadd.f32 %v5194, 1e-05
    %v5227 = vadd.f32 %v5195, 1e-05
    %v5228 = vadd.f32 %v5196, 1e-05
    %v5229 = vadd.f32 %v5197, 1e-05
    %v5230 = vadd.f32 %v5198, 1e-05
    %v5231 = vadd.f32 %v5199, 1e-05
    %v5232 = vadd.f32 %v5200, 1e-05
    %v5233 = vadd.f32 %v5201, 1e-05
    %v5234 = vadd.f32 %v5202, 1e-05
    %v5235 = vadd.f32 %v5203, 1e-05
    %v5236 = vadd.f32 %v5204, 1e-05
    %v5237 = vadd.f32 %v5205, 1e-05
    %v5238 = vadd.f32 %v5206, 1e-05
    %v5239 = vadd.f32 %v5207, 1e-05
    %v5240 = vadd.f32 %v5208, 1e-05
    %v5241 = vadd.f32 %v5209, 1e-05
    %v5242 = vadd.f32 %v5210, 1e-05
    %v5243 = vadd.f32 %v5211, 1e-05
    %v5244 = vadd.f32 %v5212, 1e-05
    %v5245 = vrsqrt.pop %v5213
    %v5246 = vmul.f32 %v5213, %v5245
    %vm5247 = vcmp.eq.f32.partialorder %v5213, inf
    %v5248 = vsel %vm5247, %v5213, %v5246
    %vm5249 = vcmp.eq.f32.partialorder %v5213, 0.0
    %v5250 = vand.u32 %v5213, 2147483648
    %v5251 = vsel %vm5249, %v5250, %v5248
    %v5252 = vrsqrt.pop %v5214
    %v5253 = vmul.f32 %v5214, %v5252
    %vm5254 = vcmp.eq.f32.partialorder %v5214, inf
    %v5255 = vsel %vm5254, %v5214, %v5253
    %vm5256 = vcmp.eq.f32.partialorder %v5214, 0.0
    %v5257 = vand.u32 %v5214, 2147483648
    %v5258 = vsel %vm5256, %v5257, %v5255
    %v5259 = vrsqrt.pop %v5215
    %v5260 = vmul.f32 %v5215, %v5259
    %vm5261 = vcmp.eq.f32.partialorder %v5215, inf
    %v5262 = vsel %vm5261, %v5215, %v5260
    %vm5263 = vcmp.eq.f32.partialorder %v5215, 0.0
    %v5264 = vand.u32 %v5215, 2147483648
    %v5265 = vsel %vm5263, %v5264, %v5262
    %v5266 = vrsqrt.pop %v5216
    %v5267 = vmul.f32 %v5216, %v5266
    %vm5268 = vcmp.eq.f32.partialorder %v5216, inf
    %v5269 = vsel %vm5268, %v5216, %v5267
    %vm5270 = vcmp.eq.f32.partialorder %v5216, 0.0
    %v5271 = vand.u32 %v5216, 2147483648
    %v5272 = vsel %vm5270, %v5271, %v5269
    %v5273 = vrsqrt.pop %v5217
    %v5274 = vmul.f32 %v5217, %v5273
    %vm5275 = vcmp.eq.f32.partialorder %v5217, inf
    %v5276 = vsel %vm5275, %v5217, %v5274
    %vm5277 = vcmp.eq.f32.partialorder %v5217, 0.0
    %v5278 = vand.u32 %v5217, 2147483648
    %v5279 = vsel %vm5277, %v5278, %v5276
    %v5280 = vrsqrt.pop %v5218
    %v5281 = vmul.f32 %v5218, %v5280
    %vm5282 = vcmp.eq.f32.partialorder %v5218, inf
    %v5283 = vsel %vm5282, %v5218, %v5281
    %vm5284 = vcmp.eq.f32.partialorder %v5218, 0.0
    %v5285 = vand.u32 %v5218, 2147483648
    %v5286 = vsel %vm5284, %v5285, %v5283
    %v5287 = vrsqrt.pop %v5219
    %v5288 = vmul.f32 %v5219, %v5287
    %vm5289 = vcmp.eq.f32.partialorder %v5219, inf
    %v5290 = vsel %vm5289, %v5219, %v5288
    %vm5291 = vcmp.eq.f32.partialorder %v5219, 0.0
    %v5292 = vand.u32 %v5219, 2147483648
    %v5293 = vsel %vm5291, %v5292, %v5290
    %v5294 = vrsqrt.pop %v5220
    %v5295 = vmul.f32 %v5220, %v5294
    %vm5296 = vcmp.eq.f32.partialorder %v5220, inf
    %v5297 = vsel %vm5296, %v5220, %v5295
    %vm5298 = vcmp.eq.f32.partialorder %v5220, 0.0
    %v5299 = vand.u32 %v5220, 2147483648
    %v5300 = vsel %vm5298, %v5299, %v5297
    %v5301 = vrsqrt.pop %v5221
    %v5302 = vmul.f32 %v5221, %v5301
    %vm5303 = vcmp.eq.f32.partialorder %v5221, inf
    %v5304 = vsel %vm5303, %v5221, %v5302
    %vm5305 = vcmp.eq.f32.partialorder %v5221, 0.0
    %v5306 = vand.u32 %v5221, 2147483648
    %v5307 = vsel %vm5305, %v5306, %v5304
    %v5308 = vrsqrt.pop %v5222
    %v5309 = vmul.f32 %v5222, %v5308
    %vm5310 = vcmp.eq.f32.partialorder %v5222, inf
    %v5311 = vsel %vm5310, %v5222, %v5309
    %vm5312 = vcmp.eq.f32.partialorder %v5222, 0.0
    %v5313 = vand.u32 %v5222, 2147483648
    %v5314 = vsel %vm5312, %v5313, %v5311
    %v5315 = vrsqrt.pop %v5223
    %v5316 = vmul.f32 %v5223, %v5315
    %vm5317 = vcmp.eq.f32.partialorder %v5223, inf
    %v5318 = vsel %vm5317, %v5223, %v5316
    %vm5319 = vcmp.eq.f32.partialorder %v5223, 0.0
    %v5320 = vand.u32 %v5223, 2147483648
    %v5321 = vsel %vm5319, %v5320, %v5318
    %v5322 = vrsqrt.pop %v5224
    %v5323 = vmul.f32 %v5224, %v5322
    %vm5324 = vcmp.eq.f32.partialorder %v5224, inf
    %v5325 = vsel %vm5324, %v5224, %v5323
    %vm5326 = vcmp.eq.f32.partialorder %v5224, 0.0
    %v5327 = vand.u32 %v5224, 2147483648
    %v5328 = vsel %vm5326, %v5327, %v5325
    %v5329 = vrsqrt.pop %v5225
    %v5330 = vmul.f32 %v5225, %v5329
    %vm5331 = vcmp.eq.f32.partialorder %v5225, inf
    %v5332 = vsel %vm5331, %v5225, %v5330
    %vm5333 = vcmp.eq.f32.partialorder %v5225, 0.0
    %v5334 = vand.u32 %v5225, 2147483648
    %v5335 = vsel %vm5333, %v5334, %v5332
    %v5336 = vrsqrt.pop %v5226
    %v5337 = vmul.f32 %v5226, %v5336
    %vm5338 = vcmp.eq.f32.partialorder %v5226, inf
    %v5339 = vsel %vm5338, %v5226, %v5337
    %vm5340 = vcmp.eq.f32.partialorder %v5226, 0.0
    %v5341 = vand.u32 %v5226, 2147483648
    %v5342 = vsel %vm5340, %v5341, %v5339
    %v5343 = vrsqrt.pop %v5227
    %v5344 = vmul.f32 %v5227, %v5343
    %vm5345 = vcmp.eq.f32.partialorder %v5227, inf
    %v5346 = vsel %vm5345, %v5227, %v5344
    %vm5347 = vcmp.eq.f32.partialorder %v5227, 0.0
    %v5348 = vand.u32 %v5227, 2147483648
    %v5349 = vsel %vm5347, %v5348, %v5346
    %v5350 = vrsqrt.pop %v5228
    %v5351 = vmul.f32 %v5228, %v5350
    %vm5352 = vcmp.eq.f32.partialorder %v5228, inf
    %v5353 = vsel %vm5352, %v5228, %v5351
    %vm5354 = vcmp.eq.f32.partialorder %v5228, 0.0
    %v5355 = vand.u32 %v5228, 2147483648
    %v5356 = vsel %vm5354, %v5355, %v5353
    %v5357 = vrsqrt.pop %v5229
    %v5358 = vmul.f32 %v5229, %v5357
    %vm5359 = vcmp.eq.f32.partialorder %v5229, inf
    %v5360 = vsel %vm5359, %v5229, %v5358
    %vm5361 = vcmp.eq.f32.partialorder %v5229, 0.0
    %v5362 = vand.u32 %v5229, 2147483648
    %v5363 = vsel %vm5361, %v5362, %v5360
    %v5364 = vrsqrt.pop %v5230
    %v5365 = vmul.f32 %v5230, %v5364
    %vm5366 = vcmp.eq.f32.partialorder %v5230, inf
    %v5367 = vsel %vm5366, %v5230, %v5365
    %vm5368 = vcmp.eq.f32.partialorder %v5230, 0.0
    %v5369 = vand.u32 %v5230, 2147483648
    %v5370 = vsel %vm5368, %v5369, %v5367
    %v5371 = vrsqrt.pop %v5231
    %v5372 = vmul.f32 %v5231, %v5371
    %vm5373 = vcmp.eq.f32.partialorder %v5231, inf
    %v5374 = vsel %vm5373, %v5231, %v5372
    %vm5375 = vcmp.eq.f32.partialorder %v5231, 0.0
    %v5376 = vand.u32 %v5231, 2147483648
    %v5377 = vsel %vm5375, %v5376, %v5374
    %v5378 = vrsqrt.pop %v5232
    %v5379 = vmul.f32 %v5232, %v5378
    %vm5380 = vcmp.eq.f32.partialorder %v5232, inf
    %v5381 = vsel %vm5380, %v5232, %v5379
    %vm5382 = vcmp.eq.f32.partialorder %v5232, 0.0
    %v5383 = vand.u32 %v5232, 2147483648
    %v5384 = vsel %vm5382, %v5383, %v5381
    %v5385 = vrsqrt.pop %v5233
    %v5386 = vmul.f32 %v5233, %v5385
    %vm5387 = vcmp.eq.f32.partialorder %v5233, inf
    %v5388 = vsel %vm5387, %v5233, %v5386
    %vm5389 = vcmp.eq.f32.partialorder %v5233, 0.0
    %v5390 = vand.u32 %v5233, 2147483648
    %v5391 = vsel %vm5389, %v5390, %v5388
    %v5392 = vrsqrt.pop %v5234
    %v5393 = vmul.f32 %v5234, %v5392
    %vm5394 = vcmp.eq.f32.partialorder %v5234, inf
    %v5395 = vsel %vm5394, %v5234, %v5393
    %vm5396 = vcmp.eq.f32.partialorder %v5234, 0.0
    %v5397 = vand.u32 %v5234, 2147483648
    %v5398 = vsel %vm5396, %v5397, %v5395
    %v5399 = vrsqrt.pop %v5235
    %v5400 = vmul.f32 %v5235, %v5399
    %vm5401 = vcmp.eq.f32.partialorder %v5235, inf
    %v5402 = vsel %vm5401, %v5235, %v5400
    %vm5403 = vcmp.eq.f32.partialorder %v5235, 0.0
    %v5404 = vand.u32 %v5235, 2147483648
    %v5405 = vsel %vm5403, %v5404, %v5402
    %v5406 = vrsqrt.pop %v5236
    %v5407 = vmul.f32 %v5236, %v5406
    %vm5408 = vcmp.eq.f32.partialorder %v5236, inf
    %v5409 = vsel %vm5408, %v5236, %v5407
    %vm5410 = vcmp.eq.f32.partialorder %v5236, 0.0
    %v5411 = vand.u32 %v5236, 2147483648
    %v5412 = vsel %vm5410, %v5411, %v5409
    %v5413 = vrsqrt.pop %v5237
    %v5414 = vmul.f32 %v5237, %v5413
    %vm5415 = vcmp.eq.f32.partialorder %v5237, inf
    %v5416 = vsel %vm5415, %v5237, %v5414
    %vm5417 = vcmp.eq.f32.partialorder %v5237, 0.0
    %v5418 = vand.u32 %v5237, 2147483648
    %v5419 = vsel %vm5417, %v5418, %v5416
    %v5420 = vrsqrt.pop %v5238
    %v5421 = vmul.f32 %v5238, %v5420
    %vm5422 = vcmp.eq.f32.partialorder %v5238, inf
    %v5423 = vsel %vm5422, %v5238, %v5421
    %vm5424 = vcmp.eq.f32.partialorder %v5238, 0.0
    %v5425 = vand.u32 %v5238, 2147483648
    %v5426 = vsel %vm5424, %v5425, %v5423
    %v5427 = vrsqrt.pop %v5239
    %v5428 = vmul.f32 %v5239, %v5427
    %vm5429 = vcmp.eq.f32.partialorder %v5239, inf
    %v5430 = vsel %vm5429, %v5239, %v5428
    %vm5431 = vcmp.eq.f32.partialorder %v5239, 0.0
    %v5432 = vand.u32 %v5239, 2147483648
    %v5433 = vsel %vm5431, %v5432, %v5430
    %v5434 = vrsqrt.pop %v5240
    %v5435 = vmul.f32 %v5240, %v5434
    %vm5436 = vcmp.eq.f32.partialorder %v5240, inf
    %v5437 = vsel %vm5436, %v5240, %v5435
    %vm5438 = vcmp.eq.f32.partialorder %v5240, 0.0
    %v5439 = vand.u32 %v5240, 2147483648
    %v5440 = vsel %vm5438, %v5439, %v5437
    %v5441 = vrsqrt.pop %v5241
    %v5442 = vmul.f32 %v5241, %v5441
    %vm5443 = vcmp.eq.f32.partialorder %v5241, inf
    %v5444 = vsel %vm5443, %v5241, %v5442
    %vm5445 = vcmp.eq.f32.partialorder %v5241, 0.0
    %v5446 = vand.u32 %v5241, 2147483648
    %v5447 = vsel %vm5445, %v5446, %v5444
    %v5448 = vrsqrt.pop %v5242
    %v5449 = vmul.f32 %v5242, %v5448
    %vm5450 = vcmp.eq.f32.partialorder %v5242, inf
    %v5451 = vsel %vm5450, %v5242, %v5449
    %vm5452 = vcmp.eq.f32.partialorder %v5242, 0.0
    %v5453 = vand.u32 %v5242, 2147483648
    %v5454 = vsel %vm5452, %v5453, %v5451
    %v5455 = vrsqrt.pop %v5243
    %v5456 = vmul.f32 %v5243, %v5455
    %vm5457 = vcmp.eq.f32.partialorder %v5243, inf
    %v5458 = vsel %vm5457, %v5243, %v5456
    %vm5459 = vcmp.eq.f32.partialorder %v5243, 0.0
    %v5460 = vand.u32 %v5243, 2147483648
    %v5461 = vsel %vm5459, %v5460, %v5458
    %v5462 = vrsqrt.pop %v5244
    %v5463 = vmul.f32 %v5244, %v5462
    %vm5464 = vcmp.eq.f32.partialorder %v5244, inf
    %v5465 = vsel %vm5464, %v5244, %v5463
    %vm5466 = vcmp.eq.f32.partialorder %v5244, 0.0
    %v5467 = vand.u32 %v5244, 2147483648
    %v5468 = vsel %vm5466, %v5467, %v5465
    %s5469 = scalar_lea.vmem %s3, 1
    %v5470 = vld [vmem:[%s5469] sm:$0x1]
    %v5471 = vpack.c.bf16 %v5054, %v5053
    %v5472 = vpack.c.bf16 %v5056, %v5055
    %v5473 = vpack.c.bf16 %v5058, %v5057
    %v5474 = vpack.c.bf16 %v5060, %v5059
    %v5475 = vpack.c.bf16 %v5062, %v5061
    %v5476 = vpack.c.bf16 %v5064, %v5063
    %v5477 = vpack.c.bf16 %v5066, %v5065
    %v5478 = vpack.c.bf16 %v5068, %v5067
    %v5479 = vpack.c.bf16 %v5070, %v5069
    %v5480 = vpack.c.bf16 %v5072, %v5071
    %v5481 = vpack.c.bf16 %v5074, %v5073
    %v5482 = vpack.c.bf16 %v5076, %v5075
    %v5483 = vpack.c.bf16 %v5078, %v5077
    %v5484 = vpack.c.bf16 %v5080, %v5079
    %v5485 = vpack.c.bf16 %v5082, %v5081
    %v5486 = vpack.c.bf16 %v5084, %v5083
    %s5487 = scalar_lea.vmem %s2, 64
    %v5488 = vld [vmem:[%s5487] sm:$0xf]
    %v5489 = vld [vmem:[%s5487 + $0x4] sm:$0xf]
    %v5490 = vld [vmem:[%s5487 + $0x8] sm:$0xf]
    %v5491 = vld [vmem:[%s5487 + $0xc] sm:$0xf]
    %v5496 = vunpack.c.l.b16 %v5488
    %v5497 = vunpack.c.l.b16 %v5489
    %v5498 = vunpack.c.l.b16 %v5490
    %v5499 = vunpack.c.l.b16 %v5491
    %v5500 = vpack.c.b16 %v5497, %v5496
    %v5501 = vpack.c.b16 %v5499, %v5498
    %v5505 = vsel %vm2747, %v5471, 0
    %v5508 = vsel %vm2747, %v5472, 0
    %v5511 = vsel %vm2747, %v5473, 0
    %v5514 = vsel %vm2747, %v5474, 0
    %v5517 = vsel %vm2747, %v5475, 0
    %v5520 = vsel %vm2747, %v5476, 0
    %v5523 = vsel %vm2747, %v5477, 0
    %v5526 = vsel %vm2747, %v5478, 0
    %v5529 = vsel %vm2747, %v5479, 0
    %v5532 = vsel %vm2747, %v5480, 0
    %v5535 = vsel %vm2747, %v5481, 0
    %v5538 = vsel %vm2747, %v5482, 0
    %v5541 = vsel %vm2747, %v5483, 0
    %v5544 = vsel %vm2747, %v5484, 0
    %v5547 = vsel %vm2747, %v5485, 0
    %v5550 = vsel %vm2747, %v5486, 0
    %5552 = vmatprep.subr.bf16.mxu0 0
    %5553 = vmatpush1.bf16.msra.mxu0 0
    %5554 = vmatprep.subr.bf16.mxu0 0
    %5555 = vmatpush1.bf16.msra.mxu0 0
    %5556 = vmatprep.subr.bf16.mxu0 0
    %5557 = vmatpush1.bf16.msra.mxu0 0
    %5558 = vmatprep.subr.bf16.mxu0 0
    %5559 = vmatpush1.bf16.msra.mxu0 0
    %5560 = vmatprep.subr.bf16.mxu0 0
    %5561 = vmatpush1.bf16.msra.mxu0 0
    %5562 = vmatprep.subr.bf16.mxu0 0
    %5563 = vmatpush1.bf16.msra.mxu0 0
    %5564 = vmatprep.subr.bf16.mxu0 0
    %5565 = vmatpush1.bf16.msra.mxu0 %v5501
    %5566 = vmatprep.subr.bf16.mxu0 0
    %5567 = vmatpush1.bf16.msra.mxu0 %v5500
    %5568 = vmatprep.subr.bf16.mxu0 0
    %5569 = vmatpush2.bf16.msra.mxu0 0
    %5570 = vmatprep.subr.bf16.mxu0 0
    %5571 = vmatpush2.bf16.msra.mxu0 0
    %5572 = vmatprep.subr.bf16.mxu0 0
    %5573 = vmatpush2.bf16.msra.mxu0 0
    %5574 = vmatprep.subr.bf16.mxu0 0
    %5575 = vmatpush2.bf16.msra.mxu0 0
    %5576 = vmatprep.subr.bf16.mxu0 0
    %5577 = vmatpush2.bf16.msra.mxu0 0
    %5578 = vmatprep.subr.bf16.mxu0 0
    %5579 = vmatpush2.bf16.msra.mxu0 0
    %5580 = vmatprep.subr.bf16.mxu0 0
    %5581 = vmatpush2.bf16.msra.mxu0 0
    %5582 = vmatprep.subr.bf16.mxu0 0
    %5583 = vmatpush2.bf16.msra.mxu0 0
    %5584 = vmatprep.mubr.bf16.mxu0 0
    %5585 = vmatmul.mubr.bf16.gmra.mxu0 %v5505
    %v5586 = vpop.f32.mrf.mxu0
    %v5587 = vadd.f32 0.0, %v5586
    %v5588 = vpop.f32.mrf.mxu0
    %v5589 = vpop.f32.mrf.mxu0
    %v5590 = vadd.f32 0.0, %v5589
    %v5591 = vpop.f32.mrf.mxu0
    %5592 = vmatprep.mubr.bf16.mxu0 0
    %5593 = vmatmul.mubr.bf16.gmra.mxu0 %v5508
    %v5594 = vpop.f32.mrf.mxu0
    %v5595 = vadd.f32 0.0, %v5594
    %v5596 = vpop.f32.mrf.mxu0
    %v5597 = vpop.f32.mrf.mxu0
    %v5598 = vadd.f32 0.0, %v5597
    %v5599 = vpop.f32.mrf.mxu0
    %5600 = vmatprep.mubr.bf16.mxu0 0
    %5601 = vmatmul.mubr.bf16.gmra.mxu0 %v5511
    %v5602 = vpop.f32.mrf.mxu0
    %v5603 = vadd.f32 0.0, %v5602
    %v5604 = vpop.f32.mrf.mxu0
    %v5605 = vpop.f32.mrf.mxu0
    %v5606 = vadd.f32 0.0, %v5605
    %v5607 = vpop.f32.mrf.mxu0
    %5608 = vmatprep.mubr.bf16.mxu0 0
    %5609 = vmatmul.mubr.bf16.gmra.mxu0 %v5514
    %v5610 = vpop.f32.mrf.mxu0
    %v5611 = vadd.f32 0.0, %v5610
    %v5612 = vpop.f32.mrf.mxu0
    %v5613 = vpop.f32.mrf.mxu0
    %v5614 = vadd.f32 0.0, %v5613
    %v5615 = vpop.f32.mrf.mxu0
    %5616 = vmatprep.mubr.bf16.mxu0 0
    %5617 = vmatmul.mubr.bf16.gmra.mxu0 %v5517
    %v5618 = vpop.f32.mrf.mxu0
    %v5619 = vadd.f32 0.0, %v5618
    %v5620 = vpop.f32.mrf.mxu0
    %v5621 = vpop.f32.mrf.mxu0
    %v5622 = vadd.f32 0.0, %v5621
    %v5623 = vpop.f32.mrf.mxu0
    %5624 = vmatprep.mubr.bf16.mxu0 0
    %5625 = vmatmul.mubr.bf16.gmra.mxu0 %v5520
    %v5626 = vpop.f32.mrf.mxu0
    %v5627 = vadd.f32 0.0, %v5626
    %v5628 = vpop.f32.mrf.mxu0
    %v5629 = vpop.f32.mrf.mxu0
    %v5630 = vadd.f32 0.0, %v5629
    %v5631 = vpop.f32.mrf.mxu0
    %5632 = vmatprep.mubr.bf16.mxu0 0
    %5633 = vmatmul.mubr.bf16.gmra.mxu0 %v5523
    %v5634 = vpop.f32.mrf.mxu0
    %v5635 = vadd.f32 0.0, %v5634
    %v5636 = vpop.f32.mrf.mxu0
    %v5637 = vpop.f32.mrf.mxu0
    %v5638 = vadd.f32 0.0, %v5637
    %v5639 = vpop.f32.mrf.mxu0
    %5640 = vmatprep.mubr.bf16.mxu0 0
    %5641 = vmatmul.mubr.bf16.gmra.mxu0 %v5526
    %v5642 = vpop.f32.mrf.mxu0
    %v5643 = vadd.f32 0.0, %v5642
    %v5644 = vpop.f32.mrf.mxu0
    %v5645 = vpop.f32.mrf.mxu0
    %v5646 = vadd.f32 0.0, %v5645
    %v5647 = vpop.f32.mrf.mxu0
    %5648 = vmatprep.mubr.bf16.mxu0 0
    %5649 = vmatmul.mubr.bf16.gmra.mxu0 %v5529
    %v5650 = vpop.f32.mrf.mxu0
    %v5651 = vadd.f32 0.0, %v5650
    %v5652 = vpop.f32.mrf.mxu0
    %v5653 = vpop.f32.mrf.mxu0
    %v5654 = vadd.f32 0.0, %v5653
    %v5655 = vpop.f32.mrf.mxu0
    %5656 = vmatprep.mubr.bf16.mxu0 0
    %5657 = vmatmul.mubr.bf16.gmra.mxu0 %v5532
    %v5658 = vpop.f32.mrf.mxu0
    %v5659 = vadd.f32 0.0, %v5658
    %v5660 = vpop.f32.mrf.mxu0
    %v5661 = vpop.f32.mrf.mxu0
    %v5662 = vadd.f32 0.0, %v5661
    %v5663 = vpop.f32.mrf.mxu0
    %5664 = vmatprep.mubr.bf16.mxu0 0
    %5665 = vmatmul.mubr.bf16.gmra.mxu0 %v5535
    %v5666 = vpop.f32.mrf.mxu0
    %v5667 = vadd.f32 0.0, %v5666
    %v5668 = vpop.f32.mrf.mxu0
    %v5669 = vpop.f32.mrf.mxu0
    %v5670 = vadd.f32 0.0, %v5669
    %v5671 = vpop.f32.mrf.mxu0
    %5672 = vmatprep.mubr.bf16.mxu0 0
    %5673 = vmatmul.mubr.bf16.gmra.mxu0 %v5538
    %v5674 = vpop.f32.mrf.mxu0
    %v5675 = vadd.f32 0.0, %v5674
    %v5676 = vpop.f32.mrf.mxu0
    %v5677 = vpop.f32.mrf.mxu0
    %v5678 = vadd.f32 0.0, %v5677
    %v5679 = vpop.f32.mrf.mxu0
    %5680 = vmatprep.mubr.bf16.mxu0 0
    %5681 = vmatmul.mubr.bf16.gmra.mxu0 %v5541
    %v5682 = vpop.f32.mrf.mxu0
    %v5683 = vadd.f32 0.0, %v5682
    %v5684 = vpop.f32.mrf.mxu0
    %v5685 = vpop.f32.mrf.mxu0
    %v5686 = vadd.f32 0.0, %v5685
    %v5687 = vpop.f32.mrf.mxu0
    %5688 = vmatprep.mubr.bf16.mxu0 0
    %5689 = vmatmul.mubr.bf16.gmra.mxu0 %v5544
    %v5690 = vpop.f32.mrf.mxu0
    %v5691 = vadd.f32 0.0, %v5690
    %v5692 = vpop.f32.mrf.mxu0
    %v5693 = vpop.f32.mrf.mxu0
    %v5694 = vadd.f32 0.0, %v5693
    %v5695 = vpop.f32.mrf.mxu0
    %5696 = vmatprep.mubr.bf16.mxu0 0
    %5697 = vmatmul.mubr.bf16.gmra.mxu0 %v5547
    %v5698 = vpop.f32.mrf.mxu0
    %v5699 = vadd.f32 0.0, %v5698
    %v5700 = vpop.f32.mrf.mxu0
    %v5701 = vpop.f32.mrf.mxu0
    %v5702 = vadd.f32 0.0, %v5701
    %v5703 = vpop.f32.mrf.mxu0
    %5704 = vmatprep.mubr.bf16.mxu0 0
    %5705 = vmatmul.mubr.bf16.gmra.mxu0 %v5550
    %v5706 = vpop.f32.mrf.mxu0
    %v5707 = vadd.f32 0.0, %v5706
    %v5708 = vpop.f32.mrf.mxu0
    %v5709 = vpop.f32.mrf.mxu0
    %v5710 = vadd.f32 0.0, %v5709
    %v5711 = vpop.f32.mrf.mxu0
    %5712 = vdwg.mxu0
    %v5714 = vlaneseq
    %v5715 = vshrl.u32 %v5714, 7
    %v5716 = vsub.s32 0, %v5715
    %v5717 = vrot.slane %v5470, %v5716
    %v5719 = vadd.f32 %v5717, %v5587
    %v5720 = vadd.f32 %v5717, %v5590
    %v5721 = vadd.f32 %v5717, %v5595
    %v5722 = vadd.f32 %v5717, %v5598
    %v5723 = vadd.f32 %v5717, %v5603
    %v5724 = vadd.f32 %v5717, %v5606
    %v5725 = vadd.f32 %v5717, %v5611
    %v5726 = vadd.f32 %v5717, %v5614
    %v5727 = vadd.f32 %v5717, %v5619
    %v5728 = vadd.f32 %v5717, %v5622
    %v5729 = vadd.f32 %v5717, %v5627
    %v5730 = vadd.f32 %v5717, %v5630
    %v5731 = vadd.f32 %v5717, %v5635
    %v5732 = vadd.f32 %v5717, %v5638
    %v5733 = vadd.f32 %v5717, %v5643
    %v5734 = vadd.f32 %v5717, %v5646
    %v5735 = vadd.f32 %v5717, %v5651
    %v5736 = vadd.f32 %v5717, %v5654
    %v5737 = vadd.f32 %v5717, %v5659
    %v5738 = vadd.f32 %v5717, %v5662
    %v5739 = vadd.f32 %v5717, %v5667
    %v5740 = vadd.f32 %v5717, %v5670
    %v5741 = vadd.f32 %v5717, %v5675
    %v5742 = vadd.f32 %v5717, %v5678
    %v5743 = vadd.f32 %v5717, %v5683
    %v5744 = vadd.f32 %v5717, %v5686
    %v5745 = vadd.f32 %v5717, %v5691
    %v5746 = vadd.f32 %v5717, %v5694
    %v5747 = vadd.f32 %v5717, %v5699
    %v5748 = vadd.f32 %v5717, %v5702
    %v5749 = vadd.f32 %v5717, %v5707
    %v5750 = vadd.f32 %v5717, %v5710
    %v5751 = vpack.c.bf16 %v4990, %v4989
    %v5752 = vpack.c.bf16 %v4992, %v4991
    %v5753 = vpack.c.bf16 %v4994, %v4993
    %v5754 = vpack.c.bf16 %v4996, %v4995
    %v5755 = vpack.c.bf16 %v4998, %v4997
    %v5756 = vpack.c.bf16 %v5000, %v4999
    %v5757 = vpack.c.bf16 %v5002, %v5001
    %v5758 = vpack.c.bf16 %v5004, %v5003
    %v5759 = vpack.c.bf16 %v5006, %v5005
    %v5760 = vpack.c.bf16 %v5008, %v5007
    %v5761 = vpack.c.bf16 %v5010, %v5009
    %v5762 = vpack.c.bf16 %v5012, %v5011
    %v5763 = vpack.c.bf16 %v5014, %v5013
    %v5764 = vpack.c.bf16 %v5016, %v5015
    %v5765 = vpack.c.bf16 %v5018, %v5017
    %v5766 = vpack.c.bf16 %v5020, %v5019
    %s5767 = scalar_lea.vmem %s2, 80
    %v5768 = vld [vmem:[%s5767] sm:$0xf]
    %v5769 = vld [vmem:[%s5767 + $0x4] sm:$0xf]
    %v5770 = vld [vmem:[%s5767 + $0x8] sm:$0xf]
    %v5771 = vld [vmem:[%s5767 + $0xc] sm:$0xf]
    %v5776 = vunpack.c.l.b16 %v5768
    %v5777 = vunpack.c.l.b16 %v5769
    %v5778 = vunpack.c.l.b16 %v5770
    %v5779 = vunpack.c.l.b16 %v5771
    %v5780 = vpack.c.b16 %v5777, %v5776
    %v5781 = vpack.c.b16 %v5779, %v5778
    %v5785 = vsel %vm2747, %v5751, 0
    %v5788 = vsel %vm2747, %v5752, 0
    %v5791 = vsel %vm2747, %v5753, 0
    %v5794 = vsel %vm2747, %v5754, 0
    %v5797 = vsel %vm2747, %v5755, 0
    %v5800 = vsel %vm2747, %v5756, 0
    %v5803 = vsel %vm2747, %v5757, 0
    %v5806 = vsel %vm2747, %v5758, 0
    %v5809 = vsel %vm2747, %v5759, 0
    %v5812 = vsel %vm2747, %v5760, 0
    %v5815 = vsel %vm2747, %v5761, 0
    %v5818 = vsel %vm2747, %v5762, 0
    %v5821 = vsel %vm2747, %v5763, 0
    %v5824 = vsel %vm2747, %v5764, 0
    %v5827 = vsel %vm2747, %v5765, 0
    %v5830 = vsel %vm2747, %v5766, 0
    %5832 = vmatprep.subr.bf16.mxu0 0
    %5833 = vmatpush1.bf16.msra.mxu0 0
    %5834 = vmatprep.subr.bf16.mxu0 0
    %5835 = vmatpush1.bf16.msra.mxu0 0
    %5836 = vmatprep.subr.bf16.mxu0 0
    %5837 = vmatpush1.bf16.msra.mxu0 0
    %5838 = vmatprep.subr.bf16.mxu0 0
    %5839 = vmatpush1.bf16.msra.mxu0 0
    %5840 = vmatprep.subr.bf16.mxu0 0
    %5841 = vmatpush1.bf16.msra.mxu0 0
    %5842 = vmatprep.subr.bf16.mxu0 0
    %5843 = vmatpush1.bf16.msra.mxu0 0
    %5844 = vmatprep.subr.bf16.mxu0 0
    %5845 = vmatpush1.bf16.msra.mxu0 %v5781
    %5846 = vmatprep.subr.bf16.mxu0 0
    %5847 = vmatpush1.bf16.msra.mxu0 %v5780
    %5848 = vmatprep.subr.bf16.mxu0 0
    %5849 = vmatpush2.bf16.msra.mxu0 0
    %5850 = vmatprep.subr.bf16.mxu0 0
    %5851 = vmatpush2.bf16.msra.mxu0 0
    %5852 = vmatprep.subr.bf16.mxu0 0
    %5853 = vmatpush2.bf16.msra.mxu0 0
    %5854 = vmatprep.subr.bf16.mxu0 0
    %5855 = vmatpush2.bf16.msra.mxu0 0
    %5856 = vmatprep.subr.bf16.mxu0 0
    %5857 = vmatpush2.bf16.msra.mxu0 0
    %5858 = vmatprep.subr.bf16.mxu0 0
    %5859 = vmatpush2.bf16.msra.mxu0 0
    %5860 = vmatprep.subr.bf16.mxu0 0
    %5861 = vmatpush2.bf16.msra.mxu0 0
    %5862 = vmatprep.subr.bf16.mxu0 0
    %5863 = vmatpush2.bf16.msra.mxu0 0
    %5864 = vmatprep.mubr.bf16.mxu0 0
    %5865 = vmatmul.mubr.bf16.gmra.mxu0 %v5785
    %v5866 = vpop.f32.mrf.mxu0
    %v5867 = vadd.f32 0.0, %v5866
    %v5868 = vpop.f32.mrf.mxu0
    %v5869 = vpop.f32.mrf.mxu0
    %v5870 = vadd.f32 0.0, %v5869
    %v5871 = vpop.f32.mrf.mxu0
    %5872 = vmatprep.mubr.bf16.mxu0 0
    %5873 = vmatmul.mubr.bf16.gmra.mxu0 %v5788
    %v5874 = vpop.f32.mrf.mxu0
    %v5875 = vadd.f32 0.0, %v5874
    %v5876 = vpop.f32.mrf.mxu0
    %v5877 = vpop.f32.mrf.mxu0
    %v5878 = vadd.f32 0.0, %v5877
    %v5879 = vpop.f32.mrf.mxu0
    %5880 = vmatprep.mubr.bf16.mxu0 0
    %5881 = vmatmul.mubr.bf16.gmra.mxu0 %v5791
    %v5882 = vpop.f32.mrf.mxu0
    %v5883 = vadd.f32 0.0, %v5882
    %v5884 = vpop.f32.mrf.mxu0
    %v5885 = vpop.f32.mrf.mxu0
    %v5886 = vadd.f32 0.0, %v5885
    %v5887 = vpop.f32.mrf.mxu0
    %5888 = vmatprep.mubr.bf16.mxu0 0
    %5889 = vmatmul.mubr.bf16.gmra.mxu0 %v5794
    %v5890 = vpop.f32.mrf.mxu0
    %v5891 = vadd.f32 0.0, %v5890
    %v5892 = vpop.f32.mrf.mxu0
    %v5893 = vpop.f32.mrf.mxu0
    %v5894 = vadd.f32 0.0, %v5893
    %v5895 = vpop.f32.mrf.mxu0
    %5896 = vmatprep.mubr.bf16.mxu0 0
    %5897 = vmatmul.mubr.bf16.gmra.mxu0 %v5797
    %v5898 = vpop.f32.mrf.mxu0
    %v5899 = vadd.f32 0.0, %v5898
    %v5900 = vpop.f32.mrf.mxu0
    %v5901 = vpop.f32.mrf.mxu0
    %v5902 = vadd.f32 0.0, %v5901
    %v5903 = vpop.f32.mrf.mxu0
    %5904 = vmatprep.mubr.bf16.mxu0 0
    %5905 = vmatmul.mubr.bf16.gmra.mxu0 %v5800
    %v5906 = vpop.f32.mrf.mxu0
    %v5907 = vadd.f32 0.0, %v5906
    %v5908 = vpop.f32.mrf.mxu0
    %v5909 = vpop.f32.mrf.mxu0
    %v5910 = vadd.f32 0.0, %v5909
    %v5911 = vpop.f32.mrf.mxu0
    %5912 = vmatprep.mubr.bf16.mxu0 0
    %5913 = vmatmul.mubr.bf16.gmra.mxu0 %v5803
    %v5914 = vpop.f32.mrf.mxu0
    %v5915 = vadd.f32 0.0, %v5914
    %v5916 = vpop.f32.mrf.mxu0
    %v5917 = vpop.f32.mrf.mxu0
    %v5918 = vadd.f32 0.0, %v5917
    %v5919 = vpop.f32.mrf.mxu0
    %5920 = vmatprep.mubr.bf16.mxu0 0
    %5921 = vmatmul.mubr.bf16.gmra.mxu0 %v5806
    %v5922 = vpop.f32.mrf.mxu0
    %v5923 = vadd.f32 0.0, %v5922
    %v5924 = vpop.f32.mrf.mxu0
    %v5925 = vpop.f32.mrf.mxu0
    %v5926 = vadd.f32 0.0, %v5925
    %v5927 = vpop.f32.mrf.mxu0
    %5928 = vmatprep.mubr.bf16.mxu0 0
    %5929 = vmatmul.mubr.bf16.gmra.mxu0 %v5809
    %v5930 = vpop.f32.mrf.mxu0
    %v5931 = vadd.f32 0.0, %v5930
    %v5932 = vpop.f32.mrf.mxu0
    %v5933 = vpop.f32.mrf.mxu0
    %v5934 = vadd.f32 0.0, %v5933
    %v5935 = vpop.f32.mrf.mxu0
    %5936 = vmatprep.mubr.bf16.mxu0 0
    %5937 = vmatmul.mubr.bf16.gmra.mxu0 %v5812
    %v5938 = vpop.f32.mrf.mxu0
    %v5939 = vadd.f32 0.0, %v5938
    %v5940 = vpop.f32.mrf.mxu0
    %v5941 = vpop.f32.mrf.mxu0
    %v5942 = vadd.f32 0.0, %v5941
    %v5943 = vpop.f32.mrf.mxu0
    %5944 = vmatprep.mubr.bf16.mxu0 0
    %5945 = vmatmul.mubr.bf16.gmra.mxu0 %v5815
    %v5946 = vpop.f32.mrf.mxu0
    %v5947 = vadd.f32 0.0, %v5946
    %v5948 = vpop.f32.mrf.mxu0
    %v5949 = vpop.f32.mrf.mxu0
    %v5950 = vadd.f32 0.0, %v5949
    %v5951 = vpop.f32.mrf.mxu0
    %5952 = vmatprep.mubr.bf16.mxu0 0
    %5953 = vmatmul.mubr.bf16.gmra.mxu0 %v5818
    %v5954 = vpop.f32.mrf.mxu0
    %v5955 = vadd.f32 0.0, %v5954
    %v5956 = vpop.f32.mrf.mxu0
    %v5957 = vpop.f32.mrf.mxu0
    %v5958 = vadd.f32 0.0, %v5957
    %v5959 = vpop.f32.mrf.mxu0
    %5960 = vmatprep.mubr.bf16.mxu0 0
    %5961 = vmatmul.mubr.bf16.gmra.mxu0 %v5821
    %v5962 = vpop.f32.mrf.mxu0
    %v5963 = vadd.f32 0.0, %v5962
    %v5964 = vpop.f32.mrf.mxu0
    %v5965 = vpop.f32.mrf.mxu0
    %v5966 = vadd.f32 0.0, %v5965
    %v5967 = vpop.f32.mrf.mxu0
    %5968 = vmatprep.mubr.bf16.mxu0 0
    %5969 = vmatmul.mubr.bf16.gmra.mxu0 %v5824
    %v5970 = vpop.f32.mrf.mxu0
    %v5971 = vadd.f32 0.0, %v5970
    %v5972 = vpop.f32.mrf.mxu0
    %v5973 = vpop.f32.mrf.mxu0
    %v5974 = vadd.f32 0.0, %v5973
    %v5975 = vpop.f32.mrf.mxu0
    %5976 = vmatprep.mubr.bf16.mxu0 0
    %5977 = vmatmul.mubr.bf16.gmra.mxu0 %v5827
    %v5978 = vpop.f32.mrf.mxu0
    %v5979 = vadd.f32 0.0, %v5978
    %v5980 = vpop.f32.mrf.mxu0
    %v5981 = vpop.f32.mrf.mxu0
    %v5982 = vadd.f32 0.0, %v5981
    %v5983 = vpop.f32.mrf.mxu0
    %5984 = vmatprep.mubr.bf16.mxu0 0
    %5985 = vmatmul.mubr.bf16.gmra.mxu0 %v5830
    %v5986 = vpop.f32.mrf.mxu0
    %v5987 = vadd.f32 0.0, %v5986
    %v5988 = vpop.f32.mrf.mxu0
    %v5989 = vpop.f32.mrf.mxu0
    %v5990 = vadd.f32 0.0, %v5989
    %v5991 = vpop.f32.mrf.mxu0
    %5992 = vdwg.mxu0
    %v5993 = vadd.f32 %v5719, %v5867
    %v5994 = vadd.f32 %v5720, %v5870
    %v5995 = vadd.f32 %v5721, %v5875
    %v5996 = vadd.f32 %v5722, %v5878
    %v5997 = vadd.f32 %v5723, %v5883
    %v5998 = vadd.f32 %v5724, %v5886
    %v5999 = vadd.f32 %v5725, %v5891
    %v6000 = vadd.f32 %v5726, %v5894
    %v6001 = vadd.f32 %v5727, %v5899
    %v6002 = vadd.f32 %v5728, %v5902
    %v6003 = vadd.f32 %v5729, %v5907
    %v6004 = vadd.f32 %v5730, %v5910
    %v6005 = vadd.f32 %v5731, %v5915
    %v6006 = vadd.f32 %v5732, %v5918
    %v6007 = vadd.f32 %v5733, %v5923
    %v6008 = vadd.f32 %v5734, %v5926
    %v6009 = vadd.f32 %v5735, %v5931
    %v6010 = vadd.f32 %v5736, %v5934
    %v6011 = vadd.f32 %v5737, %v5939
    %v6012 = vadd.f32 %v5738, %v5942
    %v6013 = vadd.f32 %v5739, %v5947
    %v6014 = vadd.f32 %v5740, %v5950
    %v6015 = vadd.f32 %v5741, %v5955
    %v6016 = vadd.f32 %v5742, %v5958
    %v6017 = vadd.f32 %v5743, %v5963
    %v6018 = vadd.f32 %v5744, %v5966
    %v6019 = vadd.f32 %v5745, %v5971
    %v6020 = vadd.f32 %v5746, %v5974
    %v6021 = vadd.f32 %v5747, %v5979
    %v6022 = vadd.f32 %v5748, %v5982
    %v6023 = vadd.f32 %v5749, %v5987
    %v6024 = vadd.f32 %v5750, %v5990
    %v6025 = vpack.c.bf16 %v5022, %v5021
    %v6026 = vpack.c.bf16 %v5024, %v5023
    %v6027 = vpack.c.bf16 %v5026, %v5025
    %v6028 = vpack.c.bf16 %v5028, %v5027
    %v6029 = vpack.c.bf16 %v5030, %v5029
    %v6030 = vpack.c.bf16 %v5032, %v5031
    %v6031 = vpack.c.bf16 %v5034, %v5033
    %v6032 = vpack.c.bf16 %v5036, %v5035
    %v6033 = vpack.c.bf16 %v5038, %v5037
    %v6034 = vpack.c.bf16 %v5040, %v5039
    %v6035 = vpack.c.bf16 %v5042, %v5041
    %v6036 = vpack.c.bf16 %v5044, %v5043
    %v6037 = vpack.c.bf16 %v5046, %v5045
    %v6038 = vpack.c.bf16 %v5048, %v5047
    %v6039 = vpack.c.bf16 %v5050, %v5049
    %v6040 = vpack.c.bf16 %v5052, %v5051
    %s6041 = scalar_lea.vmem %s2, 96
    %v6042 = vld [vmem:[%s6041] sm:$0xf]
    %v6043 = vld [vmem:[%s6041 + $0x4] sm:$0xf]
    %v6044 = vld [vmem:[%s6041 + $0x8] sm:$0xf]
    %v6045 = vld [vmem:[%s6041 + $0xc] sm:$0xf]
    %v6050 = vunpack.c.l.b16 %v6042
    %v6051 = vunpack.c.l.b16 %v6043
    %v6052 = vunpack.c.l.b16 %v6044
    %v6053 = vunpack.c.l.b16 %v6045
    %v6054 = vpack.c.b16 %v6051, %v6050
    %v6055 = vpack.c.b16 %v6053, %v6052
    %v6059 = vsel %vm2747, %v6025, 0
    %v6062 = vsel %vm2747, %v6026, 0
    %v6065 = vsel %vm2747, %v6027, 0
    %v6068 = vsel %vm2747, %v6028, 0
    %v6071 = vsel %vm2747, %v6029, 0
    %v6074 = vsel %vm2747, %v6030, 0
    %v6077 = vsel %vm2747, %v6031, 0
    %v6080 = vsel %vm2747, %v6032, 0
    %v6083 = vsel %vm2747, %v6033, 0
    %v6086 = vsel %vm2747, %v6034, 0
    %v6089 = vsel %vm2747, %v6035, 0
    %v6092 = vsel %vm2747, %v6036, 0
    %v6095 = vsel %vm2747, %v6037, 0
    %v6098 = vsel %vm2747, %v6038, 0
    %v6101 = vsel %vm2747, %v6039, 0
    %v6104 = vsel %vm2747, %v6040, 0
    %6106 = vmatprep.subr.bf16.mxu0 0
    %6107 = vmatpush1.bf16.msra.mxu0 0
    %6108 = vmatprep.subr.bf16.mxu0 0
    %6109 = vmatpush1.bf16.msra.mxu0 0
    %6110 = vmatprep.subr.bf16.mxu0 0
    %6111 = vmatpush1.bf16.msra.mxu0 0
    %6112 = vmatprep.subr.bf16.mxu0 0
    %6113 = vmatpush1.bf16.msra.mxu0 0
    %6114 = vmatprep.subr.bf16.mxu0 0
    %6115 = vmatpush1.bf16.msra.mxu0 0
    %6116 = vmatprep.subr.bf16.mxu0 0
    %6117 = vmatpush1.bf16.msra.mxu0 0
    %6118 = vmatprep.subr.bf16.mxu0 0
    %6119 = vmatpush1.bf16.msra.mxu0 %v6055
    %6120 = vmatprep.subr.bf16.mxu0 0
    %6121 = vmatpush1.bf16.msra.mxu0 %v6054
    %6122 = vmatprep.subr.bf16.mxu0 0
    %6123 = vmatpush2.bf16.msra.mxu0 0
    %6124 = vmatprep.subr.bf16.mxu0 0
    %6125 = vmatpush2.bf16.msra.mxu0 0
    %6126 = vmatprep.subr.bf16.mxu0 0
    %6127 = vmatpush2.bf16.msra.mxu0 0
    %6128 = vmatprep.subr.bf16.mxu0 0
    %6129 = vmatpush2.bf16.msra.mxu0 0
    %6130 = vmatprep.subr.bf16.mxu0 0
    %6131 = vmatpush2.bf16.msra.mxu0 0
    %6132 = vmatprep.subr.bf16.mxu0 0
    %6133 = vmatpush2.bf16.msra.mxu0 0
    %6134 = vmatprep.subr.bf16.mxu0 0
    %6135 = vmatpush2.bf16.msra.mxu0 0
    %6136 = vmatprep.subr.bf16.mxu0 0
    %6137 = vmatpush2.bf16.msra.mxu0 0
    %6138 = vmatprep.mubr.bf16.mxu0 0
    %6139 = vmatmul.mubr.bf16.gmra.mxu0 %v6059
    %v6140 = vpop.f32.mrf.mxu0
    %v6141 = vadd.f32 0.0, %v6140
    %v6142 = vpop.f32.mrf.mxu0
    %v6143 = vpop.f32.mrf.mxu0
    %v6144 = vadd.f32 0.0, %v6143
    %v6145 = vpop.f32.mrf.mxu0
    %6146 = vmatprep.mubr.bf16.mxu0 0
    %6147 = vmatmul.mubr.bf16.gmra.mxu0 %v6062
    %v6148 = vpop.f32.mrf.mxu0
    %v6149 = vadd.f32 0.0, %v6148
    %v6150 = vpop.f32.mrf.mxu0
    %v6151 = vpop.f32.mrf.mxu0
    %v6152 = vadd.f32 0.0, %v6151
    %v6153 = vpop.f32.mrf.mxu0
    %6154 = vmatprep.mubr.bf16.mxu0 0
    %6155 = vmatmul.mubr.bf16.gmra.mxu0 %v6065
    %v6156 = vpop.f32.mrf.mxu0
    %v6157 = vadd.f32 0.0, %v6156
    %v6158 = vpop.f32.mrf.mxu0
    %v6159 = vpop.f32.mrf.mxu0
    %v6160 = vadd.f32 0.0, %v6159
    %v6161 = vpop.f32.mrf.mxu0
    %6162 = vmatprep.mubr.bf16.mxu0 0
    %6163 = vmatmul.mubr.bf16.gmra.mxu0 %v6068
    %v6164 = vpop.f32.mrf.mxu0
    %v6165 = vadd.f32 0.0, %v6164
    %v6166 = vpop.f32.mrf.mxu0
    %v6167 = vpop.f32.mrf.mxu0
    %v6168 = vadd.f32 0.0, %v6167
    %v6169 = vpop.f32.mrf.mxu0
    %6170 = vmatprep.mubr.bf16.mxu0 0
    %6171 = vmatmul.mubr.bf16.gmra.mxu0 %v6071
    %v6172 = vpop.f32.mrf.mxu0
    %v6173 = vadd.f32 0.0, %v6172
    %v6174 = vpop.f32.mrf.mxu0
    %v6175 = vpop.f32.mrf.mxu0
    %v6176 = vadd.f32 0.0, %v6175
    %v6177 = vpop.f32.mrf.mxu0
    %6178 = vmatprep.mubr.bf16.mxu0 0
    %6179 = vmatmul.mubr.bf16.gmra.mxu0 %v6074
    %v6180 = vpop.f32.mrf.mxu0
    %v6181 = vadd.f32 0.0, %v6180
    %v6182 = vpop.f32.mrf.mxu0
    %v6183 = vpop.f32.mrf.mxu0
    %v6184 = vadd.f32 0.0, %v6183
    %v6185 = vpop.f32.mrf.mxu0
    %6186 = vmatprep.mubr.bf16.mxu0 0
    %6187 = vmatmul.mubr.bf16.gmra.mxu0 %v6077
    %v6188 = vpop.f32.mrf.mxu0
    %v6189 = vadd.f32 0.0, %v6188
    %v6190 = vpop.f32.mrf.mxu0
    %v6191 = vpop.f32.mrf.mxu0
    %v6192 = vadd.f32 0.0, %v6191
    %v6193 = vpop.f32.mrf.mxu0
    %6194 = vmatprep.mubr.bf16.mxu0 0
    %6195 = vmatmul.mubr.bf16.gmra.mxu0 %v6080
    %v6196 = vpop.f32.mrf.mxu0
    %v6197 = vadd.f32 0.0, %v6196
    %v6198 = vpop.f32.mrf.mxu0
    %v6199 = vpop.f32.mrf.mxu0
    %v6200 = vadd.f32 0.0, %v6199
    %v6201 = vpop.f32.mrf.mxu0
    %6202 = vmatprep.mubr.bf16.mxu0 0
    %6203 = vmatmul.mubr.bf16.gmra.mxu0 %v6083
    %v6204 = vpop.f32.mrf.mxu0
    %v6205 = vadd.f32 0.0, %v6204
    %v6206 = vpop.f32.mrf.mxu0
    %v6207 = vpop.f32.mrf.mxu0
    %v6208 = vadd.f32 0.0, %v6207
    %v6209 = vpop.f32.mrf.mxu0
    %6210 = vmatprep.mubr.bf16.mxu0 0
    %6211 = vmatmul.mubr.bf16.gmra.mxu0 %v6086
    %v6212 = vpop.f32.mrf.mxu0
    %v6213 = vadd.f32 0.0, %v6212
    %v6214 = vpop.f32.mrf.mxu0
    %v6215 = vpop.f32.mrf.mxu0
    %v6216 = vadd.f32 0.0, %v6215
    %v6217 = vpop.f32.mrf.mxu0
    %6218 = vmatprep.mubr.bf16.mxu0 0
    %6219 = vmatmul.mubr.bf16.gmra.mxu0 %v6089
    %v6220 = vpop.f32.mrf.mxu0
    %v6221 = vadd.f32 0.0, %v6220
    %v6222 = vpop.f32.mrf.mxu0
    %v6223 = vpop.f32.mrf.mxu0
    %v6224 = vadd.f32 0.0, %v6223
    %v6225 = vpop.f32.mrf.mxu0
    %6226 = vmatprep.mubr.bf16.mxu0 0
    %6227 = vmatmul.mubr.bf16.gmra.mxu0 %v6092
    %v6228 = vpop.f32.mrf.mxu0
    %v6229 = vadd.f32 0.0, %v6228
    %v6230 = vpop.f32.mrf.mxu0
    %v6231 = vpop.f32.mrf.mxu0
    %v6232 = vadd.f32 0.0, %v6231
    %v6233 = vpop.f32.mrf.mxu0
    %6234 = vmatprep.mubr.bf16.mxu0 0
    %6235 = vmatmul.mubr.bf16.gmra.mxu0 %v6095
    %v6236 = vpop.f32.mrf.mxu0
    %v6237 = vadd.f32 0.0, %v6236
    %v6238 = vpop.f32.mrf.mxu0
    %v6239 = vpop.f32.mrf.mxu0
    %v6240 = vadd.f32 0.0, %v6239
    %v6241 = vpop.f32.mrf.mxu0
    %6242 = vmatprep.mubr.bf16.mxu0 0
    %6243 = vmatmul.mubr.bf16.gmra.mxu0 %v6098
    %v6244 = vpop.f32.mrf.mxu0
    %v6245 = vadd.f32 0.0, %v6244
    %v6246 = vpop.f32.mrf.mxu0
    %v6247 = vpop.f32.mrf.mxu0
    %v6248 = vadd.f32 0.0, %v6247
    %v6249 = vpop.f32.mrf.mxu0
    %6250 = vmatprep.mubr.bf16.mxu0 0
    %6251 = vmatmul.mubr.bf16.gmra.mxu0 %v6101
    %v6252 = vpop.f32.mrf.mxu0
    %v6253 = vadd.f32 0.0, %v6252
    %v6254 = vpop.f32.mrf.mxu0
    %v6255 = vpop.f32.mrf.mxu0
    %v6256 = vadd.f32 0.0, %v6255
    %v6257 = vpop.f32.mrf.mxu0
    %6258 = vmatprep.mubr.bf16.mxu0 0
    %6259 = vmatmul.mubr.bf16.gmra.mxu0 %v6104
    %v6260 = vpop.f32.mrf.mxu0
    %v6261 = vadd.f32 0.0, %v6260
    %v6262 = vpop.f32.mrf.mxu0
    %v6263 = vpop.f32.mrf.mxu0
    %v6264 = vadd.f32 0.0, %v6263
    %v6265 = vpop.f32.mrf.mxu0
    %6266 = vdwg.mxu0
    %v6267 = vadd.f32 %v5993, %v6141
    %v6268 = vadd.f32 %v5994, %v6144
    %v6269 = vadd.f32 %v5995, %v6149
    %v6270 = vadd.f32 %v5996, %v6152
    %v6271 = vadd.f32 %v5997, %v6157
    %v6272 = vadd.f32 %v5998, %v6160
    %v6273 = vadd.f32 %v5999, %v6165
    %v6274 = vadd.f32 %v6000, %v6168
    %v6275 = vadd.f32 %v6001, %v6173
    %v6276 = vadd.f32 %v6002, %v6176
    %v6277 = vadd.f32 %v6003, %v6181
    %v6278 = vadd.f32 %v6004, %v6184
    %v6279 = vadd.f32 %v6005, %v6189
    %v6280 = vadd.f32 %v6006, %v6192
    %v6281 = vadd.f32 %v6007, %v6197
    %v6282 = vadd.f32 %v6008, %v6200
    %v6283 = vadd.f32 %v6009, %v6205
    %v6284 = vadd.f32 %v6010, %v6208
    %v6285 = vadd.f32 %v6011, %v6213
    %v6286 = vadd.f32 %v6012, %v6216
    %v6287 = vadd.f32 %v6013, %v6221
    %v6288 = vadd.f32 %v6014, %v6224
    %v6289 = vadd.f32 %v6015, %v6229
    %v6290 = vadd.f32 %v6016, %v6232
    %v6291 = vadd.f32 %v6017, %v6237
    %v6292 = vadd.f32 %v6018, %v6240
    %v6293 = vadd.f32 %v6019, %v6245
    %v6294 = vadd.f32 %v6020, %v6248
    %v6295 = vadd.f32 %v6021, %v6253
    %v6296 = vadd.f32 %v6022, %v6256
    %v6297 = vadd.f32 %v6023, %v6261
    %v6298 = vadd.f32 %v6024, %v6264
    %v6299 = vpack.c.bf16 %v5258, %v5251
    %v6300 = vpack.c.bf16 %v5272, %v5265
    %v6301 = vpack.c.bf16 %v5286, %v5279
    %v6302 = vpack.c.bf16 %v5300, %v5293
    %v6303 = vpack.c.bf16 %v5314, %v5307
    %v6304 = vpack.c.bf16 %v5328, %v5321
    %v6305 = vpack.c.bf16 %v5342, %v5335
    %v6306 = vpack.c.bf16 %v5356, %v5349
    %v6307 = vpack.c.bf16 %v5370, %v5363
    %v6308 = vpack.c.bf16 %v5384, %v5377
    %v6309 = vpack.c.bf16 %v5398, %v5391
    %v6310 = vpack.c.bf16 %v5412, %v5405
    %v6311 = vpack.c.bf16 %v5426, %v5419
    %v6312 = vpack.c.bf16 %v5440, %v5433
    %v6313 = vpack.c.bf16 %v5454, %v5447
    %v6314 = vpack.c.bf16 %v5468, %v5461
    %s6315 = scalar_lea.vmem %s2, 112
    %v6316 = vld [vmem:[%s6315] sm:$0xf]
    %v6317 = vld [vmem:[%s6315 + $0x4] sm:$0xf]
    %v6318 = vld [vmem:[%s6315 + $0x8] sm:$0xf]
    %v6319 = vld [vmem:[%s6315 + $0xc] sm:$0xf]
    %v6324 = vunpack.c.l.b16 %v6316
    %v6325 = vunpack.c.l.b16 %v6317
    %v6326 = vunpack.c.l.b16 %v6318
    %v6327 = vunpack.c.l.b16 %v6319
    %v6328 = vpack.c.b16 %v6325, %v6324
    %v6329 = vpack.c.b16 %v6327, %v6326
    %v6333 = vsel %vm2747, %v6299, 0
    %v6336 = vsel %vm2747, %v6300, 0
    %v6339 = vsel %vm2747, %v6301, 0
    %v6342 = vsel %vm2747, %v6302, 0
    %v6345 = vsel %vm2747, %v6303, 0
    %v6348 = vsel %vm2747, %v6304, 0
    %v6351 = vsel %vm2747, %v6305, 0
    %v6354 = vsel %vm2747, %v6306, 0
    %v6357 = vsel %vm2747, %v6307, 0
    %v6360 = vsel %vm2747, %v6308, 0
    %v6363 = vsel %vm2747, %v6309, 0
    %v6366 = vsel %vm2747, %v6310, 0
    %v6369 = vsel %vm2747, %v6311, 0
    %v6372 = vsel %vm2747, %v6312, 0
    %v6375 = vsel %vm2747, %v6313, 0
    %v6378 = vsel %vm2747, %v6314, 0
    %6380 = vmatprep.subr.bf16.mxu0 0
    %6381 = vmatpush1.bf16.msra.mxu0 0
    %6382 = vmatprep.subr.bf16.mxu0 0
    %6383 = vmatpush1.bf16.msra.mxu0 0
    %6384 = vmatprep.subr.bf16.mxu0 0
    %6385 = vmatpush1.bf16.msra.mxu0 0
    %6386 = vmatprep.subr.bf16.mxu0 0
    %6387 = vmatpush1.bf16.msra.mxu0 0
    %6388 = vmatprep.subr.bf16.mxu0 0
    %6389 = vmatpush1.bf16.msra.mxu0 0
    %6390 = vmatprep.subr.bf16.mxu0 0
    %6391 = vmatpush1.bf16.msra.mxu0 0
    %6392 = vmatprep.subr.bf16.mxu0 0
    %6393 = vmatpush1.bf16.msra.mxu0 %v6329
    %6394 = vmatprep.subr.bf16.mxu0 0
    %6395 = vmatpush1.bf16.msra.mxu0 %v6328
    %6396 = vmatprep.subr.bf16.mxu0 0
    %6397 = vmatpush2.bf16.msra.mxu0 0
    %6398 = vmatprep.subr.bf16.mxu0 0
    %6399 = vmatpush2.bf16.msra.mxu0 0
    %6400 = vmatprep.subr.bf16.mxu0 0
    %6401 = vmatpush2.bf16.msra.mxu0 0
    %6402 = vmatprep.subr.bf16.mxu0 0
    %6403 = vmatpush2.bf16.msra.mxu0 0
    %6404 = vmatprep.subr.bf16.mxu0 0
    %6405 = vmatpush2.bf16.msra.mxu0 0
    %6406 = vmatprep.subr.bf16.mxu0 0
    %6407 = vmatpush2.bf16.msra.mxu0 0
    %6408 = vmatprep.subr.bf16.mxu0 0
    %6409 = vmatpush2.bf16.msra.mxu0 0
    %6410 = vmatprep.subr.bf16.mxu0 0
    %6411 = vmatpush2.bf16.msra.mxu0 0
    %6412 = vmatprep.mubr.bf16.mxu0 0
    %6413 = vmatmul.mubr.bf16.gmra.mxu0 %v6333
    %v6414 = vpop.f32.mrf.mxu0
    %v6415 = vadd.f32 0.0, %v6414
    %v6416 = vpop.f32.mrf.mxu0
    %v6417 = vpop.f32.mrf.mxu0
    %v6418 = vadd.f32 0.0, %v6417
    %v6419 = vpop.f32.mrf.mxu0
    %6420 = vmatprep.mubr.bf16.mxu0 0
    %6421 = vmatmul.mubr.bf16.gmra.mxu0 %v6336
    %v6422 = vpop.f32.mrf.mxu0
    %v6423 = vadd.f32 0.0, %v6422
    %v6424 = vpop.f32.mrf.mxu0
    %v6425 = vpop.f32.mrf.mxu0
    %v6426 = vadd.f32 0.0, %v6425
    %v6427 = vpop.f32.mrf.mxu0
    %6428 = vmatprep.mubr.bf16.mxu0 0
    %6429 = vmatmul.mubr.bf16.gmra.mxu0 %v6339
    %v6430 = vpop.f32.mrf.mxu0
    %v6431 = vadd.f32 0.0, %v6430
    %v6432 = vpop.f32.mrf.mxu0
    %v6433 = vpop.f32.mrf.mxu0
    %v6434 = vadd.f32 0.0, %v6433
    %v6435 = vpop.f32.mrf.mxu0
    %6436 = vmatprep.mubr.bf16.mxu0 0
    %6437 = vmatmul.mubr.bf16.gmra.mxu0 %v6342
    %v6438 = vpop.f32.mrf.mxu0
    %v6439 = vadd.f32 0.0, %v6438
    %v6440 = vpop.f32.mrf.mxu0
    %v6441 = vpop.f32.mrf.mxu0
    %v6442 = vadd.f32 0.0, %v6441
    %v6443 = vpop.f32.mrf.mxu0
    %6444 = vmatprep.mubr.bf16.mxu0 0
    %6445 = vmatmul.mubr.bf16.gmra.mxu0 %v6345
    %v6446 = vpop.f32.mrf.mxu0
    %v6447 = vadd.f32 0.0, %v6446
    %v6448 = vpop.f32.mrf.mxu0
    %v6449 = vpop.f32.mrf.mxu0
    %v6450 = vadd.f32 0.0, %v6449
    %v6451 = vpop.f32.mrf.mxu0
    %6452 = vmatprep.mubr.bf16.mxu0 0
    %6453 = vmatmul.mubr.bf16.gmra.mxu0 %v6348
    %v6454 = vpop.f32.mrf.mxu0
    %v6455 = vadd.f32 0.0, %v6454
    %v6456 = vpop.f32.mrf.mxu0
    %v6457 = vpop.f32.mrf.mxu0
    %v6458 = vadd.f32 0.0, %v6457
    %v6459 = vpop.f32.mrf.mxu0
    %6460 = vmatprep.mubr.bf16.mxu0 0
    %6461 = vmatmul.mubr.bf16.gmra.mxu0 %v6351
    %v6462 = vpop.f32.mrf.mxu0
    %v6463 = vadd.f32 0.0, %v6462
    %v6464 = vpop.f32.mrf.mxu0
    %v6465 = vpop.f32.mrf.mxu0
    %v6466 = vadd.f32 0.0, %v6465
    %v6467 = vpop.f32.mrf.mxu0
    %6468 = vmatprep.mubr.bf16.mxu0 0
    %6469 = vmatmul.mubr.bf16.gmra.mxu0 %v6354
    %v6470 = vpop.f32.mrf.mxu0
    %v6471 = vadd.f32 0.0, %v6470
    %v6472 = vpop.f32.mrf.mxu0
    %v6473 = vpop.f32.mrf.mxu0
    %v6474 = vadd.f32 0.0, %v6473
    %v6475 = vpop.f32.mrf.mxu0
    %6476 = vmatprep.mubr.bf16.mxu0 0
    %6477 = vmatmul.mubr.bf16.gmra.mxu0 %v6357
    %v6478 = vpop.f32.mrf.mxu0
    %v6479 = vadd.f32 0.0, %v6478
    %v6480 = vpop.f32.mrf.mxu0
    %v6481 = vpop.f32.mrf.mxu0
    %v6482 = vadd.f32 0.0, %v6481
    %v6483 = vpop.f32.mrf.mxu0
    %6484 = vmatprep.mubr.bf16.mxu0 0
    %6485 = vmatmul.mubr.bf16.gmra.mxu0 %v6360
    %v6486 = vpop.f32.mrf.mxu0
    %v6487 = vadd.f32 0.0, %v6486
    %v6488 = vpop.f32.mrf.mxu0
    %v6489 = vpop.f32.mrf.mxu0
    %v6490 = vadd.f32 0.0, %v6489
    %v6491 = vpop.f32.mrf.mxu0
    %6492 = vmatprep.mubr.bf16.mxu0 0
    %6493 = vmatmul.mubr.bf16.gmra.mxu0 %v6363
    %v6494 = vpop.f32.mrf.mxu0
    %v6495 = vadd.f32 0.0, %v6494
    %v6496 = vpop.f32.mrf.mxu0
    %v6497 = vpop.f32.mrf.mxu0
    %v6498 = vadd.f32 0.0, %v6497
    %v6499 = vpop.f32.mrf.mxu0
    %6500 = vmatprep.mubr.bf16.mxu0 0
    %6501 = vmatmul.mubr.bf16.gmra.mxu0 %v6366
    %v6502 = vpop.f32.mrf.mxu0
    %v6503 = vadd.f32 0.0, %v6502
    %v6504 = vpop.f32.mrf.mxu0
    %v6505 = vpop.f32.mrf.mxu0
    %v6506 = vadd.f32 0.0, %v6505
    %v6507 = vpop.f32.mrf.mxu0
    %6508 = vmatprep.mubr.bf16.mxu0 0
    %6509 = vmatmul.mubr.bf16.gmra.mxu0 %v6369
    %v6510 = vpop.f32.mrf.mxu0
    %v6511 = vadd.f32 0.0, %v6510
    %v6512 = vpop.f32.mrf.mxu0
    %v6513 = vpop.f32.mrf.mxu0
    %v6514 = vadd.f32 0.0, %v6513
    %v6515 = vpop.f32.mrf.mxu0
    %6516 = vmatprep.mubr.bf16.mxu0 0
    %6517 = vmatmul.mubr.bf16.gmra.mxu0 %v6372
    %v6518 = vpop.f32.mrf.mxu0
    %v6519 = vadd.f32 0.0, %v6518
    %v6520 = vpop.f32.mrf.mxu0
    %v6521 = vpop.f32.mrf.mxu0
    %v6522 = vadd.f32 0.0, %v6521
    %v6523 = vpop.f32.mrf.mxu0
    %6524 = vmatprep.mubr.bf16.mxu0 0
    %6525 = vmatmul.mubr.bf16.gmra.mxu0 %v6375
    %v6526 = vpop.f32.mrf.mxu0
    %v6527 = vadd.f32 0.0, %v6526
    %v6528 = vpop.f32.mrf.mxu0
    %v6529 = vpop.f32.mrf.mxu0
    %v6530 = vadd.f32 0.0, %v6529
    %v6531 = vpop.f32.mrf.mxu0
    %6532 = vmatprep.mubr.bf16.mxu0 0
    %6533 = vmatmul.mubr.bf16.gmra.mxu0 %v6378
    %v6534 = vpop.f32.mrf.mxu0
    %v6535 = vadd.f32 0.0, %v6534
    %v6536 = vpop.f32.mrf.mxu0
    %v6537 = vpop.f32.mrf.mxu0
    %v6538 = vadd.f32 0.0, %v6537
    %v6539 = vpop.f32.mrf.mxu0
    %6540 = vdwg.mxu0
    %v6541 = vadd.f32 %v6267, %v6415
    %v6542 = vadd.f32 %v6268, %v6418
    %v6543 = vadd.f32 %v6269, %v6423
    %v6544 = vadd.f32 %v6270, %v6426
    %v6545 = vadd.f32 %v6271, %v6431
    %v6546 = vadd.f32 %v6272, %v6434
    %v6547 = vadd.f32 %v6273, %v6439
    %v6548 = vadd.f32 %v6274, %v6442
    %v6549 = vadd.f32 %v6275, %v6447
    %v6550 = vadd.f32 %v6276, %v6450
    %v6551 = vadd.f32 %v6277, %v6455
    %v6552 = vadd.f32 %v6278, %v6458
    %v6553 = vadd.f32 %v6279, %v6463
    %v6554 = vadd.f32 %v6280, %v6466
    %v6555 = vadd.f32 %v6281, %v6471
    %v6556 = vadd.f32 %v6282, %v6474
    %v6557 = vadd.f32 %v6283, %v6479
    %v6558 = vadd.f32 %v6284, %v6482
    %v6559 = vadd.f32 %v6285, %v6487
    %v6560 = vadd.f32 %v6286, %v6490
    %v6561 = vadd.f32 %v6287, %v6495
    %v6562 = vadd.f32 %v6288, %v6498
    %v6563 = vadd.f32 %v6289, %v6503
    %v6564 = vadd.f32 %v6290, %v6506
    %v6565 = vadd.f32 %v6291, %v6511
    %v6566 = vadd.f32 %v6292, %v6514
    %v6567 = vadd.f32 %v6293, %v6519
    %v6568 = vadd.f32 %v6294, %v6522
    %v6569 = vadd.f32 %v6295, %v6527
    %v6570 = vadd.f32 %v6296, %v6530
    %v6571 = vadd.f32 %v6297, %v6535
    %v6572 = vadd.f32 %v6298, %v6538
    %v6573 = vmax.f32 %v6541, 0.0
    %v6574 = vmax.f32 %v6542, 0.0
    %v6575 = vmax.f32 %v6543, 0.0
    %v6576 = vmax.f32 %v6544, 0.0
    %v6577 = vmax.f32 %v6545, 0.0
    %v6578 = vmax.f32 %v6546, 0.0
    %v6579 = vmax.f32 %v6547, 0.0
    %v6580 = vmax.f32 %v6548, 0.0
    %v6581 = vmax.f32 %v6549, 0.0
    %v6582 = vmax.f32 %v6550, 0.0
    %v6583 = vmax.f32 %v6551, 0.0
    %v6584 = vmax.f32 %v6552, 0.0
    %v6585 = vmax.f32 %v6553, 0.0
    %v6586 = vmax.f32 %v6554, 0.0
    %v6587 = vmax.f32 %v6555, 0.0
    %v6588 = vmax.f32 %v6556, 0.0
    %v6589 = vmax.f32 %v6557, 0.0
    %v6590 = vmax.f32 %v6558, 0.0
    %v6591 = vmax.f32 %v6559, 0.0
    %v6592 = vmax.f32 %v6560, 0.0
    %v6593 = vmax.f32 %v6561, 0.0
    %v6594 = vmax.f32 %v6562, 0.0
    %v6595 = vmax.f32 %v6563, 0.0
    %v6596 = vmax.f32 %v6564, 0.0
    %v6597 = vmax.f32 %v6565, 0.0
    %v6598 = vmax.f32 %v6566, 0.0
    %v6599 = vmax.f32 %v6567, 0.0
    %v6600 = vmax.f32 %v6568, 0.0
    %v6601 = vmax.f32 %v6569, 0.0
    %v6602 = vmax.f32 %v6570, 0.0
    %v6603 = vmax.f32 %v6571, 0.0
    %v6604 = vmax.f32 %v6572, 0.0
    %v6605 = vadd.f32 %v3849, %v6573
    %v6606 = vadd.f32 %v3850, %v6574
    %v6607 = vadd.f32 %v3851, %v6575
    %v6608 = vadd.f32 %v3852, %v6576
    %v6609 = vadd.f32 %v3853, %v6577
    %v6610 = vadd.f32 %v3854, %v6578
    %v6611 = vadd.f32 %v3855, %v6579
    %v6612 = vadd.f32 %v3856, %v6580
    %v6613 = vadd.f32 %v3857, %v6581
    %v6614 = vadd.f32 %v3858, %v6582
    %v6615 = vadd.f32 %v3859, %v6583
    %v6616 = vadd.f32 %v3860, %v6584
    %v6617 = vadd.f32 %v3861, %v6585
    %v6618 = vadd.f32 %v3862, %v6586
    %v6619 = vadd.f32 %v3863, %v6587
    %v6620 = vadd.f32 %v3864, %v6588
    %v6621 = vadd.f32 %v3865, %v6589
    %v6622 = vadd.f32 %v3866, %v6590
    %v6623 = vadd.f32 %v3867, %v6591
    %v6624 = vadd.f32 %v3868, %v6592
    %v6625 = vadd.f32 %v3869, %v6593
    %v6626 = vadd.f32 %v3870, %v6594
    %v6627 = vadd.f32 %v3871, %v6595
    %v6628 = vadd.f32 %v3872, %v6596
    %v6629 = vadd.f32 %v3873, %v6597
    %v6630 = vadd.f32 %v3874, %v6598
    %v6631 = vadd.f32 %v3875, %v6599
    %v6632 = vadd.f32 %v3876, %v6600
    %v6633 = vadd.f32 %v3877, %v6601
    %v6634 = vadd.f32 %v3878, %v6602
    %v6635 = vadd.f32 %v3879, %v6603
    %v6636 = vadd.f32 %v3880, %v6604
    %6637 = vst.msk [vmem:[%s9] sm:$0xff] %vm2747, %v6605
    %6638 = vst.msk [vmem:[%s9 + $0x8] sm:$0xff] %vm2747, %v6606
    %6639 = vst.msk [vmem:[%s9 + $0x10] sm:$0xff] %vm2747, %v6607
    %6640 = vst.msk [vmem:[%s9 + $0x18] sm:$0xff] %vm2747, %v6608
    %6641 = vst.msk [vmem:[%s9 + $0x20] sm:$0xff] %vm2747, %v6609
    %6642 = vst.msk [vmem:[%s9 + $0x28] sm:$0xff] %vm2747, %v6610
    %6643 = vst.msk [vmem:[%s9 + $0x30] sm:$0xff] %vm2747, %v6611
    %6644 = vst.msk [vmem:[%s9 + $0x38] sm:$0xff] %vm2747, %v6612
    %6645 = vst.msk [vmem:[%s9 + $0x40] sm:$0xff] %vm2747, %v6613
    %6646 = vst.msk [vmem:[%s9 + $0x48] sm:$0xff] %vm2747, %v6614
    %6647 = vst.msk [vmem:[%s9 + $0x50] sm:$0xff] %vm2747, %v6615
    %6648 = vst.msk [vmem:[%s9 + $0x58] sm:$0xff] %vm2747, %v6616
    %6649 = vst.msk [vmem:[%s9 + $0x60] sm:$0xff] %vm2747, %v6617
    %6650 = vst.msk [vmem:[%s9 + $0x68] sm:$0xff] %vm2747, %v6618
    %6651 = vst.msk [vmem:[%s9 + $0x70] sm:$0xff] %vm2747, %v6619
    %6652 = vst.msk [vmem:[%s9 + $0x78] sm:$0xff] %vm2747, %v6620
    %6653 = vst.msk [vmem:[%s9 + $0x80] sm:$0xff] %vm2747, %v6621
    %6654 = vst.msk [vmem:[%s9 + $0x88] sm:$0xff] %vm2747, %v6622
    %6655 = vst.msk [vmem:[%s9 + $0x90] sm:$0xff] %vm2747, %v6623
    %6656 = vst.msk [vmem:[%s9 + $0x98] sm:$0xff] %vm2747, %v6624
    %6657 = vst.msk [vmem:[%s9 + $0xa0] sm:$0xff] %vm2747, %v6625
    %6658 = vst.msk [vmem:[%s9 + $0xa8] sm:$0xff] %vm2747, %v6626
    %6659 = vst.msk [vmem:[%s9 + $0xb0] sm:$0xff] %vm2747, %v6627
    %6660 = vst.msk [vmem:[%s9 + $0xb8] sm:$0xff] %vm2747, %v6628
    %6661 = vst.msk [vmem:[%s9 + $0xc0] sm:$0xff] %vm2747, %v6629
    %6662 = vst.msk [vmem:[%s9 + $0xc8] sm:$0xff] %vm2747, %v6630
    %6663 = vst.msk [vmem:[%s9 + $0xd0] sm:$0xff] %vm2747, %v6631
    %6664 = vst.msk [vmem:[%s9 + $0xd8] sm:$0xff] %vm2747, %v6632
    %6665 = vst.msk [vmem:[%s9 + $0xe0] sm:$0xff] %vm2747, %v6633
    %6666 = vst.msk [vmem:[%s9 + $0xe8] sm:$0xff] %vm2747, %v6634
    %6667 = vst.msk [vmem:[%s9 + $0xf0] sm:$0xff] %vm2747, %v6635
    %6668 = vst.msk [vmem:[%s9 + $0xf8] sm:$0xff] %vm2747, %v6636
    %v6669 = vlaneseq
    %v6670 = vshrl.u32 %v6669, 7
    %v6671 = vadd.s32 %v6670, 8
    %v6672 = vadd.s32 %v6670, 16
    %v6673 = vadd.s32 %v6670, 24
    %v6674 = vadd.s32 %v6670, 32
    %v6675 = vadd.s32 %v6670, 40
    %v6676 = vadd.s32 %v6670, 48
    %v6677 = vadd.s32 %v6670, 56
    %v6678 = vadd.s32 %v6670, 64
    %v6679 = vadd.s32 %v6670, 72
    %v6680 = vadd.s32 %v6670, 80
    %v6681 = vadd.s32 %v6670, 88
    %v6682 = vadd.s32 %v6670, 96
    %v6683 = vadd.s32 %v6670, 104
    %v6684 = vadd.s32 %v6670, 112
    %v6685 = vadd.s32 %v6670, 120
    %v6686 = vadd.s32 %v6670, 128
    %v6687 = vadd.s32 %v6670, 136
    %v6688 = vadd.s32 %v6670, 144
    %v6689 = vadd.s32 %v6670, 152
    %v6690 = vadd.s32 %v6670, 160
    %v6691 = vadd.s32 %v6670, 168
    %v6692 = vadd.s32 %v6670, 176
    %v6693 = vadd.s32 %v6670, 184
    %v6694 = vadd.s32 %v6670, 192
    %v6695 = vadd.s32 %v6670, 200
    %v6696 = vadd.s32 %v6670, 208
    %v6697 = vadd.s32 %v6670, 216
    %v6698 = vadd.s32 %v6670, 224
    %v6699 = vadd.s32 %v6670, 232
    %v6700 = vadd.s32 %v6670, 240
    %v6701 = vadd.s32 %v6670, 248
    %vm6702 = vcmp.lt.s32.totalorder %v6670, 256
    %vm6703 = vcmp.lt.s32.totalorder %v6671, 256
    %vm6704 = vcmp.lt.s32.totalorder %v6672, 256
    %vm6705 = vcmp.lt.s32.totalorder %v6673, 256
    %vm6706 = vcmp.lt.s32.totalorder %v6674, 256
    %vm6707 = vcmp.lt.s32.totalorder %v6675, 256
    %vm6708 = vcmp.lt.s32.totalorder %v6676, 256
    %vm6709 = vcmp.lt.s32.totalorder %v6677, 256
    %vm6710 = vcmp.lt.s32.totalorder %v6678, 256
    %vm6711 = vcmp.lt.s32.totalorder %v6679, 256
    %vm6712 = vcmp.lt.s32.totalorder %v6680, 256
    %vm6713 = vcmp.lt.s32.totalorder %v6681, 256
    %vm6714 = vcmp.lt.s32.totalorder %v6682, 256
    %vm6715 = vcmp.lt.s32.totalorder %v6683, 256
    %vm6716 = vcmp.lt.s32.totalorder %v6684, 256
    %vm6717 = vcmp.lt.s32.totalorder %v6685, 256
    %vm6718 = vcmp.lt.s32.totalorder %v6686, 256
    %vm6719 = vcmp.lt.s32.totalorder %v6687, 256
    %vm6720 = vcmp.lt.s32.totalorder %v6688, 256
    %vm6721 = vcmp.lt.s32.totalorder %v6689, 256
    %vm6722 = vcmp.lt.s32.totalorder %v6690, 256
    %vm6723 = vcmp.lt.s32.totalorder %v6691, 256
    %vm6724 = vcmp.lt.s32.totalorder %v6692, 256
    %vm6725 = vcmp.lt.s32.totalorder %v6693, 256
    %vm6726 = vcmp.lt.s32.totalorder %v6694, 256
    %vm6727 = vcmp.lt.s32.totalorder %v6695, 256
    %vm6728 = vcmp.lt.s32.totalorder %v6696, 256
    %vm6729 = vcmp.lt.s32.totalorder %v6697, 256
    %vm6730 = vcmp.lt.s32.totalorder %v6698, 256
    %vm6731 = vcmp.lt.s32.totalorder %v6699, 256
    %vm6732 = vcmp.lt.s32.totalorder %v6700, 256
    %vm6733 = vcmp.lt.s32.totalorder %v6701, 256
    %v6734 = vsel %vm6702, 1, 0
    %v6735 = vsel %vm6703, 1, 0
    %v6736 = vsel %vm6704, 1, 0
    %v6737 = vsel %vm6705, 1, 0
    %v6738 = vsel %vm6706, 1, 0
    %v6739 = vsel %vm6707, 1, 0
    %v6740 = vsel %vm6708, 1, 0
    %v6741 = vsel %vm6709, 1, 0
    %v6742 = vsel %vm6710, 1, 0
    %v6743 = vsel %vm6711, 1, 0
    %v6744 = vsel %vm6712, 1, 0
    %v6745 = vsel %vm6713, 1, 0
    %v6746 = vsel %vm6714, 1, 0
    %v6747 = vsel %vm6715, 1, 0
    %v6748 = vsel %vm6716, 1, 0
    %v6749 = vsel %vm6717, 1, 0
    %v6750 = vsel %vm6718, 1, 0
    %v6751 = vsel %vm6719, 1, 0
    %v6752 = vsel %vm6720, 1, 0
    %v6753 = vsel %vm6721, 1, 0
    %v6754 = vsel %vm6722, 1, 0
    %v6755 = vsel %vm6723, 1, 0
    %v6756 = vsel %vm6724, 1, 0
    %v6757 = vsel %vm6725, 1, 0
    %v6758 = vsel %vm6726, 1, 0
    %v6759 = vsel %vm6727, 1, 0
    %v6760 = vsel %vm6728, 1, 0
    %v6761 = vsel %vm6729, 1, 0
    %v6762 = vsel %vm6730, 1, 0
    %v6763 = vsel %vm6731, 1, 0
    %v6764 = vsel %vm6732, 1, 0
    %v6765 = vsel %vm6733, 1, 0
    %vm6766 = vcmp.eq.s32.totalorder %v6734, 1
    %vm6767 = vcmp.eq.s32.totalorder %v6735, 1
    %vm6768 = vcmp.eq.s32.totalorder %v6736, 1
    %vm6769 = vcmp.eq.s32.totalorder %v6737, 1
    %vm6770 = vcmp.eq.s32.totalorder %v6738, 1
    %vm6771 = vcmp.eq.s32.totalorder %v6739, 1
    %vm6772 = vcmp.eq.s32.totalorder %v6740, 1
    %vm6773 = vcmp.eq.s32.totalorder %v6741, 1
    %vm6774 = vcmp.eq.s32.totalorder %v6742, 1
    %vm6775 = vcmp.eq.s32.totalorder %v6743, 1
    %vm6776 = vcmp.eq.s32.totalorder %v6744, 1
    %vm6777 = vcmp.eq.s32.totalorder %v6745, 1
    %vm6778 = vcmp.eq.s32.totalorder %v6746, 1
    %vm6779 = vcmp.eq.s32.totalorder %v6747, 1
    %vm6780 = vcmp.eq.s32.totalorder %v6748, 1
    %vm6781 = vcmp.eq.s32.totalorder %v6749, 1
    %vm6782 = vcmp.eq.s32.totalorder %v6750, 1
    %vm6783 = vcmp.eq.s32.totalorder %v6751, 1
    %vm6784 = vcmp.eq.s32.totalorder %v6752, 1
    %vm6785 = vcmp.eq.s32.totalorder %v6753, 1
    %vm6786 = vcmp.eq.s32.totalorder %v6754, 1
    %vm6787 = vcmp.eq.s32.totalorder %v6755, 1
    %vm6788 = vcmp.eq.s32.totalorder %v6756, 1
    %vm6789 = vcmp.eq.s32.totalorder %v6757, 1
    %vm6790 = vcmp.eq.s32.totalorder %v6758, 1
    %vm6791 = vcmp.eq.s32.totalorder %v6759, 1
    %vm6792 = vcmp.eq.s32.totalorder %v6760, 1
    %vm6793 = vcmp.eq.s32.totalorder %v6761, 1
    %vm6794 = vcmp.eq.s32.totalorder %v6762, 1
    %vm6795 = vcmp.eq.s32.totalorder %v6763, 1
    %vm6796 = vcmp.eq.s32.totalorder %v6764, 1
    %vm6797 = vcmp.eq.s32.totalorder %v6765, 1
    %v6798 = vsel %vm6766, %v6605, 0.0
    %v6799 = vsel %vm6767, %v6606, 0.0
    %v6800 = vsel %vm6768, %v6607, 0.0
    %v6801 = vsel %vm6769, %v6608, 0.0
    %v6802 = vsel %vm6770, %v6609, 0.0
    %v6803 = vsel %vm6771, %v6610, 0.0
    %v6804 = vsel %vm6772, %v6611, 0.0
    %v6805 = vsel %vm6773, %v6612, 0.0
    %v6806 = vsel %vm6774, %v6613, 0.0
    %v6807 = vsel %vm6775, %v6614, 0.0
    %v6808 = vsel %vm6776, %v6615, 0.0
    %v6809 = vsel %vm6777, %v6616, 0.0
    %v6810 = vsel %vm6778, %v6617, 0.0
    %v6811 = vsel %vm6779, %v6618, 0.0
    %v6812 = vsel %vm6780, %v6619, 0.0
    %v6813 = vsel %vm6781, %v6620, 0.0
    %v6814 = vsel %vm6782, %v6621, 0.0
    %v6815 = vsel %vm6783, %v6622, 0.0
    %v6816 = vsel %vm6784, %v6623, 0.0
    %v6817 = vsel %vm6785, %v6624, 0.0
    %v6818 = vsel %vm6786, %v6625, 0.0
    %v6819 = vsel %vm6787, %v6626, 0.0
    %v6820 = vsel %vm6788, %v6627, 0.0
    %v6821 = vsel %vm6789, %v6628, 0.0
    %v6822 = vsel %vm6790, %v6629, 0.0
    %v6823 = vsel %vm6791, %v6630, 0.0
    %v6824 = vsel %vm6792, %v6631, 0.0
    %v6825 = vsel %vm6793, %v6632, 0.0
    %v6826 = vsel %vm6794, %v6633, 0.0
    %v6827 = vsel %vm6795, %v6634, 0.0
    %v6828 = vsel %vm6796, %v6635, 0.0
    %v6829 = vsel %vm6797, %v6636, 0.0
    %v6830 = vsel %vm2747, %v6798, 0.0
    %v6831 = vsel %vm2747, %v6799, 0.0
    %v6832 = vadd.f32 %v6830, %v6831
    %v6833 = vsel %vm2747, %v6800, 0.0
    %v6834 = vadd.f32 %v6832, %v6833
    %v6835 = vsel %vm2747, %v6801, 0.0
    %v6836 = vadd.f32 %v6834, %v6835
    %v6837 = vsel %vm2747, %v6802, 0.0
    %v6838 = vadd.f32 %v6836, %v6837
    %v6839 = vsel %vm2747, %v6803, 0.0
    %v6840 = vadd.f32 %v6838, %v6839
    %v6841 = vsel %vm2747, %v6804, 0.0
    %v6842 = vadd.f32 %v6840, %v6841
    %v6843 = vsel %vm2747, %v6805, 0.0
    %v6844 = vadd.f32 %v6842, %v6843
    %v6845 = vsel %vm2747, %v6806, 0.0
    %v6846 = vadd.f32 %v6844, %v6845
    %v6847 = vsel %vm2747, %v6807, 0.0
    %v6848 = vadd.f32 %v6846, %v6847
    %v6849 = vsel %vm2747, %v6808, 0.0
    %v6850 = vadd.f32 %v6848, %v6849
    %v6851 = vsel %vm2747, %v6809, 0.0
    %v6852 = vadd.f32 %v6850, %v6851
    %v6853 = vsel %vm2747, %v6810, 0.0
    %v6854 = vadd.f32 %v6852, %v6853
    %v6855 = vsel %vm2747, %v6811, 0.0
    %v6856 = vadd.f32 %v6854, %v6855
    %v6857 = vsel %vm2747, %v6812, 0.0
    %v6858 = vadd.f32 %v6856, %v6857
    %v6859 = vsel %vm2747, %v6813, 0.0
    %v6860 = vadd.f32 %v6858, %v6859
    %v6861 = vsel %vm2747, %v6814, 0.0
    %v6862 = vadd.f32 %v6860, %v6861
    %v6863 = vsel %vm2747, %v6815, 0.0
    %v6864 = vadd.f32 %v6862, %v6863
    %v6865 = vsel %vm2747, %v6816, 0.0
    %v6866 = vadd.f32 %v6864, %v6865
    %v6867 = vsel %vm2747, %v6817, 0.0
    %v6868 = vadd.f32 %v6866, %v6867
    %v6869 = vsel %vm2747, %v6818, 0.0
    %v6870 = vadd.f32 %v6868, %v6869
    %v6871 = vsel %vm2747, %v6819, 0.0
    %v6872 = vadd.f32 %v6870, %v6871
    %v6873 = vsel %vm2747, %v6820, 0.0
    %v6874 = vadd.f32 %v6872, %v6873
    %v6875 = vsel %vm2747, %v6821, 0.0
    %v6876 = vadd.f32 %v6874, %v6875
    %v6877 = vsel %vm2747, %v6822, 0.0
    %v6878 = vadd.f32 %v6876, %v6877
    %v6879 = vsel %vm2747, %v6823, 0.0
    %v6880 = vadd.f32 %v6878, %v6879
    %v6881 = vsel %vm2747, %v6824, 0.0
    %v6882 = vadd.f32 %v6880, %v6881
    %v6883 = vsel %vm2747, %v6825, 0.0
    %v6884 = vadd.f32 %v6882, %v6883
    %v6885 = vsel %vm2747, %v6826, 0.0
    %v6886 = vadd.f32 %v6884, %v6885
    %v6887 = vsel %vm2747, %v6827, 0.0
    %v6888 = vadd.f32 %v6886, %v6887
    %v6889 = vsel %vm2747, %v6828, 0.0
    %v6890 = vadd.f32 %v6888, %v6889
    %v6891 = vsel %vm2747, %v6829, 0.0
    %v6892 = vadd.f32 %v6890, %v6891
    %v6893 = vrot.slane %v6892, 4
    %v6894 = vadd.f32 %v6892, %v6893
    %v6895 = vrot.slane %v6894, 2
    %v6896 = vadd.f32 %v6894, %v6895
    %v6897 = vrot.slane %v6896, 1
    %v6898 = vadd.f32 %v6896, %v6897
    %v6899 = vmul.f32 %v6898, 0.00390625
    %v6900 = vsel %vm6766, %v6605, -3.4028235e+38
    %v6901 = vsel %vm6767, %v6606, -3.4028235e+38
    %v6902 = vsel %vm6768, %v6607, -3.4028235e+38
    %v6903 = vsel %vm6769, %v6608, -3.4028235e+38
    %v6904 = vsel %vm6770, %v6609, -3.4028235e+38
    %v6905 = vsel %vm6771, %v6610, -3.4028235e+38
    %v6906 = vsel %vm6772, %v6611, -3.4028235e+38
    %v6907 = vsel %vm6773, %v6612, -3.4028235e+38
    %v6908 = vsel %vm6774, %v6613, -3.4028235e+38
    %v6909 = vsel %vm6775, %v6614, -3.4028235e+38
    %v6910 = vsel %vm6776, %v6615, -3.4028235e+38
    %v6911 = vsel %vm6777, %v6616, -3.4028235e+38
    %v6912 = vsel %vm6778, %v6617, -3.4028235e+38
    %v6913 = vsel %vm6779, %v6618, -3.4028235e+38
    %v6914 = vsel %vm6780, %v6619, -3.4028235e+38
    %v6915 = vsel %vm6781, %v6620, -3.4028235e+38
    %v6916 = vsel %vm6782, %v6621, -3.4028235e+38
    %v6917 = vsel %vm6783, %v6622, -3.4028235e+38
    %v6918 = vsel %vm6784, %v6623, -3.4028235e+38
    %v6919 = vsel %vm6785, %v6624, -3.4028235e+38
    %v6920 = vsel %vm6786, %v6625, -3.4028235e+38
    %v6921 = vsel %vm6787, %v6626, -3.4028235e+38
    %v6922 = vsel %vm6788, %v6627, -3.4028235e+38
    %v6923 = vsel %vm6789, %v6628, -3.4028235e+38
    %v6924 = vsel %vm6790, %v6629, -3.4028235e+38
    %v6925 = vsel %vm6791, %v6630, -3.4028235e+38
    %v6926 = vsel %vm6792, %v6631, -3.4028235e+38
    %v6927 = vsel %vm6793, %v6632, -3.4028235e+38
    %v6928 = vsel %vm6794, %v6633, -3.4028235e+38
    %v6929 = vsel %vm6795, %v6634, -3.4028235e+38
    %v6930 = vsel %vm6796, %v6635, -3.4028235e+38
    %v6931 = vsel %vm6797, %v6636, -3.4028235e+38
    %v6932 = vsel %vm2747, %v6900, -inf
    %v6933 = vsel %vm2747, %v6901, -inf
    %v6934 = vsel %vm2747, %v6902, -inf
    %v6935 = vsel %vm2747, %v6903, -inf
    %v6936 = vsel %vm2747, %v6904, -inf
    %v6937 = vmax.f32 %v6932, %v6936
    %v6938 = vsel %vm2747, %v6905, -inf
    %v6939 = vmax.f32 %v6933, %v6938
    %v6940 = vsel %vm2747, %v6906, -inf
    %v6941 = vmax.f32 %v6934, %v6940
    %v6942 = vsel %vm2747, %v6907, -inf
    %v6943 = vmax.f32 %v6935, %v6942
    %v6944 = vsel %vm2747, %v6908, -inf
    %v6945 = vmax.f32 %v6937, %v6944
    %v6946 = vsel %vm2747, %v6909, -inf
    %v6947 = vmax.f32 %v6939, %v6946
    %v6948 = vsel %vm2747, %v6910, -inf
    %v6949 = vmax.f32 %v6941, %v6948
    %v6950 = vsel %vm2747, %v6911, -inf
    %v6951 = vmax.f32 %v6943, %v6950
    %v6952 = vsel %vm2747, %v6912, -inf
    %v6953 = vmax.f32 %v6945, %v6952
    %v6954 = vsel %vm2747, %v6913, -inf
    %v6955 = vmax.f32 %v6947, %v6954
    %v6956 = vsel %vm2747, %v6914, -inf
    %v6957 = vmax.f32 %v6949, %v6956
    %v6958 = vsel %vm2747, %v6915, -inf
    %v6959 = vmax.f32 %v6951, %v6958
    %v6960 = vsel %vm2747, %v6916, -inf
    %v6961 = vmax.f32 %v6953, %v6960
    %v6962 = vsel %vm2747, %v6917, -inf
    %v6963 = vmax.f32 %v6955, %v6962
    %v6964 = vsel %vm2747, %v6918, -inf
    %v6965 = vmax.f32 %v6957, %v6964
    %v6966 = vsel %vm2747, %v6919, -inf
    %v6967 = vmax.f32 %v6959, %v6966
    %v6968 = vsel %vm2747, %v6920, -inf
    %v6969 = vmax.f32 %v6961, %v6968
    %v6970 = vsel %vm2747, %v6921, -inf
    %v6971 = vmax.f32 %v6963, %v6970
    %v6972 = vsel %vm2747, %v6922, -inf
    %v6973 = vmax.f32 %v6965, %v6972
    %v6974 = vsel %vm2747, %v6923, -inf
    %v6975 = vmax.f32 %v6967, %v6974
    %v6976 = vsel %vm2747, %v6924, -inf
    %v6977 = vmax.f32 %v6969, %v6976
    %v6978 = vsel %vm2747, %v6925, -inf
    %v6979 = vmax.f32 %v6971, %v6978
    %v6980 = vsel %vm2747, %v6926, -inf
    %v6981 = vmax.f32 %v6973, %v6980
    %v6982 = vsel %vm2747, %v6927, -inf
    %v6983 = vmax.f32 %v6975, %v6982
    %v6984 = vsel %vm2747, %v6928, -inf
    %v6985 = vmax.f32 %v6977, %v6984
    %v6986 = vsel %vm2747, %v6929, -inf
    %v6987 = vmax.f32 %v6979, %v6986
    %v6988 = vsel %vm2747, %v6930, -inf
    %v6989 = vmax.f32 %v6981, %v6988
    %v6990 = vsel %vm2747, %v6931, -inf
    %v6991 = vmax.f32 %v6983, %v6990
    %v6992 = vmax.f32 %v6985, %v6987
    %v6993 = vmax.f32 %v6989, %v6991
    %v6994 = vmax.f32 %v6992, %v6993
    %v6995 = vrot.slane %v6994, 4
    %v6996 = vmax.f32 %v6994, %v6995
    %v6997 = vrot.slane %v6996, 2
    %v6998 = vmax.f32 %v6996, %v6997
    %v6999 = vrot.slane %v6998, 1
    %v7000 = vmax.f32 %v6998, %v6999
    %v7001 = vld [vmem:[%s5] sm:$0x1]
    %v7002 = vld [vmem:[%s4] sm:$0xff]
    %v7003 = vld [vmem:[%s4 + $0x8] sm:$0xff]
    %v7004 = vld [vmem:[%s4 + $0x10] sm:$0xff]
    %v7005 = vld [vmem:[%s4 + $0x18] sm:$0xff]
    %v7007 = vsel %vm2747, %v6898, 0
    %7009 = vmatprep.subr.mxu0 0.0
    %7010 = vmatpush1.msra.mxu0 0.0
    %7011 = vmatprep.subr.mxu0 0.0
    %7012 = vmatpush1.msra.mxu0 0.0
    %7013 = vmatprep.subr.mxu0 0.0
    %7014 = vmatpush1.msra.mxu0 0.0
    %7015 = vmatprep.subr.mxu0 0.0
    %7016 = vmatpush1.msra.mxu0 0.0
    %7017 = vmatprep.subr.mxu0 0.0
    %7018 = vmatpush1.msra.mxu0 0.0
    %7019 = vmatprep.subr.mxu0 0.0
    %7020 = vmatpush1.msra.mxu0 0.0
    %7021 = vmatprep.subr.mxu0 0.0
    %7022 = vmatpush1.msra.mxu0 0.0
    %7023 = vmatprep.subr.mxu0 0.0
    %7024 = vmatpush1.msra.mxu0 0.0
    %7025 = vmatprep.subr.mxu0 0.0
    %7026 = vmatpush1.msra.mxu0 0.0
    %7027 = vmatprep.subr.mxu0 0.0
    %7028 = vmatpush1.msra.mxu0 0.0
    %7029 = vmatprep.subr.mxu0 0.0
    %7030 = vmatpush1.msra.mxu0 0.0
    %7031 = vmatprep.subr.mxu0 0.0
    %7032 = vmatpush1.msra.mxu0 0.0
    %7033 = vmatprep.subr.mxu0 0.0
    %7034 = vmatpush1.msra.mxu0 %v7005
    %7035 = vmatprep.subr.mxu0 0.0
    %7036 = vmatpush1.msra.mxu0 %v7004
    %7037 = vmatprep.subr.mxu0 0.0
    %7038 = vmatpush1.msra.mxu0 %v7003
    %7039 = vmatprep.subr.mxu0 0.0
    %7040 = vmatpush1.msra.mxu0 %v7002
    %7041 = vmatprep.subr.mxu0 0.0
    %7042 = vmatpush2.msra.mxu0 0.0
    %7043 = vmatprep.subr.mxu0 0.0
    %7044 = vmatpush2.msra.mxu0 0.0
    %7045 = vmatprep.subr.mxu0 0.0
    %7046 = vmatpush2.msra.mxu0 0.0
    %7047 = vmatprep.subr.mxu0 0.0
    %7048 = vmatpush2.msra.mxu0 0.0
    %7049 = vmatprep.subr.mxu0 0.0
    %7050 = vmatpush2.msra.mxu0 0.0
    %7051 = vmatprep.subr.mxu0 0.0
    %7052 = vmatpush2.msra.mxu0 0.0
    %7053 = vmatprep.subr.mxu0 0.0
    %7054 = vmatpush2.msra.mxu0 0.0
    %7055 = vmatprep.subr.mxu0 0.0
    %7056 = vmatpush2.msra.mxu0 0.0
    %7057 = vmatprep.subr.mxu0 0.0
    %7058 = vmatpush2.msra.mxu0 0.0
    %7059 = vmatprep.subr.mxu0 0.0
    %7060 = vmatpush2.msra.mxu0 0.0
    %7061 = vmatprep.subr.mxu0 0.0
    %7062 = vmatpush2.msra.mxu0 0.0
    %7063 = vmatprep.subr.mxu0 0.0
    %7064 = vmatpush2.msra.mxu0 0.0
    %7065 = vmatprep.subr.mxu0 0.0
    %7066 = vmatpush2.msra.mxu0 0.0
    %7067 = vmatprep.subr.mxu0 0.0
    %7068 = vmatpush2.msra.mxu0 0.0
    %7069 = vmatprep.subr.mxu0 0.0
    %7070 = vmatpush2.msra.mxu0 0.0
    %7071 = vmatprep.subr.mxu0 0.0
    %7072 = vmatpush2.msra.mxu0 0.0
    %7073 = vmatprep.mubr.f32.mxu0 0.0
    %7074 = vmatmul.mubr.f32.gmra.mxu0 %v7007
    %v7075 = vpop.f32.mrf.mxu0
    %v7076 = vadd.f32 0.0, %v7075
    %v7077 = vpop.f32.mrf.mxu0
    %7078 = vdwg.mxu0
    %v7080 = vlaneseq
    %v7081 = vshrl.u32 %v7080, 7
    %v7082 = vsub.s32 0, %v7081
    %v7083 = vrot.slane %v7001, %v7082
    %v7085 = vadd.f32 %v7083, %v7076
    %s7086 = scalar_lea.vmem %s4, 32
    %v7087 = vld [vmem:[%s7086] sm:$0xff]
    %v7088 = vld [vmem:[%s7086 + $0x8] sm:$0xff]
    %v7089 = vld [vmem:[%s7086 + $0x10] sm:$0xff]
    %v7090 = vld [vmem:[%s7086 + $0x18] sm:$0xff]
    %v7092 = vsel %vm2747, %v6899, 0
    %7094 = vmatprep.subr.mxu0 0.0
    %7095 = vmatpush1.msra.mxu0 0.0
    %7096 = vmatprep.subr.mxu0 0.0
    %7097 = vmatpush1.msra.mxu0 0.0
    %7098 = vmatprep.subr.mxu0 0.0
    %7099 = vmatpush1.msra.mxu0 0.0
    %7100 = vmatprep.subr.mxu0 0.0
    %7101 = vmatpush1.msra.mxu0 0.0
    %7102 = vmatprep.subr.mxu0 0.0
    %7103 = vmatpush1.msra.mxu0 0.0
    %7104 = vmatprep.subr.mxu0 0.0
    %7105 = vmatpush1.msra.mxu0 0.0
    %7106 = vmatprep.subr.mxu0 0.0
    %7107 = vmatpush1.msra.mxu0 0.0
    %7108 = vmatprep.subr.mxu0 0.0
    %7109 = vmatpush1.msra.mxu0 0.0
    %7110 = vmatprep.subr.mxu0 0.0
    %7111 = vmatpush1.msra.mxu0 0.0
    %7112 = vmatprep.subr.mxu0 0.0
    %7113 = vmatpush1.msra.mxu0 0.0
    %7114 = vmatprep.subr.mxu0 0.0
    %7115 = vmatpush1.msra.mxu0 0.0
    %7116 = vmatprep.subr.mxu0 0.0
    %7117 = vmatpush1.msra.mxu0 0.0
    %7118 = vmatprep.subr.mxu0 0.0
    %7119 = vmatpush1.msra.mxu0 %v7090
    %7120 = vmatprep.subr.mxu0 0.0
    %7121 = vmatpush1.msra.mxu0 %v7089
    %7122 = vmatprep.subr.mxu0 0.0
    %7123 = vmatpush1.msra.mxu0 %v7088
    %7124 = vmatprep.subr.mxu0 0.0
    %7125 = vmatpush1.msra.mxu0 %v7087
    %7126 = vmatprep.subr.mxu0 0.0
    %7127 = vmatpush2.msra.mxu0 0.0
    %7128 = vmatprep.subr.mxu0 0.0
    %7129 = vmatpush2.msra.mxu0 0.0
    %7130 = vmatprep.subr.mxu0 0.0
    %7131 = vmatpush2.msra.mxu0 0.0
    %7132 = vmatprep.subr.mxu0 0.0
    %7133 = vmatpush2.msra.mxu0 0.0
    %7134 = vmatprep.subr.mxu0 0.0
    %7135 = vmatpush2.msra.mxu0 0.0
    %7136 = vmatprep.subr.mxu0 0.0
    %7137 = vmatpush2.msra.mxu0 0.0
    %7138 = vmatprep.subr.mxu0 0.0
    %7139 = vmatpush2.msra.mxu0 0.0
    %7140 = vmatprep.subr.mxu0 0.0
    %7141 = vmatpush2.msra.mxu0 0.0
    %7142 = vmatprep.subr.mxu0 0.0
    %7143 = vmatpush2.msra.mxu0 0.0
    %7144 = vmatprep.subr.mxu0 0.0
    %7145 = vmatpush2.msra.mxu0 0.0
    %7146 = vmatprep.subr.mxu0 0.0
    %7147 = vmatpush2.msra.mxu0 0.0
    %7148 = vmatprep.subr.mxu0 0.0
    %7149 = vmatpush2.msra.mxu0 0.0
    %7150 = vmatprep.subr.mxu0 0.0
    %7151 = vmatpush2.msra.mxu0 0.0
    %7152 = vmatprep.subr.mxu0 0.0
    %7153 = vmatpush2.msra.mxu0 0.0
    %7154 = vmatprep.subr.mxu0 0.0
    %7155 = vmatpush2.msra.mxu0 0.0
    %7156 = vmatprep.subr.mxu0 0.0
    %7157 = vmatpush2.msra.mxu0 0.0
    %7158 = vmatprep.mubr.f32.mxu0 0.0
    %7159 = vmatmul.mubr.f32.gmra.mxu0 %v7092
    %v7160 = vpop.f32.mrf.mxu0
    %v7161 = vadd.f32 0.0, %v7160
    %v7162 = vpop.f32.mrf.mxu0
    %7163 = vdwg.mxu0
    %v7164 = vadd.f32 %v7085, %v7161
    %s7165 = scalar_lea.vmem %s4, 64
    %v7166 = vld [vmem:[%s7165] sm:$0xff]
    %v7167 = vld [vmem:[%s7165 + $0x8] sm:$0xff]
    %v7168 = vld [vmem:[%s7165 + $0x10] sm:$0xff]
    %v7169 = vld [vmem:[%s7165 + $0x18] sm:$0xff]
    %v7171 = vsel %vm2747, %v7000, 0
    %7173 = vmatprep.subr.mxu0 0.0
    %7174 = vmatpush1.msra.mxu0 0.0
    %7175 = vmatprep.subr.mxu0 0.0
    %7176 = vmatpush1.msra.mxu0 0.0
    %7177 = vmatprep.subr.mxu0 0.0
    %7178 = vmatpush1.msra.mxu0 0.0
    %7179 = vmatprep.subr.mxu0 0.0
    %7180 = vmatpush1.msra.mxu0 0.0
    %7181 = vmatprep.subr.mxu0 0.0
    %7182 = vmatpush1.msra.mxu0 0.0
    %7183 = vmatprep.subr.mxu0 0.0
    %7184 = vmatpush1.msra.mxu0 0.0
    %7185 = vmatprep.subr.mxu0 0.0
    %7186 = vmatpush1.msra.mxu0 0.0
    %7187 = vmatprep.subr.mxu0 0.0
    %7188 = vmatpush1.msra.mxu0 0.0
    %7189 = vmatprep.subr.mxu0 0.0
    %7190 = vmatpush1.msra.mxu0 0.0
    %7191 = vmatprep.subr.mxu0 0.0
    %7192 = vmatpush1.msra.mxu0 0.0
    %7193 = vmatprep.subr.mxu0 0.0
    %7194 = vmatpush1.msra.mxu0 0.0
    %7195 = vmatprep.subr.mxu0 0.0
    %7196 = vmatpush1.msra.mxu0 0.0
    %7197 = vmatprep.subr.mxu0 0.0
    %7198 = vmatpush1.msra.mxu0 %v7169
    %7199 = vmatprep.subr.mxu0 0.0
    %7200 = vmatpush1.msra.mxu0 %v7168
    %7201 = vmatprep.subr.mxu0 0.0
    %7202 = vmatpush1.msra.mxu0 %v7167
    %7203 = vmatprep.subr.mxu0 0.0
    %7204 = vmatpush1.msra.mxu0 %v7166
    %7205 = vmatprep.subr.mxu0 0.0
    %7206 = vmatpush2.msra.mxu0 0.0
    %7207 = vmatprep.subr.mxu0 0.0
    %7208 = vmatpush2.msra.mxu0 0.0
    %7209 = vmatprep.subr.mxu0 0.0
    %7210 = vmatpush2.msra.mxu0 0.0
    %7211 = vmatprep.subr.mxu0 0.0
    %7212 = vmatpush2.msra.mxu0 0.0
    %7213 = vmatprep.subr.mxu0 0.0
    %7214 = vmatpush2.msra.mxu0 0.0
    %7215 = vmatprep.subr.mxu0 0.0
    %7216 = vmatpush2.msra.mxu0 0.0
    %7217 = vmatprep.subr.mxu0 0.0
    %7218 = vmatpush2.msra.mxu0 0.0
    %7219 = vmatprep.subr.mxu0 0.0
    %7220 = vmatpush2.msra.mxu0 0.0
    %7221 = vmatprep.subr.mxu0 0.0
    %7222 = vmatpush2.msra.mxu0 0.0
    %7223 = vmatprep.subr.mxu0 0.0
    %7224 = vmatpush2.msra.mxu0 0.0
    %7225 = vmatprep.subr.mxu0 0.0
    %7226 = vmatpush2.msra.mxu0 0.0
    %7227 = vmatprep.subr.mxu0 0.0
    %7228 = vmatpush2.msra.mxu0 0.0
    %7229 = vmatprep.subr.mxu0 0.0
    %7230 = vmatpush2.msra.mxu0 0.0
    %7231 = vmatprep.subr.mxu0 0.0
    %7232 = vmatpush2.msra.mxu0 0.0
    %7233 = vmatprep.subr.mxu0 0.0
    %7234 = vmatpush2.msra.mxu0 0.0
    %7235 = vmatprep.subr.mxu0 0.0
    %7236 = vmatpush2.msra.mxu0 0.0
    %7237 = vmatprep.mubr.f32.mxu0 0.0
    %7238 = vmatmul.mubr.f32.gmra.mxu0 %v7171
    %v7239 = vpop.f32.mrf.mxu0
    %v7240 = vadd.f32 0.0, %v7239
    %v7241 = vpop.f32.mrf.mxu0
    %7242 = vdwg.mxu0
    %v7243 = vadd.f32 %v7164, %v7240
    %v7244 = vmax.f32 %v7243, 0.0
    %v7245 = vld [vmem:[%s6] sm:$0x1]
    %v7247 = vlaneseq
    %v7248 = vshrl.u32 %v7247, 7
    %v7249 = vsub.s32 0, %v7248
    %v7250 = vrot.slane %v7245, %v7249
    %v7252 = vmul.f32 %v7244, %v7250
    %v7253 = vsel %vm2747, %v7252, 0.0
    %7254 = vadd.xlane.f32.xlu0 %v7253
    %v7255 = vpop.xlane.xlu0 %7254
    %v7256 = vld [vmem:[#allocation2] sm:$0x1]
    %v7258 = vlaneseq
    %v7259 = vshrl.u32 %v7258, 7
    %v7260 = vsub.s32 0, %v7259
    %v7261 = vrot.slane %v7256, %v7260
    %v7263 = vadd.f32 %v7255, %v7261
    %vm7264 = vcmask 0
    %7265 = vst.msk [vmem:[#allocation3] sm:$0x1] %vm7264, %v7263
    // Predicated region
    $region34: #{pna_original_simple_forward.1} parent=1 // pred_check
      _
    $region35: #{pna_original_simple_forward.1} parent=1 // pred_check_branch
      %7267 = sbr.rel (0) target = $region37
    $region36: #{pna_original_simple_forward.1} parent=1 // pred_region
      %s7269 = ssub.s32 16, 16
      %7270 = vsyncadd [#allocation4], %s7269
      %s7272 = sshll.u32 [#allocation3], 4
      %s7273 = int_to_ptr.vmem [resolvable:$true] %s7272
      %7275 = dma.vmem_to_hbm [thread:$0]  %s7273, 16, %s8, [#allocation4]
    $region37: #{pna_original_simple_forward.1} parent=1 // pred_fallthru
      _
    // Predicated region
    $region38: #{pna_original_simple_forward.1} parent=1 // pred_check
      _
    $region39: #{pna_original_simple_forward.1} parent=1 // pred_check_branch
      %7277 = sbr.rel (0) target = $region41
    $region40: #{pna_original_simple_forward.1} parent=1 // pred_region
      _
    $region41: #{pna_original_simple_forward.1} parent=1 // pred_fallthru
      _
    // Predicated region
    $region42: #{pna_original_simple_forward.1} parent=1 // pred_check
      _
    $region43: #{pna_original_simple_forward.1} parent=1 // pred_check_branch
      %7279 = sbr.rel (0) target = $region45
    $region44: #{pna_original_simple_forward.1} parent=1 // pred_region
      %7280 = dma.done [#allocation4], 16
    $region45: #{pna_original_simple_forward.1} parent=1 // pred_fallthru
      _
    // Predicated region
    $region46: #{pna_original_simple_forward.1} parent=1 // pred_check
      _
    $region47: #{pna_original_simple_forward.1} parent=1 // pred_check_branch
      %7282 = sbr.rel (0) target = $region49
    $region48: #{pna_original_simple_forward.1} parent=1 // pred_region
      _
    $region49: #{pna_original_simple_forward.1} parent=1 // pred_fallthru
      _
    %7283 = vsyncpa [#allocation4], 1

</llo_original>
